<compile_context>
chip_gen: v5e
topology: v5e:2x2
jax: 0.10.0
libtpu: 0.0.40
codegen_flags: <defaults>
</compile_context>

<pallas_src>
import functools

import jax
import jax.numpy as jnp
from jax.experimental import pallas as pl
from jax.experimental.pallas import tpu as pltpu

Z_SIZE = 50
LEAKY_SLOPE = 0.01                    # nn.LeakyReLU default
KL_WEIGHT = 0.1
KERNEL = 5                            # all conv kernels are 5x5
ENC_CHANNELS = (1, 16, 32, 64)        # ConvsBase channels, stride 2, padding 2
DEC_CHANNELS = (Z_SIZE, 32, 16, 8, 1) # ConvsTransposeBase channels
DEC_STRIDES = (3, 2, 2, 2)
LANE = 128


def _round_up(x, m):
    return ((x + m - 1) // m) * m


def _ceil_div(a, b):
    return -(-a // b)


# ----------------------------- Pallas kernels -----------------------------

def _matmul_bias_act_kernel(a_ref, b_ref, bias_ref, o_ref, *, act):
    acc = jnp.dot(a_ref[...], b_ref[...], preferred_element_type=jnp.float32)
    acc = acc + bias_ref[...]
    if act == "leaky_relu":
        acc = jnp.where(acc >= 0.0, acc, LEAKY_SLOPE * acc)
    elif act == "sigmoid":
        acc = jax.nn.sigmoid(acc)
    elif act != "none":
        raise ValueError(f"unknown activation {act}")
    o_ref[...] = acc.astype(o_ref.dtype)


def _choose_tm(m):
    """Adaptive row tile: no 128x padding of tiny layers, <=512 rows for big ones,
    and (where possible) >=2 grid steps so both v7x TensorCores get work."""
    if m <= 16:
        return _round_up(m, 16)
    return min(512, _round_up(_ceil_div(m, 2), 16))


def matmul_bias_act(a, b, bias, act, out_dtype=jnp.float32):
    """Fused (M,K)@(K,Npad) + bias + activation, tiled over M on the MXU.
    Npad is a multiple of 128 so every store is lane-dense; A/B are bf16, acc f32."""
    m, k = a.shape
    k2, n_pad = b.shape
    assert k == k2 and n_pad % LANE == 0
    tm = _choose_tm(m)
    mp = _ceil_div(m, tm) * tm
    a = a.astype(jnp.bfloat16)
    if mp != m:
        a = jnp.pad(a, ((0, mp - m), (0, 0)))
    out = pl.pallas_call(
        functools.partial(_matmul_bias_act_kernel, act=act),
        out_shape=jax.ShapeDtypeStruct((mp, n_pad), out_dtype),
        grid=(mp // tm,),
        in_specs=[
            pl.BlockSpec((tm, k), lambda i: (i, 0)),
            pl.BlockSpec((k, n_pad), lambda i: (0, 0)),
            pl.BlockSpec((1, n_pad), lambda i: (0, 0)),
        ],
        out_specs=pl.BlockSpec((tm, n_pad), lambda i: (i, 0)),
        compiler_params=pltpu.CompilerParams(dimension_semantics=("parallel",)),
    )(a, b, bias)
    return out if mp == m else out[:m]


def _vae_loss_kernel(recon_ref, x_ref, mu_ref, logvar_ref, o_ref, *, kl_weight, batch):
    r = recon_ref[...]
    x = x_ref[...]
    # F.binary_cross_entropy(recon, x, reduction='sum'); PyTorch clamps log at -100.
    log_r = jnp.maximum(jnp.log(r), -100.0)
    log_1mr = jnp.maximum(jnp.log(1.0 - r), -100.0)
    bce = -jnp.sum(x * log_r + (1.0 - x) * log_1mr, keepdims=True)            # (1,1)
    mu = mu_ref[...]
    lv = logvar_ref[...]
    kld = -0.5 * jnp.sum(1.0 + lv - mu * mu - jnp.exp(lv), keepdims=True)     # (1,1)
    o_ref[...] = (bce + kl_weight * kld) / float(batch)


def vae_loss(recon, x, mu, logvar, kl_weight):
    batch = x.shape[0]
    out = pl.pallas_call(
        functools.partial(_vae_loss_kernel, kl_weight=kl_weight, batch=batch),
        out_shape=jax.ShapeDtypeStruct((1, 1), jnp.float32),
    )(recon.reshape(batch, -1), x.reshape(batch, -1), mu, logvar)
    return out[0, 0]


# --------------------------- conv glue (layout only) ---------------------------

def conv2d_nhwc(x, wmat, bias, n_valid, k, stride, padding, act, out_dtype):
    """x: [N,H,W,C]; wmat: [k*k*C, Npad] bf16 (row order (kh,kw,ci)); bias: (1,Npad) f32.
    Channel-last im2col: the duplicated patches slab reshapes to 2D for free and the
    kernel output reshapes back to NHWC for free (no HBM transposes around the call)."""
    n, h, w, c = x.shape
    xp = jnp.pad(x, ((0, 0), (padding, padding), (padding, padding), (0, 0)))
    hp, wp = h + 2 * padding, w + 2 * padding
    ho = (hp - k) // stride + 1
    wo = (wp - k) // stride + 1
    cols = []
    for kh in range(k):
        for kw in range(k):
            cols.append(xp[:, kh:kh + stride * ho:stride, kw:kw + stride * wo:stride, :])
    patches = jnp.concatenate(cols, axis=-1).reshape(n * ho * wo, k * k * c)
    y = matmul_bias_act(patches, wmat, bias, act, out_dtype=out_dtype)  # [M, Npad]
    return y[:, :n_valid].reshape(n, ho, wo, n_valid)


# ----------------------- weight prepacking (init time) -----------------------

def _pack_matmul(wmat, bias):
    """Pad columns to a multiple of 128 lanes; weights -> bf16, bias -> (1, Npad) f32."""
    _, n = wmat.shape
    n_pad = _round_up(n, LANE)
    wmat = jnp.pad(wmat, ((0, 0), (0, n_pad - n))).astype(jnp.bfloat16)
    bias = jnp.pad(bias, (0, n_pad - n)).astype(jnp.float32).reshape(1, n_pad)
    return wmat, bias


def _subpixel_pack(w, b, stride):
    """ConvTranspose2d(w:[Cin,Cout,k,k], stride s, padding=0) rewritten as ONE stride-1
    conv producing s*s output phases (sub-pixel decomposition). Returns
    wmat:[T*T*Cin, Cout*s*s] (row order (t,u,ci), column order (co,py,px)) and bias."""
    cin, cout, k, _ = w.shape
    s = stride
    t_max = _ceil_div(k, s)
    wk = jnp.zeros((t_max, t_max, cin, cout, s, s), w.dtype)
    for py in range(s):
        for px in range(s):
            for t in range(_ceil_div(k - py, s)):
                for u in range(_ceil_div(k - px, s)):
                    wk = wk.at[t_max - 1 - t, t_max - 1 - u, :, :, py, px].set(
                        w[:, :, py + s * t, px + s * u])
    wmat = wk.reshape(t_max * t_max * cin, cout * s * s)
    bias = jnp.repeat(b, s * s)
    return wmat, bias


def init_params(key):
    def dense(kk, shape, fan_in):
        return jax.random.normal(kk, shape, jnp.float32) / jnp.sqrt(float(fan_in))

    keys = jax.random.split(key, 16)
    ki = 0
    params = {"enc": [], "dec": []}
    # encoder: ConvsBase channels [16,32,64], k=5, stride=2, padding=2, LeakyReLU
    for cin, cout in zip(ENC_CHANNELS[:-1], ENC_CHANNELS[1:]):
        w = dense(keys[ki], (cout, cin, KERNEL, KERNEL), cin * KERNEL * KERNEL); ki += 1
        b = jnp.zeros((cout,), jnp.float32)
        wmat = w.transpose(2, 3, 1, 0).reshape(KERNEL * KERNEL * cin, cout)  # (kh,kw,ci) x co
        params["enc"].append(_pack_matmul(wmat, b))
    # fused latent heads: encoder output [N,64,4,4] -> 1024 features -> (mu | logvar)
    feat = 64 * 4 * 4
    mu_w = dense(keys[ki], (Z_SIZE, feat), feat); ki += 1
    lv_w = dense(keys[ki], (Z_SIZE, feat), feat); ki += 1
    head_w = jnp.concatenate([mu_w.T, lv_w.T], axis=1)                        # [1024, 100]
    head_b = jnp.zeros((2 * Z_SIZE,), jnp.float32)
    params["head"] = _pack_matmul(head_w, head_b)
    # decoder: ConvTranspose channels [32,16,8,1], strides [3,2,2,2], k=5, padding=0
    for (cin, cout), s in zip(zip(DEC_CHANNELS[:-1], DEC_CHANNELS[1:]), DEC_STRIDES):
        w = dense(keys[ki], (cin, cout, KERNEL, KERNEL), cin * KERNEL * KERNEL); ki += 1
        b = jnp.zeros((cout,), jnp.float32)
        params["dec"].append(_pack_matmul(*_subpixel_pack(w, b, s)))
    return params


# ------------------------------ forward passes ------------------------------

def encoder_fwd(params, x):
    h = x                                                    # [N,28,28,1]
    for li, (wmat, bias) in enumerate(params["enc"]):
        h = conv2d_nhwc(h, wmat, bias, n_valid=ENC_CHANNELS[li + 1], k=KERNEL,
                        stride=2, padding=2, act="leaky_relu", out_dtype=jnp.bfloat16)
    return h                                                 # [N,4,4,64] bf16


def decoder_fwd(params, z_img):
    """z_img: [Nb,1,1,Z]. last_layer_is_output=True -> sigmoid only on the last layer."""
    h = z_img
    n_layers = len(params["dec"])
    for li, (wmat, bias) in enumerate(params["dec"]):
        s = DEC_STRIDES[li]
        cout = DEC_CHANNELS[li + 1]
        t_max = _ceil_div(KERNEL, s)
        last = li == n_layers - 1
        n, hin, win, _ = h.shape
        # one stride-1 conv computing all s*s output phases at once
        y = conv2d_nhwc(h, wmat, bias, n_valid=cout * s * s, k=t_max, stride=1,
                        padding=t_max - 1,
                        act="sigmoid" if last else "leaky_relu",
                        out_dtype=jnp.float32 if last else jnp.bfloat16)
        lh, lw = hin + t_max - 1, win + t_max - 1             # per-phase output size
        # interleave the s*s phases (channel order (co,py,px)) back to full resolution
        y = y.reshape(n, lh, lw, cout, s, s).transpose(0, 1, 4, 2, 5, 3)
        y = y.reshape(n, lh * s, lw * s, cout)
        hout, wout = (hin - 1) * s + KERNEL, (win - 1) * s + KERNEL
        h = y[:, :hout, :wout, :]
    return h                                                  # [Nb,61,61,1]


def crop_center(x, th, tw):
    # TODO(synk): trw.transforms.crop_or_pad_fun also pads; only center-crop is needed here.
    oh = (x.shape[1] - th) // 2
    ow = (x.shape[2] - tw) // 2
    return x[:, oh:oh + th, ow:ow + tw, :]


def net_forward(params, images, eps, z_random):
    """Equivalent of Net.forward({'images': images}) (training mode)."""
    n = images.shape[0]
    x = images.transpose(0, 2, 3, 1)                          # NCHW -> NHWC
    enc = encoder_fwd(params, x)                              # [N,4,4,64]
    flat = enc.transpose(0, 3, 1, 2).reshape(n, -1)           # PyTorch (C,H,W) flatten order
    head_w, head_b = params["head"]
    head = matmul_bias_act(flat, head_w, head_b, "none", out_dtype=jnp.float32)
    mu = head[:, :Z_SIZE]
    logvar = head[:, Z_SIZE:2 * Z_SIZE]
    # reparameterize (training): z = mu + eps * exp(0.5*logvar)
    z = mu + eps * jnp.exp(0.5 * logvar)
    # fuse reconstruction decode and autoencoder.sample(len(images)) decode into one pass
    z_all = jnp.concatenate([z, z_random], axis=0).reshape(2 * n, 1, 1, Z_SIZE)
    dec = decoder_fwd(params, z_all)                          # [2N,61,61,1]
    dec = crop_center(dec, images.shape[2], images.shape[3])  # -> [2N,28,28,1]
    dec = dec.transpose(0, 3, 1, 2)                           # NHWC -> NCHW
    recon, samples = dec[:n], dec[n:]
    loss = vae_loss(recon, images, mu, logvar, KL_WEIGHT)
    return {"loss": loss, "recon": recon, "random_samples": samples}


if __name__ == "__main__":
    key = jax.random.PRNGKey(0)
    kp, kx, keps, kz = jax.random.split(key, 4)
    params = init_params(kp)
    # MNIST-like input: batch=2, 1 channel, 28x28, values in [0,1] (required by BCE).
    images = jax.random.uniform(kx, (2, 1, 28, 28), jnp.float32)
    eps = jax.random.normal(keps, (2, Z_SIZE), jnp.float32)        # reparameterization noise
    z_random = jax.random.normal(kz, (2, Z_SIZE), jnp.float32)     # autoencoder.sample noise

    out = jax.jit(net_forward)(params, images, eps, z_random)
    out = jax.block_until_ready(out)

    assert out["recon"].shape == (2, 1, 28, 28)
    assert out["random_samples"].shape == (2, 1, 28, 28)
    assert out["loss"].shape == ()
    assert bool(jnp.isfinite(out["loss"]))
    print("KERNEL_OK")
</pallas_src>

<mosaic_0001>
module attributes {stable_mosaic.version = 11 : i64} {
  func.func @_matmul_bias_act_kernel(%arg0: i32, %arg1: memref<208x25xbf16, #tpu.memory_space<vmem>>, %arg2: memref<25x128xbf16, #tpu.memory_space<vmem>>, %arg3: memref<1x128xf32, #tpu.memory_space<vmem>>, %arg4: memref<208x128xbf16, #tpu.memory_space<vmem>>) attributes {dimension_semantics = [#tpu.dimension_semantics<parallel>], iteration_bounds = array<i64: 2>, scalar_prefetch = 0 : i64, scratch_operands = 0 : i64, tpu.core_type = #tpu.core_type<tc>, window_params = [{transform_indices = @transform_0, window_bounds = array<i64: 208, 25>}, {pipeline_mode = #tpu.pipeline_mode<synchronous>, transform_indices = @transform_1, window_bounds = array<i64: 25, 128>}, {pipeline_mode = #tpu.pipeline_mode<synchronous>, transform_indices = @transform_2, window_bounds = array<i64: 1, 128>}, {transform_indices = @transform_3, window_bounds = array<i64: 208, 128>}]} {
    %c0 = arith.constant 0 : index
    %c0_0 = arith.constant 0 : index
    %0 = vector.load %arg1[%c0, %c0_0] : memref<208x25xbf16, #tpu.memory_space<vmem>>, vector<208x25xbf16>
    %c0_1 = arith.constant 0 : index
    %c0_2 = arith.constant 0 : index
    %1 = vector.load %arg2[%c0_1, %c0_2] : memref<25x128xbf16, #tpu.memory_space<vmem>>, vector<25x128xbf16>
    %cst = arith.constant dense<0.000000e+00> : vector<208x128xf32>
    %2 = tpu.matmul %0, %1, %cst {dimension_numbers = #tpu.dot_dimension_numbers<[1], [0], [0], [1], [0, 0, 1, 1], [], []>} : vector<208x25xbf16>, vector<25x128xbf16>, vector<208x128xf32> -> vector<208x128xf32>
    %c0_3 = arith.constant 0 : index
    %c0_4 = arith.constant 0 : index
    %3 = vector.load %arg3[%c0_3, %c0_4] : memref<1x128xf32, #tpu.memory_space<vmem>>, vector<1x128xf32>
    %4 = vector.broadcast %3 : vector<1x128xf32> to vector<208x128xf32>
    %5 = arith.addf %2, %4 : vector<208x128xf32>
    %cst_5 = arith.constant 0.000000e+00 : f32
    %6 = vector.broadcast %cst_5 : f32 to vector<208x128xf32>
    %7 = arith.cmpf oge, %5, %6 : vector<208x128xf32>
    %cst_6 = arith.constant 0.00999999977 : f32
    %8 = vector.broadcast %cst_6 : f32 to vector<208x128xf32>
    %9 = arith.mulf %8, %5 : vector<208x128xf32>
    %10 = arith.select %7, %5, %9 : vector<208x128xi1>, vector<208x128xf32>
    %11 = arith.truncf %10 : vector<208x128xf32> to vector<208x128xbf16>
    %c0_7 = arith.constant 0 : index
    %c0_8 = arith.constant 0 : index
    %12 = vector.load %arg4[%c0_7, %c0_8] : memref<208x128xbf16, #tpu.memory_space<vmem>>, vector<208x128xbf16>
    tpu.vector_store %arg4[%c0_7, %c0_8], %11 {strides = array<i32>} : memref<208x128xbf16, #tpu.memory_space<vmem>>, vector<208x128xbf16>,
    return
  }
  func.func @transform_0(%arg0: i32) -> (i32, i32) {
    %c0_i32 = arith.constant 0 : i32
    %c0_i32_0 = arith.constant 0 : i32
    return %arg0, %c0_i32 : i32, i32
  }
  func.func @transform_1(%arg0: i32) -> (i32, i32) {
    %c0_i32 = arith.constant 0 : i32
    %c0_i32_0 = arith.constant 0 : i32
    %c0_i32_1 = arith.constant 0 : i32
    return %c0_i32, %c0_i32_0 : i32, i32
  }
  func.func @transform_2(%arg0: i32) -> (i32, i32) {
    %c0_i32 = arith.constant 0 : i32
    %c0_i32_0 = arith.constant 0 : i32
    %c0_i32_1 = arith.constant 0 : i32
    return %c0_i32, %c0_i32_0 : i32, i32
  }
  func.func @transform_3(%arg0: i32) -> (i32, i32) {
    %c0_i32 = arith.constant 0 : i32
    %c0_i32_0 = arith.constant 0 : i32
    return %arg0, %c0_i32 : i32, i32
  }
}

module attributes {stable_mosaic.version = 11 : i64} {
  func.func @_matmul_bias_act_kernel(%arg0: i32, %arg1: memref<64x400xbf16, #tpu.memory_space<vmem>>, %arg2: memref<400x128xbf16, #tpu.memory_space<vmem>>, %arg3: memref<1x128xf32, #tpu.memory_space<vmem>>, %arg4: memref<64x128xbf16, #tpu.memory_space<vmem>>) attributes {dimension_semantics = [#tpu.dimension_semantics<parallel>], iteration_bounds = array<i64: 2>, scalar_prefetch = 0 : i64, scratch_operands = 0 : i64, tpu.core_type = #tpu.core_type<tc>, window_params = [{transform_indices = @transform_0, window_bounds = array<i64: 64, 400>}, {pipeline_mode = #tpu.pipeline_mode<synchronous>, transform_indices = @transform_1, window_bounds = array<i64: 400, 128>}, {pipeline_mode = #tpu.pipeline_mode<synchronous>, transform_indices = @transform_2, window_bounds = array<i64: 1, 128>}, {transform_indices = @transform_3, window_bounds = array<i64: 64, 128>}]} {
    %c0 = arith.constant 0 : index
    %c0_0 = arith.constant 0 : index
    %0 = vector.load %arg1[%c0, %c0_0] : memref<64x400xbf16, #tpu.memory_space<vmem>>, vector<64x400xbf16>
    %c0_1 = arith.constant 0 : index
    %c0_2 = arith.constant 0 : index
    %1 = vector.load %arg2[%c0_1, %c0_2] : memref<400x128xbf16, #tpu.memory_space<vmem>>, vector<400x128xbf16>
    %cst = arith.constant dense<0.000000e+00> : vector<64x128xf32>
    %2 = tpu.matmul %0, %1, %cst {dimension_numbers = #tpu.dot_dimension_numbers<[1], [0], [0], [1], [0, 0, 1, 1], [], []>} : vector<64x400xbf16>, vector<400x128xbf16>, vector<64x128xf32> -> vector<64x128xf32>
    %c0_3 = arith.constant 0 : index
    %c0_4 = arith.constant 0 : index
    %3 = vector.load %arg3[%c0_3, %c0_4] : memref<1x128xf32, #tpu.memory_space<vmem>>, vector<1x128xf32>
    %4 = vector.broadcast %3 : vector<1x128xf32> to vector<64x128xf32>
    %5 = arith.addf %2, %4 : vector<64x128xf32>
    %cst_5 = arith.constant 0.000000e+00 : f32
    %6 = vector.broadcast %cst_5 : f32 to vector<64x128xf32>
    %7 = arith.cmpf oge, %5, %6 : vector<64x128xf32>
    %cst_6 = arith.constant 0.00999999977 : f32
    %8 = vector.broadcast %cst_6 : f32 to vector<64x128xf32>
    %9 = arith.mulf %8, %5 : vector<64x128xf32>
    %10 = arith.select %7, %5, %9 : vector<64x128xi1>, vector<64x128xf32>
    %11 = arith.truncf %10 : vector<64x128xf32> to vector<64x128xbf16>
    %c0_7 = arith.constant 0 : index
    %c0_8 = arith.constant 0 : index
    %12 = vector.load %arg4[%c0_7, %c0_8] : memref<64x128xbf16, #tpu.memory_space<vmem>>, vector<64x128xbf16>
    tpu.vector_store %arg4[%c0_7, %c0_8], %11 {strides = array<i32>} : memref<64x128xbf16, #tpu.memory_space<vmem>>, vector<64x128xbf16>,
    return
  }
  func.func @transform_0(%arg0: i32) -> (i32, i32) {
    %c0_i32 = arith.constant 0 : i32
    %c0_i32_0 = arith.constant 0 : i32
    return %arg0, %c0_i32 : i32, i32
  }
  func.func @transform_1(%arg0: i32) -> (i32, i32) {
    %c0_i32 = arith.constant 0 : i32
    %c0_i32_0 = arith.constant 0 : i32
    %c0_i32_1 = arith.constant 0 : i32
    return %c0_i32, %c0_i32_0 : i32, i32
  }
  func.func @transform_2(%arg0: i32) -> (i32, i32) {
    %c0_i32 = arith.constant 0 : i32
    %c0_i32_0 = arith.constant 0 : i32
    %c0_i32_1 = arith.constant 0 : i32
    return %c0_i32, %c0_i32_0 : i32, i32
  }
  func.func @transform_3(%arg0: i32) -> (i32, i32) {
    %c0_i32 = arith.constant 0 : i32
    %c0_i32_0 = arith.constant 0 : i32
    return %arg0, %c0_i32 : i32, i32
  }
}

module attributes {stable_mosaic.version = 11 : i64} {
  func.func @_matmul_bias_act_kernel(%arg0: i32, %arg1: memref<16x800xbf16, #tpu.memory_space<vmem>>, %arg2: memref<800x128xbf16, #tpu.memory_space<vmem>>, %arg3: memref<1x128xf32, #tpu.memory_space<vmem>>, %arg4: memref<16x128xbf16, #tpu.memory_space<vmem>>) attributes {dimension_semantics = [#tpu.dimension_semantics<parallel>], iteration_bounds = array<i64: 2>, scalar_prefetch = 0 : i64, scratch_operands = 0 : i64, tpu.core_type = #tpu.core_type<tc>, window_params = [{transform_indices = @transform_0, window_bounds = array<i64: 16, 800>}, {pipeline_mode = #tpu.pipeline_mode<synchronous>, transform_indices = @transform_1, window_bounds = array<i64: 800, 128>}, {pipeline_mode = #tpu.pipeline_mode<synchronous>, transform_indices = @transform_2, window_bounds = array<i64: 1, 128>}, {transform_indices = @transform_3, window_bounds = array<i64: 16, 128>}]} {
    %c0 = arith.constant 0 : index
    %c0_0 = arith.constant 0 : index
    %0 = vector.load %arg1[%c0, %c0_0] : memref<16x800xbf16, #tpu.memory_space<vmem>>, vector<16x800xbf16>
    %c0_1 = arith.constant 0 : index
    %c0_2 = arith.constant 0 : index
    %1 = vector.load %arg2[%c0_1, %c0_2] : memref<800x128xbf16, #tpu.memory_space<vmem>>, vector<800x128xbf16>
    %cst = arith.constant dense<0.000000e+00> : vector<16x128xf32>
    %2 = tpu.matmul %0, %1, %cst {dimension_numbers = #tpu.dot_dimension_numbers<[1], [0], [0], [1], [0, 0, 1, 1], [], []>} : vector<16x800xbf16>, vector<800x128xbf16>, vector<16x128xf32> -> vector<16x128xf32>
    %c0_3 = arith.constant 0 : index
    %c0_4 = arith.constant 0 : index
    %3 = vector.load %arg3[%c0_3, %c0_4] : memref<1x128xf32, #tpu.memory_space<vmem>>, vector<1x128xf32>
    %4 = vector.broadcast %3 : vector<1x128xf32> to vector<16x128xf32>
    %5 = arith.addf %2, %4 : vector<16x128xf32>
    %cst_5 = arith.constant 0.000000e+00 : f32
    %6 = vector.broadcast %cst_5 : f32 to vector<16x128xf32>
    %7 = arith.cmpf oge, %5, %6 : vector<16x128xf32>
    %cst_6 = arith.constant 0.00999999977 : f32
    %8 = vector.broadcast %cst_6 : f32 to vector<16x128xf32>
    %9 = arith.mulf %8, %5 : vector<16x128xf32>
    %10 = arith.select %7, %5, %9 : vector<16x128xi1>, vector<16x128xf32>
    %11 = arith.truncf %10 : vector<16x128xf32> to vector<16x128xbf16>
    %c0_7 = arith.constant 0 : index
    %c0_8 = arith.constant 0 : index
    %12 = vector.load %arg4[%c0_7, %c0_8] : memref<16x128xbf16, #tpu.memory_space<vmem>>, vector<16x128xbf16>
    tpu.vector_store %arg4[%c0_7, %c0_8], %11 {strides = array<i32>} : memref<16x128xbf16, #tpu.memory_space<vmem>>, vector<16x128xbf16>,
    return
  }
  func.func @transform_0(%arg0: i32) -> (i32, i32) {
    %c0_i32 = arith.constant 0 : i32
    %c0_i32_0 = arith.constant 0 : i32
    return %arg0, %c0_i32 : i32, i32
  }
  func.func @transform_1(%arg0: i32) -> (i32, i32) {
    %c0_i32 = arith.constant 0 : i32
    %c0_i32_0 = arith.constant 0 : i32
    %c0_i32_1 = arith.constant 0 : i32
    return %c0_i32, %c0_i32_0 : i32, i32
  }
  func.func @transform_2(%arg0: i32) -> (i32, i32) {
    %c0_i32 = arith.constant 0 : i32
    %c0_i32_0 = arith.constant 0 : i32
    %c0_i32_1 = arith.constant 0 : i32
    return %c0_i32, %c0_i32_0 : i32, i32
  }
  func.func @transform_3(%arg0: i32) -> (i32, i32) {
    %c0_i32 = arith.constant 0 : i32
    %c0_i32_0 = arith.constant 0 : i32
    return %arg0, %c0_i32 : i32, i32
  }
}

module attributes {stable_mosaic.version = 11 : i64} {
  func.func @_matmul_bias_act_kernel(%arg0: i32, %arg1: memref<16x1024xbf16, #tpu.memory_space<vmem>>, %arg2: memref<1024x128xbf16, #tpu.memory_space<vmem>>, %arg3: memref<1x128xf32, #tpu.memory_space<vmem>>, %arg4: memref<16x128xf32, #tpu.memory_space<vmem>>) attributes {dimension_semantics = [#tpu.dimension_semantics<parallel>], iteration_bounds = array<i64: 1>, scalar_prefetch = 0 : i64, scratch_operands = 0 : i64, tpu.core_type = #tpu.core_type<tc>, window_params = [{transform_indices = @transform_0, window_bounds = array<i64: 16, 1024>}, {pipeline_mode = #tpu.pipeline_mode<synchronous>, transform_indices = @transform_1, window_bounds = array<i64: 1024, 128>}, {pipeline_mode = #tpu.pipeline_mode<synchronous>, transform_indices = @transform_2, window_bounds = array<i64: 1, 128>}, {transform_indices = @transform_3, window_bounds = array<i64: 16, 128>}]} {
    %c0 = arith.constant 0 : index
    %c0_0 = arith.constant 0 : index
    %0 = vector.load %arg1[%c0, %c0_0] : memref<16x1024xbf16, #tpu.memory_space<vmem>>, vector<16x1024xbf16>
    %c0_1 = arith.constant 0 : index
    %c0_2 = arith.constant 0 : index
    %1 = vector.load %arg2[%c0_1, %c0_2] : memref<1024x128xbf16, #tpu.memory_space<vmem>>, vector<1024x128xbf16>
    %cst = arith.constant dense<0.000000e+00> : vector<16x128xf32>
    %2 = tpu.matmul %0, %1, %cst {dimension_numbers = #tpu.dot_dimension_numbers<[1], [0], [0], [1], [0, 0, 1, 1], [], []>} : vector<16x1024xbf16>, vector<1024x128xbf16>, vector<16x128xf32> -> vector<16x128xf32>
    %c0_3 = arith.constant 0 : index
    %c0_4 = arith.constant 0 : index
    %3 = vector.load %arg3[%c0_3, %c0_4] : memref<1x128xf32, #tpu.memory_space<vmem>>, vector<1x128xf32>
    %4 = vector.broadcast %3 : vector<1x128xf32> to vector<16x128xf32>
    %5 = arith.addf %2, %4 : vector<16x128xf32>
    %c0_5 = arith.constant 0 : index
    %c0_6 = arith.constant 0 : index
    %6 = vector.load %arg4[%c0_5, %c0_6] : memref<16x128xf32, #tpu.memory_space<vmem>>, vector<16x128xf32>
    tpu.vector_store %arg4[%c0_5, %c0_6], %5 {strides = array<i32>} : memref<16x128xf32, #tpu.memory_space<vmem>>, vector<16x128xf32>,
    return
  }
  func.func @transform_0(%arg0: i32) -> (i32, i32) {
    %c0_i32 = arith.constant 0 : i32
    %c0_i32_0 = arith.constant 0 : i32
    return %arg0, %c0_i32 : i32, i32
  }
  func.func @transform_1(%arg0: i32) -> (i32, i32) {
    %c0_i32 = arith.constant 0 : i32
    %c0_i32_0 = arith.constant 0 : i32
    %c0_i32_1 = arith.constant 0 : i32
    return %c0_i32, %c0_i32_0 : i32, i32
  }
  func.func @transform_2(%arg0: i32) -> (i32, i32) {
    %c0_i32 = arith.constant 0 : i32
    %c0_i32_0 = arith.constant 0 : i32
    %c0_i32_1 = arith.constant 0 : i32
    return %c0_i32, %c0_i32_0 : i32, i32
  }
  func.func @transform_3(%arg0: i32) -> (i32, i32) {
    %c0_i32 = arith.constant 0 : i32
    %c0_i32_0 = arith.constant 0 : i32
    return %arg0, %c0_i32 : i32, i32
  }
}

module attributes {stable_mosaic.version = 11 : i64} {
  func.func @_matmul_bias_act_kernel(%arg0: i32, %arg1: memref<16x200xbf16, #tpu.memory_space<vmem>>, %arg2: memref<200x384xbf16, #tpu.memory_space<vmem>>, %arg3: memref<1x384xf32, #tpu.memory_space<vmem>>, %arg4: memref<16x384xbf16, #tpu.memory_space<vmem>>) attributes {dimension_semantics = [#tpu.dimension_semantics<parallel>], iteration_bounds = array<i64: 1>, scalar_prefetch = 0 : i64, scratch_operands = 0 : i64, tpu.core_type = #tpu.core_type<tc>, window_params = [{transform_indices = @transform_0, window_bounds = array<i64: 16, 200>}, {pipeline_mode = #tpu.pipeline_mode<synchronous>, transform_indices = @transform_1, window_bounds = array<i64: 200, 384>}, {pipeline_mode = #tpu.pipeline_mode<synchronous>, transform_indices = @transform_2, window_bounds = array<i64: 1, 384>}, {transform_indices = @transform_3, window_bounds = array<i64: 16, 384>}]} {
    %c0 = arith.constant 0 : index
    %c0_0 = arith.constant 0 : index
    %0 = vector.load %arg1[%c0, %c0_0] : memref<16x200xbf16, #tpu.memory_space<vmem>>, vector<16x200xbf16>
    %c0_1 = arith.constant 0 : index
    %c0_2 = arith.constant 0 : index
    %1 = vector.load %arg2[%c0_1, %c0_2] : memref<200x384xbf16, #tpu.memory_space<vmem>>, vector<200x384xbf16>
    %cst = arith.constant dense<0.000000e+00> : vector<16x384xf32>
    %2 = tpu.matmul %0, %1, %cst {dimension_numbers = #tpu.dot_dimension_numbers<[1], [0], [0], [1], [0, 0, 1, 1], [], []>} : vector<16x200xbf16>, vector<200x384xbf16>, vector<16x384xf32> -> vector<16x384xf32>
    %c0_3 = arith.constant 0 : index
    %c0_4 = arith.constant 0 : index
    %3 = vector.load %arg3[%c0_3, %c0_4] : memref<1x384xf32, #tpu.memory_space<vmem>>, vector<1x384xf32>
    %4 = vector.broadcast %3 : vector<1x384xf32> to vector<16x384xf32>
    %5 = arith.addf %2, %4 : vector<16x384xf32>
    %cst_5 = arith.constant 0.000000e+00 : f32
    %6 = vector.broadcast %cst_5 : f32 to vector<16x384xf32>
    %7 = arith.cmpf oge, %5, %6 : vector<16x384xf32>
    %cst_6 = arith.constant 0.00999999977 : f32
    %8 = vector.broadcast %cst_6 : f32 to vector<16x384xf32>
    %9 = arith.mulf %8, %5 : vector<16x384xf32>
    %10 = arith.select %7, %5, %9 : vector<16x384xi1>, vector<16x384xf32>
    %11 = arith.truncf %10 : vector<16x384xf32> to vector<16x384xbf16>
    %c0_7 = arith.constant 0 : index
    %c0_8 = arith.constant 0 : index
    %12 = vector.load %arg4[%c0_7, %c0_8] : memref<16x384xbf16, #tpu.memory_space<vmem>>, vector<16x384xbf16>
    tpu.vector_store %arg4[%c0_7, %c0_8], %11 {strides = array<i32>} : memref<16x384xbf16, #tpu.memory_space<vmem>>, vector<16x384xbf16>,
    return
  }
  func.func @transform_0(%arg0: i32) -> (i32, i32) {
    %c0_i32 = arith.constant 0 : i32
    %c0_i32_0 = arith.constant 0 : i32
    return %arg0, %c0_i32 : i32, i32
  }
  func.func @transform_1(%arg0: i32) -> (i32, i32) {
    %c0_i32 = arith.constant 0 : i32
    %c0_i32_0 = arith.constant 0 : i32
    %c0_i32_1 = arith.constant 0 : i32
    return %c0_i32, %c0_i32_0 : i32, i32
  }
  func.func @transform_2(%arg0: i32) -> (i32, i32) {
    %c0_i32 = arith.constant 0 : i32
    %c0_i32_0 = arith.constant 0 : i32
    %c0_i32_1 = arith.constant 0 : i32
    return %c0_i32, %c0_i32_0 : i32, i32
  }
  func.func @transform_3(%arg0: i32) -> (i32, i32) {
    %c0_i32 = arith.constant 0 : i32
    %c0_i32_0 = arith.constant 0 : i32
    return %arg0, %c0_i32 : i32, i32
  }
}

module attributes {stable_mosaic.version = 11 : i64} {
  func.func @_matmul_bias_act_kernel(%arg0: i32, %arg1: memref<112x288xbf16, #tpu.memory_space<vmem>>, %arg2: memref<288x128xbf16, #tpu.memory_space<vmem>>, %arg3: memref<1x128xf32, #tpu.memory_space<vmem>>, %arg4: memref<112x128xbf16, #tpu.memory_space<vmem>>) attributes {dimension_semantics = [#tpu.dimension_semantics<parallel>], iteration_bounds = array<i64: 2>, scalar_prefetch = 0 : i64, scratch_operands = 0 : i64, tpu.core_type = #tpu.core_type<tc>, window_params = [{transform_indices = @transform_0, window_bounds = array<i64: 112, 288>}, {pipeline_mode = #tpu.pipeline_mode<synchronous>, transform_indices = @transform_1, window_bounds = array<i64: 288, 128>}, {pipeline_mode = #tpu.pipeline_mode<synchronous>, transform_indices = @transform_2, window_bounds = array<i64: 1, 128>}, {transform_indices = @transform_3, window_bounds = array<i64: 112, 128>}]} {
    %c0 = arith.constant 0 : index
    %c0_0 = arith.constant 0 : index
    %0 = vector.load %arg1[%c0, %c0_0] : memref<112x288xbf16, #tpu.memory_space<vmem>>, vector<112x288xbf16>
    %c0_1 = arith.constant 0 : index
    %c0_2 = arith.constant 0 : index
    %1 = vector.load %arg2[%c0_1, %c0_2] : memref<288x128xbf16, #tpu.memory_space<vmem>>, vector<288x128xbf16>
    %cst = arith.constant dense<0.000000e+00> : vector<112x128xf32>
    %2 = tpu.matmul %0, %1, %cst {dimension_numbers = #tpu.dot_dimension_numbers<[1], [0], [0], [1], [0, 0, 1, 1], [], []>} : vector<112x288xbf16>, vector<288x128xbf16>, vector<112x128xf32> -> vector<112x128xf32>
    %c0_3 = arith.constant 0 : index
    %c0_4 = arith.constant 0 : index
    %3 = vector.load %arg3[%c0_3, %c0_4] : memref<1x128xf32, #tpu.memory_space<vmem>>, vector<1x128xf32>
    %4 = vector.broadcast %3 : vector<1x128xf32> to vector<112x128xf32>
    %5 = arith.addf %2, %4 : vector<112x128xf32>
    %cst_5 = arith.constant 0.000000e+00 : f32
    %6 = vector.broadcast %cst_5 : f32 to vector<112x128xf32>
    %7 = arith.cmpf oge, %5, %6 : vector<112x128xf32>
    %cst_6 = arith.constant 0.00999999977 : f32
    %8 = vector.broadcast %cst_6 : f32 to vector<112x128xf32>
    %9 = arith.mulf %8, %5 : vector<112x128xf32>
    %10 = arith.select %7, %5, %9 : vector<112x128xi1>, vector<112x128xf32>
    %11 = arith.truncf %10 : vector<112x128xf32> to vector<112x128xbf16>
    %c0_7 = arith.constant 0 : index
    %c0_8 = arith.constant 0 : index
    %12 = vector.load %arg4[%c0_7, %c0_8] : memref<112x128xbf16, #tpu.memory_space<vmem>>, vector<112x128xbf16>
    tpu.vector_store %arg4[%c0_7, %c0_8], %11 {strides = array<i32>} : memref<112x128xbf16, #tpu.memory_space<vmem>>, vector<112x128xbf16>,
    return
  }
  func.func @transform_0(%arg0: i32) -> (i32, i32) {
    %c0_i32 = arith.constant 0 : i32
    %c0_i32_0 = arith.constant 0 : i32
    return %arg0, %c0_i32 : i32, i32
  }
  func.func @transform_1(%arg0: i32) -> (i32, i32) {
    %c0_i32 = arith.constant 0 : i32
    %c0_i32_0 = arith.constant 0 : i32
    %c0_i32_1 = arith.constant 0 : i32
    return %c0_i32, %c0_i32_0 : i32, i32
  }
  func.func @transform_2(%arg0: i32) -> (i32, i32) {
    %c0_i32 = arith.constant 0 : i32
    %c0_i32_0 = arith.constant 0 : i32
    %c0_i32_1 = arith.constant 0 : i32
    return %c0_i32, %c0_i32_0 : i32, i32
  }
  func.func @transform_3(%arg0: i32) -> (i32, i32) {
    %c0_i32 = arith.constant 0 : i32
    %c0_i32_0 = arith.constant 0 : i32
    return %arg0, %c0_i32 : i32, i32
  }
}

module attributes {stable_mosaic.version = 11 : i64} {
  func.func @_matmul_bias_act_kernel(%arg0: i32, %arg1: memref<464x144xbf16, #tpu.memory_space<vmem>>, %arg2: memref<144x128xbf16, #tpu.memory_space<vmem>>, %arg3: memref<1x128xf32, #tpu.memory_space<vmem>>, %arg4: memref<464x128xbf16, #tpu.memory_space<vmem>>) attributes {dimension_semantics = [#tpu.dimension_semantics<parallel>], iteration_bounds = array<i64: 2>, scalar_prefetch = 0 : i64, scratch_operands = 0 : i64, tpu.core_type = #tpu.core_type<tc>, window_params = [{transform_indices = @transform_0, window_bounds = array<i64: 464, 144>}, {pipeline_mode = #tpu.pipeline_mode<synchronous>, transform_indices = @transform_1, window_bounds = array<i64: 144, 128>}, {pipeline_mode = #tpu.pipeline_mode<synchronous>, transform_indices = @transform_2, window_bounds = array<i64: 1, 128>}, {transform_indices = @transform_3, window_bounds = array<i64: 464, 128>}]} {
    %c0 = arith.constant 0 : index
    %c0_0 = arith.constant 0 : index
    %0 = vector.load %arg1[%c0, %c0_0] : memref<464x144xbf16, #tpu.memory_space<vmem>>, vector<464x144xbf16>
    %c0_1 = arith.constant 0 : index
    %c0_2 = arith.constant 0 : index
    %1 = vector.load %arg2[%c0_1, %c0_2] : memref<144x128xbf16, #tpu.memory_space<vmem>>, vector<144x128xbf16>
    %cst = arith.constant dense<0.000000e+00> : vector<464x128xf32>
    %2 = tpu.matmul %0, %1, %cst {dimension_numbers = #tpu.dot_dimension_numbers<[1], [0], [0], [1], [0, 0, 1, 1], [], []>} : vector<464x144xbf16>, vector<144x128xbf16>, vector<464x128xf32> -> vector<464x128xf32>
    %c0_3 = arith.constant 0 : index
    %c0_4 = arith.constant 0 : index
    %3 = vector.load %arg3[%c0_3, %c0_4] : memref<1x128xf32, #tpu.memory_space<vmem>>, vector<1x128xf32>
    %4 = vector.broadcast %3 : vector<1x128xf32> to vector<464x128xf32>
    %5 = arith.addf %2, %4 : vector<464x128xf32>
    %cst_5 = arith.constant 0.000000e+00 : f32
    %6 = vector.broadcast %cst_5 : f32 to vector<464x128xf32>
    %7 = arith.cmpf oge, %5, %6 : vector<464x128xf32>
    %cst_6 = arith.constant 0.00999999977 : f32
    %8 = vector.broadcast %cst_6 : f32 to vector<464x128xf32>
    %9 = arith.mulf %8, %5 : vector<464x128xf32>
    %10 = arith.select %7, %5, %9 : vector<464x128xi1>, vector<464x128xf32>
    %11 = arith.truncf %10 : vector<464x128xf32> to vector<464x128xbf16>
    %c0_7 = arith.constant 0 : index
    %c0_8 = arith.constant 0 : index
    %12 = vector.load %arg4[%c0_7, %c0_8] : memref<464x128xbf16, #tpu.memory_space<vmem>>, vector<464x128xbf16>
    tpu.vector_store %arg4[%c0_7, %c0_8], %11 {strides = array<i32>} : memref<464x128xbf16, #tpu.memory_space<vmem>>, vector<464x128xbf16>,
    return
  }
  func.func @transform_0(%arg0: i32) -> (i32, i32) {
    %c0_i32 = arith.constant 0 : i32
    %c0_i32_0 = arith.constant 0 : i32
    return %arg0, %c0_i32 : i32, i32
  }
  func.func @transform_1(%arg0: i32) -> (i32, i32) {
    %c0_i32 = arith.constant 0 : i32
    %c0_i32_0 = arith.constant 0 : i32
    %c0_i32_1 = arith.constant 0 : i32
    return %c0_i32, %c0_i32_0 : i32, i32
  }
  func.func @transform_2(%arg0: i32) -> (i32, i32) {
    %c0_i32 = arith.constant 0 : i32
    %c0_i32_0 = arith.constant 0 : i32
    %c0_i32_1 = arith.constant 0 : i32
    return %c0_i32, %c0_i32_0 : i32, i32
  }
  func.func @transform_3(%arg0: i32) -> (i32, i32) {
    %c0_i32 = arith.constant 0 : i32
    %c0_i32_0 = arith.constant 0 : i32
    return %arg0, %c0_i32 : i32, i32
  }
}

module attributes {stable_mosaic.version = 11 : i64} {
  func.func @_matmul_bias_act_kernel(%arg0: i32, %arg1: memref<512x72xbf16, #tpu.memory_space<vmem>>, %arg2: memref<72x128xbf16, #tpu.memory_space<vmem>>, %arg3: memref<1x128xf32, #tpu.memory_space<vmem>>, %arg4: memref<512x128xf32, #tpu.memory_space<vmem>>) attributes {dimension_semantics = [#tpu.dimension_semantics<parallel>], iteration_bounds = array<i64: 8>, scalar_prefetch = 0 : i64, scratch_operands = 0 : i64, tpu.core_type = #tpu.core_type<tc>, window_params = [{transform_indices = @transform_0, window_bounds = array<i64: 512, 72>}, {pipeline_mode = #tpu.pipeline_mode<synchronous>, transform_indices = @transform_1, window_bounds = array<i64: 72, 128>}, {pipeline_mode = #tpu.pipeline_mode<synchronous>, transform_indices = @transform_2, window_bounds = array<i64: 1, 128>}, {transform_indices = @transform_3, window_bounds = array<i64: 512, 128>}]} {
    %c0 = arith.constant 0 : index
    %c0_0 = arith.constant 0 : index
    %0 = vector.load %arg1[%c0, %c0_0] : memref<512x72xbf16, #tpu.memory_space<vmem>>, vector<512x72xbf16>
    %c0_1 = arith.constant 0 : index
    %c0_2 = arith.constant 0 : index
    %1 = vector.load %arg2[%c0_1, %c0_2] : memref<72x128xbf16, #tpu.memory_space<vmem>>, vector<72x128xbf16>
    %cst = arith.constant dense<0.000000e+00> : vector<512x128xf32>
    %2 = tpu.matmul %0, %1, %cst {dimension_numbers = #tpu.dot_dimension_numbers<[1], [0], [0], [1], [0, 0, 1, 1], [], []>} : vector<512x72xbf16>, vector<72x128xbf16>, vector<512x128xf32> -> vector<512x128xf32>
    %c0_3 = arith.constant 0 : index
    %c0_4 = arith.constant 0 : index
    %3 = vector.load %arg3[%c0_3, %c0_4] : memref<1x128xf32, #tpu.memory_space<vmem>>, vector<1x128xf32>
    %4 = vector.broadcast %3 : vector<1x128xf32> to vector<512x128xf32>
    %5 = arith.addf %2, %4 : vector<512x128xf32>
    %6 = arith.negf %5 : vector<512x128xf32>
    %7 = math.exp %6 : vector<512x128xf32>
    %cst_5 = arith.constant 1.000000e+00 : f32
    %8 = vector.broadcast %cst_5 : f32 to vector<512x128xf32>
    %9 = arith.addf %8, %7 : vector<512x128xf32>
    %10 = arith.divf %8, %9 : vector<512x128xf32>
    %c0_6 = arith.constant 0 : index
    %c0_7 = arith.constant 0 : index
    %11 = vector.load %arg4[%c0_6, %c0_7] : memref<512x128xf32, #tpu.memory_space<vmem>>, vector<512x128xf32>
    tpu.vector_store %arg4[%c0_6, %c0_7], %10 {strides = array<i32>} : memref<512x128xf32, #tpu.memory_space<vmem>>, vector<512x128xf32>,
    return
  }
  func.func @transform_0(%arg0: i32) -> (i32, i32) {
    %c0_i32 = arith.constant 0 : i32
    %c0_i32_0 = arith.constant 0 : i32
    return %arg0, %c0_i32 : i32, i32
  }
  func.func @transform_1(%arg0: i32) -> (i32, i32) {
    %c0_i32 = arith.constant 0 : i32
    %c0_i32_0 = arith.constant 0 : i32
    %c0_i32_1 = arith.constant 0 : i32
    return %c0_i32, %c0_i32_0 : i32, i32
  }
  func.func @transform_2(%arg0: i32) -> (i32, i32) {
    %c0_i32 = arith.constant 0 : i32
    %c0_i32_0 = arith.constant 0 : i32
    %c0_i32_1 = arith.constant 0 : i32
    return %c0_i32, %c0_i32_0 : i32, i32
  }
  func.func @transform_3(%arg0: i32) -> (i32, i32) {
    %c0_i32 = arith.constant 0 : i32
    %c0_i32_0 = arith.constant 0 : i32
    return %arg0, %c0_i32 : i32, i32
  }
}

module attributes {stable_mosaic.version = 11 : i64} {
  func.func @_vae_loss_kernel(%arg0: memref<2x784xf32, #tpu.memory_space<vmem>>, %arg1: memref<2x784xf32, #tpu.memory_space<vmem>>, %arg2: memref<2x50xf32, #tpu.memory_space<vmem>>, %arg3: memref<2x50xf32, #tpu.memory_space<vmem>>, %arg4: memref<1x1xf32, #tpu.memory_space<vmem>>) attributes {dimension_semantics = [], scalar_prefetch = 0 : i64, scratch_operands = 0 : i64, tpu.core_type = #tpu.core_type<tc>} {
    %c0 = arith.constant 0 : index
    %c0_0 = arith.constant 0 : index
    %0 = vector.load %arg0[%c0, %c0_0] : memref<2x784xf32, #tpu.memory_space<vmem>>, vector<2x784xf32>
    %c0_1 = arith.constant 0 : index
    %c0_2 = arith.constant 0 : index
    %1 = vector.load %arg1[%c0_1, %c0_2] : memref<2x784xf32, #tpu.memory_space<vmem>>, vector<2x784xf32>
    %2 = math.log %0 : vector<2x784xf32>
    %cst = arith.constant -1.000000e+02 : f32
    %3 = vector.broadcast %cst : f32 to vector<2x784xf32>
    %4 = arith.maximumf %2, %3 : vector<2x784xf32>
    %cst_3 = arith.constant 1.000000e+00 : f32
    %5 = vector.broadcast %cst_3 : f32 to vector<2x784xf32>
    %6 = arith.subf %5, %0 : vector<2x784xf32>
    %7 = math.log %6 : vector<2x784xf32>
    %cst_4 = arith.constant -1.000000e+02 : f32
    %8 = vector.broadcast %cst_4 : f32 to vector<2x784xf32>
    %9 = arith.maximumf %7, %8 : vector<2x784xf32>
    %10 = arith.mulf %1, %4 : vector<2x784xf32>
    %cst_5 = arith.constant 1.000000e+00 : f32
    %11 = vector.broadcast %cst_5 : f32 to vector<2x784xf32>
    %12 = arith.subf %11, %1 : vector<2x784xf32>
    %13 = arith.mulf %12, %9 : vector<2x784xf32>
    %14 = arith.addf %10, %13 : vector<2x784xf32>
    %15 = vector.shape_cast %14 : vector<2x784xf32> to vector<1x2x784xf32>
    %cst_6 = arith.constant dense<0.000000e+00> : vector<1xf32>
    %16 = vector.multi_reduction <add>, %15, %cst_6 [1, 2] : vector<1x2x784xf32> to vector<1xf32>
    %17 = vector.shape_cast %16 : vector<1xf32> to vector<1x1x1xf32>
    %18 = vector.extract %17[0, 0, 0] : f32 from vector<1x1x1xf32>
    %19 = vector.broadcast %18 : f32 to vector<1x1xf32>
    %cst_7 = arith.constant 0.000000e+00 : f32
    %20 = vector.broadcast %cst_7 : f32 to vector<1x1xf32>
    %21 = arith.subf %20, %19 : vector<1x1xf32>
    %c0_8 = arith.constant 0 : index
    %c0_9 = arith.constant 0 : index
    %22 = vector.load %arg2[%c0_8, %c0_9] : memref<2x50xf32, #tpu.memory_space<vmem>>, vector<2x50xf32>
    %c0_10 = arith.constant 0 : index
    %c0_11 = arith.constant 0 : index
    %23 = vector.load %arg3[%c0_10, %c0_11] : memref<2x50xf32, #tpu.memory_space<vmem>>, vector<2x50xf32>
    %cst_12 = arith.constant 1.000000e+00 : f32
    %24 = vector.broadcast %cst_12 : f32 to vector<2x50xf32>
    %25 = arith.addf %24, %23 : vector<2x50xf32>
    %26 = arith.mulf %22, %22 : vector<2x50xf32>
    %27 = arith.subf %25, %26 : vector<2x50xf32>
    %28 = math.exp %23 : vector<2x50xf32>
    %29 = arith.subf %27, %28 : vector<2x50xf32>
    %30 = vector.shape_cast %29 : vector<2x50xf32> to vector<1x2x50xf32>
    %cst_13 = arith.constant dense<0.000000e+00> : vector<1xf32>
    %31 = vector.multi_reduction <add>, %30, %cst_13 [1, 2] : vector<1x2x50xf32> to vector<1xf32>
    %32 = vector.shape_cast %31 : vector<1xf32> to vector<1x1x1xf32>
    %33 = vector.extract %32[0, 0, 0] : f32 from vector<1x1x1xf32>
    %34 = vector.broadcast %33 : f32 to vector<1x1xf32>
    %cst_14 = arith.constant -5.000000e-01 : f32
    %35 = vector.broadcast %cst_14 : f32 to vector<1x1xf32>
    %36 = arith.mulf %35, %34 : vector<1x1xf32>
    %cst_15 = arith.constant 1.000000e-01 : f32
    %37 = vector.broadcast %cst_15 : f32 to vector<1x1xf32>
    %38 = arith.mulf %37, %36 : vector<1x1xf32>
    %39 = arith.addf %21, %38 : vector<1x1xf32>
    %cst_16 = arith.constant 2.000000e+00 : f32
    %40 = vector.broadcast %cst_16 : f32 to vector<1x1xf32>
    %41 = arith.divf %39, %40 : vector<1x1xf32>
    %c0_17 = arith.constant 0 : index
    %c0_18 = arith.constant 0 : index
    %42 = vector.load %arg4[%c0_17, %c0_18] : memref<1x1xf32, #tpu.memory_space<vmem>>, vector<1x1xf32>
    tpu.vector_store %arg4[%c0_17, %c0_18], %41 {strides = array<i32>} : memref<1x1xf32, #tpu.memory_space<vmem>>, vector<1x1xf32>,
    return
  }
}

</mosaic_0001>

<llo_original>
// kernel: net_forward.9
$region0: #{net_forward.9}
  #allocation0 [shape = 'u32[]', space=smem, size = 0x4, offset = 0x4, fixed_abs, tag = 'smem constant byte address 0x4 - core index']
  #allocation1 [shape = 'u32[72,128]{1,0:T(1,128)}', space=vmem, size = 0x9000, scoped, tag = 'internal scratch']
  %s0 = inlined_call_operand.vmem [shape: bf16[416,25], index: 0, kind: input, shape index: {}]
  %s1 = inlined_call_operand.vmem [shape: bf16[25,128], index: 1, kind: input, shape index: {}]
  %s2 = inlined_call_operand.vmem [shape: f32[1,128], index: 2, kind: input, shape index: {}]
  %s3 = inlined_call_operand.vmem [shape: bf16[416,128], index: 3, kind: output, shape index: {}]
  %s4 = sld [smem:[#allocation0]]
  $region45: #{net_forward.9} parent=0
    _
  %s6 = ssub.s32 1, %s4
  %s7 = scalar_select 0, %s6, %s4
  loop: start=0, step=1, limit=4
  $region2: #{net_forward.9} parent=0 // loop_pre_header
    _
  $region3: #{net_forward.9} parent=0 // loop_header
    %s9 = sphi 0, %s13
    %p10 = scmp.ge.s32.totalorder %s9, 4
    %s19 = sphi 0, %s21
    %s22 = sphi 0, %s19
    %s23 = sphi 0, %s22
    %s39 = sphi 0, %s23
    %s43 = sphi 0, %s43
    %s45 = sphi 0, %s43
    %s46 = sphi 0, %s45
    %s60 = sphi 0, %s46
    %s64 = sphi 0, %s64
    %s66 = sphi 0, %s64
    %s67 = sphi 0, %s66
    %s81 = sphi 0, %s67
    %s87 = sphi 0, %s89
    %s90 = sphi 0, %s87
    %s91 = sphi 0, %s90
    %s107 = sphi 0, %s91
  $region4: #{net_forward.9} parent=0 // loop_header_branch
    %12 = sbr.rel (%p10) target = $region8
  $region5: #{net_forward.9} parent=0 // loop_body
    %s14 = ssub.s32 %s9, 1
    %s15 = ssub.s32 %s9, 2
    %s16 = sadd.s32 %s9, 1
    %s17 = ssub.s32 %s9, %s16
    %p18 = scmp.eq.s32.totalorder %s17, 0
    %s20 = sadd.s32 %s19, 1
    %s21 = scalar_select %p18, %s19, %s20
    %p24 = pneg %p18
    %p25 = scmp.eq.s32.totalorder %s9, 1
    %p26 = por %p24, %p25
    %p27 = scmp.ne.s32.totalorder %s19, %s22
    %p28 = scmp.eq.s32.totalorder %s9, 0
    %p29 = por %p27, %p28
    %p30 = scmp.ne.s32.totalorder %s19, %s22
    %p31 = scmp.eq.s32.totalorder %s14, 1
    %p32 = por %p30, %p31
    %p33 = scmp.ne.s32.totalorder %s22, %s23
    %p34 = scmp.eq.s32.totalorder %s14, 0
    %p35 = por %p33, %p34
    %p36 = scmp.ne.s32.totalorder %s22, %s23
    %p37 = scmp.eq.s32.totalorder %s15, 1
    %p38 = por %p36, %p37
    %p40 = scmp.ne.s32.totalorder %s23, %s39
    %p41 = scmp.eq.s32.totalorder %s15, 0
    %p42 = por %p40, %p41
    %s44 = sadd.s32 %s43, 1
    %p47 = scmp.eq.s32.totalorder %s9, 1
    %p48 = scmp.ne.s32.totalorder %s43, %s45
    %p49 = scmp.eq.s32.totalorder %s9, 0
    %p50 = por %p48, %p49
    %p51 = scmp.ne.s32.totalorder %s43, %s45
    %p52 = scmp.eq.s32.totalorder %s14, 1
    %p53 = por %p51, %p52
    %p54 = scmp.ne.s32.totalorder %s45, %s46
    %p55 = scmp.eq.s32.totalorder %s14, 0
    %p56 = por %p54, %p55
    %p57 = scmp.ne.s32.totalorder %s45, %s46
    %p58 = scmp.eq.s32.totalorder %s15, 1
    %p59 = por %p57, %p58
    %p61 = scmp.ne.s32.totalorder %s46, %s60
    %p62 = scmp.eq.s32.totalorder %s15, 0
    %p63 = por %p61, %p62
    %s65 = sadd.s32 %s64, 1
    %p68 = scmp.eq.s32.totalorder %s9, 1
    %p69 = scmp.ne.s32.totalorder %s64, %s66
    %p70 = scmp.eq.s32.totalorder %s9, 0
    %p71 = por %p69, %p70
    %p72 = scmp.ne.s32.totalorder %s64, %s66
    %p73 = scmp.eq.s32.totalorder %s14, 1
    %p74 = por %p72, %p73
    %p75 = scmp.ne.s32.totalorder %s66, %s67
    %p76 = scmp.eq.s32.totalorder %s14, 0
    %p77 = por %p75, %p76
    %p78 = scmp.ne.s32.totalorder %s66, %s67
    %p79 = scmp.eq.s32.totalorder %s15, 1
    %p80 = por %p78, %p79
    %p82 = scmp.ne.s32.totalorder %s67, %s81
    %p83 = scmp.eq.s32.totalorder %s15, 0
    %p84 = por %p82, %p83
    %s85 = ssub.s32 %s9, %s16
    %p86 = scmp.eq.s32.totalorder %s85, 0
    %s88 = sadd.s32 %s87, 1
    %s89 = scalar_select %p86, %s87, %s88
    %p92 = pneg %p86
    %p93 = scmp.eq.s32.totalorder %s9, 1
    %p94 = por %p92, %p93
    %p95 = scmp.ne.s32.totalorder %s87, %s90
    %p96 = scmp.eq.s32.totalorder %s9, 0
    %p97 = por %p95, %p96
    %p98 = scmp.ne.s32.totalorder %s87, %s90
    %p99 = scmp.eq.s32.totalorder %s14, 1
    %p100 = por %p98, %p99
    %p101 = scmp.ne.s32.totalorder %s90, %s91
    %p102 = scmp.eq.s32.totalorder %s14, 0
    %p103 = por %p101, %p102
    %p104 = scmp.ne.s32.totalorder %s90, %s91
    %p105 = scmp.eq.s32.totalorder %s15, 1
    %p106 = por %p104, %p105
    %p108 = scmp.ne.s32.totalorder %s91, %s107
    %p109 = scmp.eq.s32.totalorder %s15, 0
    %p110 = por %p108, %p109
    %p111 = scmp.le.s32.totalorder 1, %s9
    %p112 = scmp.lt.s32.totalorder %s9, 3
    %p113 = pnand %p111, %p112
    %p114 = pneg %p113
    // Predicated region
    $region9: #{net_forward.9} parent=5 // pred_check
      _
    $region10: #{net_forward.9} parent=5 // pred_check_branch
      %116 = sbr.rel (%p113) target = $region12
    $region11: #{net_forward.9} parent=5 // pred_region
      %s117 = ssub.s32 %s9, 1
      // Predicated region
      $region13: #{net_forward.9} parent=11 // pred_check
        %p118 = pneg %p56
      $region14: #{net_forward.9} parent=11 // pred_check_branch
        %120 = sbr.rel (%p118) target = $region16
      $region15: #{net_forward.9} parent=11 // pred_region
        _
      $region16: #{net_forward.9} parent=11 // pred_fallthru
        _
      // Predicated region
      $region17: #{net_forward.9} parent=11 // pred_check
        %p121 = pneg %p77
      $region18: #{net_forward.9} parent=11 // pred_check_branch
        %123 = sbr.rel (%p121) target = $region20
      $region19: #{net_forward.9} parent=11 // pred_region
        _
      $region20: #{net_forward.9} parent=11 // pred_fallthru
        _
    $region12: #{net_forward.9} parent=5 // pred_fallthru
      _
    %p124 = scmp.lt.s32.totalorder %s9, 2
    // Predicated region
    $region21: #{net_forward.9} parent=5 // pred_check
      %p125 = pneg %p124
    $region22: #{net_forward.9} parent=5 // pred_check_branch
      %127 = sbr.rel (%p125) target = $region24
    $region23: #{net_forward.9} parent=5 // pred_region
      // Predicated region
      $region25: #{net_forward.9} parent=23 // pred_check
        %p128 = pneg %p29
      $region26: #{net_forward.9} parent=23 // pred_check_branch
        %130 = sbr.rel (%p128) target = $region28
      $region27: #{net_forward.9} parent=23 // pred_region
        %s131 = smul.u32 26, %s9
        %p132 = scmp.lt.s32.totalorder %s131, 51
        %s133 = scalar_select %p132, %s131, 51
        %s134 = smul.addr %s133, 4
        %s135 = scalar_lea.vmem %s0, %s134
        %s136 = smul.u32 26, %s9
      $region28: #{net_forward.9} parent=23 // pred_fallthru
        _
    $region24: #{net_forward.9} parent=5 // pred_fallthru
      _
    %p137 = scmp.le.s32.totalorder 1, %s9
    %p138 = scmp.lt.s32.totalorder %s9, 3
    %p139 = pnand %p137, %p138
    %p140 = pneg %p139
    // Predicated region
    $region29: #{net_forward.9} parent=5 // pred_check
      _
    $region30: #{net_forward.9} parent=5 // pred_check_branch
      %142 = sbr.rel (%p139) target = $region32
    $region31: #{net_forward.9} parent=5 // pred_region
      %s143 = ssub.s32 %s9, 1
      %s144 = smul.u32 26, %s14
      %p145 = scmp.lt.s32.totalorder %s144, 51
      %s146 = scalar_select %p145, %s144, 51
      %s147 = smul.addr %s146, 4
      %s148 = scalar_lea.vmem %s0, %s147
      %p149 = pneg %p35
      %p150 = pneg %p32
      %p151 = pneg %p56
      %p152 = pneg %p53
      %p153 = pneg %p77
      %p154 = pneg %p74
      %p155 = pneg %p103
      %p156 = pneg %p100
      %s157 = smul.u32 26, %s14
      %p158 = scmp.lt.s32.totalorder %s157, 51
      %s159 = scalar_select %p158, %s157, 51
      %s160 = smul.addr %s159, 4
      %s161 = scalar_lea.vmem %s3, %s160
      %s162 = smul.u32 26, %s14
      %p163 = scmp.lt.s32.totalorder %s162, 51
      %s164 = scalar_select %p163, %s162, 51
      %s165 = smul.addr %s164, 4
      %s166 = scalar_lea.vmem %s0, %s165
      %s167 = smul.u32 26, %s14
      %s168 = smul.u32 26, %s14
      %p169 = scmp.lt.s32.totalorder %s168, 51
      %s170 = scalar_select %p169, %s168, 51
      %s171 = smul.addr %s170, 4
      %s172 = scalar_lea.vmem %s3, %s171
      %s173 = smul.u32 26, %s14
      %v175 = vld [vmem:[%s166] sm:$0xf]
      %v176 = vld [vmem:[%s166 + $0x4] sm:$0xf]
      %v177 = vld [vmem:[%s166 + $0x8] sm:$0xf]
      %v178 = vld [vmem:[%s166 + $0xc] sm:$0xf]
      %v179 = vld [vmem:[%s166 + $0x10] sm:$0xf]
      %v180 = vld [vmem:[%s166 + $0x14] sm:$0xf]
      %v181 = vld [vmem:[%s166 + $0x18] sm:$0xf]
      %v182 = vld [vmem:[%s166 + $0x1c] sm:$0xf]
      %v183 = vld [vmem:[%s166 + $0x20] sm:$0xf]
      %v184 = vld [vmem:[%s166 + $0x24] sm:$0xf]
      %v185 = vld [vmem:[%s166 + $0x28] sm:$0xf]
      %v186 = vld [vmem:[%s166 + $0x2c] sm:$0xf]
      %v187 = vld [vmem:[%s166 + $0x30] sm:$0xf]
      %v188 = vld [vmem:[%s166 + $0x34] sm:$0xf]
      %v189 = vld [vmem:[%s166 + $0x38] sm:$0xf]
      %v190 = vld [vmem:[%s166 + $0x3c] sm:$0xf]
      %v191 = vld [vmem:[%s166 + $0x40] sm:$0xf]
      %v192 = vld [vmem:[%s166 + $0x44] sm:$0xf]
      %v193 = vld [vmem:[%s166 + $0x48] sm:$0xf]
      %v194 = vld [vmem:[%s166 + $0x4c] sm:$0xf]
      %v195 = vld [vmem:[%s166 + $0x50] sm:$0xf]
      %v196 = vld [vmem:[%s166 + $0x54] sm:$0xf]
      %v197 = vld [vmem:[%s166 + $0x58] sm:$0xf]
      %v198 = vld [vmem:[%s166 + $0x5c] sm:$0xf]
      %v199 = vld [vmem:[%s166 + $0x60] sm:$0xf]
      %v200 = vld [vmem:[%s166 + $0x64] sm:$0xf]
      %v201 = vld [vmem:[%s1] sm:$0xf]
      %v202 = vld [vmem:[%s1 + $0x4] sm:$0xf]
      %v203 = vld [vmem:[%s1 + $0x8] sm:$0xf]
      %v204 = vld [vmem:[%s1 + $0xc] sm:$0x1]
      %v205 = vld [vmem:[%s2] sm:$0x1]
      %v207 = vperm.slane %v205, 0
      %v235 = vunpack.c.l.b16 %v175
      %v236 = vunpack.c.l.b16 %v176
      %v237 = vunpack.c.l.b16 %v177
      %v238 = vunpack.c.l.b16 %v178
      %v239 = vunpack.c.l.b16 %v179
      %v240 = vunpack.c.l.b16 %v180
      %v241 = vunpack.c.l.b16 %v181
      %v242 = vunpack.c.l.b16 %v182
      %v243 = vunpack.c.l.b16 %v183
      %v244 = vunpack.c.l.b16 %v184
      %v245 = vunpack.c.l.b16 %v185
      %v246 = vunpack.c.l.b16 %v186
      %v247 = vunpack.c.l.b16 %v187
      %v248 = vunpack.c.l.b16 %v188
      %v249 = vunpack.c.l.b16 %v189
      %v250 = vunpack.c.l.b16 %v190
      %v251 = vunpack.c.l.b16 %v191
      %v252 = vunpack.c.l.b16 %v192
      %v253 = vunpack.c.l.b16 %v193
      %v254 = vunpack.c.l.b16 %v194
      %v255 = vunpack.c.l.b16 %v195
      %v256 = vunpack.c.l.b16 %v196
      %v257 = vunpack.c.l.b16 %v197
      %v258 = vunpack.c.l.b16 %v198
      %v259 = vunpack.c.l.b16 %v199
      %v260 = vunpack.c.l.b16 %v200
      %v261 = vpack.c.b16 %v236, %v235
      %v262 = vpack.c.b16 %v238, %v237
      %v263 = vpack.c.b16 %v240, %v239
      %v264 = vpack.c.b16 %v242, %v241
      %v265 = vpack.c.b16 %v244, %v243
      %v266 = vpack.c.b16 %v246, %v245
      %v267 = vpack.c.b16 %v248, %v247
      %v268 = vpack.c.b16 %v250, %v249
      %v269 = vpack.c.b16 %v252, %v251
      %v270 = vpack.c.b16 %v254, %v253
      %v271 = vpack.c.b16 %v256, %v255
      %v272 = vpack.c.b16 %v258, %v257
      %v273 = vpack.c.b16 %v260, %v259
      %v278 = vunpack.c.l.b16 %v201
      %v279 = vunpack.c.l.b16 %v202
      %v280 = vunpack.c.l.b16 %v203
      %v281 = vunpack.c.l.b16 %v204
      %v282 = vpack.c.b16 %v279, %v278
      %v283 = vpack.c.b16 %v281, %v280
      %vm285 = vcmask 203776
      %v287 = vsel %vm285, %v261, 0
      %v290 = vsel %vm285, %v262, 0
      %v293 = vsel %vm285, %v263, 0
      %v296 = vsel %vm285, %v264, 0
      %v299 = vsel %vm285, %v265, 0
      %v302 = vsel %vm285, %v266, 0
      %v305 = vsel %vm285, %v267, 0
      %v308 = vsel %vm285, %v268, 0
      %v311 = vsel %vm285, %v269, 0
      %v314 = vsel %vm285, %v270, 0
      %v317 = vsel %vm285, %v271, 0
      %v320 = vsel %vm285, %v272, 0
      %v323 = vsel %vm285, %v273, 0
      %vm325 = vcmask 1043456
      %vm326 = vcmask 1044480
      %v327 = vsel %vm325, 4294967295, 65535
      %v328 = vsel %vm326, %v327, 0
      %v330 = vand.u32 %v283, %v328
      %332 = vmatpush.bf16.msra.mxu0 0
      %333 = vmatpush.bf16.msra.mxu0 0
      %334 = vmatpush.bf16.msra.mxu0 0
      %335 = vmatpush.bf16.msra.mxu0 0
      %336 = vmatpush.bf16.msra.mxu0 0
      %337 = vmatpush.bf16.msra.mxu0 0
      %338 = vmatpush.bf16.msra.mxu0 %v330
      %339 = vmatpush.bf16.msra.mxu0 %v282
      %340 = vmatmul.bf16.gmra.mxu0 %v287
      %v341 = vpop.f32.mrf.mxu0
      %v342 = vadd.f32 %v207, %v341
      %v343 = vpop.f32.mrf.mxu0
      %v344 = vadd.f32 %v207, %v343
      %345 = vmatmul.bf16.gmra.mxu0 %v290
      %v346 = vpop.f32.mrf.mxu0
      %v347 = vadd.f32 %v207, %v346
      %v348 = vpop.f32.mrf.mxu0
      %v349 = vadd.f32 %v207, %v348
      %350 = vmatmul.bf16.gmra.mxu0 %v293
      %v351 = vpop.f32.mrf.mxu0
      %v352 = vadd.f32 %v207, %v351
      %v353 = vpop.f32.mrf.mxu0
      %v354 = vadd.f32 %v207, %v353
      %355 = vmatmul.bf16.gmra.mxu0 %v296
      %v356 = vpop.f32.mrf.mxu0
      %v357 = vadd.f32 %v207, %v356
      %v358 = vpop.f32.mrf.mxu0
      %v359 = vadd.f32 %v207, %v358
      %360 = vmatmul.bf16.gmra.mxu0 %v299
      %v361 = vpop.f32.mrf.mxu0
      %v362 = vadd.f32 %v207, %v361
      %v363 = vpop.f32.mrf.mxu0
      %v364 = vadd.f32 %v207, %v363
      %365 = vmatmul.bf16.gmra.mxu0 %v302
      %v366 = vpop.f32.mrf.mxu0
      %v367 = vadd.f32 %v207, %v366
      %v368 = vpop.f32.mrf.mxu0
      %v369 = vadd.f32 %v207, %v368
      %370 = vmatmul.bf16.gmra.mxu0 %v305
      %v371 = vpop.f32.mrf.mxu0
      %v372 = vadd.f32 %v207, %v371
      %v373 = vpop.f32.mrf.mxu0
      %v374 = vadd.f32 %v207, %v373
      %375 = vmatmul.bf16.gmra.mxu0 %v308
      %v376 = vpop.f32.mrf.mxu0
      %v377 = vadd.f32 %v207, %v376
      %v378 = vpop.f32.mrf.mxu0
      %v379 = vadd.f32 %v207, %v378
      %380 = vmatmul.bf16.gmra.mxu0 %v311
      %v381 = vpop.f32.mrf.mxu0
      %v382 = vadd.f32 %v207, %v381
      %v383 = vpop.f32.mrf.mxu0
      %v384 = vadd.f32 %v207, %v383
      %385 = vmatmul.bf16.gmra.mxu0 %v314
      %v386 = vpop.f32.mrf.mxu0
      %v387 = vadd.f32 %v207, %v386
      %v388 = vpop.f32.mrf.mxu0
      %v389 = vadd.f32 %v207, %v388
      %390 = vmatmul.bf16.gmra.mxu0 %v317
      %v391 = vpop.f32.mrf.mxu0
      %v392 = vadd.f32 %v207, %v391
      %v393 = vpop.f32.mrf.mxu0
      %v394 = vadd.f32 %v207, %v393
      %395 = vmatmul.bf16.gmra.mxu0 %v320
      %v396 = vpop.f32.mrf.mxu0
      %v397 = vadd.f32 %v207, %v396
      %v398 = vpop.f32.mrf.mxu0
      %v399 = vadd.f32 %v207, %v398
      %400 = vmatmul.bf16.gmra.mxu0 %v323
      %v401 = vpop.f32.mrf.mxu0
      %v402 = vadd.f32 %v207, %v401
      %v403 = vpop.f32.mrf.mxu0
      %v404 = vadd.f32 %v207, %v403
      %405 = vdwg.mxu0
      %vm406 = vcmp.ge.f32.partialorder %v342, 0.0
      %vm407 = vcmp.ge.f32.partialorder %v344, 0.0
      %vm408 = vcmp.ge.f32.partialorder %v347, 0.0
      %vm409 = vcmp.ge.f32.partialorder %v349, 0.0
      %vm410 = vcmp.ge.f32.partialorder %v352, 0.0
      %vm411 = vcmp.ge.f32.partialorder %v354, 0.0
      %vm412 = vcmp.ge.f32.partialorder %v357, 0.0
      %vm413 = vcmp.ge.f32.partialorder %v359, 0.0
      %vm414 = vcmp.ge.f32.partialorder %v362, 0.0
      %vm415 = vcmp.ge.f32.partialorder %v364, 0.0
      %vm416 = vcmp.ge.f32.partialorder %v367, 0.0
      %vm417 = vcmp.ge.f32.partialorder %v369, 0.0
      %vm418 = vcmp.ge.f32.partialorder %v372, 0.0
      %vm419 = vcmp.ge.f32.partialorder %v374, 0.0
      %vm420 = vcmp.ge.f32.partialorder %v377, 0.0
      %vm421 = vcmp.ge.f32.partialorder %v379, 0.0
      %vm422 = vcmp.ge.f32.partialorder %v382, 0.0
      %vm423 = vcmp.ge.f32.partialorder %v384, 0.0
      %vm424 = vcmp.ge.f32.partialorder %v387, 0.0
      %vm425 = vcmp.ge.f32.partialorder %v389, 0.0
      %vm426 = vcmp.ge.f32.partialorder %v392, 0.0
      %vm427 = vcmp.ge.f32.partialorder %v394, 0.0
      %vm428 = vcmp.ge.f32.partialorder %v397, 0.0
      %vm429 = vcmp.ge.f32.partialorder %v399, 0.0
      %vm430 = vcmp.ge.f32.partialorder %v402, 0.0
      %vm431 = vcmp.ge.f32.partialorder %v404, 0.0
      %v432 = vmul.f32 %v342, 0.01
      %v433 = vmul.f32 %v344, 0.01
      %v434 = vmul.f32 %v347, 0.01
      %v435 = vmul.f32 %v349, 0.01
      %v436 = vmul.f32 %v352, 0.01
      %v437 = vmul.f32 %v354, 0.01
      %v438 = vmul.f32 %v357, 0.01
      %v439 = vmul.f32 %v359, 0.01
      %v440 = vmul.f32 %v362, 0.01
      %v441 = vmul.f32 %v364, 0.01
      %v442 = vmul.f32 %v367, 0.01
      %v443 = vmul.f32 %v369, 0.01
      %v444 = vmul.f32 %v372, 0.01
      %v445 = vmul.f32 %v374, 0.01
      %v446 = vmul.f32 %v377, 0.01
      %v447 = vmul.f32 %v379, 0.01
      %v448 = vmul.f32 %v382, 0.01
      %v449 = vmul.f32 %v384, 0.01
      %v450 = vmul.f32 %v387, 0.01
      %v451 = vmul.f32 %v389, 0.01
      %v452 = vmul.f32 %v392, 0.01
      %v453 = vmul.f32 %v394, 0.01
      %v454 = vmul.f32 %v397, 0.01
      %v455 = vmul.f32 %v399, 0.01
      %v456 = vmul.f32 %v402, 0.01
      %v457 = vmul.f32 %v404, 0.01
      %v458 = vsel %vm406, %v342, %v432
      %v459 = vsel %vm407, %v344, %v433
      %v460 = vsel %vm408, %v347, %v434
      %v461 = vsel %vm409, %v349, %v435
      %v462 = vsel %vm410, %v352, %v436
      %v463 = vsel %vm411, %v354, %v437
      %v464 = vsel %vm412, %v357, %v438
      %v465 = vsel %vm413, %v359, %v439
      %v466 = vsel %vm414, %v362, %v440
      %v467 = vsel %vm415, %v364, %v441
      %v468 = vsel %vm416, %v367, %v442
      %v469 = vsel %vm417, %v369, %v443
      %v470 = vsel %vm418, %v372, %v444
      %v471 = vsel %vm419, %v374, %v445
      %v472 = vsel %vm420, %v377, %v446
      %v473 = vsel %vm421, %v379, %v447
      %v474 = vsel %vm422, %v382, %v448
      %v475 = vsel %vm423, %v384, %v449
      %v476 = vsel %vm424, %v387, %v450
      %v477 = vsel %vm425, %v389, %v451
      %v478 = vsel %vm426, %v392, %v452
      %v479 = vsel %vm427, %v394, %v453
      %v480 = vsel %vm428, %v397, %v454
      %v481 = vsel %vm429, %v399, %v455
      %v482 = vsel %vm430, %v402, %v456
      %v483 = vsel %vm431, %v404, %v457
      %v484 = vpack.c.bf16 %v458, %v458
      %v485 = vpack.c.bf16 %v459, %v459
      %v486 = vpack.c.bf16 %v460, %v460
      %v487 = vpack.c.bf16 %v461, %v461
      %v488 = vpack.c.bf16 %v462, %v462
      %v489 = vpack.c.bf16 %v463, %v463
      %v490 = vpack.c.bf16 %v464, %v464
      %v491 = vpack.c.bf16 %v465, %v465
      %v492 = vpack.c.bf16 %v466, %v466
      %v493 = vpack.c.bf16 %v467, %v467
      %v494 = vpack.c.bf16 %v468, %v468
      %v495 = vpack.c.bf16 %v469, %v469
      %v496 = vpack.c.bf16 %v470, %v470
      %v497 = vpack.c.bf16 %v471, %v471
      %v498 = vpack.c.bf16 %v472, %v472
      %v499 = vpack.c.bf16 %v473, %v473
      %v500 = vpack.c.bf16 %v474, %v474
      %v501 = vpack.c.bf16 %v475, %v475
      %v502 = vpack.c.bf16 %v476, %v476
      %v503 = vpack.c.bf16 %v477, %v477
      %v504 = vpack.c.bf16 %v478, %v478
      %v505 = vpack.c.bf16 %v479, %v479
      %v506 = vpack.c.bf16 %v480, %v480
      %v507 = vpack.c.bf16 %v481, %v481
      %v508 = vpack.c.bf16 %v482, %v482
      %v509 = vpack.c.bf16 %v483, %v483
      %510 = vst [vmem:[%s172] sm:$0xf] %v484
      %511 = vst [vmem:[%s172 + $0x4] sm:$0xf] %v485
      %512 = vst [vmem:[%s172 + $0x8] sm:$0xf] %v486
      %513 = vst [vmem:[%s172 + $0xc] sm:$0xf] %v487
      %514 = vst [vmem:[%s172 + $0x10] sm:$0xf] %v488
      %515 = vst [vmem:[%s172 + $0x14] sm:$0xf] %v489
      %516 = vst [vmem:[%s172 + $0x18] sm:$0xf] %v490
      %517 = vst [vmem:[%s172 + $0x1c] sm:$0xf] %v491
      %518 = vst [vmem:[%s172 + $0x20] sm:$0xf] %v492
      %519 = vst [vmem:[%s172 + $0x24] sm:$0xf] %v493
      %520 = vst [vmem:[%s172 + $0x28] sm:$0xf] %v494
      %521 = vst [vmem:[%s172 + $0x2c] sm:$0xf] %v495
      %522 = vst [vmem:[%s172 + $0x30] sm:$0xf] %v496
      %523 = vst [vmem:[%s172 + $0x34] sm:$0xf] %v497
      %524 = vst [vmem:[%s172 + $0x38] sm:$0xf] %v498
      %525 = vst [vmem:[%s172 + $0x3c] sm:$0xf] %v499
      %526 = vst [vmem:[%s172 + $0x40] sm:$0xf] %v500
      %527 = vst [vmem:[%s172 + $0x44] sm:$0xf] %v501
      %528 = vst [vmem:[%s172 + $0x48] sm:$0xf] %v502
      %529 = vst [vmem:[%s172 + $0x4c] sm:$0xf] %v503
      %530 = vst [vmem:[%s172 + $0x50] sm:$0xf] %v504
      %531 = vst [vmem:[%s172 + $0x54] sm:$0xf] %v505
      %532 = vst [vmem:[%s172 + $0x58] sm:$0xf] %v506
      %533 = vst [vmem:[%s172 + $0x5c] sm:$0xf] %v507
      %534 = vst [vmem:[%s172 + $0x60] sm:$0xf] %v508
      %535 = vst [vmem:[%s172 + $0x64] sm:$0xf] %v509
      %s536 = smul.u32 26, %s14
      %p537 = scmp.lt.s32.totalorder %s536, 51
      %s538 = scalar_select %p537, %s536, 51
      %s539 = smul.addr %s538, 4
      %s540 = scalar_lea.vmem %s3, %s539
      // Predicated region
      $region33: #{net_forward.9} parent=31 // pred_check
        %p541 = pneg %p100
      $region34: #{net_forward.9} parent=31 // pred_check_branch
        %543 = sbr.rel (%p541) target = $region36
      $region35: #{net_forward.9} parent=31 // pred_region
        %s544 = smul.u32 26, %s14
      $region36: #{net_forward.9} parent=31 // pred_fallthru
        _
    $region32: #{net_forward.9} parent=5 // pred_fallthru
      _
    %p545 = scmp.le.s32.totalorder 2, %s9
    // Predicated region
    $region37: #{net_forward.9} parent=5 // pred_check
      %p546 = pneg %p545
    $region38: #{net_forward.9} parent=5 // pred_check_branch
      %548 = sbr.rel (%p546) target = $region40
    $region39: #{net_forward.9} parent=5 // pred_region
      %s549 = ssub.s32 %s9, 2
      // Predicated region
      $region41: #{net_forward.9} parent=39 // pred_check
        %p550 = pneg %p106
      $region42: #{net_forward.9} parent=39 // pred_check_branch
        %552 = sbr.rel (%p550) target = $region44
      $region43: #{net_forward.9} parent=39 // pred_region
        %s553 = smul.u32 26, %s15
        %p554 = scmp.lt.s32.totalorder %s553, 51
        %s555 = scalar_select %p554, %s553, 51
        %s556 = smul.addr %s555, 4
        %s557 = scalar_lea.vmem %s3, %s556
      $region44: #{net_forward.9} parent=39 // pred_fallthru
        _
    $region40: #{net_forward.9} parent=5 // pred_fallthru
      _
  $region6: #{net_forward.9} parent=0 // loop_footer
    %s13 = sadd.s32 1, %s9
  $region7: #{net_forward.9} parent=0 // loop_footer_branch
    %8 = sbr.rel target = $region3
  $region8: #{net_forward.9} parent=0 // loop_exit
    _

// kernel: net_forward.10
$region0: #{net_forward.10}
  #allocation0 [shape = 'u32[]', space=smem, size = 0x4, offset = 0x4, fixed_abs, tag = 'smem constant byte address 0x4 - core index']
  #allocation1 [shape = 'u32[72,128]{1,0:T(1,128)}', space=vmem, size = 0x9000, scoped, tag = 'internal scratch']
  %s0 = inlined_call_operand.vmem [shape: bf16[128,400], index: 0, kind: input, shape index: {}]
  %s1 = inlined_call_operand.vmem [shape: bf16[400,128], index: 1, kind: input, shape index: {}]
  %s2 = inlined_call_operand.vmem [shape: f32[1,128], index: 2, kind: input, shape index: {}]
  %s3 = inlined_call_operand.vmem [shape: bf16[128,128], index: 3, kind: output, shape index: {}]
  %s4 = sld [smem:[#allocation0]]
  $region45: #{net_forward.10} parent=0
    _
  %s6 = ssub.s32 1, %s4
  %s7 = scalar_select 0, %s6, %s4
  loop: start=0, step=1, limit=4
  $region2: #{net_forward.10} parent=0 // loop_pre_header
    _
  $region3: #{net_forward.10} parent=0 // loop_header
    %s9 = sphi 0, %s13
    %p10 = scmp.ge.s32.totalorder %s9, 4
    %s19 = sphi 0, %s21
    %s22 = sphi 0, %s19
    %s23 = sphi 0, %s22
    %s39 = sphi 0, %s23
    %s43 = sphi 0, %s43
    %s45 = sphi 0, %s43
    %s46 = sphi 0, %s45
    %s60 = sphi 0, %s46
    %s64 = sphi 0, %s64
    %s66 = sphi 0, %s64
    %s67 = sphi 0, %s66
    %s81 = sphi 0, %s67
    %s87 = sphi 0, %s89
    %s90 = sphi 0, %s87
    %s91 = sphi 0, %s90
    %s107 = sphi 0, %s91
  $region4: #{net_forward.10} parent=0 // loop_header_branch
    %12 = sbr.rel (%p10) target = $region8
  $region5: #{net_forward.10} parent=0 // loop_body
    %s14 = ssub.s32 %s9, 1
    %s15 = ssub.s32 %s9, 2
    %s16 = sadd.s32 %s9, 1
    %s17 = ssub.s32 %s9, %s16
    %p18 = scmp.eq.s32.totalorder %s17, 0
    %s20 = sadd.s32 %s19, 1
    %s21 = scalar_select %p18, %s19, %s20
    %p24 = pneg %p18
    %p25 = scmp.eq.s32.totalorder %s9, 1
    %p26 = por %p24, %p25
    %p27 = scmp.ne.s32.totalorder %s19, %s22
    %p28 = scmp.eq.s32.totalorder %s9, 0
    %p29 = por %p27, %p28
    %p30 = scmp.ne.s32.totalorder %s19, %s22
    %p31 = scmp.eq.s32.totalorder %s14, 1
    %p32 = por %p30, %p31
    %p33 = scmp.ne.s32.totalorder %s22, %s23
    %p34 = scmp.eq.s32.totalorder %s14, 0
    %p35 = por %p33, %p34
    %p36 = scmp.ne.s32.totalorder %s22, %s23
    %p37 = scmp.eq.s32.totalorder %s15, 1
    %p38 = por %p36, %p37
    %p40 = scmp.ne.s32.totalorder %s23, %s39
    %p41 = scmp.eq.s32.totalorder %s15, 0
    %p42 = por %p40, %p41
    %s44 = sadd.s32 %s43, 1
    %p47 = scmp.eq.s32.totalorder %s9, 1
    %p48 = scmp.ne.s32.totalorder %s43, %s45
    %p49 = scmp.eq.s32.totalorder %s9, 0
    %p50 = por %p48, %p49
    %p51 = scmp.ne.s32.totalorder %s43, %s45
    %p52 = scmp.eq.s32.totalorder %s14, 1
    %p53 = por %p51, %p52
    %p54 = scmp.ne.s32.totalorder %s45, %s46
    %p55 = scmp.eq.s32.totalorder %s14, 0
    %p56 = por %p54, %p55
    %p57 = scmp.ne.s32.totalorder %s45, %s46
    %p58 = scmp.eq.s32.totalorder %s15, 1
    %p59 = por %p57, %p58
    %p61 = scmp.ne.s32.totalorder %s46, %s60
    %p62 = scmp.eq.s32.totalorder %s15, 0
    %p63 = por %p61, %p62
    %s65 = sadd.s32 %s64, 1
    %p68 = scmp.eq.s32.totalorder %s9, 1
    %p69 = scmp.ne.s32.totalorder %s64, %s66
    %p70 = scmp.eq.s32.totalorder %s9, 0
    %p71 = por %p69, %p70
    %p72 = scmp.ne.s32.totalorder %s64, %s66
    %p73 = scmp.eq.s32.totalorder %s14, 1
    %p74 = por %p72, %p73
    %p75 = scmp.ne.s32.totalorder %s66, %s67
    %p76 = scmp.eq.s32.totalorder %s14, 0
    %p77 = por %p75, %p76
    %p78 = scmp.ne.s32.totalorder %s66, %s67
    %p79 = scmp.eq.s32.totalorder %s15, 1
    %p80 = por %p78, %p79
    %p82 = scmp.ne.s32.totalorder %s67, %s81
    %p83 = scmp.eq.s32.totalorder %s15, 0
    %p84 = por %p82, %p83
    %s85 = ssub.s32 %s9, %s16
    %p86 = scmp.eq.s32.totalorder %s85, 0
    %s88 = sadd.s32 %s87, 1
    %s89 = scalar_select %p86, %s87, %s88
    %p92 = pneg %p86
    %p93 = scmp.eq.s32.totalorder %s9, 1
    %p94 = por %p92, %p93
    %p95 = scmp.ne.s32.totalorder %s87, %s90
    %p96 = scmp.eq.s32.totalorder %s9, 0
    %p97 = por %p95, %p96
    %p98 = scmp.ne.s32.totalorder %s87, %s90
    %p99 = scmp.eq.s32.totalorder %s14, 1
    %p100 = por %p98, %p99
    %p101 = scmp.ne.s32.totalorder %s90, %s91
    %p102 = scmp.eq.s32.totalorder %s14, 0
    %p103 = por %p101, %p102
    %p104 = scmp.ne.s32.totalorder %s90, %s91
    %p105 = scmp.eq.s32.totalorder %s15, 1
    %p106 = por %p104, %p105
    %p108 = scmp.ne.s32.totalorder %s91, %s107
    %p109 = scmp.eq.s32.totalorder %s15, 0
    %p110 = por %p108, %p109
    %p111 = scmp.le.s32.totalorder 1, %s9
    %p112 = scmp.lt.s32.totalorder %s9, 3
    %p113 = pnand %p111, %p112
    %p114 = pneg %p113
    // Predicated region
    $region9: #{net_forward.10} parent=5 // pred_check
      _
    $region10: #{net_forward.10} parent=5 // pred_check_branch
      %116 = sbr.rel (%p113) target = $region12
    $region11: #{net_forward.10} parent=5 // pred_region
      %s117 = ssub.s32 %s9, 1
      // Predicated region
      $region13: #{net_forward.10} parent=11 // pred_check
        %p118 = pneg %p56
      $region14: #{net_forward.10} parent=11 // pred_check_branch
        %120 = sbr.rel (%p118) target = $region16
      $region15: #{net_forward.10} parent=11 // pred_region
        _
      $region16: #{net_forward.10} parent=11 // pred_fallthru
        _
      // Predicated region
      $region17: #{net_forward.10} parent=11 // pred_check
        %p121 = pneg %p77
      $region18: #{net_forward.10} parent=11 // pred_check_branch
        %123 = sbr.rel (%p121) target = $region20
      $region19: #{net_forward.10} parent=11 // pred_region
        _
      $region20: #{net_forward.10} parent=11 // pred_fallthru
        _
    $region12: #{net_forward.10} parent=5 // pred_fallthru
      _
    %p124 = scmp.lt.s32.totalorder %s9, 2
    // Predicated region
    $region21: #{net_forward.10} parent=5 // pred_check
      %p125 = pneg %p124
    $region22: #{net_forward.10} parent=5 // pred_check_branch
      %127 = sbr.rel (%p125) target = $region24
    $region23: #{net_forward.10} parent=5 // pred_region
      // Predicated region
      $region25: #{net_forward.10} parent=23 // pred_check
        %p128 = pneg %p29
      $region26: #{net_forward.10} parent=23 // pred_check_branch
        %130 = sbr.rel (%p128) target = $region28
      $region27: #{net_forward.10} parent=23 // pred_region
        %s131 = smul.u32 8, %s9
        %p132 = scmp.lt.s32.totalorder %s131, 15
        %s133 = scalar_select %p132, %s131, 15
        %s134 = smul.addr %s133, 4
        %s135 = smul.addr %s134, 4
        %s136 = scalar_lea.vmem %s0, %s135
        %s137 = smul.u32 8, %s9
      $region28: #{net_forward.10} parent=23 // pred_fallthru
        _
    $region24: #{net_forward.10} parent=5 // pred_fallthru
      _
    %p138 = scmp.le.s32.totalorder 1, %s9
    %p139 = scmp.lt.s32.totalorder %s9, 3
    %p140 = pnand %p138, %p139
    %p141 = pneg %p140
    // Predicated region
    $region29: #{net_forward.10} parent=5 // pred_check
      _
    $region30: #{net_forward.10} parent=5 // pred_check_branch
      %143 = sbr.rel (%p140) target = $region32
    $region31: #{net_forward.10} parent=5 // pred_region
      %s144 = ssub.s32 %s9, 1
      %s145 = smul.u32 8, %s14
      %p146 = scmp.lt.s32.totalorder %s145, 15
      %s147 = scalar_select %p146, %s145, 15
      %s148 = smul.addr %s147, 4
      %s149 = smul.addr %s148, 4
      %s150 = scalar_lea.vmem %s0, %s149
      %p151 = pneg %p35
      %p152 = pneg %p32
      %p153 = pneg %p56
      %p154 = pneg %p53
      %p155 = pneg %p77
      %p156 = pneg %p74
      %p157 = pneg %p103
      %p158 = pneg %p100
      %s159 = smul.u32 8, %s14
      %p160 = scmp.lt.s32.totalorder %s159, 15
      %s161 = scalar_select %p160, %s159, 15
      %s162 = smul.addr %s161, 4
      %s163 = scalar_lea.vmem %s3, %s162
      %s164 = smul.u32 8, %s14
      %p165 = scmp.lt.s32.totalorder %s164, 15
      %s166 = scalar_select %p165, %s164, 15
      %s167 = smul.addr %s166, 4
      %s168 = smul.addr %s167, 4
      %s169 = scalar_lea.vmem %s0, %s168
      %s170 = smul.u32 8, %s14
      %s171 = smul.u32 8, %s14
      %p172 = scmp.lt.s32.totalorder %s171, 15
      %s173 = scalar_select %p172, %s171, 15
      %s174 = smul.addr %s173, 4
      %s175 = scalar_lea.vmem %s3, %s174
      %s176 = smul.u32 8, %s14
      %v178 = vld [vmem:[%s169] sm:$0xff]
      %v179 = vld [vmem:[%s169 + $0x8] sm:$0xff]
      %v180 = vld [vmem:[%s169 + $0x10] sm:$0xff]
      %v181 = vld [vmem:[%s169 + $0x18] sm:$0xff]
      %v182 = vld [vmem:[%s169 + $0x20] sm:$0xff]
      %v183 = vld [vmem:[%s169 + $0x28] sm:$0xff]
      %v184 = vld [vmem:[%s169 + $0x30] sm:$0xff]
      %v185 = vld [vmem:[%s169 + $0x38] sm:$0xff]
      %v186 = vld [vmem:[%s169 + $0x40] sm:$0xff]
      %v187 = vld [vmem:[%s169 + $0x48] sm:$0xff]
      %v188 = vld [vmem:[%s169 + $0x50] sm:$0xff]
      %v189 = vld [vmem:[%s169 + $0x58] sm:$0xff]
      %v190 = vld [vmem:[%s169 + $0x60] sm:$0xff]
      %v191 = vld [vmem:[%s169 + $0x68] sm:$0xff]
      %v192 = vld [vmem:[%s169 + $0x70] sm:$0xff]
      %v193 = vld [vmem:[%s169 + $0x78] sm:$0xff]
      %v194 = vld [vmem:[%s1] sm:$0xf]
      %v195 = vld [vmem:[%s1 + $0x4] sm:$0xf]
      %v196 = vld [vmem:[%s1 + $0x8] sm:$0xf]
      %v197 = vld [vmem:[%s1 + $0xc] sm:$0xf]
      %v198 = vld [vmem:[%s1 + $0x10] sm:$0xf]
      %v199 = vld [vmem:[%s1 + $0x14] sm:$0xf]
      %v200 = vld [vmem:[%s1 + $0x18] sm:$0xf]
      %v201 = vld [vmem:[%s1 + $0x1c] sm:$0xf]
      %v202 = vld [vmem:[%s1 + $0x20] sm:$0xf]
      %v203 = vld [vmem:[%s1 + $0x24] sm:$0xf]
      %v204 = vld [vmem:[%s1 + $0x28] sm:$0xf]
      %v205 = vld [vmem:[%s1 + $0x2c] sm:$0xf]
      %v206 = vld [vmem:[%s1 + $0x30] sm:$0xf]
      %v207 = vld [vmem:[%s1 + $0x34] sm:$0xf]
      %v208 = vld [vmem:[%s1 + $0x38] sm:$0xf]
      %v209 = vld [vmem:[%s1 + $0x3c] sm:$0xf]
      %v210 = vld [vmem:[%s1 + $0x40] sm:$0xf]
      %v211 = vld [vmem:[%s1 + $0x44] sm:$0xf]
      %v212 = vld [vmem:[%s1 + $0x48] sm:$0xf]
      %v213 = vld [vmem:[%s1 + $0x4c] sm:$0xf]
      %v214 = vld [vmem:[%s1 + $0x50] sm:$0xf]
      %v215 = vld [vmem:[%s1 + $0x54] sm:$0xf]
      %v216 = vld [vmem:[%s1 + $0x58] sm:$0xf]
      %v217 = vld [vmem:[%s1 + $0x5c] sm:$0xf]
      %v218 = vld [vmem:[%s1 + $0x60] sm:$0xf]
      %v219 = vld [vmem:[%s1 + $0x64] sm:$0xf]
      %v220 = vld [vmem:[%s1 + $0x68] sm:$0xf]
      %v221 = vld [vmem:[%s1 + $0x6c] sm:$0xf]
      %v222 = vld [vmem:[%s1 + $0x70] sm:$0xf]
      %v223 = vld [vmem:[%s1 + $0x74] sm:$0xf]
      %v224 = vld [vmem:[%s1 + $0x78] sm:$0xf]
      %v225 = vld [vmem:[%s1 + $0x7c] sm:$0xf]
      %v226 = vld [vmem:[%s1 + $0x80] sm:$0xf]
      %v227 = vld [vmem:[%s1 + $0x84] sm:$0xf]
      %v228 = vld [vmem:[%s1 + $0x88] sm:$0xf]
      %v229 = vld [vmem:[%s1 + $0x8c] sm:$0xf]
      %v230 = vld [vmem:[%s1 + $0x90] sm:$0xf]
      %v231 = vld [vmem:[%s1 + $0x94] sm:$0xf]
      %v232 = vld [vmem:[%s1 + $0x98] sm:$0xf]
      %v233 = vld [vmem:[%s1 + $0x9c] sm:$0xf]
      %v234 = vld [vmem:[%s1 + $0xa0] sm:$0xf]
      %v235 = vld [vmem:[%s1 + $0xa4] sm:$0xf]
      %v236 = vld [vmem:[%s1 + $0xa8] sm:$0xf]
      %v237 = vld [vmem:[%s1 + $0xac] sm:$0xf]
      %v238 = vld [vmem:[%s1 + $0xb0] sm:$0xf]
      %v239 = vld [vmem:[%s1 + $0xb4] sm:$0xf]
      %v240 = vld [vmem:[%s1 + $0xb8] sm:$0xf]
      %v241 = vld [vmem:[%s1 + $0xbc] sm:$0xf]
      %v242 = vld [vmem:[%s1 + $0xc0] sm:$0xf]
      %v243 = vld [vmem:[%s1 + $0xc4] sm:$0xf]
      %v244 = vld [vmem:[%s2] sm:$0x1]
      %v246 = vperm.slane %v244, 0
      %v264 = vunpack.c.l.b16 %v178
      %v265 = vunpack.c.h.b16 %v178
      %v266 = vunpack.c.l.b16 %v179
      %v267 = vunpack.c.h.b16 %v179
      %v268 = vunpack.c.l.b16 %v180
      %v269 = vunpack.c.h.b16 %v180
      %v270 = vunpack.c.l.b16 %v181
      %v271 = vunpack.c.h.b16 %v181
      %v272 = vunpack.c.l.b16 %v182
      %v273 = vunpack.c.h.b16 %v182
      %v274 = vunpack.c.l.b16 %v183
      %v275 = vunpack.c.h.b16 %v183
      %v276 = vunpack.c.l.b16 %v184
      %v277 = vunpack.c.h.b16 %v184
      %v278 = vunpack.c.l.b16 %v185
      %v279 = vunpack.c.h.b16 %v185
      %v280 = vunpack.c.l.b16 %v186
      %v281 = vunpack.c.h.b16 %v186
      %v282 = vunpack.c.l.b16 %v187
      %v283 = vunpack.c.h.b16 %v187
      %v284 = vunpack.c.l.b16 %v188
      %v285 = vunpack.c.h.b16 %v188
      %v286 = vunpack.c.l.b16 %v189
      %v287 = vunpack.c.h.b16 %v189
      %v288 = vunpack.c.l.b16 %v190
      %v289 = vunpack.c.h.b16 %v190
      %v290 = vunpack.c.l.b16 %v191
      %v291 = vunpack.c.h.b16 %v191
      %v292 = vunpack.c.l.b16 %v192
      %v293 = vunpack.c.h.b16 %v192
      %v294 = vunpack.c.l.b16 %v193
      %v295 = vunpack.c.h.b16 %v193
      %v296 = vpack.c.b16 %v268, %v264
      %v297 = vpack.c.b16 %v269, %v265
      %v298 = vpack.c.b16 %v270, %v266
      %v299 = vpack.c.b16 %v271, %v267
      %v300 = vpack.c.b16 %v276, %v272
      %v301 = vpack.c.b16 %v277, %v273
      %v302 = vpack.c.b16 %v278, %v274
      %v303 = vpack.c.b16 %v279, %v275
      %v304 = vpack.c.b16 %v284, %v280
      %v305 = vpack.c.b16 %v285, %v281
      %v306 = vpack.c.b16 %v286, %v282
      %v307 = vpack.c.b16 %v287, %v283
      %v308 = vpack.c.b16 %v292, %v288
      %v309 = vpack.c.b16 %v293, %v289
      %v310 = vpack.c.b16 %v294, %v290
      %v311 = vpack.c.b16 %v295, %v291
      %v374 = vunpack.c.l.b16 %v194
      %v375 = vunpack.c.l.b16 %v195
      %v376 = vunpack.c.l.b16 %v196
      %v377 = vunpack.c.l.b16 %v197
      %v378 = vunpack.c.l.b16 %v198
      %v379 = vunpack.c.l.b16 %v199
      %v380 = vunpack.c.l.b16 %v200
      %v381 = vunpack.c.l.b16 %v201
      %v382 = vunpack.c.l.b16 %v202
      %v383 = vunpack.c.l.b16 %v203
      %v384 = vunpack.c.l.b16 %v204
      %v385 = vunpack.c.l.b16 %v205
      %v386 = vunpack.c.l.b16 %v206
      %v387 = vunpack.c.l.b16 %v207
      %v388 = vunpack.c.l.b16 %v208
      %v389 = vunpack.c.l.b16 %v209
      %v390 = vunpack.c.l.b16 %v210
      %v391 = vunpack.c.l.b16 %v211
      %v392 = vunpack.c.l.b16 %v212
      %v393 = vunpack.c.l.b16 %v213
      %v394 = vunpack.c.l.b16 %v214
      %v395 = vunpack.c.l.b16 %v215
      %v396 = vunpack.c.l.b16 %v216
      %v397 = vunpack.c.l.b16 %v217
      %v398 = vunpack.c.l.b16 %v218
      %v399 = vunpack.c.l.b16 %v219
      %v400 = vunpack.c.l.b16 %v220
      %v401 = vunpack.c.l.b16 %v221
      %v402 = vunpack.c.l.b16 %v222
      %v403 = vunpack.c.l.b16 %v223
      %v404 = vunpack.c.l.b16 %v224
      %v405 = vunpack.c.l.b16 %v225
      %v406 = vunpack.c.l.b16 %v226
      %v407 = vunpack.c.l.b16 %v227
      %v408 = vunpack.c.l.b16 %v228
      %v409 = vunpack.c.l.b16 %v229
      %v410 = vunpack.c.l.b16 %v230
      %v411 = vunpack.c.l.b16 %v231
      %v412 = vunpack.c.l.b16 %v232
      %v413 = vunpack.c.l.b16 %v233
      %v414 = vunpack.c.l.b16 %v234
      %v415 = vunpack.c.l.b16 %v235
      %v416 = vunpack.c.l.b16 %v236
      %v417 = vunpack.c.l.b16 %v237
      %v418 = vunpack.c.l.b16 %v238
      %v419 = vunpack.c.l.b16 %v239
      %v420 = vunpack.c.l.b16 %v240
      %v421 = vunpack.c.l.b16 %v241
      %v422 = vunpack.c.l.b16 %v242
      %v423 = vunpack.c.l.b16 %v243
      %v424 = vpack.c.b16 %v375, %v374
      %v425 = vpack.c.b16 %v377, %v376
      %v426 = vpack.c.b16 %v379, %v378
      %v427 = vpack.c.b16 %v381, %v380
      %v428 = vpack.c.b16 %v383, %v382
      %v429 = vpack.c.b16 %v385, %v384
      %v430 = vpack.c.b16 %v387, %v386
      %v431 = vpack.c.b16 %v389, %v388
      %v432 = vpack.c.b16 %v391, %v390
      %v433 = vpack.c.b16 %v393, %v392
      %v434 = vpack.c.b16 %v395, %v394
      %v435 = vpack.c.b16 %v397, %v396
      %v436 = vpack.c.b16 %v399, %v398
      %v437 = vpack.c.b16 %v401, %v400
      %v438 = vpack.c.b16 %v403, %v402
      %v439 = vpack.c.b16 %v405, %v404
      %v440 = vpack.c.b16 %v407, %v406
      %v441 = vpack.c.b16 %v409, %v408
      %v442 = vpack.c.b16 %v411, %v410
      %v443 = vpack.c.b16 %v413, %v412
      %v444 = vpack.c.b16 %v415, %v414
      %v445 = vpack.c.b16 %v417, %v416
      %v446 = vpack.c.b16 %v419, %v418
      %v447 = vpack.c.b16 %v421, %v420
      %v448 = vpack.c.b16 %v423, %v422
      %vm474 = vcmask 130048
      %v476 = vsel %vm474, %v299, 0
      %v479 = vsel %vm474, %v303, 0
      %v482 = vsel %vm474, %v307, 0
      %v485 = vsel %vm474, %v311, 0
      %487 = vmatpush.bf16.msra.mxu0 %v431
      %488 = vmatpush.bf16.msra.mxu0 %v430
      %489 = vmatpush.bf16.msra.mxu0 %v429
      %490 = vmatpush.bf16.msra.mxu0 %v428
      %491 = vmatpush.bf16.msra.mxu0 %v427
      %492 = vmatpush.bf16.msra.mxu0 %v426
      %493 = vmatpush.bf16.msra.mxu0 %v425
      %494 = vmatpush.bf16.msra.mxu0 %v424
      %495 = vmatmul.bf16.gmra.mxu0 %v296
      %v496 = vpop.f32.mrf.mxu0
      %v497 = vadd.f32 %v246, %v496
      %v498 = vpop.f32.mrf.mxu0
      %v499 = vadd.f32 %v246, %v498
      %500 = vmatmul.bf16.gmra.mxu0 %v300
      %v501 = vpop.f32.mrf.mxu0
      %v502 = vadd.f32 %v246, %v501
      %v503 = vpop.f32.mrf.mxu0
      %v504 = vadd.f32 %v246, %v503
      %505 = vmatmul.bf16.gmra.mxu0 %v304
      %v506 = vpop.f32.mrf.mxu0
      %v507 = vadd.f32 %v246, %v506
      %v508 = vpop.f32.mrf.mxu0
      %v509 = vadd.f32 %v246, %v508
      %510 = vmatmul.bf16.gmra.mxu0 %v308
      %v511 = vpop.f32.mrf.mxu0
      %v512 = vadd.f32 %v246, %v511
      %v513 = vpop.f32.mrf.mxu0
      %v514 = vadd.f32 %v246, %v513
      %515 = vdwg.mxu0
      %516 = vmatpush.bf16.msra.mxu0 %v439
      %517 = vmatpush.bf16.msra.mxu0 %v438
      %518 = vmatpush.bf16.msra.mxu0 %v437
      %519 = vmatpush.bf16.msra.mxu0 %v436
      %520 = vmatpush.bf16.msra.mxu0 %v435
      %521 = vmatpush.bf16.msra.mxu0 %v434
      %522 = vmatpush.bf16.msra.mxu0 %v433
      %523 = vmatpush.bf16.msra.mxu0 %v432
      %524 = vmatmul.bf16.gmra.mxu0 %v297
      %v525 = vpop.f32.mrf.mxu0
      %v526 = vadd.f32 %v497, %v525
      %v527 = vpop.f32.mrf.mxu0
      %v528 = vadd.f32 %v499, %v527
      %529 = vmatmul.bf16.gmra.mxu0 %v301
      %v530 = vpop.f32.mrf.mxu0
      %v531 = vadd.f32 %v502, %v530
      %v532 = vpop.f32.mrf.mxu0
      %v533 = vadd.f32 %v504, %v532
      %534 = vmatmul.bf16.gmra.mxu0 %v305
      %v535 = vpop.f32.mrf.mxu0
      %v536 = vadd.f32 %v507, %v535
      %v537 = vpop.f32.mrf.mxu0
      %v538 = vadd.f32 %v509, %v537
      %539 = vmatmul.bf16.gmra.mxu0 %v309
      %v540 = vpop.f32.mrf.mxu0
      %v541 = vadd.f32 %v512, %v540
      %v542 = vpop.f32.mrf.mxu0
      %v543 = vadd.f32 %v514, %v542
      %544 = vdwg.mxu0
      %545 = vmatpush.bf16.msra.mxu0 %v447
      %546 = vmatpush.bf16.msra.mxu0 %v446
      %547 = vmatpush.bf16.msra.mxu0 %v445
      %548 = vmatpush.bf16.msra.mxu0 %v444
      %549 = vmatpush.bf16.msra.mxu0 %v443
      %550 = vmatpush.bf16.msra.mxu0 %v442
      %551 = vmatpush.bf16.msra.mxu0 %v441
      %552 = vmatpush.bf16.msra.mxu0 %v440
      %553 = vmatmul.bf16.gmra.mxu0 %v298
      %v554 = vpop.f32.mrf.mxu0
      %v555 = vadd.f32 %v526, %v554
      %v556 = vpop.f32.mrf.mxu0
      %v557 = vadd.f32 %v528, %v556
      %558 = vmatmul.bf16.gmra.mxu0 %v302
      %v559 = vpop.f32.mrf.mxu0
      %v560 = vadd.f32 %v531, %v559
      %v561 = vpop.f32.mrf.mxu0
      %v562 = vadd.f32 %v533, %v561
      %563 = vmatmul.bf16.gmra.mxu0 %v306
      %v564 = vpop.f32.mrf.mxu0
      %v565 = vadd.f32 %v536, %v564
      %v566 = vpop.f32.mrf.mxu0
      %v567 = vadd.f32 %v538, %v566
      %568 = vmatmul.bf16.gmra.mxu0 %v310
      %v569 = vpop.f32.mrf.mxu0
      %v570 = vadd.f32 %v541, %v569
      %v571 = vpop.f32.mrf.mxu0
      %v572 = vadd.f32 %v543, %v571
      %573 = vdwg.mxu0
      %574 = vmatpush.bf16.msra.mxu0 0
      %575 = vmatpush.bf16.msra.mxu0 0
      %576 = vmatpush.bf16.msra.mxu0 0
      %577 = vmatpush.bf16.msra.mxu0 0
      %578 = vmatpush.bf16.msra.mxu0 0
      %579 = vmatpush.bf16.msra.mxu0 0
      %580 = vmatpush.bf16.msra.mxu0 0
      %581 = vmatpush.bf16.msra.mxu0 %v448
      %582 = vmatmul.bf16.gmra.mxu0 %v476
      %v583 = vpop.f32.mrf.mxu0
      %v584 = vadd.f32 %v555, %v583
      %v585 = vpop.f32.mrf.mxu0
      %v586 = vadd.f32 %v557, %v585
      %587 = vmatmul.bf16.gmra.mxu0 %v479
      %v588 = vpop.f32.mrf.mxu0
      %v589 = vadd.f32 %v560, %v588
      %v590 = vpop.f32.mrf.mxu0
      %v591 = vadd.f32 %v562, %v590
      %592 = vmatmul.bf16.gmra.mxu0 %v482
      %v593 = vpop.f32.mrf.mxu0
      %v594 = vadd.f32 %v565, %v593
      %v595 = vpop.f32.mrf.mxu0
      %v596 = vadd.f32 %v567, %v595
      %597 = vmatmul.bf16.gmra.mxu0 %v485
      %v598 = vpop.f32.mrf.mxu0
      %v599 = vadd.f32 %v570, %v598
      %v600 = vpop.f32.mrf.mxu0
      %v601 = vadd.f32 %v572, %v600
      %602 = vdwg.mxu0
      %vm603 = vcmp.ge.f32.partialorder %v584, 0.0
      %vm604 = vcmp.ge.f32.partialorder %v586, 0.0
      %vm605 = vcmp.ge.f32.partialorder %v589, 0.0
      %vm606 = vcmp.ge.f32.partialorder %v591, 0.0
      %vm607 = vcmp.ge.f32.partialorder %v594, 0.0
      %vm608 = vcmp.ge.f32.partialorder %v596, 0.0
      %vm609 = vcmp.ge.f32.partialorder %v599, 0.0
      %vm610 = vcmp.ge.f32.partialorder %v601, 0.0
      %v611 = vmul.f32 %v584, 0.01
      %v612 = vmul.f32 %v586, 0.01
      %v613 = vmul.f32 %v589, 0.01
      %v614 = vmul.f32 %v591, 0.01
      %v615 = vmul.f32 %v594, 0.01
      %v616 = vmul.f32 %v596, 0.01
      %v617 = vmul.f32 %v599, 0.01
      %v618 = vmul.f32 %v601, 0.01
      %v619 = vsel %vm603, %v584, %v611
      %v620 = vsel %vm604, %v586, %v612
      %v621 = vsel %vm605, %v589, %v613
      %v622 = vsel %vm606, %v591, %v614
      %v623 = vsel %vm607, %v594, %v615
      %v624 = vsel %vm608, %v596, %v616
      %v625 = vsel %vm609, %v599, %v617
      %v626 = vsel %vm610, %v601, %v618
      %v627 = vpack.c.bf16 %v619, %v619
      %v628 = vpack.c.bf16 %v620, %v620
      %v629 = vpack.c.bf16 %v621, %v621
      %v630 = vpack.c.bf16 %v622, %v622
      %v631 = vpack.c.bf16 %v623, %v623
      %v632 = vpack.c.bf16 %v624, %v624
      %v633 = vpack.c.bf16 %v625, %v625
      %v634 = vpack.c.bf16 %v626, %v626
      %635 = vst [vmem:[%s175] sm:$0xf] %v627
      %636 = vst [vmem:[%s175 + $0x4] sm:$0xf] %v628
      %637 = vst [vmem:[%s175 + $0x8] sm:$0xf] %v629
      %638 = vst [vmem:[%s175 + $0xc] sm:$0xf] %v630
      %639 = vst [vmem:[%s175 + $0x10] sm:$0xf] %v631
      %640 = vst [vmem:[%s175 + $0x14] sm:$0xf] %v632
      %641 = vst [vmem:[%s175 + $0x18] sm:$0xf] %v633
      %642 = vst [vmem:[%s175 + $0x1c] sm:$0xf] %v634
      %s643 = smul.u32 8, %s14
      %p644 = scmp.lt.s32.totalorder %s643, 15
      %s645 = scalar_select %p644, %s643, 15
      %s646 = smul.addr %s645, 4
      %s647 = scalar_lea.vmem %s3, %s646
      // Predicated region
      $region33: #{net_forward.10} parent=31 // pred_check
        %p648 = pneg %p100
      $region34: #{net_forward.10} parent=31 // pred_check_branch
        %650 = sbr.rel (%p648) target = $region36
      $region35: #{net_forward.10} parent=31 // pred_region
        %s651 = smul.u32 8, %s14
      $region36: #{net_forward.10} parent=31 // pred_fallthru
        _
    $region32: #{net_forward.10} parent=5 // pred_fallthru
      _
    %p652 = scmp.le.s32.totalorder 2, %s9
    // Predicated region
    $region37: #{net_forward.10} parent=5 // pred_check
      %p653 = pneg %p652
    $region38: #{net_forward.10} parent=5 // pred_check_branch
      %655 = sbr.rel (%p653) target = $region40
    $region39: #{net_forward.10} parent=5 // pred_region
      %s656 = ssub.s32 %s9, 2
      // Predicated region
      $region41: #{net_forward.10} parent=39 // pred_check
        %p657 = pneg %p106
      $region42: #{net_forward.10} parent=39 // pred_check_branch
        %659 = sbr.rel (%p657) target = $region44
      $region43: #{net_forward.10} parent=39 // pred_region
        %s660 = smul.u32 8, %s15
        %p661 = scmp.lt.s32.totalorder %s660, 15
        %s662 = scalar_select %p661, %s660, 15
        %s663 = smul.addr %s662, 4
        %s664 = scalar_lea.vmem %s3, %s663
      $region44: #{net_forward.10} parent=39 // pred_fallthru
        _
    $region40: #{net_forward.10} parent=5 // pred_fallthru
      _
  $region6: #{net_forward.10} parent=0 // loop_footer
    %s13 = sadd.s32 1, %s9
  $region7: #{net_forward.10} parent=0 // loop_footer_branch
    %8 = sbr.rel target = $region3
  $region8: #{net_forward.10} parent=0 // loop_exit
    _

// kernel: net_forward.11
$region0: #{net_forward.11}
  #allocation0 [shape = 'u32[]', space=smem, size = 0x4, offset = 0x4, fixed_abs, tag = 'smem constant byte address 0x4 - core index']
  #allocation1 [shape = 'u32[72,128]{1,0:T(1,128)}', space=vmem, size = 0x9000, scoped, tag = 'internal scratch']
  %s0 = inlined_call_operand.vmem [shape: bf16[32,800], index: 0, kind: input, shape index: {}]
  %s1 = inlined_call_operand.vmem [shape: bf16[800,128], index: 1, kind: input, shape index: {}]
  %s2 = inlined_call_operand.vmem [shape: f32[1,128], index: 2, kind: input, shape index: {}]
  %s3 = inlined_call_operand.vmem [shape: bf16[32,128], index: 3, kind: output, shape index: {}]
  %s4 = sld [smem:[#allocation0]]
  $region45: #{net_forward.11} parent=0
    _
  %s6 = ssub.s32 1, %s4
  %s7 = scalar_select 0, %s6, %s4
  loop: start=0, step=1, limit=4
  $region2: #{net_forward.11} parent=0 // loop_pre_header
    _
  $region3: #{net_forward.11} parent=0 // loop_header
    %s9 = sphi 0, %s13
    %p10 = scmp.ge.s32.totalorder %s9, 4
    %s19 = sphi 0, %s21
    %s22 = sphi 0, %s19
    %s23 = sphi 0, %s22
    %s39 = sphi 0, %s23
    %s43 = sphi 0, %s43
    %s45 = sphi 0, %s43
    %s46 = sphi 0, %s45
    %s60 = sphi 0, %s46
    %s64 = sphi 0, %s64
    %s66 = sphi 0, %s64
    %s67 = sphi 0, %s66
    %s81 = sphi 0, %s67
    %s87 = sphi 0, %s89
    %s90 = sphi 0, %s87
    %s91 = sphi 0, %s90
    %s107 = sphi 0, %s91
  $region4: #{net_forward.11} parent=0 // loop_header_branch
    %12 = sbr.rel (%p10) target = $region8
  $region5: #{net_forward.11} parent=0 // loop_body
    %s14 = ssub.s32 %s9, 1
    %s15 = ssub.s32 %s9, 2
    %s16 = sadd.s32 %s9, 1
    %s17 = ssub.s32 %s9, %s16
    %p18 = scmp.eq.s32.totalorder %s17, 0
    %s20 = sadd.s32 %s19, 1
    %s21 = scalar_select %p18, %s19, %s20
    %p24 = pneg %p18
    %p25 = scmp.eq.s32.totalorder %s9, 1
    %p26 = por %p24, %p25
    %p27 = scmp.ne.s32.totalorder %s19, %s22
    %p28 = scmp.eq.s32.totalorder %s9, 0
    %p29 = por %p27, %p28
    %p30 = scmp.ne.s32.totalorder %s19, %s22
    %p31 = scmp.eq.s32.totalorder %s14, 1
    %p32 = por %p30, %p31
    %p33 = scmp.ne.s32.totalorder %s22, %s23
    %p34 = scmp.eq.s32.totalorder %s14, 0
    %p35 = por %p33, %p34
    %p36 = scmp.ne.s32.totalorder %s22, %s23
    %p37 = scmp.eq.s32.totalorder %s15, 1
    %p38 = por %p36, %p37
    %p40 = scmp.ne.s32.totalorder %s23, %s39
    %p41 = scmp.eq.s32.totalorder %s15, 0
    %p42 = por %p40, %p41
    %s44 = sadd.s32 %s43, 1
    %p47 = scmp.eq.s32.totalorder %s9, 1
    %p48 = scmp.ne.s32.totalorder %s43, %s45
    %p49 = scmp.eq.s32.totalorder %s9, 0
    %p50 = por %p48, %p49
    %p51 = scmp.ne.s32.totalorder %s43, %s45
    %p52 = scmp.eq.s32.totalorder %s14, 1
    %p53 = por %p51, %p52
    %p54 = scmp.ne.s32.totalorder %s45, %s46
    %p55 = scmp.eq.s32.totalorder %s14, 0
    %p56 = por %p54, %p55
    %p57 = scmp.ne.s32.totalorder %s45, %s46
    %p58 = scmp.eq.s32.totalorder %s15, 1
    %p59 = por %p57, %p58
    %p61 = scmp.ne.s32.totalorder %s46, %s60
    %p62 = scmp.eq.s32.totalorder %s15, 0
    %p63 = por %p61, %p62
    %s65 = sadd.s32 %s64, 1
    %p68 = scmp.eq.s32.totalorder %s9, 1
    %p69 = scmp.ne.s32.totalorder %s64, %s66
    %p70 = scmp.eq.s32.totalorder %s9, 0
    %p71 = por %p69, %p70
    %p72 = scmp.ne.s32.totalorder %s64, %s66
    %p73 = scmp.eq.s32.totalorder %s14, 1
    %p74 = por %p72, %p73
    %p75 = scmp.ne.s32.totalorder %s66, %s67
    %p76 = scmp.eq.s32.totalorder %s14, 0
    %p77 = por %p75, %p76
    %p78 = scmp.ne.s32.totalorder %s66, %s67
    %p79 = scmp.eq.s32.totalorder %s15, 1
    %p80 = por %p78, %p79
    %p82 = scmp.ne.s32.totalorder %s67, %s81
    %p83 = scmp.eq.s32.totalorder %s15, 0
    %p84 = por %p82, %p83
    %s85 = ssub.s32 %s9, %s16
    %p86 = scmp.eq.s32.totalorder %s85, 0
    %s88 = sadd.s32 %s87, 1
    %s89 = scalar_select %p86, %s87, %s88
    %p92 = pneg %p86
    %p93 = scmp.eq.s32.totalorder %s9, 1
    %p94 = por %p92, %p93
    %p95 = scmp.ne.s32.totalorder %s87, %s90
    %p96 = scmp.eq.s32.totalorder %s9, 0
    %p97 = por %p95, %p96
    %p98 = scmp.ne.s32.totalorder %s87, %s90
    %p99 = scmp.eq.s32.totalorder %s14, 1
    %p100 = por %p98, %p99
    %p101 = scmp.ne.s32.totalorder %s90, %s91
    %p102 = scmp.eq.s32.totalorder %s14, 0
    %p103 = por %p101, %p102
    %p104 = scmp.ne.s32.totalorder %s90, %s91
    %p105 = scmp.eq.s32.totalorder %s15, 1
    %p106 = por %p104, %p105
    %p108 = scmp.ne.s32.totalorder %s91, %s107
    %p109 = scmp.eq.s32.totalorder %s15, 0
    %p110 = por %p108, %p109
    %p111 = scmp.le.s32.totalorder 1, %s9
    %p112 = scmp.lt.s32.totalorder %s9, 3
    %p113 = pnand %p111, %p112
    %p114 = pneg %p113
    // Predicated region
    $region9: #{net_forward.11} parent=5 // pred_check
      _
    $region10: #{net_forward.11} parent=5 // pred_check_branch
      %116 = sbr.rel (%p113) target = $region12
    $region11: #{net_forward.11} parent=5 // pred_region
      %s117 = ssub.s32 %s9, 1
      // Predicated region
      $region13: #{net_forward.11} parent=11 // pred_check
        %p118 = pneg %p56
      $region14: #{net_forward.11} parent=11 // pred_check_branch
        %120 = sbr.rel (%p118) target = $region16
      $region15: #{net_forward.11} parent=11 // pred_region
        _
      $region16: #{net_forward.11} parent=11 // pred_fallthru
        _
      // Predicated region
      $region17: #{net_forward.11} parent=11 // pred_check
        %p121 = pneg %p77
      $region18: #{net_forward.11} parent=11 // pred_check_branch
        %123 = sbr.rel (%p121) target = $region20
      $region19: #{net_forward.11} parent=11 // pred_region
        _
      $region20: #{net_forward.11} parent=11 // pred_fallthru
        _
    $region12: #{net_forward.11} parent=5 // pred_fallthru
      _
    %p124 = scmp.lt.s32.totalorder %s9, 2
    // Predicated region
    $region21: #{net_forward.11} parent=5 // pred_check
      %p125 = pneg %p124
    $region22: #{net_forward.11} parent=5 // pred_check_branch
      %127 = sbr.rel (%p125) target = $region24
    $region23: #{net_forward.11} parent=5 // pred_region
      // Predicated region
      $region25: #{net_forward.11} parent=23 // pred_check
        %p128 = pneg %p29
      $region26: #{net_forward.11} parent=23 // pred_check_branch
        %130 = sbr.rel (%p128) target = $region28
      $region27: #{net_forward.11} parent=23 // pred_region
        %s131 = smul.u32 2, %s9
        %p132 = scmp.lt.s32.totalorder %s131, 3
        %s133 = scalar_select %p132, %s131, 3
        %s134 = smul.addr %s133, 7
        %s135 = smul.addr %s134, 4
        %s136 = scalar_lea.vmem %s0, %s135
        %s137 = smul.u32 2, %s9
      $region28: #{net_forward.11} parent=23 // pred_fallthru
        _
    $region24: #{net_forward.11} parent=5 // pred_fallthru
      _
    %p138 = scmp.le.s32.totalorder 1, %s9
    %p139 = scmp.lt.s32.totalorder %s9, 3
    %p140 = pnand %p138, %p139
    %p141 = pneg %p140
    // Predicated region
    $region29: #{net_forward.11} parent=5 // pred_check
      _
    $region30: #{net_forward.11} parent=5 // pred_check_branch
      %143 = sbr.rel (%p140) target = $region32
    $region31: #{net_forward.11} parent=5 // pred_region
      %s144 = ssub.s32 %s9, 1
      %s145 = smul.u32 2, %s14
      %p146 = scmp.lt.s32.totalorder %s145, 3
      %s147 = scalar_select %p146, %s145, 3
      %s148 = smul.addr %s147, 7
      %s149 = smul.addr %s148, 4
      %s150 = scalar_lea.vmem %s0, %s149
      %p151 = pneg %p35
      %p152 = pneg %p32
      %p153 = pneg %p56
      %p154 = pneg %p53
      %p155 = pneg %p77
      %p156 = pneg %p74
      %p157 = pneg %p103
      %p158 = pneg %p100
      %s159 = smul.u32 2, %s14
      %p160 = scmp.lt.s32.totalorder %s159, 3
      %s161 = scalar_select %p160, %s159, 3
      %s162 = smul.addr %s161, 4
      %s163 = scalar_lea.vmem %s3, %s162
      %s164 = smul.u32 2, %s14
      %p165 = scmp.lt.s32.totalorder %s164, 3
      %s166 = scalar_select %p165, %s164, 3
      %s167 = smul.addr %s166, 7
      %s168 = smul.addr %s167, 4
      %s169 = scalar_lea.vmem %s0, %s168
      %s170 = smul.u32 2, %s14
      %s171 = smul.u32 2, %s14
      %p172 = scmp.lt.s32.totalorder %s171, 3
      %s173 = scalar_select %p172, %s171, 3
      %s174 = smul.addr %s173, 4
      %s175 = scalar_lea.vmem %s3, %s174
      %s176 = smul.u32 2, %s14
      %v178 = vld [vmem:[%s169] sm:$0xff]
      %v179 = vld [vmem:[%s169 + $0x8] sm:$0xff]
      %v180 = vld [vmem:[%s169 + $0x10] sm:$0xff]
      %v181 = vld [vmem:[%s169 + $0x18] sm:$0xf]
      %v182 = vld [vmem:[%s169 + $0x1c] sm:$0xff]
      %v183 = vld [vmem:[%s169 + $0x24] sm:$0xff]
      %v184 = vld [vmem:[%s169 + $0x2c] sm:$0xff]
      %v185 = vld [vmem:[%s169 + $0x34] sm:$0xf]
      %v186 = vld [vmem:[%s1] sm:$0xf]
      %v187 = vld [vmem:[%s1 + $0x4] sm:$0xf]
      %v188 = vld [vmem:[%s1 + $0x8] sm:$0xf]
      %v189 = vld [vmem:[%s1 + $0xc] sm:$0xf]
      %v190 = vld [vmem:[%s1 + $0x10] sm:$0xf]
      %v191 = vld [vmem:[%s1 + $0x14] sm:$0xf]
      %v192 = vld [vmem:[%s1 + $0x18] sm:$0xf]
      %v193 = vld [vmem:[%s1 + $0x1c] sm:$0xf]
      %v194 = vld [vmem:[%s1 + $0x20] sm:$0xf]
      %v195 = vld [vmem:[%s1 + $0x24] sm:$0xf]
      %v196 = vld [vmem:[%s1 + $0x28] sm:$0xf]
      %v197 = vld [vmem:[%s1 + $0x2c] sm:$0xf]
      %v198 = vld [vmem:[%s1 + $0x30] sm:$0xf]
      %v199 = vld [vmem:[%s1 + $0x34] sm:$0xf]
      %v200 = vld [vmem:[%s1 + $0x38] sm:$0xf]
      %v201 = vld [vmem:[%s1 + $0x3c] sm:$0xf]
      %v202 = vld [vmem:[%s1 + $0x40] sm:$0xf]
      %v203 = vld [vmem:[%s1 + $0x44] sm:$0xf]
      %v204 = vld [vmem:[%s1 + $0x48] sm:$0xf]
      %v205 = vld [vmem:[%s1 + $0x4c] sm:$0xf]
      %v206 = vld [vmem:[%s1 + $0x50] sm:$0xf]
      %v207 = vld [vmem:[%s1 + $0x54] sm:$0xf]
      %v208 = vld [vmem:[%s1 + $0x58] sm:$0xf]
      %v209 = vld [vmem:[%s1 + $0x5c] sm:$0xf]
      %v210 = vld [vmem:[%s1 + $0x60] sm:$0xf]
      %v211 = vld [vmem:[%s1 + $0x64] sm:$0xf]
      %v212 = vld [vmem:[%s1 + $0x68] sm:$0xf]
      %v213 = vld [vmem:[%s1 + $0x6c] sm:$0xf]
      %v214 = vld [vmem:[%s1 + $0x70] sm:$0xf]
      %v215 = vld [vmem:[%s1 + $0x74] sm:$0xf]
      %v216 = vld [vmem:[%s1 + $0x78] sm:$0xf]
      %v217 = vld [vmem:[%s1 + $0x7c] sm:$0xf]
      %v218 = vld [vmem:[%s1 + $0x80] sm:$0xf]
      %v219 = vld [vmem:[%s1 + $0x84] sm:$0xf]
      %v220 = vld [vmem:[%s1 + $0x88] sm:$0xf]
      %v221 = vld [vmem:[%s1 + $0x8c] sm:$0xf]
      %v222 = vld [vmem:[%s1 + $0x90] sm:$0xf]
      %v223 = vld [vmem:[%s1 + $0x94] sm:$0xf]
      %v224 = vld [vmem:[%s1 + $0x98] sm:$0xf]
      %v225 = vld [vmem:[%s1 + $0x9c] sm:$0xf]
      %v226 = vld [vmem:[%s1 + $0xa0] sm:$0xf]
      %v227 = vld [vmem:[%s1 + $0xa4] sm:$0xf]
      %v228 = vld [vmem:[%s1 + $0xa8] sm:$0xf]
      %v229 = vld [vmem:[%s1 + $0xac] sm:$0xf]
      %v230 = vld [vmem:[%s1 + $0xb0] sm:$0xf]
      %v231 = vld [vmem:[%s1 + $0xb4] sm:$0xf]
      %v232 = vld [vmem:[%s1 + $0xb8] sm:$0xf]
      %v233 = vld [vmem:[%s1 + $0xbc] sm:$0xf]
      %v234 = vld [vmem:[%s1 + $0xc0] sm:$0xf]
      %v235 = vld [vmem:[%s1 + $0xc4] sm:$0xf]
      %v236 = vld [vmem:[%s1 + $0xc8] sm:$0xf]
      %v237 = vld [vmem:[%s1 + $0xcc] sm:$0xf]
      %v238 = vld [vmem:[%s1 + $0xd0] sm:$0xf]
      %v239 = vld [vmem:[%s1 + $0xd4] sm:$0xf]
      %v240 = vld [vmem:[%s1 + $0xd8] sm:$0xf]
      %v241 = vld [vmem:[%s1 + $0xdc] sm:$0xf]
      %v242 = vld [vmem:[%s1 + $0xe0] sm:$0xf]
      %v243 = vld [vmem:[%s1 + $0xe4] sm:$0xf]
      %v244 = vld [vmem:[%s1 + $0xe8] sm:$0xf]
      %v245 = vld [vmem:[%s1 + $0xec] sm:$0xf]
      %v246 = vld [vmem:[%s1 + $0xf0] sm:$0xf]
      %v247 = vld [vmem:[%s1 + $0xf4] sm:$0xf]
      %v248 = vld [vmem:[%s1 + $0xf8] sm:$0xf]
      %v249 = vld [vmem:[%s1 + $0xfc] sm:$0xf]
      %v250 = vld [vmem:[%s1 + $0x100] sm:$0xf]
      %v251 = vld [vmem:[%s1 + $0x104] sm:$0xf]
      %v252 = vld [vmem:[%s1 + $0x108] sm:$0xf]
      %v253 = vld [vmem:[%s1 + $0x10c] sm:$0xf]
      %v254 = vld [vmem:[%s1 + $0x110] sm:$0xf]
      %v255 = vld [vmem:[%s1 + $0x114] sm:$0xf]
      %v256 = vld [vmem:[%s1 + $0x118] sm:$0xf]
      %v257 = vld [vmem:[%s1 + $0x11c] sm:$0xf]
      %v258 = vld [vmem:[%s1 + $0x120] sm:$0xf]
      %v259 = vld [vmem:[%s1 + $0x124] sm:$0xf]
      %v260 = vld [vmem:[%s1 + $0x128] sm:$0xf]
      %v261 = vld [vmem:[%s1 + $0x12c] sm:$0xf]
      %v262 = vld [vmem:[%s1 + $0x130] sm:$0xf]
      %v263 = vld [vmem:[%s1 + $0x134] sm:$0xf]
      %v264 = vld [vmem:[%s1 + $0x138] sm:$0xf]
      %v265 = vld [vmem:[%s1 + $0x13c] sm:$0xf]
      %v266 = vld [vmem:[%s1 + $0x140] sm:$0xf]
      %v267 = vld [vmem:[%s1 + $0x144] sm:$0xf]
      %v268 = vld [vmem:[%s1 + $0x148] sm:$0xf]
      %v269 = vld [vmem:[%s1 + $0x14c] sm:$0xf]
      %v270 = vld [vmem:[%s1 + $0x150] sm:$0xf]
      %v271 = vld [vmem:[%s1 + $0x154] sm:$0xf]
      %v272 = vld [vmem:[%s1 + $0x158] sm:$0xf]
      %v273 = vld [vmem:[%s1 + $0x15c] sm:$0xf]
      %v274 = vld [vmem:[%s1 + $0x160] sm:$0xf]
      %v275 = vld [vmem:[%s1 + $0x164] sm:$0xf]
      %v276 = vld [vmem:[%s1 + $0x168] sm:$0xf]
      %v277 = vld [vmem:[%s1 + $0x16c] sm:$0xf]
      %v278 = vld [vmem:[%s1 + $0x170] sm:$0xf]
      %v279 = vld [vmem:[%s1 + $0x174] sm:$0xf]
      %v280 = vld [vmem:[%s1 + $0x178] sm:$0xf]
      %v281 = vld [vmem:[%s1 + $0x17c] sm:$0xf]
      %v282 = vld [vmem:[%s1 + $0x180] sm:$0xf]
      %v283 = vld [vmem:[%s1 + $0x184] sm:$0xf]
      %v284 = vld [vmem:[%s1 + $0x188] sm:$0xf]
      %v285 = vld [vmem:[%s1 + $0x18c] sm:$0xf]
      %v286 = vld [vmem:[%s2] sm:$0x1]
      %v288 = vperm.slane %v286, 0
      %v298 = vunpack.c.l.b16 %v178
      %v299 = vunpack.c.h.b16 %v178
      %v300 = vunpack.c.l.b16 %v179
      %v301 = vunpack.c.h.b16 %v179
      %v302 = vunpack.c.l.b16 %v180
      %v303 = vunpack.c.h.b16 %v180
      %v304 = vunpack.c.l.b16 %v181
      %v305 = vunpack.c.l.b16 %v182
      %v306 = vunpack.c.h.b16 %v182
      %v307 = vunpack.c.l.b16 %v183
      %v308 = vunpack.c.h.b16 %v183
      %v309 = vunpack.c.l.b16 %v184
      %v310 = vunpack.c.h.b16 %v184
      %v311 = vunpack.c.l.b16 %v185
      %v312 = vpack.c.b16 %v305, %v298
      %v313 = vpack.c.b16 %v306, %v299
      %v314 = vpack.c.b16 %v307, %v300
      %v315 = vpack.c.b16 %v308, %v301
      %v316 = vpack.c.b16 %v309, %v302
      %v317 = vpack.c.b16 %v310, %v303
      %v318 = vpack.c.b16 %v311, %v304
      %v425 = vunpack.c.l.b16 %v186
      %v426 = vunpack.c.l.b16 %v187
      %v427 = vunpack.c.l.b16 %v188
      %v428 = vunpack.c.l.b16 %v189
      %v429 = vunpack.c.l.b16 %v190
      %v430 = vunpack.c.l.b16 %v191
      %v431 = vunpack.c.l.b16 %v192
      %v432 = vunpack.c.l.b16 %v193
      %v433 = vunpack.c.l.b16 %v194
      %v434 = vunpack.c.l.b16 %v195
      %v435 = vunpack.c.l.b16 %v196
      %v436 = vunpack.c.l.b16 %v197
      %v437 = vunpack.c.l.b16 %v198
      %v438 = vunpack.c.l.b16 %v199
      %v439 = vunpack.c.l.b16 %v200
      %v440 = vunpack.c.l.b16 %v201
      %v441 = vunpack.c.l.b16 %v202
      %v442 = vunpack.c.l.b16 %v203
      %v443 = vunpack.c.l.b16 %v204
      %v444 = vunpack.c.l.b16 %v205
      %v445 = vunpack.c.l.b16 %v206
      %v446 = vunpack.c.l.b16 %v207
      %v447 = vunpack.c.l.b16 %v208
      %v448 = vunpack.c.l.b16 %v209
      %v449 = vunpack.c.l.b16 %v210
      %v450 = vunpack.c.l.b16 %v211
      %v451 = vunpack.c.l.b16 %v212
      %v452 = vunpack.c.l.b16 %v213
      %v453 = vunpack.c.l.b16 %v214
      %v454 = vunpack.c.l.b16 %v215
      %v455 = vunpack.c.l.b16 %v216
      %v456 = vunpack.c.l.b16 %v217
      %v457 = vunpack.c.l.b16 %v218
      %v458 = vunpack.c.l.b16 %v219
      %v459 = vunpack.c.l.b16 %v220
      %v460 = vunpack.c.l.b16 %v221
      %v461 = vunpack.c.l.b16 %v222
      %v462 = vunpack.c.l.b16 %v223
      %v463 = vunpack.c.l.b16 %v224
      %v464 = vunpack.c.l.b16 %v225
      %v465 = vunpack.c.l.b16 %v226
      %v466 = vunpack.c.l.b16 %v227
      %v467 = vunpack.c.l.b16 %v228
      %v468 = vunpack.c.l.b16 %v229
      %v469 = vunpack.c.l.b16 %v230
      %v470 = vunpack.c.l.b16 %v231
      %v471 = vunpack.c.l.b16 %v232
      %v472 = vunpack.c.l.b16 %v233
      %v473 = vunpack.c.l.b16 %v234
      %v474 = vunpack.c.l.b16 %v235
      %v475 = vunpack.c.l.b16 %v236
      %v476 = vunpack.c.l.b16 %v237
      %v477 = vunpack.c.l.b16 %v238
      %v478 = vunpack.c.l.b16 %v239
      %v479 = vunpack.c.l.b16 %v240
      %v480 = vunpack.c.l.b16 %v241
      %v481 = vunpack.c.l.b16 %v242
      %v482 = vunpack.c.l.b16 %v243
      %v483 = vunpack.c.l.b16 %v244
      %v484 = vunpack.c.l.b16 %v245
      %v485 = vunpack.c.l.b16 %v246
      %v486 = vunpack.c.l.b16 %v247
      %v487 = vunpack.c.l.b16 %v248
      %v488 = vunpack.c.l.b16 %v249
      %v489 = vunpack.c.l.b16 %v250
      %v490 = vunpack.c.l.b16 %v251
      %v491 = vunpack.c.l.b16 %v252
      %v492 = vunpack.c.l.b16 %v253
      %v493 = vunpack.c.l.b16 %v254
      %v494 = vunpack.c.l.b16 %v255
      %v495 = vunpack.c.l.b16 %v256
      %v496 = vunpack.c.l.b16 %v257
      %v497 = vunpack.c.l.b16 %v258
      %v498 = vunpack.c.l.b16 %v259
      %v499 = vunpack.c.l.b16 %v260
      %v500 = vunpack.c.l.b16 %v261
      %v501 = vunpack.c.l.b16 %v262
      %v502 = vunpack.c.l.b16 %v263
      %v503 = vunpack.c.l.b16 %v264
      %v504 = vunpack.c.l.b16 %v265
      %v505 = vunpack.c.l.b16 %v266
      %v506 = vunpack.c.l.b16 %v267
      %v507 = vunpack.c.l.b16 %v268
      %v508 = vunpack.c.l.b16 %v269
      %v509 = vunpack.c.l.b16 %v270
      %v510 = vunpack.c.l.b16 %v271
      %v511 = vunpack.c.l.b16 %v272
      %v512 = vunpack.c.l.b16 %v273
      %v513 = vunpack.c.l.b16 %v274
      %v514 = vunpack.c.l.b16 %v275
      %v515 = vunpack.c.l.b16 %v276
      %v516 = vunpack.c.l.b16 %v277
      %v517 = vunpack.c.l.b16 %v278
      %v518 = vunpack.c.l.b16 %v279
      %v519 = vunpack.c.l.b16 %v280
      %v520 = vunpack.c.l.b16 %v281
      %v521 = vunpack.c.l.b16 %v282
      %v522 = vunpack.c.l.b16 %v283
      %v523 = vunpack.c.l.b16 %v284
      %v524 = vunpack.c.l.b16 %v285
      %v525 = vpack.c.b16 %v426, %v425
      %v526 = vpack.c.b16 %v428, %v427
      %v527 = vpack.c.b16 %v430, %v429
      %v528 = vpack.c.b16 %v432, %v431
      %v529 = vpack.c.b16 %v434, %v433
      %v530 = vpack.c.b16 %v436, %v435
      %v531 = vpack.c.b16 %v438, %v437
      %v532 = vpack.c.b16 %v440, %v439
      %v533 = vpack.c.b16 %v442, %v441
      %v534 = vpack.c.b16 %v444, %v443
      %v535 = vpack.c.b16 %v446, %v445
      %v536 = vpack.c.b16 %v448, %v447
      %v537 = vpack.c.b16 %v450, %v449
      %v538 = vpack.c.b16 %v452, %v451
      %v539 = vpack.c.b16 %v454, %v453
      %v540 = vpack.c.b16 %v456, %v455
      %v541 = vpack.c.b16 %v458, %v457
      %v542 = vpack.c.b16 %v460, %v459
      %v543 = vpack.c.b16 %v462, %v461
      %v544 = vpack.c.b16 %v464, %v463
      %v545 = vpack.c.b16 %v466, %v465
      %v546 = vpack.c.b16 %v468, %v467
      %v547 = vpack.c.b16 %v470, %v469
      %v548 = vpack.c.b16 %v472, %v471
      %v549 = vpack.c.b16 %v474, %v473
      %v550 = vpack.c.b16 %v476, %v475
      %v551 = vpack.c.b16 %v478, %v477
      %v552 = vpack.c.b16 %v480, %v479
      %v553 = vpack.c.b16 %v482, %v481
      %v554 = vpack.c.b16 %v484, %v483
      %v555 = vpack.c.b16 %v486, %v485
      %v556 = vpack.c.b16 %v488, %v487
      %v557 = vpack.c.b16 %v490, %v489
      %v558 = vpack.c.b16 %v492, %v491
      %v559 = vpack.c.b16 %v494, %v493
      %v560 = vpack.c.b16 %v496, %v495
      %v561 = vpack.c.b16 %v498, %v497
      %v562 = vpack.c.b16 %v500, %v499
      %v563 = vpack.c.b16 %v502, %v501
      %v564 = vpack.c.b16 %v504, %v503
      %v565 = vpack.c.b16 %v506, %v505
      %v566 = vpack.c.b16 %v508, %v507
      %v567 = vpack.c.b16 %v510, %v509
      %v568 = vpack.c.b16 %v512, %v511
      %v569 = vpack.c.b16 %v514, %v513
      %v570 = vpack.c.b16 %v516, %v515
      %v571 = vpack.c.b16 %v518, %v517
      %v572 = vpack.c.b16 %v520, %v519
      %v573 = vpack.c.b16 %v522, %v521
      %v574 = vpack.c.b16 %v524, %v523
      %vm625 = vcmask 261120
      %v627 = vsel %vm625, %v318, 0
      %629 = vmatpush.bf16.msra.mxu0 %v532
      %630 = vmatpush.bf16.msra.mxu0 %v531
      %631 = vmatpush.bf16.msra.mxu0 %v530
      %632 = vmatpush.bf16.msra.mxu0 %v529
      %633 = vmatpush.bf16.msra.mxu0 %v528
      %634 = vmatpush.bf16.msra.mxu0 %v527
      %635 = vmatpush.bf16.msra.mxu0 %v526
      %636 = vmatpush.bf16.msra.mxu0 %v525
      %637 = vmatmul.bf16.gmra.mxu0 %v312
      %v638 = vpop.f32.mrf.mxu0
      %v639 = vadd.f32 %v288, %v638
      %v640 = vpop.f32.mrf.mxu0
      %v641 = vadd.f32 %v288, %v640
      %642 = vdwg.mxu0
      %643 = vmatpush.bf16.msra.mxu0 %v540
      %644 = vmatpush.bf16.msra.mxu0 %v539
      %645 = vmatpush.bf16.msra.mxu0 %v538
      %646 = vmatpush.bf16.msra.mxu0 %v537
      %647 = vmatpush.bf16.msra.mxu0 %v536
      %648 = vmatpush.bf16.msra.mxu0 %v535
      %649 = vmatpush.bf16.msra.mxu0 %v534
      %650 = vmatpush.bf16.msra.mxu0 %v533
      %651 = vmatmul.bf16.gmra.mxu0 %v313
      %v652 = vpop.f32.mrf.mxu0
      %v653 = vadd.f32 %v639, %v652
      %v654 = vpop.f32.mrf.mxu0
      %v655 = vadd.f32 %v641, %v654
      %656 = vdwg.mxu0
      %657 = vmatpush.bf16.msra.mxu0 %v548
      %658 = vmatpush.bf16.msra.mxu0 %v547
      %659 = vmatpush.bf16.msra.mxu0 %v546
      %660 = vmatpush.bf16.msra.mxu0 %v545
      %661 = vmatpush.bf16.msra.mxu0 %v544
      %662 = vmatpush.bf16.msra.mxu0 %v543
      %663 = vmatpush.bf16.msra.mxu0 %v542
      %664 = vmatpush.bf16.msra.mxu0 %v541
      %665 = vmatmul.bf16.gmra.mxu0 %v314
      %v666 = vpop.f32.mrf.mxu0
      %v667 = vadd.f32 %v653, %v666
      %v668 = vpop.f32.mrf.mxu0
      %v669 = vadd.f32 %v655, %v668
      %670 = vdwg.mxu0
      %671 = vmatpush.bf16.msra.mxu0 %v556
      %672 = vmatpush.bf16.msra.mxu0 %v555
      %673 = vmatpush.bf16.msra.mxu0 %v554
      %674 = vmatpush.bf16.msra.mxu0 %v553
      %675 = vmatpush.bf16.msra.mxu0 %v552
      %676 = vmatpush.bf16.msra.mxu0 %v551
      %677 = vmatpush.bf16.msra.mxu0 %v550
      %678 = vmatpush.bf16.msra.mxu0 %v549
      %679 = vmatmul.bf16.gmra.mxu0 %v315
      %v680 = vpop.f32.mrf.mxu0
      %v681 = vadd.f32 %v667, %v680
      %v682 = vpop.f32.mrf.mxu0
      %v683 = vadd.f32 %v669, %v682
      %684 = vdwg.mxu0
      %685 = vmatpush.bf16.msra.mxu0 %v564
      %686 = vmatpush.bf16.msra.mxu0 %v563
      %687 = vmatpush.bf16.msra.mxu0 %v562
      %688 = vmatpush.bf16.msra.mxu0 %v561
      %689 = vmatpush.bf16.msra.mxu0 %v560
      %690 = vmatpush.bf16.msra.mxu0 %v559
      %691 = vmatpush.bf16.msra.mxu0 %v558
      %692 = vmatpush.bf16.msra.mxu0 %v557
      %693 = vmatmul.bf16.gmra.mxu0 %v316
      %v694 = vpop.f32.mrf.mxu0
      %v695 = vadd.f32 %v681, %v694
      %v696 = vpop.f32.mrf.mxu0
      %v697 = vadd.f32 %v683, %v696
      %698 = vdwg.mxu0
      %699 = vmatpush.bf16.msra.mxu0 %v572
      %700 = vmatpush.bf16.msra.mxu0 %v571
      %701 = vmatpush.bf16.msra.mxu0 %v570
      %702 = vmatpush.bf16.msra.mxu0 %v569
      %703 = vmatpush.bf16.msra.mxu0 %v568
      %704 = vmatpush.bf16.msra.mxu0 %v567
      %705 = vmatpush.bf16.msra.mxu0 %v566
      %706 = vmatpush.bf16.msra.mxu0 %v565
      %707 = vmatmul.bf16.gmra.mxu0 %v317
      %v708 = vpop.f32.mrf.mxu0
      %v709 = vadd.f32 %v695, %v708
      %v710 = vpop.f32.mrf.mxu0
      %v711 = vadd.f32 %v697, %v710
      %712 = vdwg.mxu0
      %713 = vmatpush.bf16.msra.mxu0 0
      %714 = vmatpush.bf16.msra.mxu0 0
      %715 = vmatpush.bf16.msra.mxu0 0
      %716 = vmatpush.bf16.msra.mxu0 0
      %717 = vmatpush.bf16.msra.mxu0 0
      %718 = vmatpush.bf16.msra.mxu0 0
      %719 = vmatpush.bf16.msra.mxu0 %v574
      %720 = vmatpush.bf16.msra.mxu0 %v573
      %721 = vmatmul.bf16.gmra.mxu0 %v627
      %v722 = vpop.f32.mrf.mxu0
      %v723 = vadd.f32 %v709, %v722
      %v724 = vpop.f32.mrf.mxu0
      %v725 = vadd.f32 %v711, %v724
      %726 = vdwg.mxu0
      %vm727 = vcmp.ge.f32.partialorder %v723, 0.0
      %vm728 = vcmp.ge.f32.partialorder %v725, 0.0
      %v729 = vmul.f32 %v723, 0.01
      %v730 = vmul.f32 %v725, 0.01
      %v731 = vsel %vm727, %v723, %v729
      %v732 = vsel %vm728, %v725, %v730
      %v733 = vpack.c.bf16 %v731, %v731
      %v734 = vpack.c.bf16 %v732, %v732
      %735 = vst [vmem:[%s175] sm:$0xf] %v733
      %736 = vst [vmem:[%s175 + $0x4] sm:$0xf] %v734
      %s737 = smul.u32 2, %s14
      %p738 = scmp.lt.s32.totalorder %s737, 3
      %s739 = scalar_select %p738, %s737, 3
      %s740 = smul.addr %s739, 4
      %s741 = scalar_lea.vmem %s3, %s740
      // Predicated region
      $region33: #{net_forward.11} parent=31 // pred_check
        %p742 = pneg %p100
      $region34: #{net_forward.11} parent=31 // pred_check_branch
        %744 = sbr.rel (%p742) target = $region36
      $region35: #{net_forward.11} parent=31 // pred_region
        %s745 = smul.u32 2, %s14
      $region36: #{net_forward.11} parent=31 // pred_fallthru
        _
    $region32: #{net_forward.11} parent=5 // pred_fallthru
      _
    %p746 = scmp.le.s32.totalorder 2, %s9
    // Predicated region
    $region37: #{net_forward.11} parent=5 // pred_check
      %p747 = pneg %p746
    $region38: #{net_forward.11} parent=5 // pred_check_branch
      %749 = sbr.rel (%p747) target = $region40
    $region39: #{net_forward.11} parent=5 // pred_region
      %s750 = ssub.s32 %s9, 2
      // Predicated region
      $region41: #{net_forward.11} parent=39 // pred_check
        %p751 = pneg %p106
      $region42: #{net_forward.11} parent=39 // pred_check_branch
        %753 = sbr.rel (%p751) target = $region44
      $region43: #{net_forward.11} parent=39 // pred_region
        %s754 = smul.u32 2, %s15
        %p755 = scmp.lt.s32.totalorder %s754, 3
        %s756 = scalar_select %p755, %s754, 3
        %s757 = smul.addr %s756, 4
        %s758 = scalar_lea.vmem %s3, %s757
      $region44: #{net_forward.11} parent=39 // pred_fallthru
        _
    $region40: #{net_forward.11} parent=5 // pred_fallthru
      _
  $region6: #{net_forward.11} parent=0 // loop_footer
    %s13 = sadd.s32 1, %s9
  $region7: #{net_forward.11} parent=0 // loop_footer_branch
    %8 = sbr.rel target = $region3
  $region8: #{net_forward.11} parent=0 // loop_exit
    _

// kernel: net_forward.12
$region0: #{net_forward.12}
  #allocation0 [shape = 'u32[]', space=smem, size = 0x4, offset = 0x4, fixed_abs, tag = 'smem constant byte address 0x4 - core index']
  #allocation1 [shape = 'u32[72,128]{1,0:T(1,128)}', space=vmem, size = 0x9000, scoped, tag = 'internal scratch']
  %s0 = inlined_call_operand.vmem [shape: bf16[16,1024], index: 0, kind: input, shape index: {}]
  %s1 = inlined_call_operand.vmem [shape: bf16[1024,128], index: 1, kind: input, shape index: {}]
  %s2 = inlined_call_operand.vmem [shape: f32[1,128], index: 2, kind: input, shape index: {}]
  %s3 = inlined_call_operand.vmem [shape: f32[16,128], index: 3, kind: output, shape index: {}]
  %s4 = sld [smem:[#allocation0]]
  $region22: #{net_forward.12} parent=0
    _
  %s6 = ssub.s32 1, %s4
  %s7 = scalar_select 0, %s6, %s4
  // Predicated region
  $region2: #{net_forward.12} parent=0 // pred_check
    _
  $region3: #{net_forward.12} parent=0 // pred_check_branch
    %9 = sbr.rel (0) target = $region5
  $region4: #{net_forward.12} parent=0 // pred_region
    _
  $region5: #{net_forward.12} parent=0 // pred_fallthru
    _
  // Predicated region
  $region6: #{net_forward.12} parent=0 // pred_check
    _
  $region7: #{net_forward.12} parent=0 // pred_check_branch
    %11 = sbr.rel (0) target = $region9
  $region8: #{net_forward.12} parent=0 // pred_region
    _
  $region9: #{net_forward.12} parent=0 // pred_fallthru
    _
  // Predicated region
  $region10: #{net_forward.12} parent=0 // pred_check
    _
  $region11: #{net_forward.12} parent=0 // pred_check_branch
    %13 = sbr.rel (0) target = $region13
  $region12: #{net_forward.12} parent=0 // pred_region
    _
  $region13: #{net_forward.12} parent=0 // pred_fallthru
    _
  %v14 = vld [vmem:[%s0] sm:$0xff]
  %v15 = vld [vmem:[%s0 + $0x8] sm:$0xff]
  %v16 = vld [vmem:[%s0 + $0x10] sm:$0xff]
  %v17 = vld [vmem:[%s0 + $0x18] sm:$0xff]
  %v18 = vld [vmem:[%s0 + $0x20] sm:$0xff]
  %v19 = vld [vmem:[%s0 + $0x28] sm:$0xff]
  %v20 = vld [vmem:[%s0 + $0x30] sm:$0xff]
  %v21 = vld [vmem:[%s0 + $0x38] sm:$0xff]
  %v22 = vld [vmem:[%s1] sm:$0xf]
  %v23 = vld [vmem:[%s1 + $0x4] sm:$0xf]
  %v24 = vld [vmem:[%s1 + $0x8] sm:$0xf]
  %v25 = vld [vmem:[%s1 + $0xc] sm:$0xf]
  %v26 = vld [vmem:[%s1 + $0x10] sm:$0xf]
  %v27 = vld [vmem:[%s1 + $0x14] sm:$0xf]
  %v28 = vld [vmem:[%s1 + $0x18] sm:$0xf]
  %v29 = vld [vmem:[%s1 + $0x1c] sm:$0xf]
  %v30 = vld [vmem:[%s1 + $0x20] sm:$0xf]
  %v31 = vld [vmem:[%s1 + $0x24] sm:$0xf]
  %v32 = vld [vmem:[%s1 + $0x28] sm:$0xf]
  %v33 = vld [vmem:[%s1 + $0x2c] sm:$0xf]
  %v34 = vld [vmem:[%s1 + $0x30] sm:$0xf]
  %v35 = vld [vmem:[%s1 + $0x34] sm:$0xf]
  %v36 = vld [vmem:[%s1 + $0x38] sm:$0xf]
  %v37 = vld [vmem:[%s1 + $0x3c] sm:$0xf]
  %v38 = vld [vmem:[%s1 + $0x40] sm:$0xf]
  %v39 = vld [vmem:[%s1 + $0x44] sm:$0xf]
  %v40 = vld [vmem:[%s1 + $0x48] sm:$0xf]
  %v41 = vld [vmem:[%s1 + $0x4c] sm:$0xf]
  %v42 = vld [vmem:[%s1 + $0x50] sm:$0xf]
  %v43 = vld [vmem:[%s1 + $0x54] sm:$0xf]
  %v44 = vld [vmem:[%s1 + $0x58] sm:$0xf]
  %v45 = vld [vmem:[%s1 + $0x5c] sm:$0xf]
  %v46 = vld [vmem:[%s1 + $0x60] sm:$0xf]
  %v47 = vld [vmem:[%s1 + $0x64] sm:$0xf]
  %v48 = vld [vmem:[%s1 + $0x68] sm:$0xf]
  %v49 = vld [vmem:[%s1 + $0x6c] sm:$0xf]
  %v50 = vld [vmem:[%s1 + $0x70] sm:$0xf]
  %v51 = vld [vmem:[%s1 + $0x74] sm:$0xf]
  %v52 = vld [vmem:[%s1 + $0x78] sm:$0xf]
  %v53 = vld [vmem:[%s1 + $0x7c] sm:$0xf]
  %v54 = vld [vmem:[%s1 + $0x80] sm:$0xf]
  %v55 = vld [vmem:[%s1 + $0x84] sm:$0xf]
  %v56 = vld [vmem:[%s1 + $0x88] sm:$0xf]
  %v57 = vld [vmem:[%s1 + $0x8c] sm:$0xf]
  %v58 = vld [vmem:[%s1 + $0x90] sm:$0xf]
  %v59 = vld [vmem:[%s1 + $0x94] sm:$0xf]
  %v60 = vld [vmem:[%s1 + $0x98] sm:$0xf]
  %v61 = vld [vmem:[%s1 + $0x9c] sm:$0xf]
  %v62 = vld [vmem:[%s1 + $0xa0] sm:$0xf]
  %v63 = vld [vmem:[%s1 + $0xa4] sm:$0xf]
  %v64 = vld [vmem:[%s1 + $0xa8] sm:$0xf]
  %v65 = vld [vmem:[%s1 + $0xac] sm:$0xf]
  %v66 = vld [vmem:[%s1 + $0xb0] sm:$0xf]
  %v67 = vld [vmem:[%s1 + $0xb4] sm:$0xf]
  %v68 = vld [vmem:[%s1 + $0xb8] sm:$0xf]
  %v69 = vld [vmem:[%s1 + $0xbc] sm:$0xf]
  %v70 = vld [vmem:[%s1 + $0xc0] sm:$0xf]
  %v71 = vld [vmem:[%s1 + $0xc4] sm:$0xf]
  %v72 = vld [vmem:[%s1 + $0xc8] sm:$0xf]
  %v73 = vld [vmem:[%s1 + $0xcc] sm:$0xf]
  %v74 = vld [vmem:[%s1 + $0xd0] sm:$0xf]
  %v75 = vld [vmem:[%s1 + $0xd4] sm:$0xf]
  %v76 = vld [vmem:[%s1 + $0xd8] sm:$0xf]
  %v77 = vld [vmem:[%s1 + $0xdc] sm:$0xf]
  %v78 = vld [vmem:[%s1 + $0xe0] sm:$0xf]
  %v79 = vld [vmem:[%s1 + $0xe4] sm:$0xf]
  %v80 = vld [vmem:[%s1 + $0xe8] sm:$0xf]
  %v81 = vld [vmem:[%s1 + $0xec] sm:$0xf]
  %v82 = vld [vmem:[%s1 + $0xf0] sm:$0xf]
  %v83 = vld [vmem:[%s1 + $0xf4] sm:$0xf]
  %v84 = vld [vmem:[%s1 + $0xf8] sm:$0xf]
  %v85 = vld [vmem:[%s1 + $0xfc] sm:$0xf]
  %v86 = vld [vmem:[%s1 + $0x100] sm:$0xf]
  %v87 = vld [vmem:[%s1 + $0x104] sm:$0xf]
  %v88 = vld [vmem:[%s1 + $0x108] sm:$0xf]
  %v89 = vld [vmem:[%s1 + $0x10c] sm:$0xf]
  %v90 = vld [vmem:[%s1 + $0x110] sm:$0xf]
  %v91 = vld [vmem:[%s1 + $0x114] sm:$0xf]
  %v92 = vld [vmem:[%s1 + $0x118] sm:$0xf]
  %v93 = vld [vmem:[%s1 + $0x11c] sm:$0xf]
  %v94 = vld [vmem:[%s1 + $0x120] sm:$0xf]
  %v95 = vld [vmem:[%s1 + $0x124] sm:$0xf]
  %v96 = vld [vmem:[%s1 + $0x128] sm:$0xf]
  %v97 = vld [vmem:[%s1 + $0x12c] sm:$0xf]
  %v98 = vld [vmem:[%s1 + $0x130] sm:$0xf]
  %v99 = vld [vmem:[%s1 + $0x134] sm:$0xf]
  %v100 = vld [vmem:[%s1 + $0x138] sm:$0xf]
  %v101 = vld [vmem:[%s1 + $0x13c] sm:$0xf]
  %v102 = vld [vmem:[%s1 + $0x140] sm:$0xf]
  %v103 = vld [vmem:[%s1 + $0x144] sm:$0xf]
  %v104 = vld [vmem:[%s1 + $0x148] sm:$0xf]
  %v105 = vld [vmem:[%s1 + $0x14c] sm:$0xf]
  %v106 = vld [vmem:[%s1 + $0x150] sm:$0xf]
  %v107 = vld [vmem:[%s1 + $0x154] sm:$0xf]
  %v108 = vld [vmem:[%s1 + $0x158] sm:$0xf]
  %v109 = vld [vmem:[%s1 + $0x15c] sm:$0xf]
  %v110 = vld [vmem:[%s1 + $0x160] sm:$0xf]
  %v111 = vld [vmem:[%s1 + $0x164] sm:$0xf]
  %v112 = vld [vmem:[%s1 + $0x168] sm:$0xf]
  %v113 = vld [vmem:[%s1 + $0x16c] sm:$0xf]
  %v114 = vld [vmem:[%s1 + $0x170] sm:$0xf]
  %v115 = vld [vmem:[%s1 + $0x174] sm:$0xf]
  %v116 = vld [vmem:[%s1 + $0x178] sm:$0xf]
  %v117 = vld [vmem:[%s1 + $0x17c] sm:$0xf]
  %v118 = vld [vmem:[%s1 + $0x180] sm:$0xf]
  %v119 = vld [vmem:[%s1 + $0x184] sm:$0xf]
  %v120 = vld [vmem:[%s1 + $0x188] sm:$0xf]
  %v121 = vld [vmem:[%s1 + $0x18c] sm:$0xf]
  %v122 = vld [vmem:[%s1 + $0x190] sm:$0xf]
  %v123 = vld [vmem:[%s1 + $0x194] sm:$0xf]
  %v124 = vld [vmem:[%s1 + $0x198] sm:$0xf]
  %v125 = vld [vmem:[%s1 + $0x19c] sm:$0xf]
  %v126 = vld [vmem:[%s1 + $0x1a0] sm:$0xf]
  %v127 = vld [vmem:[%s1 + $0x1a4] sm:$0xf]
  %v128 = vld [vmem:[%s1 + $0x1a8] sm:$0xf]
  %v129 = vld [vmem:[%s1 + $0x1ac] sm:$0xf]
  %v130 = vld [vmem:[%s1 + $0x1b0] sm:$0xf]
  %v131 = vld [vmem:[%s1 + $0x1b4] sm:$0xf]
  %v132 = vld [vmem:[%s1 + $0x1b8] sm:$0xf]
  %v133 = vld [vmem:[%s1 + $0x1bc] sm:$0xf]
  %v134 = vld [vmem:[%s1 + $0x1c0] sm:$0xf]
  %v135 = vld [vmem:[%s1 + $0x1c4] sm:$0xf]
  %v136 = vld [vmem:[%s1 + $0x1c8] sm:$0xf]
  %v137 = vld [vmem:[%s1 + $0x1cc] sm:$0xf]
  %v138 = vld [vmem:[%s1 + $0x1d0] sm:$0xf]
  %v139 = vld [vmem:[%s1 + $0x1d4] sm:$0xf]
  %v140 = vld [vmem:[%s1 + $0x1d8] sm:$0xf]
  %v141 = vld [vmem:[%s1 + $0x1dc] sm:$0xf]
  %v142 = vld [vmem:[%s1 + $0x1e0] sm:$0xf]
  %v143 = vld [vmem:[%s1 + $0x1e4] sm:$0xf]
  %v144 = vld [vmem:[%s1 + $0x1e8] sm:$0xf]
  %v145 = vld [vmem:[%s1 + $0x1ec] sm:$0xf]
  %v146 = vld [vmem:[%s1 + $0x1f0] sm:$0xf]
  %v147 = vld [vmem:[%s1 + $0x1f4] sm:$0xf]
  %v148 = vld [vmem:[%s1 + $0x1f8] sm:$0xf]
  %v149 = vld [vmem:[%s1 + $0x1fc] sm:$0xf]
  %v150 = vld [vmem:[%s2] sm:$0x1]
  %v152 = vperm.slane %v150, 0
  %v162 = vunpack.c.l.b16 %v14
  %v163 = vunpack.c.h.b16 %v14
  %v164 = vunpack.c.l.b16 %v15
  %v165 = vunpack.c.h.b16 %v15
  %v166 = vunpack.c.l.b16 %v16
  %v167 = vunpack.c.h.b16 %v16
  %v168 = vunpack.c.l.b16 %v17
  %v169 = vunpack.c.h.b16 %v17
  %v170 = vunpack.c.l.b16 %v18
  %v171 = vunpack.c.h.b16 %v18
  %v172 = vunpack.c.l.b16 %v19
  %v173 = vunpack.c.h.b16 %v19
  %v174 = vunpack.c.l.b16 %v20
  %v175 = vunpack.c.h.b16 %v20
  %v176 = vunpack.c.l.b16 %v21
  %v177 = vunpack.c.h.b16 %v21
  %v178 = vpack.c.b16 %v170, %v162
  %v179 = vpack.c.b16 %v171, %v163
  %v180 = vpack.c.b16 %v172, %v164
  %v181 = vpack.c.b16 %v173, %v165
  %v182 = vpack.c.b16 %v174, %v166
  %v183 = vpack.c.b16 %v175, %v167
  %v184 = vpack.c.b16 %v176, %v168
  %v185 = vpack.c.b16 %v177, %v169
  %v322 = vunpack.c.l.b16 %v22
  %v323 = vunpack.c.l.b16 %v23
  %v324 = vunpack.c.l.b16 %v24
  %v325 = vunpack.c.l.b16 %v25
  %v326 = vunpack.c.l.b16 %v26
  %v327 = vunpack.c.l.b16 %v27
  %v328 = vunpack.c.l.b16 %v28
  %v329 = vunpack.c.l.b16 %v29
  %v330 = vunpack.c.l.b16 %v30
  %v331 = vunpack.c.l.b16 %v31
  %v332 = vunpack.c.l.b16 %v32
  %v333 = vunpack.c.l.b16 %v33
  %v334 = vunpack.c.l.b16 %v34
  %v335 = vunpack.c.l.b16 %v35
  %v336 = vunpack.c.l.b16 %v36
  %v337 = vunpack.c.l.b16 %v37
  %v338 = vunpack.c.l.b16 %v38
  %v339 = vunpack.c.l.b16 %v39
  %v340 = vunpack.c.l.b16 %v40
  %v341 = vunpack.c.l.b16 %v41
  %v342 = vunpack.c.l.b16 %v42
  %v343 = vunpack.c.l.b16 %v43
  %v344 = vunpack.c.l.b16 %v44
  %v345 = vunpack.c.l.b16 %v45
  %v346 = vunpack.c.l.b16 %v46
  %v347 = vunpack.c.l.b16 %v47
  %v348 = vunpack.c.l.b16 %v48
  %v349 = vunpack.c.l.b16 %v49
  %v350 = vunpack.c.l.b16 %v50
  %v351 = vunpack.c.l.b16 %v51
  %v352 = vunpack.c.l.b16 %v52
  %v353 = vunpack.c.l.b16 %v53
  %v354 = vunpack.c.l.b16 %v54
  %v355 = vunpack.c.l.b16 %v55
  %v356 = vunpack.c.l.b16 %v56
  %v357 = vunpack.c.l.b16 %v57
  %v358 = vunpack.c.l.b16 %v58
  %v359 = vunpack.c.l.b16 %v59
  %v360 = vunpack.c.l.b16 %v60
  %v361 = vunpack.c.l.b16 %v61
  %v362 = vunpack.c.l.b16 %v62
  %v363 = vunpack.c.l.b16 %v63
  %v364 = vunpack.c.l.b16 %v64
  %v365 = vunpack.c.l.b16 %v65
  %v366 = vunpack.c.l.b16 %v66
  %v367 = vunpack.c.l.b16 %v67
  %v368 = vunpack.c.l.b16 %v68
  %v369 = vunpack.c.l.b16 %v69
  %v370 = vunpack.c.l.b16 %v70
  %v371 = vunpack.c.l.b16 %v71
  %v372 = vunpack.c.l.b16 %v72
  %v373 = vunpack.c.l.b16 %v73
  %v374 = vunpack.c.l.b16 %v74
  %v375 = vunpack.c.l.b16 %v75
  %v376 = vunpack.c.l.b16 %v76
  %v377 = vunpack.c.l.b16 %v77
  %v378 = vunpack.c.l.b16 %v78
  %v379 = vunpack.c.l.b16 %v79
  %v380 = vunpack.c.l.b16 %v80
  %v381 = vunpack.c.l.b16 %v81
  %v382 = vunpack.c.l.b16 %v82
  %v383 = vunpack.c.l.b16 %v83
  %v384 = vunpack.c.l.b16 %v84
  %v385 = vunpack.c.l.b16 %v85
  %v386 = vunpack.c.l.b16 %v86
  %v387 = vunpack.c.l.b16 %v87
  %v388 = vunpack.c.l.b16 %v88
  %v389 = vunpack.c.l.b16 %v89
  %v390 = vunpack.c.l.b16 %v90
  %v391 = vunpack.c.l.b16 %v91
  %v392 = vunpack.c.l.b16 %v92
  %v393 = vunpack.c.l.b16 %v93
  %v394 = vunpack.c.l.b16 %v94
  %v395 = vunpack.c.l.b16 %v95
  %v396 = vunpack.c.l.b16 %v96
  %v397 = vunpack.c.l.b16 %v97
  %v398 = vunpack.c.l.b16 %v98
  %v399 = vunpack.c.l.b16 %v99
  %v400 = vunpack.c.l.b16 %v100
  %v401 = vunpack.c.l.b16 %v101
  %v402 = vunpack.c.l.b16 %v102
  %v403 = vunpack.c.l.b16 %v103
  %v404 = vunpack.c.l.b16 %v104
  %v405 = vunpack.c.l.b16 %v105
  %v406 = vunpack.c.l.b16 %v106
  %v407 = vunpack.c.l.b16 %v107
  %v408 = vunpack.c.l.b16 %v108
  %v409 = vunpack.c.l.b16 %v109
  %v410 = vunpack.c.l.b16 %v110
  %v411 = vunpack.c.l.b16 %v111
  %v412 = vunpack.c.l.b16 %v112
  %v413 = vunpack.c.l.b16 %v113
  %v414 = vunpack.c.l.b16 %v114
  %v415 = vunpack.c.l.b16 %v115
  %v416 = vunpack.c.l.b16 %v116
  %v417 = vunpack.c.l.b16 %v117
  %v418 = vunpack.c.l.b16 %v118
  %v419 = vunpack.c.l.b16 %v119
  %v420 = vunpack.c.l.b16 %v120
  %v421 = vunpack.c.l.b16 %v121
  %v422 = vunpack.c.l.b16 %v122
  %v423 = vunpack.c.l.b16 %v123
  %v424 = vunpack.c.l.b16 %v124
  %v425 = vunpack.c.l.b16 %v125
  %v426 = vunpack.c.l.b16 %v126
  %v427 = vunpack.c.l.b16 %v127
  %v428 = vunpack.c.l.b16 %v128
  %v429 = vunpack.c.l.b16 %v129
  %v430 = vunpack.c.l.b16 %v130
  %v431 = vunpack.c.l.b16 %v131
  %v432 = vunpack.c.l.b16 %v132
  %v433 = vunpack.c.l.b16 %v133
  %v434 = vunpack.c.l.b16 %v134
  %v435 = vunpack.c.l.b16 %v135
  %v436 = vunpack.c.l.b16 %v136
  %v437 = vunpack.c.l.b16 %v137
  %v438 = vunpack.c.l.b16 %v138
  %v439 = vunpack.c.l.b16 %v139
  %v440 = vunpack.c.l.b16 %v140
  %v441 = vunpack.c.l.b16 %v141
  %v442 = vunpack.c.l.b16 %v142
  %v443 = vunpack.c.l.b16 %v143
  %v444 = vunpack.c.l.b16 %v144
  %v445 = vunpack.c.l.b16 %v145
  %v446 = vunpack.c.l.b16 %v146
  %v447 = vunpack.c.l.b16 %v147
  %v448 = vunpack.c.l.b16 %v148
  %v449 = vunpack.c.l.b16 %v149
  %v450 = vpack.c.b16 %v323, %v322
  %v451 = vpack.c.b16 %v325, %v324
  %v452 = vpack.c.b16 %v327, %v326
  %v453 = vpack.c.b16 %v329, %v328
  %v454 = vpack.c.b16 %v331, %v330
  %v455 = vpack.c.b16 %v333, %v332
  %v456 = vpack.c.b16 %v335, %v334
  %v457 = vpack.c.b16 %v337, %v336
  %v458 = vpack.c.b16 %v339, %v338
  %v459 = vpack.c.b16 %v341, %v340
  %v460 = vpack.c.b16 %v343, %v342
  %v461 = vpack.c.b16 %v345, %v344
  %v462 = vpack.c.b16 %v347, %v346
  %v463 = vpack.c.b16 %v349, %v348
  %v464 = vpack.c.b16 %v351, %v350
  %v465 = vpack.c.b16 %v353, %v352
  %v466 = vpack.c.b16 %v355, %v354
  %v467 = vpack.c.b16 %v357, %v356
  %v468 = vpack.c.b16 %v359, %v358
  %v469 = vpack.c.b16 %v361, %v360
  %v470 = vpack.c.b16 %v363, %v362
  %v471 = vpack.c.b16 %v365, %v364
  %v472 = vpack.c.b16 %v367, %v366
  %v473 = vpack.c.b16 %v369, %v368
  %v474 = vpack.c.b16 %v371, %v370
  %v475 = vpack.c.b16 %v373, %v372
  %v476 = vpack.c.b16 %v375, %v374
  %v477 = vpack.c.b16 %v377, %v376
  %v478 = vpack.c.b16 %v379, %v378
  %v479 = vpack.c.b16 %v381, %v380
  %v480 = vpack.c.b16 %v383, %v382
  %v481 = vpack.c.b16 %v385, %v384
  %v482 = vpack.c.b16 %v387, %v386
  %v483 = vpack.c.b16 %v389, %v388
  %v484 = vpack.c.b16 %v391, %v390
  %v485 = vpack.c.b16 %v393, %v392
  %v486 = vpack.c.b16 %v395, %v394
  %v487 = vpack.c.b16 %v397, %v396
  %v488 = vpack.c.b16 %v399, %v398
  %v489 = vpack.c.b16 %v401, %v400
  %v490 = vpack.c.b16 %v403, %v402
  %v491 = vpack.c.b16 %v405, %v404
  %v492 = vpack.c.b16 %v407, %v406
  %v493 = vpack.c.b16 %v409, %v408
  %v494 = vpack.c.b16 %v411, %v410
  %v495 = vpack.c.b16 %v413, %v412
  %v496 = vpack.c.b16 %v415, %v414
  %v497 = vpack.c.b16 %v417, %v416
  %v498 = vpack.c.b16 %v419, %v418
  %v499 = vpack.c.b16 %v421, %v420
  %v500 = vpack.c.b16 %v423, %v422
  %v501 = vpack.c.b16 %v425, %v424
  %v502 = vpack.c.b16 %v427, %v426
  %v503 = vpack.c.b16 %v429, %v428
  %v504 = vpack.c.b16 %v431, %v430
  %v505 = vpack.c.b16 %v433, %v432
  %v506 = vpack.c.b16 %v435, %v434
  %v507 = vpack.c.b16 %v437, %v436
  %v508 = vpack.c.b16 %v439, %v438
  %v509 = vpack.c.b16 %v441, %v440
  %v510 = vpack.c.b16 %v443, %v442
  %v511 = vpack.c.b16 %v445, %v444
  %v512 = vpack.c.b16 %v447, %v446
  %v513 = vpack.c.b16 %v449, %v448
  %578 = vmatpush.bf16.msra.mxu0 %v457
  %579 = vmatpush.bf16.msra.mxu0 %v456
  %580 = vmatpush.bf16.msra.mxu0 %v455
  %581 = vmatpush.bf16.msra.mxu0 %v454
  %582 = vmatpush.bf16.msra.mxu0 %v453
  %583 = vmatpush.bf16.msra.mxu0 %v452
  %584 = vmatpush.bf16.msra.mxu0 %v451
  %585 = vmatpush.bf16.msra.mxu0 %v450
  %586 = vmatmul.bf16.gmra.mxu0 %v178
  %v587 = vpop.f32.mrf.mxu0
  %v588 = vadd.f32 %v152, %v587
  %v589 = vpop.f32.mrf.mxu0
  %v590 = vadd.f32 %v152, %v589
  %591 = vdwg.mxu0
  %592 = vmatpush.bf16.msra.mxu0 %v465
  %593 = vmatpush.bf16.msra.mxu0 %v464
  %594 = vmatpush.bf16.msra.mxu0 %v463
  %595 = vmatpush.bf16.msra.mxu0 %v462
  %596 = vmatpush.bf16.msra.mxu0 %v461
  %597 = vmatpush.bf16.msra.mxu0 %v460
  %598 = vmatpush.bf16.msra.mxu0 %v459
  %599 = vmatpush.bf16.msra.mxu0 %v458
  %600 = vmatmul.bf16.gmra.mxu0 %v179
  %v601 = vpop.f32.mrf.mxu0
  %v602 = vadd.f32 %v588, %v601
  %v603 = vpop.f32.mrf.mxu0
  %v604 = vadd.f32 %v590, %v603
  %605 = vdwg.mxu0
  %606 = vmatpush.bf16.msra.mxu0 %v473
  %607 = vmatpush.bf16.msra.mxu0 %v472
  %608 = vmatpush.bf16.msra.mxu0 %v471
  %609 = vmatpush.bf16.msra.mxu0 %v470
  %610 = vmatpush.bf16.msra.mxu0 %v469
  %611 = vmatpush.bf16.msra.mxu0 %v468
  %612 = vmatpush.bf16.msra.mxu0 %v467
  %613 = vmatpush.bf16.msra.mxu0 %v466
  %614 = vmatmul.bf16.gmra.mxu0 %v180
  %v615 = vpop.f32.mrf.mxu0
  %v616 = vadd.f32 %v602, %v615
  %v617 = vpop.f32.mrf.mxu0
  %v618 = vadd.f32 %v604, %v617
  %619 = vdwg.mxu0
  %620 = vmatpush.bf16.msra.mxu0 %v481
  %621 = vmatpush.bf16.msra.mxu0 %v480
  %622 = vmatpush.bf16.msra.mxu0 %v479
  %623 = vmatpush.bf16.msra.mxu0 %v478
  %624 = vmatpush.bf16.msra.mxu0 %v477
  %625 = vmatpush.bf16.msra.mxu0 %v476
  %626 = vmatpush.bf16.msra.mxu0 %v475
  %627 = vmatpush.bf16.msra.mxu0 %v474
  %628 = vmatmul.bf16.gmra.mxu0 %v181
  %v629 = vpop.f32.mrf.mxu0
  %v630 = vadd.f32 %v616, %v629
  %v631 = vpop.f32.mrf.mxu0
  %v632 = vadd.f32 %v618, %v631
  %633 = vdwg.mxu0
  %634 = vmatpush.bf16.msra.mxu0 %v489
  %635 = vmatpush.bf16.msra.mxu0 %v488
  %636 = vmatpush.bf16.msra.mxu0 %v487
  %637 = vmatpush.bf16.msra.mxu0 %v486
  %638 = vmatpush.bf16.msra.mxu0 %v485
  %639 = vmatpush.bf16.msra.mxu0 %v484
  %640 = vmatpush.bf16.msra.mxu0 %v483
  %641 = vmatpush.bf16.msra.mxu0 %v482
  %642 = vmatmul.bf16.gmra.mxu0 %v182
  %v643 = vpop.f32.mrf.mxu0
  %v644 = vadd.f32 %v630, %v643
  %v645 = vpop.f32.mrf.mxu0
  %v646 = vadd.f32 %v632, %v645
  %647 = vdwg.mxu0
  %648 = vmatpush.bf16.msra.mxu0 %v497
  %649 = vmatpush.bf16.msra.mxu0 %v496
  %650 = vmatpush.bf16.msra.mxu0 %v495
  %651 = vmatpush.bf16.msra.mxu0 %v494
  %652 = vmatpush.bf16.msra.mxu0 %v493
  %653 = vmatpush.bf16.msra.mxu0 %v492
  %654 = vmatpush.bf16.msra.mxu0 %v491
  %655 = vmatpush.bf16.msra.mxu0 %v490
  %656 = vmatmul.bf16.gmra.mxu0 %v183
  %v657 = vpop.f32.mrf.mxu0
  %v658 = vadd.f32 %v644, %v657
  %v659 = vpop.f32.mrf.mxu0
  %v660 = vadd.f32 %v646, %v659
  %661 = vdwg.mxu0
  %662 = vmatpush.bf16.msra.mxu0 %v505
  %663 = vmatpush.bf16.msra.mxu0 %v504
  %664 = vmatpush.bf16.msra.mxu0 %v503
  %665 = vmatpush.bf16.msra.mxu0 %v502
  %666 = vmatpush.bf16.msra.mxu0 %v501
  %667 = vmatpush.bf16.msra.mxu0 %v500
  %668 = vmatpush.bf16.msra.mxu0 %v499
  %669 = vmatpush.bf16.msra.mxu0 %v498
  %670 = vmatmul.bf16.gmra.mxu0 %v184
  %v671 = vpop.f32.mrf.mxu0
  %v672 = vadd.f32 %v658, %v671
  %v673 = vpop.f32.mrf.mxu0
  %v674 = vadd.f32 %v660, %v673
  %675 = vdwg.mxu0
  %676 = vmatpush.bf16.msra.mxu0 %v513
  %677 = vmatpush.bf16.msra.mxu0 %v512
  %678 = vmatpush.bf16.msra.mxu0 %v511
  %679 = vmatpush.bf16.msra.mxu0 %v510
  %680 = vmatpush.bf16.msra.mxu0 %v509
  %681 = vmatpush.bf16.msra.mxu0 %v508
  %682 = vmatpush.bf16.msra.mxu0 %v507
  %683 = vmatpush.bf16.msra.mxu0 %v506
  %684 = vmatmul.bf16.gmra.mxu0 %v185
  %v685 = vpop.f32.mrf.mxu0
  %v686 = vadd.f32 %v672, %v685
  %v687 = vpop.f32.mrf.mxu0
  %v688 = vadd.f32 %v674, %v687
  %689 = vdwg.mxu0
  %690 = vst [vmem:[%s3] sm:$0xff] %v686
  %691 = vst [vmem:[%s3 + $0x8] sm:$0xff] %v688
  // Predicated region
  $region14: #{net_forward.12} parent=0 // pred_check
    _
  $region15: #{net_forward.12} parent=0 // pred_check_branch
    %693 = sbr.rel (0) target = $region17
  $region16: #{net_forward.12} parent=0 // pred_region
    _
  $region17: #{net_forward.12} parent=0 // pred_fallthru
    _
  // Predicated region
  $region18: #{net_forward.12} parent=0 // pred_check
    _
  $region19: #{net_forward.12} parent=0 // pred_check_branch
    %695 = sbr.rel (0) target = $region21
  $region20: #{net_forward.12} parent=0 // pred_region
    _
  $region21: #{net_forward.12} parent=0 // pred_fallthru
    _

// kernel: net_forward.13
$region0: #{net_forward.13}
  #allocation0 [shape = 'u32[]', space=smem, size = 0x4, offset = 0x4, fixed_abs, tag = 'smem constant byte address 0x4 - core index']
  #allocation1 [shape = 'u32[72,128]{1,0:T(1,128)}', space=vmem, size = 0x9000, scoped, tag = 'internal scratch']
  %s0 = inlined_call_operand.vmem [shape: bf16[16,200], index: 0, kind: input, shape index: {}]
  %s1 = inlined_call_operand.vmem [shape: bf16[200,384], index: 1, kind: input, shape index: {}]
  %s2 = inlined_call_operand.vmem [shape: f32[1,384], index: 2, kind: input, shape index: {}]
  %s3 = inlined_call_operand.vmem [shape: bf16[16,384], index: 3, kind: output, shape index: {}]
  %s4 = sld [smem:[#allocation0]]
  $region22: #{net_forward.13} parent=0
    _
  %s6 = ssub.s32 1, %s4
  %s7 = scalar_select 0, %s6, %s4
  // Predicated region
  $region2: #{net_forward.13} parent=0 // pred_check
    _
  $region3: #{net_forward.13} parent=0 // pred_check_branch
    %9 = sbr.rel (0) target = $region5
  $region4: #{net_forward.13} parent=0 // pred_region
    _
  $region5: #{net_forward.13} parent=0 // pred_fallthru
    _
  // Predicated region
  $region6: #{net_forward.13} parent=0 // pred_check
    _
  $region7: #{net_forward.13} parent=0 // pred_check_branch
    %11 = sbr.rel (0) target = $region9
  $region8: #{net_forward.13} parent=0 // pred_region
    _
  $region9: #{net_forward.13} parent=0 // pred_fallthru
    _
  // Predicated region
  $region10: #{net_forward.13} parent=0 // pred_check
    _
  $region11: #{net_forward.13} parent=0 // pred_check_branch
    %13 = sbr.rel (0) target = $region13
  $region12: #{net_forward.13} parent=0 // pred_region
    _
  $region13: #{net_forward.13} parent=0 // pred_fallthru
    _
  %v15 = vld [vmem:[%s0] sm:$0xff]
  %v16 = vld [vmem:[%s0 + $0x8] sm:$0xff]
  %v17 = vld [vmem:[%s1] sm:$0xff]
  %v18 = vld [vmem:[%s1 + $0x8] sm:$0xf]
  %v19 = vld [vmem:[%s1 + $0xc] sm:$0xff]
  %v20 = vld [vmem:[%s1 + $0x14] sm:$0xf]
  %v21 = vld [vmem:[%s1 + $0x18] sm:$0xff]
  %v22 = vld [vmem:[%s1 + $0x20] sm:$0xf]
  %v23 = vld [vmem:[%s1 + $0x24] sm:$0xff]
  %v24 = vld [vmem:[%s1 + $0x2c] sm:$0xf]
  %v25 = vld [vmem:[%s1 + $0x30] sm:$0xff]
  %v26 = vld [vmem:[%s1 + $0x38] sm:$0xf]
  %v27 = vld [vmem:[%s1 + $0x3c] sm:$0xff]
  %v28 = vld [vmem:[%s1 + $0x44] sm:$0xf]
  %v29 = vld [vmem:[%s1 + $0x48] sm:$0xff]
  %v30 = vld [vmem:[%s1 + $0x50] sm:$0xf]
  %v31 = vld [vmem:[%s1 + $0x54] sm:$0xff]
  %v32 = vld [vmem:[%s1 + $0x5c] sm:$0xf]
  %v33 = vld [vmem:[%s1 + $0x60] sm:$0xff]
  %v34 = vld [vmem:[%s1 + $0x68] sm:$0xf]
  %v35 = vld [vmem:[%s1 + $0x6c] sm:$0xff]
  %v36 = vld [vmem:[%s1 + $0x74] sm:$0xf]
  %v37 = vld [vmem:[%s1 + $0x78] sm:$0xff]
  %v38 = vld [vmem:[%s1 + $0x80] sm:$0xf]
  %v39 = vld [vmem:[%s1 + $0x84] sm:$0xff]
  %v40 = vld [vmem:[%s1 + $0x8c] sm:$0xf]
  %v41 = vld [vmem:[%s1 + $0x90] sm:$0xff]
  %v42 = vld [vmem:[%s1 + $0x98] sm:$0xf]
  %v43 = vld [vmem:[%s1 + $0x9c] sm:$0xff]
  %v44 = vld [vmem:[%s1 + $0xa4] sm:$0xf]
  %v45 = vld [vmem:[%s1 + $0xa8] sm:$0xff]
  %v46 = vld [vmem:[%s1 + $0xb0] sm:$0xf]
  %v47 = vld [vmem:[%s1 + $0xb4] sm:$0xff]
  %v48 = vld [vmem:[%s1 + $0xbc] sm:$0xf]
  %v49 = vld [vmem:[%s1 + $0xc0] sm:$0xff]
  %v50 = vld [vmem:[%s1 + $0xc8] sm:$0xf]
  %v51 = vld [vmem:[%s1 + $0xcc] sm:$0xff]
  %v52 = vld [vmem:[%s1 + $0xd4] sm:$0xf]
  %v53 = vld [vmem:[%s1 + $0xd8] sm:$0xff]
  %v54 = vld [vmem:[%s1 + $0xe0] sm:$0xf]
  %v55 = vld [vmem:[%s1 + $0xe4] sm:$0xff]
  %v56 = vld [vmem:[%s1 + $0xec] sm:$0xf]
  %v57 = vld [vmem:[%s1 + $0xf0] sm:$0xff]
  %v58 = vld [vmem:[%s1 + $0xf8] sm:$0xf]
  %v59 = vld [vmem:[%s1 + $0xfc] sm:$0xff]
  %v60 = vld [vmem:[%s1 + $0x104] sm:$0xf]
  %v61 = vld [vmem:[%s1 + $0x108] sm:$0xff]
  %v62 = vld [vmem:[%s1 + $0x110] sm:$0xf]
  %v63 = vld [vmem:[%s1 + $0x114] sm:$0xff]
  %v64 = vld [vmem:[%s1 + $0x11c] sm:$0xf]
  %v65 = vld [vmem:[%s1 + $0x120] sm:$0xff]
  %v66 = vld [vmem:[%s1 + $0x128] sm:$0xf]
  %v67 = vld [vmem:[%s2] sm:$0x7]
  %v69 = vperm.slane %v67, 0
  %v70 = vperm.slane %v67, 1
  %v71 = vperm.slane %v67, 2
  %v77 = vunpack.c.l.b16 %v15
  %v78 = vunpack.c.h.b16 %v15
  %v79 = vunpack.c.l.b16 %v16
  %v80 = vunpack.c.h.b16 %v16
  %v81 = vpack.c.b16 %v79, %v77
  %v82 = vpack.c.b16 %v80, %v78
  %v134 = vunpack.c.l.b16 %v17
  %v135 = vunpack.c.h.b16 %v17
  %v136 = vunpack.c.l.b16 %v18
  %v137 = vunpack.c.l.b16 %v19
  %v138 = vunpack.c.h.b16 %v19
  %v139 = vunpack.c.l.b16 %v20
  %v140 = vunpack.c.l.b16 %v21
  %v141 = vunpack.c.h.b16 %v21
  %v142 = vunpack.c.l.b16 %v22
  %v143 = vunpack.c.l.b16 %v23
  %v144 = vunpack.c.h.b16 %v23
  %v145 = vunpack.c.l.b16 %v24
  %v146 = vunpack.c.l.b16 %v25
  %v147 = vunpack.c.h.b16 %v25
  %v148 = vunpack.c.l.b16 %v26
  %v149 = vunpack.c.l.b16 %v27
  %v150 = vunpack.c.h.b16 %v27
  %v151 = vunpack.c.l.b16 %v28
  %v152 = vunpack.c.l.b16 %v29
  %v153 = vunpack.c.h.b16 %v29
  %v154 = vunpack.c.l.b16 %v30
  %v155 = vunpack.c.l.b16 %v31
  %v156 = vunpack.c.h.b16 %v31
  %v157 = vunpack.c.l.b16 %v32
  %v158 = vunpack.c.l.b16 %v33
  %v159 = vunpack.c.h.b16 %v33
  %v160 = vunpack.c.l.b16 %v34
  %v161 = vunpack.c.l.b16 %v35
  %v162 = vunpack.c.h.b16 %v35
  %v163 = vunpack.c.l.b16 %v36
  %v164 = vunpack.c.l.b16 %v37
  %v165 = vunpack.c.h.b16 %v37
  %v166 = vunpack.c.l.b16 %v38
  %v167 = vunpack.c.l.b16 %v39
  %v168 = vunpack.c.h.b16 %v39
  %v169 = vunpack.c.l.b16 %v40
  %v170 = vunpack.c.l.b16 %v41
  %v171 = vunpack.c.h.b16 %v41
  %v172 = vunpack.c.l.b16 %v42
  %v173 = vunpack.c.l.b16 %v43
  %v174 = vunpack.c.h.b16 %v43
  %v175 = vunpack.c.l.b16 %v44
  %v176 = vunpack.c.l.b16 %v45
  %v177 = vunpack.c.h.b16 %v45
  %v178 = vunpack.c.l.b16 %v46
  %v179 = vunpack.c.l.b16 %v47
  %v180 = vunpack.c.h.b16 %v47
  %v181 = vunpack.c.l.b16 %v48
  %v182 = vunpack.c.l.b16 %v49
  %v183 = vunpack.c.h.b16 %v49
  %v184 = vunpack.c.l.b16 %v50
  %v185 = vunpack.c.l.b16 %v51
  %v186 = vunpack.c.h.b16 %v51
  %v187 = vunpack.c.l.b16 %v52
  %v188 = vunpack.c.l.b16 %v53
  %v189 = vunpack.c.h.b16 %v53
  %v190 = vunpack.c.l.b16 %v54
  %v191 = vunpack.c.l.b16 %v55
  %v192 = vunpack.c.h.b16 %v55
  %v193 = vunpack.c.l.b16 %v56
  %v194 = vunpack.c.l.b16 %v57
  %v195 = vunpack.c.h.b16 %v57
  %v196 = vunpack.c.l.b16 %v58
  %v197 = vunpack.c.l.b16 %v59
  %v198 = vunpack.c.h.b16 %v59
  %v199 = vunpack.c.l.b16 %v60
  %v200 = vunpack.c.l.b16 %v61
  %v201 = vunpack.c.h.b16 %v61
  %v202 = vunpack.c.l.b16 %v62
  %v203 = vunpack.c.l.b16 %v63
  %v204 = vunpack.c.h.b16 %v63
  %v205 = vunpack.c.l.b16 %v64
  %v206 = vunpack.c.l.b16 %v65
  %v207 = vunpack.c.h.b16 %v65
  %v208 = vunpack.c.l.b16 %v66
  %v209 = vpack.c.b16 %v137, %v134
  %v210 = vpack.c.b16 %v138, %v135
  %v211 = vpack.c.b16 %v139, %v136
  %v212 = vpack.c.b16 %v143, %v140
  %v213 = vpack.c.b16 %v144, %v141
  %v214 = vpack.c.b16 %v145, %v142
  %v215 = vpack.c.b16 %v149, %v146
  %v216 = vpack.c.b16 %v150, %v147
  %v217 = vpack.c.b16 %v151, %v148
  %v218 = vpack.c.b16 %v155, %v152
  %v219 = vpack.c.b16 %v156, %v153
  %v220 = vpack.c.b16 %v157, %v154
  %v221 = vpack.c.b16 %v161, %v158
  %v222 = vpack.c.b16 %v162, %v159
  %v223 = vpack.c.b16 %v163, %v160
  %v224 = vpack.c.b16 %v167, %v164
  %v225 = vpack.c.b16 %v168, %v165
  %v226 = vpack.c.b16 %v169, %v166
  %v227 = vpack.c.b16 %v173, %v170
  %v228 = vpack.c.b16 %v174, %v171
  %v229 = vpack.c.b16 %v175, %v172
  %v230 = vpack.c.b16 %v179, %v176
  %v231 = vpack.c.b16 %v180, %v177
  %v232 = vpack.c.b16 %v181, %v178
  %v233 = vpack.c.b16 %v185, %v182
  %v234 = vpack.c.b16 %v186, %v183
  %v235 = vpack.c.b16 %v187, %v184
  %v236 = vpack.c.b16 %v191, %v188
  %v237 = vpack.c.b16 %v192, %v189
  %v238 = vpack.c.b16 %v193, %v190
  %v239 = vpack.c.b16 %v197, %v194
  %v240 = vpack.c.b16 %v198, %v195
  %v241 = vpack.c.b16 %v199, %v196
  %v242 = vpack.c.b16 %v203, %v200
  %v243 = vpack.c.b16 %v204, %v201
  %v244 = vpack.c.b16 %v205, %v202
  %v245 = vpack.c.b16 %v206, %v206
  %v246 = vpack.c.b16 %v207, %v207
  %v247 = vpack.c.b16 %v208, %v208
  %vm284 = vcmask 588800
  %v286 = vsel %vm284, %v82, 0
  %vm288 = vcmask 1043456
  %v290 = vsel %vm288, %v245, 0
  %v293 = vsel %vm288, %v246, 0
  %v296 = vsel %vm288, %v247, 0
  %298 = vmatpush.bf16.msra.mxu0 %v230
  %299 = vmatpush.bf16.msra.mxu0 %v227
  %300 = vmatpush.bf16.msra.mxu0 %v224
  %301 = vmatpush.bf16.msra.mxu0 %v221
  %302 = vmatpush.bf16.msra.mxu0 %v218
  %303 = vmatpush.bf16.msra.mxu0 %v215
  %304 = vmatpush.bf16.msra.mxu0 %v212
  %305 = vmatpush.bf16.msra.mxu0 %v209
  %306 = vmatmul.bf16.gmra.mxu0 %v81
  %v307 = vpop.f32.mrf.mxu0
  %v308 = vadd.f32 %v69, %v307
  %v309 = vpop.f32.mrf.mxu0
  %v310 = vadd.f32 %v69, %v309
  %311 = vdwg.mxu0
  %312 = vmatpush.bf16.msra.mxu0 0
  %313 = vmatpush.bf16.msra.mxu0 0
  %314 = vmatpush.bf16.msra.mxu0 0
  %315 = vmatpush.bf16.msra.mxu0 %v290
  %316 = vmatpush.bf16.msra.mxu0 %v242
  %317 = vmatpush.bf16.msra.mxu0 %v239
  %318 = vmatpush.bf16.msra.mxu0 %v236
  %319 = vmatpush.bf16.msra.mxu0 %v233
  %320 = vmatmul.bf16.gmra.mxu0 %v286
  %v321 = vpop.f32.mrf.mxu0
  %v322 = vadd.f32 %v308, %v321
  %v323 = vpop.f32.mrf.mxu0
  %v324 = vadd.f32 %v310, %v323
  %325 = vdwg.mxu0
  %326 = vmatpush.bf16.msra.mxu0 %v231
  %327 = vmatpush.bf16.msra.mxu0 %v228
  %328 = vmatpush.bf16.msra.mxu0 %v225
  %329 = vmatpush.bf16.msra.mxu0 %v222
  %330 = vmatpush.bf16.msra.mxu0 %v219
  %331 = vmatpush.bf16.msra.mxu0 %v216
  %332 = vmatpush.bf16.msra.mxu0 %v213
  %333 = vmatpush.bf16.msra.mxu0 %v210
  %334 = vmatmul.bf16.gmra.mxu0 %v81
  %v335 = vpop.f32.mrf.mxu0
  %v336 = vadd.f32 %v70, %v335
  %v337 = vpop.f32.mrf.mxu0
  %v338 = vadd.f32 %v70, %v337
  %339 = vdwg.mxu0
  %340 = vmatpush.bf16.msra.mxu0 0
  %341 = vmatpush.bf16.msra.mxu0 0
  %342 = vmatpush.bf16.msra.mxu0 0
  %343 = vmatpush.bf16.msra.mxu0 %v293
  %344 = vmatpush.bf16.msra.mxu0 %v243
  %345 = vmatpush.bf16.msra.mxu0 %v240
  %346 = vmatpush.bf16.msra.mxu0 %v237
  %347 = vmatpush.bf16.msra.mxu0 %v234
  %348 = vmatmul.bf16.gmra.mxu0 %v286
  %v349 = vpop.f32.mrf.mxu0
  %v350 = vadd.f32 %v336, %v349
  %v351 = vpop.f32.mrf.mxu0
  %v352 = vadd.f32 %v338, %v351
  %353 = vdwg.mxu0
  %354 = vmatpush.bf16.msra.mxu0 %v232
  %355 = vmatpush.bf16.msra.mxu0 %v229
  %356 = vmatpush.bf16.msra.mxu0 %v226
  %357 = vmatpush.bf16.msra.mxu0 %v223
  %358 = vmatpush.bf16.msra.mxu0 %v220
  %359 = vmatpush.bf16.msra.mxu0 %v217
  %360 = vmatpush.bf16.msra.mxu0 %v214
  %361 = vmatpush.bf16.msra.mxu0 %v211
  %362 = vmatmul.bf16.gmra.mxu0 %v81
  %v363 = vpop.f32.mrf.mxu0
  %v364 = vadd.f32 %v71, %v363
  %v365 = vpop.f32.mrf.mxu0
  %v366 = vadd.f32 %v71, %v365
  %367 = vdwg.mxu0
  %368 = vmatpush.bf16.msra.mxu0 0
  %369 = vmatpush.bf16.msra.mxu0 0
  %370 = vmatpush.bf16.msra.mxu0 0
  %371 = vmatpush.bf16.msra.mxu0 %v296
  %372 = vmatpush.bf16.msra.mxu0 %v244
  %373 = vmatpush.bf16.msra.mxu0 %v241
  %374 = vmatpush.bf16.msra.mxu0 %v238
  %375 = vmatpush.bf16.msra.mxu0 %v235
  %376 = vmatmul.bf16.gmra.mxu0 %v286
  %v377 = vpop.f32.mrf.mxu0
  %v378 = vadd.f32 %v364, %v377
  %v379 = vpop.f32.mrf.mxu0
  %v380 = vadd.f32 %v366, %v379
  %381 = vdwg.mxu0
  %vm382 = vcmp.ge.f32.partialorder %v322, 0.0
  %vm383 = vcmp.ge.f32.partialorder %v350, 0.0
  %vm384 = vcmp.ge.f32.partialorder %v378, 0.0
  %vm385 = vcmp.ge.f32.partialorder %v324, 0.0
  %vm386 = vcmp.ge.f32.partialorder %v352, 0.0
  %vm387 = vcmp.ge.f32.partialorder %v380, 0.0
  %v388 = vmul.f32 %v322, 0.01
  %v389 = vmul.f32 %v350, 0.01
  %v390 = vmul.f32 %v378, 0.01
  %v391 = vmul.f32 %v324, 0.01
  %v392 = vmul.f32 %v352, 0.01
  %v393 = vmul.f32 %v380, 0.01
  %v394 = vsel %vm382, %v322, %v388
  %v395 = vsel %vm383, %v350, %v389
  %v396 = vsel %vm384, %v378, %v390
  %v397 = vsel %vm385, %v324, %v391
  %v398 = vsel %vm386, %v352, %v392
  %v399 = vsel %vm387, %v380, %v393
  %v400 = vpack.c.bf16 %v395, %v394
  %v401 = vpack.c.bf16 %v396, %v396
  %v402 = vpack.c.bf16 %v398, %v397
  %v403 = vpack.c.bf16 %v399, %v399
  %404 = vst [vmem:[%s3] sm:$0xff] %v400
  %405 = vst [vmem:[%s3 + $0x8] sm:$0xf] %v401
  %406 = vst [vmem:[%s3 + $0xc] sm:$0xff] %v402
  %407 = vst [vmem:[%s3 + $0x14] sm:$0xf] %v403
  // Predicated region
  $region14: #{net_forward.13} parent=0 // pred_check
    _
  $region15: #{net_forward.13} parent=0 // pred_check_branch
    %409 = sbr.rel (0) target = $region17
  $region16: #{net_forward.13} parent=0 // pred_region
    _
  $region17: #{net_forward.13} parent=0 // pred_fallthru
    _
  // Predicated region
  $region18: #{net_forward.13} parent=0 // pred_check
    _
  $region19: #{net_forward.13} parent=0 // pred_check_branch
    %411 = sbr.rel (0) target = $region21
  $region20: #{net_forward.13} parent=0 // pred_region
    _
  $region21: #{net_forward.13} parent=0 // pred_fallthru
    _

// kernel: net_forward.14
$region0: #{net_forward.14}
  #allocation0 [shape = 'u32[]', space=smem, size = 0x4, offset = 0x4, fixed_abs, tag = 'smem constant byte address 0x4 - core index']
  #allocation1 [shape = 'u32[72,128]{1,0:T(1,128)}', space=vmem, size = 0x9000, scoped, tag = 'internal scratch']
  %s0 = inlined_call_operand.vmem [shape: bf16[224,288], index: 0, kind: input, shape index: {}]
  %s1 = inlined_call_operand.vmem [shape: bf16[288,128], index: 1, kind: input, shape index: {}]
  %s2 = inlined_call_operand.vmem [shape: f32[1,128], index: 2, kind: input, shape index: {}]
  %s3 = inlined_call_operand.vmem [shape: bf16[224,128], index: 3, kind: output, shape index: {}]
  %s4 = sld [smem:[#allocation0]]
  $region45: #{net_forward.14} parent=0
    _
  %s6 = ssub.s32 1, %s4
  %s7 = scalar_select 0, %s6, %s4
  loop: start=0, step=1, limit=4
  $region2: #{net_forward.14} parent=0 // loop_pre_header
    _
  $region3: #{net_forward.14} parent=0 // loop_header
    %s9 = sphi 0, %s13
    %p10 = scmp.ge.s32.totalorder %s9, 4
    %s19 = sphi 0, %s21
    %s22 = sphi 0, %s19
    %s23 = sphi 0, %s22
    %s39 = sphi 0, %s23
    %s43 = sphi 0, %s43
    %s45 = sphi 0, %s43
    %s46 = sphi 0, %s45
    %s60 = sphi 0, %s46
    %s64 = sphi 0, %s64
    %s66 = sphi 0, %s64
    %s67 = sphi 0, %s66
    %s81 = sphi 0, %s67
    %s87 = sphi 0, %s89
    %s90 = sphi 0, %s87
    %s91 = sphi 0, %s90
    %s107 = sphi 0, %s91
  $region4: #{net_forward.14} parent=0 // loop_header_branch
    %12 = sbr.rel (%p10) target = $region8
  $region5: #{net_forward.14} parent=0 // loop_body
    %s14 = ssub.s32 %s9, 1
    %s15 = ssub.s32 %s9, 2
    %s16 = sadd.s32 %s9, 1
    %s17 = ssub.s32 %s9, %s16
    %p18 = scmp.eq.s32.totalorder %s17, 0
    %s20 = sadd.s32 %s19, 1
    %s21 = scalar_select %p18, %s19, %s20
    %p24 = pneg %p18
    %p25 = scmp.eq.s32.totalorder %s9, 1
    %p26 = por %p24, %p25
    %p27 = scmp.ne.s32.totalorder %s19, %s22
    %p28 = scmp.eq.s32.totalorder %s9, 0
    %p29 = por %p27, %p28
    %p30 = scmp.ne.s32.totalorder %s19, %s22
    %p31 = scmp.eq.s32.totalorder %s14, 1
    %p32 = por %p30, %p31
    %p33 = scmp.ne.s32.totalorder %s22, %s23
    %p34 = scmp.eq.s32.totalorder %s14, 0
    %p35 = por %p33, %p34
    %p36 = scmp.ne.s32.totalorder %s22, %s23
    %p37 = scmp.eq.s32.totalorder %s15, 1
    %p38 = por %p36, %p37
    %p40 = scmp.ne.s32.totalorder %s23, %s39
    %p41 = scmp.eq.s32.totalorder %s15, 0
    %p42 = por %p40, %p41
    %s44 = sadd.s32 %s43, 1
    %p47 = scmp.eq.s32.totalorder %s9, 1
    %p48 = scmp.ne.s32.totalorder %s43, %s45
    %p49 = scmp.eq.s32.totalorder %s9, 0
    %p50 = por %p48, %p49
    %p51 = scmp.ne.s32.totalorder %s43, %s45
    %p52 = scmp.eq.s32.totalorder %s14, 1
    %p53 = por %p51, %p52
    %p54 = scmp.ne.s32.totalorder %s45, %s46
    %p55 = scmp.eq.s32.totalorder %s14, 0
    %p56 = por %p54, %p55
    %p57 = scmp.ne.s32.totalorder %s45, %s46
    %p58 = scmp.eq.s32.totalorder %s15, 1
    %p59 = por %p57, %p58
    %p61 = scmp.ne.s32.totalorder %s46, %s60
    %p62 = scmp.eq.s32.totalorder %s15, 0
    %p63 = por %p61, %p62
    %s65 = sadd.s32 %s64, 1
    %p68 = scmp.eq.s32.totalorder %s9, 1
    %p69 = scmp.ne.s32.totalorder %s64, %s66
    %p70 = scmp.eq.s32.totalorder %s9, 0
    %p71 = por %p69, %p70
    %p72 = scmp.ne.s32.totalorder %s64, %s66
    %p73 = scmp.eq.s32.totalorder %s14, 1
    %p74 = por %p72, %p73
    %p75 = scmp.ne.s32.totalorder %s66, %s67
    %p76 = scmp.eq.s32.totalorder %s14, 0
    %p77 = por %p75, %p76
    %p78 = scmp.ne.s32.totalorder %s66, %s67
    %p79 = scmp.eq.s32.totalorder %s15, 1
    %p80 = por %p78, %p79
    %p82 = scmp.ne.s32.totalorder %s67, %s81
    %p83 = scmp.eq.s32.totalorder %s15, 0
    %p84 = por %p82, %p83
    %s85 = ssub.s32 %s9, %s16
    %p86 = scmp.eq.s32.totalorder %s85, 0
    %s88 = sadd.s32 %s87, 1
    %s89 = scalar_select %p86, %s87, %s88
    %p92 = pneg %p86
    %p93 = scmp.eq.s32.totalorder %s9, 1
    %p94 = por %p92, %p93
    %p95 = scmp.ne.s32.totalorder %s87, %s90
    %p96 = scmp.eq.s32.totalorder %s9, 0
    %p97 = por %p95, %p96
    %p98 = scmp.ne.s32.totalorder %s87, %s90
    %p99 = scmp.eq.s32.totalorder %s14, 1
    %p100 = por %p98, %p99
    %p101 = scmp.ne.s32.totalorder %s90, %s91
    %p102 = scmp.eq.s32.totalorder %s14, 0
    %p103 = por %p101, %p102
    %p104 = scmp.ne.s32.totalorder %s90, %s91
    %p105 = scmp.eq.s32.totalorder %s15, 1
    %p106 = por %p104, %p105
    %p108 = scmp.ne.s32.totalorder %s91, %s107
    %p109 = scmp.eq.s32.totalorder %s15, 0
    %p110 = por %p108, %p109
    %p111 = scmp.le.s32.totalorder 1, %s9
    %p112 = scmp.lt.s32.totalorder %s9, 3
    %p113 = pnand %p111, %p112
    %p114 = pneg %p113
    // Predicated region
    $region9: #{net_forward.14} parent=5 // pred_check
      _
    $region10: #{net_forward.14} parent=5 // pred_check_branch
      %116 = sbr.rel (%p113) target = $region12
    $region11: #{net_forward.14} parent=5 // pred_region
      %s117 = ssub.s32 %s9, 1
      // Predicated region
      $region13: #{net_forward.14} parent=11 // pred_check
        %p118 = pneg %p56
      $region14: #{net_forward.14} parent=11 // pred_check_branch
        %120 = sbr.rel (%p118) target = $region16
      $region15: #{net_forward.14} parent=11 // pred_region
        _
      $region16: #{net_forward.14} parent=11 // pred_fallthru
        _
      // Predicated region
      $region17: #{net_forward.14} parent=11 // pred_check
        %p121 = pneg %p77
      $region18: #{net_forward.14} parent=11 // pred_check_branch
        %123 = sbr.rel (%p121) target = $region20
      $region19: #{net_forward.14} parent=11 // pred_region
        _
      $region20: #{net_forward.14} parent=11 // pred_fallthru
        _
    $region12: #{net_forward.14} parent=5 // pred_fallthru
      _
    %p124 = scmp.lt.s32.totalorder %s9, 2
    // Predicated region
    $region21: #{net_forward.14} parent=5 // pred_check
      %p125 = pneg %p124
    $region22: #{net_forward.14} parent=5 // pred_check_branch
      %127 = sbr.rel (%p125) target = $region24
    $region23: #{net_forward.14} parent=5 // pred_region
      // Predicated region
      $region25: #{net_forward.14} parent=23 // pred_check
        %p128 = pneg %p29
      $region26: #{net_forward.14} parent=23 // pred_check_branch
        %130 = sbr.rel (%p128) target = $region28
      $region27: #{net_forward.14} parent=23 // pred_region
        %s131 = smul.u32 14, %s9
        %p132 = scmp.lt.s32.totalorder %s131, 27
        %s133 = scalar_select %p132, %s131, 27
        %s134 = smul.addr %s133, 3
        %s135 = smul.addr %s134, 4
        %s136 = scalar_lea.vmem %s0, %s135
        %s137 = smul.u32 14, %s9
      $region28: #{net_forward.14} parent=23 // pred_fallthru
        _
    $region24: #{net_forward.14} parent=5 // pred_fallthru
      _
    %p138 = scmp.le.s32.totalorder 1, %s9
    %p139 = scmp.lt.s32.totalorder %s9, 3
    %p140 = pnand %p138, %p139
    %p141 = pneg %p140
    // Predicated region
    $region29: #{net_forward.14} parent=5 // pred_check
      _
    $region30: #{net_forward.14} parent=5 // pred_check_branch
      %143 = sbr.rel (%p140) target = $region32
    $region31: #{net_forward.14} parent=5 // pred_region
      %s144 = ssub.s32 %s9, 1
      %s145 = smul.u32 14, %s14
      %p146 = scmp.lt.s32.totalorder %s145, 27
      %s147 = scalar_select %p146, %s145, 27
      %s148 = smul.addr %s147, 3
      %s149 = smul.addr %s148, 4
      %s150 = scalar_lea.vmem %s0, %s149
      %p151 = pneg %p35
      %p152 = pneg %p32
      %p153 = pneg %p56
      %p154 = pneg %p53
      %p155 = pneg %p77
      %p156 = pneg %p74
      %p157 = pneg %p103
      %p158 = pneg %p100
      %s159 = smul.u32 14, %s14
      %p160 = scmp.lt.s32.totalorder %s159, 27
      %s161 = scalar_select %p160, %s159, 27
      %s162 = smul.addr %s161, 4
      %s163 = scalar_lea.vmem %s3, %s162
      %s164 = smul.u32 14, %s14
      %p165 = scmp.lt.s32.totalorder %s164, 27
      %s166 = scalar_select %p165, %s164, 27
      %s167 = smul.addr %s166, 3
      %s168 = smul.addr %s167, 4
      %s169 = scalar_lea.vmem %s0, %s168
      %s170 = smul.u32 14, %s14
      %s171 = smul.u32 14, %s14
      %p172 = scmp.lt.s32.totalorder %s171, 27
      %s173 = scalar_select %p172, %s171, 27
      %s174 = smul.addr %s173, 4
      %s175 = scalar_lea.vmem %s3, %s174
      %s176 = smul.u32 14, %s14
      %v178 = vld [vmem:[%s169] sm:$0xff]
      %v179 = vld [vmem:[%s169 + $0x8] sm:$0xf]
      %v180 = vld [vmem:[%s169 + $0xc] sm:$0xff]
      %v181 = vld [vmem:[%s169 + $0x14] sm:$0xf]
      %v182 = vld [vmem:[%s169 + $0x18] sm:$0xff]
      %v183 = vld [vmem:[%s169 + $0x20] sm:$0xf]
      %v184 = vld [vmem:[%s169 + $0x24] sm:$0xff]
      %v185 = vld [vmem:[%s169 + $0x2c] sm:$0xf]
      %v186 = vld [vmem:[%s169 + $0x30] sm:$0xff]
      %v187 = vld [vmem:[%s169 + $0x38] sm:$0xf]
      %v188 = vld [vmem:[%s169 + $0x3c] sm:$0xff]
      %v189 = vld [vmem:[%s169 + $0x44] sm:$0xf]
      %v190 = vld [vmem:[%s169 + $0x48] sm:$0xff]
      %v191 = vld [vmem:[%s169 + $0x50] sm:$0xf]
      %v192 = vld [vmem:[%s169 + $0x54] sm:$0xff]
      %v193 = vld [vmem:[%s169 + $0x5c] sm:$0xf]
      %v194 = vld [vmem:[%s169 + $0x60] sm:$0xff]
      %v195 = vld [vmem:[%s169 + $0x68] sm:$0xf]
      %v196 = vld [vmem:[%s169 + $0x6c] sm:$0xff]
      %v197 = vld [vmem:[%s169 + $0x74] sm:$0xf]
      %v198 = vld [vmem:[%s169 + $0x78] sm:$0xff]
      %v199 = vld [vmem:[%s169 + $0x80] sm:$0xf]
      %v200 = vld [vmem:[%s169 + $0x84] sm:$0xff]
      %v201 = vld [vmem:[%s169 + $0x8c] sm:$0xf]
      %v202 = vld [vmem:[%s169 + $0x90] sm:$0xff]
      %v203 = vld [vmem:[%s169 + $0x98] sm:$0xf]
      %v204 = vld [vmem:[%s169 + $0x9c] sm:$0xff]
      %v205 = vld [vmem:[%s169 + $0xa4] sm:$0xf]
      %v206 = vld [vmem:[%s1] sm:$0xf]
      %v207 = vld [vmem:[%s1 + $0x4] sm:$0xf]
      %v208 = vld [vmem:[%s1 + $0x8] sm:$0xf]
      %v209 = vld [vmem:[%s1 + $0xc] sm:$0xf]
      %v210 = vld [vmem:[%s1 + $0x10] sm:$0xf]
      %v211 = vld [vmem:[%s1 + $0x14] sm:$0xf]
      %v212 = vld [vmem:[%s1 + $0x18] sm:$0xf]
      %v213 = vld [vmem:[%s1 + $0x1c] sm:$0xf]
      %v214 = vld [vmem:[%s1 + $0x20] sm:$0xf]
      %v215 = vld [vmem:[%s1 + $0x24] sm:$0xf]
      %v216 = vld [vmem:[%s1 + $0x28] sm:$0xf]
      %v217 = vld [vmem:[%s1 + $0x2c] sm:$0xf]
      %v218 = vld [vmem:[%s1 + $0x30] sm:$0xf]
      %v219 = vld [vmem:[%s1 + $0x34] sm:$0xf]
      %v220 = vld [vmem:[%s1 + $0x38] sm:$0xf]
      %v221 = vld [vmem:[%s1 + $0x3c] sm:$0xf]
      %v222 = vld [vmem:[%s1 + $0x40] sm:$0xf]
      %v223 = vld [vmem:[%s1 + $0x44] sm:$0xf]
      %v224 = vld [vmem:[%s1 + $0x48] sm:$0xf]
      %v225 = vld [vmem:[%s1 + $0x4c] sm:$0xf]
      %v226 = vld [vmem:[%s1 + $0x50] sm:$0xf]
      %v227 = vld [vmem:[%s1 + $0x54] sm:$0xf]
      %v228 = vld [vmem:[%s1 + $0x58] sm:$0xf]
      %v229 = vld [vmem:[%s1 + $0x5c] sm:$0xf]
      %v230 = vld [vmem:[%s1 + $0x60] sm:$0xf]
      %v231 = vld [vmem:[%s1 + $0x64] sm:$0xf]
      %v232 = vld [vmem:[%s1 + $0x68] sm:$0xf]
      %v233 = vld [vmem:[%s1 + $0x6c] sm:$0xf]
      %v234 = vld [vmem:[%s1 + $0x70] sm:$0xf]
      %v235 = vld [vmem:[%s1 + $0x74] sm:$0xf]
      %v236 = vld [vmem:[%s1 + $0x78] sm:$0xf]
      %v237 = vld [vmem:[%s1 + $0x7c] sm:$0xf]
      %v238 = vld [vmem:[%s1 + $0x80] sm:$0xf]
      %v239 = vld [vmem:[%s1 + $0x84] sm:$0xf]
      %v240 = vld [vmem:[%s1 + $0x88] sm:$0xf]
      %v241 = vld [vmem:[%s1 + $0x8c] sm:$0xf]
      %v242 = vld [vmem:[%s2] sm:$0x1]
      %v244 = vperm.slane %v242, 0
      %v274 = vunpack.c.l.b16 %v178
      %v275 = vunpack.c.h.b16 %v178
      %v276 = vunpack.c.l.b16 %v179
      %v277 = vunpack.c.l.b16 %v180
      %v278 = vunpack.c.h.b16 %v180
      %v279 = vunpack.c.l.b16 %v181
      %v280 = vunpack.c.l.b16 %v182
      %v281 = vunpack.c.h.b16 %v182
      %v282 = vunpack.c.l.b16 %v183
      %v283 = vunpack.c.l.b16 %v184
      %v284 = vunpack.c.h.b16 %v184
      %v285 = vunpack.c.l.b16 %v185
      %v286 = vunpack.c.l.b16 %v186
      %v287 = vunpack.c.h.b16 %v186
      %v288 = vunpack.c.l.b16 %v187
      %v289 = vunpack.c.l.b16 %v188
      %v290 = vunpack.c.h.b16 %v188
      %v291 = vunpack.c.l.b16 %v189
      %v292 = vunpack.c.l.b16 %v190
      %v293 = vunpack.c.h.b16 %v190
      %v294 = vunpack.c.l.b16 %v191
      %v295 = vunpack.c.l.b16 %v192
      %v296 = vunpack.c.h.b16 %v192
      %v297 = vunpack.c.l.b16 %v193
      %v298 = vunpack.c.l.b16 %v194
      %v299 = vunpack.c.h.b16 %v194
      %v300 = vunpack.c.l.b16 %v195
      %v301 = vunpack.c.l.b16 %v196
      %v302 = vunpack.c.h.b16 %v196
      %v303 = vunpack.c.l.b16 %v197
      %v304 = vunpack.c.l.b16 %v198
      %v305 = vunpack.c.h.b16 %v198
      %v306 = vunpack.c.l.b16 %v199
      %v307 = vunpack.c.l.b16 %v200
      %v308 = vunpack.c.h.b16 %v200
      %v309 = vunpack.c.l.b16 %v201
      %v310 = vunpack.c.l.b16 %v202
      %v311 = vunpack.c.h.b16 %v202
      %v312 = vunpack.c.l.b16 %v203
      %v313 = vunpack.c.l.b16 %v204
      %v314 = vunpack.c.h.b16 %v204
      %v315 = vunpack.c.l.b16 %v205
      %v316 = vpack.c.b16 %v277, %v274
      %v317 = vpack.c.b16 %v278, %v275
      %v318 = vpack.c.b16 %v279, %v276
      %v319 = vpack.c.b16 %v283, %v280
      %v320 = vpack.c.b16 %v284, %v281
      %v321 = vpack.c.b16 %v285, %v282
      %v322 = vpack.c.b16 %v289, %v286
      %v323 = vpack.c.b16 %v290, %v287
      %v324 = vpack.c.b16 %v291, %v288
      %v325 = vpack.c.b16 %v295, %v292
      %v326 = vpack.c.b16 %v296, %v293
      %v327 = vpack.c.b16 %v297, %v294
      %v328 = vpack.c.b16 %v301, %v298
      %v329 = vpack.c.b16 %v302, %v299
      %v330 = vpack.c.b16 %v303, %v300
      %v331 = vpack.c.b16 %v307, %v304
      %v332 = vpack.c.b16 %v308, %v305
      %v333 = vpack.c.b16 %v309, %v306
      %v334 = vpack.c.b16 %v313, %v310
      %v335 = vpack.c.b16 %v314, %v311
      %v336 = vpack.c.b16 %v315, %v312
      %v387 = vunpack.c.l.b16 %v206
      %v388 = vunpack.c.l.b16 %v207
      %v389 = vunpack.c.l.b16 %v208
      %v390 = vunpack.c.l.b16 %v209
      %v391 = vunpack.c.l.b16 %v210
      %v392 = vunpack.c.l.b16 %v211
      %v393 = vunpack.c.l.b16 %v212
      %v394 = vunpack.c.l.b16 %v213
      %v395 = vunpack.c.l.b16 %v214
      %v396 = vunpack.c.l.b16 %v215
      %v397 = vunpack.c.l.b16 %v216
      %v398 = vunpack.c.l.b16 %v217
      %v399 = vunpack.c.l.b16 %v218
      %v400 = vunpack.c.l.b16 %v219
      %v401 = vunpack.c.l.b16 %v220
      %v402 = vunpack.c.l.b16 %v221
      %v403 = vunpack.c.l.b16 %v222
      %v404 = vunpack.c.l.b16 %v223
      %v405 = vunpack.c.l.b16 %v224
      %v406 = vunpack.c.l.b16 %v225
      %v407 = vunpack.c.l.b16 %v226
      %v408 = vunpack.c.l.b16 %v227
      %v409 = vunpack.c.l.b16 %v228
      %v410 = vunpack.c.l.b16 %v229
      %v411 = vunpack.c.l.b16 %v230
      %v412 = vunpack.c.l.b16 %v231
      %v413 = vunpack.c.l.b16 %v232
      %v414 = vunpack.c.l.b16 %v233
      %v415 = vunpack.c.l.b16 %v234
      %v416 = vunpack.c.l.b16 %v235
      %v417 = vunpack.c.l.b16 %v236
      %v418 = vunpack.c.l.b16 %v237
      %v419 = vunpack.c.l.b16 %v238
      %v420 = vunpack.c.l.b16 %v239
      %v421 = vunpack.c.l.b16 %v240
      %v422 = vunpack.c.l.b16 %v241
      %v423 = vpack.c.b16 %v388, %v387
      %v424 = vpack.c.b16 %v390, %v389
      %v425 = vpack.c.b16 %v392, %v391
      %v426 = vpack.c.b16 %v394, %v393
      %v427 = vpack.c.b16 %v396, %v395
      %v428 = vpack.c.b16 %v398, %v397
      %v429 = vpack.c.b16 %v400, %v399
      %v430 = vpack.c.b16 %v402, %v401
      %v431 = vpack.c.b16 %v404, %v403
      %v432 = vpack.c.b16 %v406, %v405
      %v433 = vpack.c.b16 %v408, %v407
      %v434 = vpack.c.b16 %v410, %v409
      %v435 = vpack.c.b16 %v412, %v411
      %v436 = vpack.c.b16 %v414, %v413
      %v437 = vpack.c.b16 %v416, %v415
      %v438 = vpack.c.b16 %v418, %v417
      %v439 = vpack.c.b16 %v420, %v419
      %v440 = vpack.c.b16 %v422, %v421
      %vm459 = vcmask 261120
      %v461 = vsel %vm459, %v318, 0
      %v464 = vsel %vm459, %v321, 0
      %v467 = vsel %vm459, %v324, 0
      %v470 = vsel %vm459, %v327, 0
      %v473 = vsel %vm459, %v330, 0
      %v476 = vsel %vm459, %v333, 0
      %v479 = vsel %vm459, %v336, 0
      %481 = vmatpush.bf16.msra.mxu0 %v430
      %482 = vmatpush.bf16.msra.mxu0 %v429
      %483 = vmatpush.bf16.msra.mxu0 %v428
      %484 = vmatpush.bf16.msra.mxu0 %v427
      %485 = vmatpush.bf16.msra.mxu0 %v426
      %486 = vmatpush.bf16.msra.mxu0 %v425
      %487 = vmatpush.bf16.msra.mxu0 %v424
      %488 = vmatpush.bf16.msra.mxu0 %v423
      %489 = vmatmul.bf16.gmra.mxu0 %v316
      %v490 = vpop.f32.mrf.mxu0
      %v491 = vadd.f32 %v244, %v490
      %v492 = vpop.f32.mrf.mxu0
      %v493 = vadd.f32 %v244, %v492
      %494 = vmatmul.bf16.gmra.mxu0 %v319
      %v495 = vpop.f32.mrf.mxu0
      %v496 = vadd.f32 %v244, %v495
      %v497 = vpop.f32.mrf.mxu0
      %v498 = vadd.f32 %v244, %v497
      %499 = vmatmul.bf16.gmra.mxu0 %v322
      %v500 = vpop.f32.mrf.mxu0
      %v501 = vadd.f32 %v244, %v500
      %v502 = vpop.f32.mrf.mxu0
      %v503 = vadd.f32 %v244, %v502
      %504 = vmatmul.bf16.gmra.mxu0 %v325
      %v505 = vpop.f32.mrf.mxu0
      %v506 = vadd.f32 %v244, %v505
      %v507 = vpop.f32.mrf.mxu0
      %v508 = vadd.f32 %v244, %v507
      %509 = vmatmul.bf16.gmra.mxu0 %v328
      %v510 = vpop.f32.mrf.mxu0
      %v511 = vadd.f32 %v244, %v510
      %v512 = vpop.f32.mrf.mxu0
      %v513 = vadd.f32 %v244, %v512
      %514 = vmatmul.bf16.gmra.mxu0 %v331
      %v515 = vpop.f32.mrf.mxu0
      %v516 = vadd.f32 %v244, %v515
      %v517 = vpop.f32.mrf.mxu0
      %v518 = vadd.f32 %v244, %v517
      %519 = vmatmul.bf16.gmra.mxu0 %v334
      %v520 = vpop.f32.mrf.mxu0
      %v521 = vadd.f32 %v244, %v520
      %v522 = vpop.f32.mrf.mxu0
      %v523 = vadd.f32 %v244, %v522
      %524 = vdwg.mxu0
      %525 = vmatpush.bf16.msra.mxu0 %v438
      %526 = vmatpush.bf16.msra.mxu0 %v437
      %527 = vmatpush.bf16.msra.mxu0 %v436
      %528 = vmatpush.bf16.msra.mxu0 %v435
      %529 = vmatpush.bf16.msra.mxu0 %v434
      %530 = vmatpush.bf16.msra.mxu0 %v433
      %531 = vmatpush.bf16.msra.mxu0 %v432
      %532 = vmatpush.bf16.msra.mxu0 %v431
      %533 = vmatmul.bf16.gmra.mxu0 %v317
      %v534 = vpop.f32.mrf.mxu0
      %v535 = vadd.f32 %v491, %v534
      %v536 = vpop.f32.mrf.mxu0
      %v537 = vadd.f32 %v493, %v536
      %538 = vmatmul.bf16.gmra.mxu0 %v320
      %v539 = vpop.f32.mrf.mxu0
      %v540 = vadd.f32 %v496, %v539
      %v541 = vpop.f32.mrf.mxu0
      %v542 = vadd.f32 %v498, %v541
      %543 = vmatmul.bf16.gmra.mxu0 %v323
      %v544 = vpop.f32.mrf.mxu0
      %v545 = vadd.f32 %v501, %v544
      %v546 = vpop.f32.mrf.mxu0
      %v547 = vadd.f32 %v503, %v546
      %548 = vmatmul.bf16.gmra.mxu0 %v326
      %v549 = vpop.f32.mrf.mxu0
      %v550 = vadd.f32 %v506, %v549
      %v551 = vpop.f32.mrf.mxu0
      %v552 = vadd.f32 %v508, %v551
      %553 = vmatmul.bf16.gmra.mxu0 %v329
      %v554 = vpop.f32.mrf.mxu0
      %v555 = vadd.f32 %v511, %v554
      %v556 = vpop.f32.mrf.mxu0
      %v557 = vadd.f32 %v513, %v556
      %558 = vmatmul.bf16.gmra.mxu0 %v332
      %v559 = vpop.f32.mrf.mxu0
      %v560 = vadd.f32 %v516, %v559
      %v561 = vpop.f32.mrf.mxu0
      %v562 = vadd.f32 %v518, %v561
      %563 = vmatmul.bf16.gmra.mxu0 %v335
      %v564 = vpop.f32.mrf.mxu0
      %v565 = vadd.f32 %v521, %v564
      %v566 = vpop.f32.mrf.mxu0
      %v567 = vadd.f32 %v523, %v566
      %568 = vdwg.mxu0
      %569 = vmatpush.bf16.msra.mxu0 0
      %570 = vmatpush.bf16.msra.mxu0 0
      %571 = vmatpush.bf16.msra.mxu0 0
      %572 = vmatpush.bf16.msra.mxu0 0
      %573 = vmatpush.bf16.msra.mxu0 0
      %574 = vmatpush.bf16.msra.mxu0 0
      %575 = vmatpush.bf16.msra.mxu0 %v440
      %576 = vmatpush.bf16.msra.mxu0 %v439
      %577 = vmatmul.bf16.gmra.mxu0 %v461
      %v578 = vpop.f32.mrf.mxu0
      %v579 = vadd.f32 %v535, %v578
      %v580 = vpop.f32.mrf.mxu0
      %v581 = vadd.f32 %v537, %v580
      %582 = vmatmul.bf16.gmra.mxu0 %v464
      %v583 = vpop.f32.mrf.mxu0
      %v584 = vadd.f32 %v540, %v583
      %v585 = vpop.f32.mrf.mxu0
      %v586 = vadd.f32 %v542, %v585
      %587 = vmatmul.bf16.gmra.mxu0 %v467
      %v588 = vpop.f32.mrf.mxu0
      %v589 = vadd.f32 %v545, %v588
      %v590 = vpop.f32.mrf.mxu0
      %v591 = vadd.f32 %v547, %v590
      %592 = vmatmul.bf16.gmra.mxu0 %v470
      %v593 = vpop.f32.mrf.mxu0
      %v594 = vadd.f32 %v550, %v593
      %v595 = vpop.f32.mrf.mxu0
      %v596 = vadd.f32 %v552, %v595
      %597 = vmatmul.bf16.gmra.mxu0 %v473
      %v598 = vpop.f32.mrf.mxu0
      %v599 = vadd.f32 %v555, %v598
      %v600 = vpop.f32.mrf.mxu0
      %v601 = vadd.f32 %v557, %v600
      %602 = vmatmul.bf16.gmra.mxu0 %v476
      %v603 = vpop.f32.mrf.mxu0
      %v604 = vadd.f32 %v560, %v603
      %v605 = vpop.f32.mrf.mxu0
      %v606 = vadd.f32 %v562, %v605
      %607 = vmatmul.bf16.gmra.mxu0 %v479
      %v608 = vpop.f32.mrf.mxu0
      %v609 = vadd.f32 %v565, %v608
      %v610 = vpop.f32.mrf.mxu0
      %v611 = vadd.f32 %v567, %v610
      %612 = vdwg.mxu0
      %vm613 = vcmp.ge.f32.partialorder %v579, 0.0
      %vm614 = vcmp.ge.f32.partialorder %v581, 0.0
      %vm615 = vcmp.ge.f32.partialorder %v584, 0.0
      %vm616 = vcmp.ge.f32.partialorder %v586, 0.0
      %vm617 = vcmp.ge.f32.partialorder %v589, 0.0
      %vm618 = vcmp.ge.f32.partialorder %v591, 0.0
      %vm619 = vcmp.ge.f32.partialorder %v594, 0.0
      %vm620 = vcmp.ge.f32.partialorder %v596, 0.0
      %vm621 = vcmp.ge.f32.partialorder %v599, 0.0
      %vm622 = vcmp.ge.f32.partialorder %v601, 0.0
      %vm623 = vcmp.ge.f32.partialorder %v604, 0.0
      %vm624 = vcmp.ge.f32.partialorder %v606, 0.0
      %vm625 = vcmp.ge.f32.partialorder %v609, 0.0
      %vm626 = vcmp.ge.f32.partialorder %v611, 0.0
      %v627 = vmul.f32 %v579, 0.01
      %v628 = vmul.f32 %v581, 0.01
      %v629 = vmul.f32 %v584, 0.01
      %v630 = vmul.f32 %v586, 0.01
      %v631 = vmul.f32 %v589, 0.01
      %v632 = vmul.f32 %v591, 0.01
      %v633 = vmul.f32 %v594, 0.01
      %v634 = vmul.f32 %v596, 0.01
      %v635 = vmul.f32 %v599, 0.01
      %v636 = vmul.f32 %v601, 0.01
      %v637 = vmul.f32 %v604, 0.01
      %v638 = vmul.f32 %v606, 0.01
      %v639 = vmul.f32 %v609, 0.01
      %v640 = vmul.f32 %v611, 0.01
      %v641 = vsel %vm613, %v579, %v627
      %v642 = vsel %vm614, %v581, %v628
      %v643 = vsel %vm615, %v584, %v629
      %v644 = vsel %vm616, %v586, %v630
      %v645 = vsel %vm617, %v589, %v631
      %v646 = vsel %vm618, %v591, %v632
      %v647 = vsel %vm619, %v594, %v633
      %v648 = vsel %vm620, %v596, %v634
      %v649 = vsel %vm621, %v599, %v635
      %v650 = vsel %vm622, %v601, %v636
      %v651 = vsel %vm623, %v604, %v637
      %v652 = vsel %vm624, %v606, %v638
      %v653 = vsel %vm625, %v609, %v639
      %v654 = vsel %vm626, %v611, %v640
      %v655 = vpack.c.bf16 %v641, %v641
      %v656 = vpack.c.bf16 %v642, %v642
      %v657 = vpack.c.bf16 %v643, %v643
      %v658 = vpack.c.bf16 %v644, %v644
      %v659 = vpack.c.bf16 %v645, %v645
      %v660 = vpack.c.bf16 %v646, %v646
      %v661 = vpack.c.bf16 %v647, %v647
      %v662 = vpack.c.bf16 %v648, %v648
      %v663 = vpack.c.bf16 %v649, %v649
      %v664 = vpack.c.bf16 %v650, %v650
      %v665 = vpack.c.bf16 %v651, %v651
      %v666 = vpack.c.bf16 %v652, %v652
      %v667 = vpack.c.bf16 %v653, %v653
      %v668 = vpack.c.bf16 %v654, %v654
      %669 = vst [vmem:[%s175] sm:$0xf] %v655
      %670 = vst [vmem:[%s175 + $0x4] sm:$0xf] %v656
      %671 = vst [vmem:[%s175 + $0x8] sm:$0xf] %v657
      %672 = vst [vmem:[%s175 + $0xc] sm:$0xf] %v658
      %673 = vst [vmem:[%s175 + $0x10] sm:$0xf] %v659
      %674 = vst [vmem:[%s175 + $0x14] sm:$0xf] %v660
      %675 = vst [vmem:[%s175 + $0x18] sm:$0xf] %v661
      %676 = vst [vmem:[%s175 + $0x1c] sm:$0xf] %v662
      %677 = vst [vmem:[%s175 + $0x20] sm:$0xf] %v663
      %678 = vst [vmem:[%s175 + $0x24] sm:$0xf] %v664
      %679 = vst [vmem:[%s175 + $0x28] sm:$0xf] %v665
      %680 = vst [vmem:[%s175 + $0x2c] sm:$0xf] %v666
      %681 = vst [vmem:[%s175 + $0x30] sm:$0xf] %v667
      %682 = vst [vmem:[%s175 + $0x34] sm:$0xf] %v668
      %s683 = smul.u32 14, %s14
      %p684 = scmp.lt.s32.totalorder %s683, 27
      %s685 = scalar_select %p684, %s683, 27
      %s686 = smul.addr %s685, 4
      %s687 = scalar_lea.vmem %s3, %s686
      // Predicated region
      $region33: #{net_forward.14} parent=31 // pred_check
        %p688 = pneg %p100
      $region34: #{net_forward.14} parent=31 // pred_check_branch
        %690 = sbr.rel (%p688) target = $region36
      $region35: #{net_forward.14} parent=31 // pred_region
        %s691 = smul.u32 14, %s14
      $region36: #{net_forward.14} parent=31 // pred_fallthru
        _
    $region32: #{net_forward.14} parent=5 // pred_fallthru
      _
    %p692 = scmp.le.s32.totalorder 2, %s9
    // Predicated region
    $region37: #{net_forward.14} parent=5 // pred_check
      %p693 = pneg %p692
    $region38: #{net_forward.14} parent=5 // pred_check_branch
      %695 = sbr.rel (%p693) target = $region40
    $region39: #{net_forward.14} parent=5 // pred_region
      %s696 = ssub.s32 %s9, 2
      // Predicated region
      $region41: #{net_forward.14} parent=39 // pred_check
        %p697 = pneg %p106
      $region42: #{net_forward.14} parent=39 // pred_check_branch
        %699 = sbr.rel (%p697) target = $region44
      $region43: #{net_forward.14} parent=39 // pred_region
        %s700 = smul.u32 14, %s15
        %p701 = scmp.lt.s32.totalorder %s700, 27
        %s702 = scalar_select %p701, %s700, 27
        %s703 = smul.addr %s702, 4
        %s704 = scalar_lea.vmem %s3, %s703
      $region44: #{net_forward.14} parent=39 // pred_fallthru
        _
    $region40: #{net_forward.14} parent=5 // pred_fallthru
      _
  $region6: #{net_forward.14} parent=0 // loop_footer
    %s13 = sadd.s32 1, %s9
  $region7: #{net_forward.14} parent=0 // loop_footer_branch
    %8 = sbr.rel target = $region3
  $region8: #{net_forward.14} parent=0 // loop_exit
    _

// kernel: net_forward.15
$region0: #{net_forward.15}
  #allocation0 [shape = 'u32[]', space=smem, size = 0x4, offset = 0x4, fixed_abs, tag = 'smem constant byte address 0x4 - core index']
  #allocation1 [shape = 'u32[72,128]{1,0:T(1,128)}', space=vmem, size = 0x9000, scoped, tag = 'internal scratch']
  %s0 = inlined_call_operand.vmem [shape: bf16[928,144], index: 0, kind: input, shape index: {}]
  %s1 = inlined_call_operand.vmem [shape: bf16[144,128], index: 1, kind: input, shape index: {}]
  %s2 = inlined_call_operand.vmem [shape: f32[1,128], index: 2, kind: input, shape index: {}]
  %s3 = inlined_call_operand.vmem [shape: bf16[928,128], index: 3, kind: output, shape index: {}]
  %s4 = sld [smem:[#allocation0]]
  $region45: #{net_forward.15} parent=0
    _
  %s6 = ssub.s32 1, %s4
  %s7 = scalar_select 0, %s6, %s4
  loop: start=0, step=1, limit=4
  $region2: #{net_forward.15} parent=0 // loop_pre_header
    _
  $region3: #{net_forward.15} parent=0 // loop_header
    %s9 = sphi 0, %s13
    %p10 = scmp.ge.s32.totalorder %s9, 4
    %s19 = sphi 0, %s21
    %s22 = sphi 0, %s19
    %s23 = sphi 0, %s22
    %s39 = sphi 0, %s23
    %s43 = sphi 0, %s43
    %s45 = sphi 0, %s43
    %s46 = sphi 0, %s45
    %s60 = sphi 0, %s46
    %s64 = sphi 0, %s64
    %s66 = sphi 0, %s64
    %s67 = sphi 0, %s66
    %s81 = sphi 0, %s67
    %s87 = sphi 0, %s89
    %s90 = sphi 0, %s87
    %s91 = sphi 0, %s90
    %s107 = sphi 0, %s91
  $region4: #{net_forward.15} parent=0 // loop_header_branch
    %12 = sbr.rel (%p10) target = $region8
  $region5: #{net_forward.15} parent=0 // loop_body
    %s14 = ssub.s32 %s9, 1
    %s15 = ssub.s32 %s9, 2
    %s16 = sadd.s32 %s9, 1
    %s17 = ssub.s32 %s9, %s16
    %p18 = scmp.eq.s32.totalorder %s17, 0
    %s20 = sadd.s32 %s19, 1
    %s21 = scalar_select %p18, %s19, %s20
    %p24 = pneg %p18
    %p25 = scmp.eq.s32.totalorder %s9, 1
    %p26 = por %p24, %p25
    %p27 = scmp.ne.s32.totalorder %s19, %s22
    %p28 = scmp.eq.s32.totalorder %s9, 0
    %p29 = por %p27, %p28
    %p30 = scmp.ne.s32.totalorder %s19, %s22
    %p31 = scmp.eq.s32.totalorder %s14, 1
    %p32 = por %p30, %p31
    %p33 = scmp.ne.s32.totalorder %s22, %s23
    %p34 = scmp.eq.s32.totalorder %s14, 0
    %p35 = por %p33, %p34
    %p36 = scmp.ne.s32.totalorder %s22, %s23
    %p37 = scmp.eq.s32.totalorder %s15, 1
    %p38 = por %p36, %p37
    %p40 = scmp.ne.s32.totalorder %s23, %s39
    %p41 = scmp.eq.s32.totalorder %s15, 0
    %p42 = por %p40, %p41
    %s44 = sadd.s32 %s43, 1
    %p47 = scmp.eq.s32.totalorder %s9, 1
    %p48 = scmp.ne.s32.totalorder %s43, %s45
    %p49 = scmp.eq.s32.totalorder %s9, 0
    %p50 = por %p48, %p49
    %p51 = scmp.ne.s32.totalorder %s43, %s45
    %p52 = scmp.eq.s32.totalorder %s14, 1
    %p53 = por %p51, %p52
    %p54 = scmp.ne.s32.totalorder %s45, %s46
    %p55 = scmp.eq.s32.totalorder %s14, 0
    %p56 = por %p54, %p55
    %p57 = scmp.ne.s32.totalorder %s45, %s46
    %p58 = scmp.eq.s32.totalorder %s15, 1
    %p59 = por %p57, %p58
    %p61 = scmp.ne.s32.totalorder %s46, %s60
    %p62 = scmp.eq.s32.totalorder %s15, 0
    %p63 = por %p61, %p62
    %s65 = sadd.s32 %s64, 1
    %p68 = scmp.eq.s32.totalorder %s9, 1
    %p69 = scmp.ne.s32.totalorder %s64, %s66
    %p70 = scmp.eq.s32.totalorder %s9, 0
    %p71 = por %p69, %p70
    %p72 = scmp.ne.s32.totalorder %s64, %s66
    %p73 = scmp.eq.s32.totalorder %s14, 1
    %p74 = por %p72, %p73
    %p75 = scmp.ne.s32.totalorder %s66, %s67
    %p76 = scmp.eq.s32.totalorder %s14, 0
    %p77 = por %p75, %p76
    %p78 = scmp.ne.s32.totalorder %s66, %s67
    %p79 = scmp.eq.s32.totalorder %s15, 1
    %p80 = por %p78, %p79
    %p82 = scmp.ne.s32.totalorder %s67, %s81
    %p83 = scmp.eq.s32.totalorder %s15, 0
    %p84 = por %p82, %p83
    %s85 = ssub.s32 %s9, %s16
    %p86 = scmp.eq.s32.totalorder %s85, 0
    %s88 = sadd.s32 %s87, 1
    %s89 = scalar_select %p86, %s87, %s88
    %p92 = pneg %p86
    %p93 = scmp.eq.s32.totalorder %s9, 1
    %p94 = por %p92, %p93
    %p95 = scmp.ne.s32.totalorder %s87, %s90
    %p96 = scmp.eq.s32.totalorder %s9, 0
    %p97 = por %p95, %p96
    %p98 = scmp.ne.s32.totalorder %s87, %s90
    %p99 = scmp.eq.s32.totalorder %s14, 1
    %p100 = por %p98, %p99
    %p101 = scmp.ne.s32.totalorder %s90, %s91
    %p102 = scmp.eq.s32.totalorder %s14, 0
    %p103 = por %p101, %p102
    %p104 = scmp.ne.s32.totalorder %s90, %s91
    %p105 = scmp.eq.s32.totalorder %s15, 1
    %p106 = por %p104, %p105
    %p108 = scmp.ne.s32.totalorder %s91, %s107
    %p109 = scmp.eq.s32.totalorder %s15, 0
    %p110 = por %p108, %p109
    %p111 = scmp.le.s32.totalorder 1, %s9
    %p112 = scmp.lt.s32.totalorder %s9, 3
    %p113 = pnand %p111, %p112
    %p114 = pneg %p113
    // Predicated region
    $region9: #{net_forward.15} parent=5 // pred_check
      _
    $region10: #{net_forward.15} parent=5 // pred_check_branch
      %116 = sbr.rel (%p113) target = $region12
    $region11: #{net_forward.15} parent=5 // pred_region
      %s117 = ssub.s32 %s9, 1
      // Predicated region
      $region13: #{net_forward.15} parent=11 // pred_check
        %p118 = pneg %p56
      $region14: #{net_forward.15} parent=11 // pred_check_branch
        %120 = sbr.rel (%p118) target = $region16
      $region15: #{net_forward.15} parent=11 // pred_region
        _
      $region16: #{net_forward.15} parent=11 // pred_fallthru
        _
      // Predicated region
      $region17: #{net_forward.15} parent=11 // pred_check
        %p121 = pneg %p77
      $region18: #{net_forward.15} parent=11 // pred_check_branch
        %123 = sbr.rel (%p121) target = $region20
      $region19: #{net_forward.15} parent=11 // pred_region
        _
      $region20: #{net_forward.15} parent=11 // pred_fallthru
        _
    $region12: #{net_forward.15} parent=5 // pred_fallthru
      _
    %p124 = scmp.lt.s32.totalorder %s9, 2
    // Predicated region
    $region21: #{net_forward.15} parent=5 // pred_check
      %p125 = pneg %p124
    $region22: #{net_forward.15} parent=5 // pred_check_branch
      %127 = sbr.rel (%p125) target = $region24
    $region23: #{net_forward.15} parent=5 // pred_region
      // Predicated region
      $region25: #{net_forward.15} parent=23 // pred_check
        %p128 = pneg %p29
      $region26: #{net_forward.15} parent=23 // pred_check_branch
        %130 = sbr.rel (%p128) target = $region28
      $region27: #{net_forward.15} parent=23 // pred_region
        %s131 = smul.u32 58, %s9
        %p132 = scmp.lt.s32.totalorder %s131, 115
        %s133 = scalar_select %p132, %s131, 115
        %s134 = smul.addr %s133, 2
        %s135 = smul.addr %s134, 4
        %s136 = scalar_lea.vmem %s0, %s135
        %s137 = smul.u32 58, %s9
      $region28: #{net_forward.15} parent=23 // pred_fallthru
        _
    $region24: #{net_forward.15} parent=5 // pred_fallthru
      _
    %p138 = scmp.le.s32.totalorder 1, %s9
    %p139 = scmp.lt.s32.totalorder %s9, 3
    %p140 = pnand %p138, %p139
    %p141 = pneg %p140
    // Predicated region
    $region29: #{net_forward.15} parent=5 // pred_check
      _
    $region30: #{net_forward.15} parent=5 // pred_check_branch
      %143 = sbr.rel (%p140) target = $region32
    $region31: #{net_forward.15} parent=5 // pred_region
      %s144 = ssub.s32 %s9, 1
      %s145 = smul.u32 58, %s14
      %p146 = scmp.lt.s32.totalorder %s145, 115
      %s147 = scalar_select %p146, %s145, 115
      %s148 = smul.addr %s147, 2
      %s149 = smul.addr %s148, 4
      %s150 = scalar_lea.vmem %s0, %s149
      %p151 = pneg %p35
      %p152 = pneg %p32
      %p153 = pneg %p56
      %p154 = pneg %p53
      %p155 = pneg %p77
      %p156 = pneg %p74
      %p157 = pneg %p103
      %p158 = pneg %p100
      %s159 = smul.u32 58, %s14
      %p160 = scmp.lt.s32.totalorder %s159, 115
      %s161 = scalar_select %p160, %s159, 115
      %s162 = smul.addr %s161, 4
      %s163 = scalar_lea.vmem %s3, %s162
      %s164 = smul.u32 58, %s14
      %p165 = scmp.lt.s32.totalorder %s164, 115
      %s166 = scalar_select %p165, %s164, 115
      %s167 = smul.addr %s166, 2
      %s168 = smul.addr %s167, 4
      %s169 = scalar_lea.vmem %s0, %s168
      %s170 = smul.u32 58, %s14
      %s171 = smul.u32 58, %s14
      %p172 = scmp.lt.s32.totalorder %s171, 115
      %s173 = scalar_select %p172, %s171, 115
      %s174 = smul.addr %s173, 4
      %s175 = scalar_lea.vmem %s3, %s174
      %s176 = smul.u32 58, %s14
      %v178 = vld [vmem:[%s169] sm:$0xff]
      %v179 = vld [vmem:[%s169 + $0x8] sm:$0xff]
      %v180 = vld [vmem:[%s169 + $0x10] sm:$0xff]
      %v181 = vld [vmem:[%s169 + $0x18] sm:$0xff]
      %v182 = vld [vmem:[%s169 + $0x20] sm:$0xff]
      %v183 = vld [vmem:[%s169 + $0x28] sm:$0xff]
      %v184 = vld [vmem:[%s169 + $0x30] sm:$0xff]
      %v185 = vld [vmem:[%s169 + $0x38] sm:$0xff]
      %v186 = vld [vmem:[%s169 + $0x40] sm:$0xff]
      %v187 = vld [vmem:[%s169 + $0x48] sm:$0xff]
      %v188 = vld [vmem:[%s169 + $0x50] sm:$0xff]
      %v189 = vld [vmem:[%s169 + $0x58] sm:$0xff]
      %v190 = vld [vmem:[%s169 + $0x60] sm:$0xff]
      %v191 = vld [vmem:[%s169 + $0x68] sm:$0xff]
      %v192 = vld [vmem:[%s169 + $0x70] sm:$0xff]
      %v193 = vld [vmem:[%s169 + $0x78] sm:$0xff]
      %v194 = vld [vmem:[%s169 + $0x80] sm:$0xff]
      %v195 = vld [vmem:[%s169 + $0x88] sm:$0xff]
      %v196 = vld [vmem:[%s169 + $0x90] sm:$0xff]
      %v197 = vld [vmem:[%s169 + $0x98] sm:$0xff]
      %v198 = vld [vmem:[%s169 + $0xa0] sm:$0xff]
      %v199 = vld [vmem:[%s169 + $0xa8] sm:$0xff]
      %v200 = vld [vmem:[%s169 + $0xb0] sm:$0xff]
      %v201 = vld [vmem:[%s169 + $0xb8] sm:$0xff]
      %v202 = vld [vmem:[%s169 + $0xc0] sm:$0xff]
      %v203 = vld [vmem:[%s169 + $0xc8] sm:$0xff]
      %v204 = vld [vmem:[%s169 + $0xd0] sm:$0xff]
      %v205 = vld [vmem:[%s169 + $0xd8] sm:$0xff]
      %v206 = vld [vmem:[%s169 + $0xe0] sm:$0xff]
      %v207 = vld [vmem:[%s169 + $0xe8] sm:$0xff]
      %v208 = vld [vmem:[%s169 + $0xf0] sm:$0xff]
      %v209 = vld [vmem:[%s169 + $0xf8] sm:$0xff]
      %v210 = vld [vmem:[%s169 + $0x100] sm:$0xff]
      %v211 = vld [vmem:[%s169 + $0x108] sm:$0xff]
      %v212 = vld [vmem:[%s169 + $0x110] sm:$0xff]
      %v213 = vld [vmem:[%s169 + $0x118] sm:$0xff]
      %v214 = vld [vmem:[%s169 + $0x120] sm:$0xff]
      %v215 = vld [vmem:[%s169 + $0x128] sm:$0xff]
      %v216 = vld [vmem:[%s169 + $0x130] sm:$0xff]
      %v217 = vld [vmem:[%s169 + $0x138] sm:$0xff]
      %v218 = vld [vmem:[%s169 + $0x140] sm:$0xff]
      %v219 = vld [vmem:[%s169 + $0x148] sm:$0xff]
      %v220 = vld [vmem:[%s169 + $0x150] sm:$0xff]
      %v221 = vld [vmem:[%s169 + $0x158] sm:$0xff]
      %v222 = vld [vmem:[%s169 + $0x160] sm:$0xff]
      %v223 = vld [vmem:[%s169 + $0x168] sm:$0xff]
      %v224 = vld [vmem:[%s169 + $0x170] sm:$0xff]
      %v225 = vld [vmem:[%s169 + $0x178] sm:$0xff]
      %v226 = vld [vmem:[%s169 + $0x180] sm:$0xff]
      %v227 = vld [vmem:[%s169 + $0x188] sm:$0xff]
      %v228 = vld [vmem:[%s169 + $0x190] sm:$0xff]
      %v229 = vld [vmem:[%s169 + $0x198] sm:$0xff]
      %v230 = vld [vmem:[%s169 + $0x1a0] sm:$0xff]
      %v231 = vld [vmem:[%s169 + $0x1a8] sm:$0xff]
      %v232 = vld [vmem:[%s169 + $0x1b0] sm:$0xff]
      %v233 = vld [vmem:[%s169 + $0x1b8] sm:$0xff]
      %v234 = vld [vmem:[%s169 + $0x1c0] sm:$0xff]
      %v235 = vld [vmem:[%s169 + $0x1c8] sm:$0xff]
      %v236 = vld [vmem:[%s1] sm:$0xf]
      %v237 = vld [vmem:[%s1 + $0x4] sm:$0xf]
      %v238 = vld [vmem:[%s1 + $0x8] sm:$0xf]
      %v239 = vld [vmem:[%s1 + $0xc] sm:$0xf]
      %v240 = vld [vmem:[%s1 + $0x10] sm:$0xf]
      %v241 = vld [vmem:[%s1 + $0x14] sm:$0xf]
      %v242 = vld [vmem:[%s1 + $0x18] sm:$0xf]
      %v243 = vld [vmem:[%s1 + $0x1c] sm:$0xf]
      %v244 = vld [vmem:[%s1 + $0x20] sm:$0xf]
      %v245 = vld [vmem:[%s1 + $0x24] sm:$0xf]
      %v246 = vld [vmem:[%s1 + $0x28] sm:$0xf]
      %v247 = vld [vmem:[%s1 + $0x2c] sm:$0xf]
      %v248 = vld [vmem:[%s1 + $0x30] sm:$0xf]
      %v249 = vld [vmem:[%s1 + $0x34] sm:$0xf]
      %v250 = vld [vmem:[%s1 + $0x38] sm:$0xf]
      %v251 = vld [vmem:[%s1 + $0x3c] sm:$0xf]
      %v252 = vld [vmem:[%s1 + $0x40] sm:$0xf]
      %v253 = vld [vmem:[%s1 + $0x44] sm:$0xf]
      %v254 = vld [vmem:[%s2] sm:$0x1]
      %v256 = vperm.slane %v254, 0
      %v316 = vunpack.c.l.b16 %v178
      %v317 = vunpack.c.h.b16 %v178
      %v318 = vunpack.c.l.b16 %v179
      %v319 = vunpack.c.h.b16 %v179
      %v320 = vunpack.c.l.b16 %v180
      %v321 = vunpack.c.h.b16 %v180
      %v322 = vunpack.c.l.b16 %v181
      %v323 = vunpack.c.h.b16 %v181
      %v324 = vunpack.c.l.b16 %v182
      %v325 = vunpack.c.h.b16 %v182
      %v326 = vunpack.c.l.b16 %v183
      %v327 = vunpack.c.h.b16 %v183
      %v328 = vunpack.c.l.b16 %v184
      %v329 = vunpack.c.h.b16 %v184
      %v330 = vunpack.c.l.b16 %v185
      %v331 = vunpack.c.h.b16 %v185
      %v332 = vunpack.c.l.b16 %v186
      %v333 = vunpack.c.h.b16 %v186
      %v334 = vunpack.c.l.b16 %v187
      %v335 = vunpack.c.h.b16 %v187
      %v336 = vunpack.c.l.b16 %v188
      %v337 = vunpack.c.h.b16 %v188
      %v338 = vunpack.c.l.b16 %v189
      %v339 = vunpack.c.h.b16 %v189
      %v340 = vunpack.c.l.b16 %v190
      %v341 = vunpack.c.h.b16 %v190
      %v342 = vunpack.c.l.b16 %v191
      %v343 = vunpack.c.h.b16 %v191
      %v344 = vunpack.c.l.b16 %v192
      %v345 = vunpack.c.h.b16 %v192
      %v346 = vunpack.c.l.b16 %v193
      %v347 = vunpack.c.h.b16 %v193
      %v348 = vunpack.c.l.b16 %v194
      %v349 = vunpack.c.h.b16 %v194
      %v350 = vunpack.c.l.b16 %v195
      %v351 = vunpack.c.h.b16 %v195
      %v352 = vunpack.c.l.b16 %v196
      %v353 = vunpack.c.h.b16 %v196
      %v354 = vunpack.c.l.b16 %v197
      %v355 = vunpack.c.h.b16 %v197
      %v356 = vunpack.c.l.b16 %v198
      %v357 = vunpack.c.h.b16 %v198
      %v358 = vunpack.c.l.b16 %v199
      %v359 = vunpack.c.h.b16 %v199
      %v360 = vunpack.c.l.b16 %v200
      %v361 = vunpack.c.h.b16 %v200
      %v362 = vunpack.c.l.b16 %v201
      %v363 = vunpack.c.h.b16 %v201
      %v364 = vunpack.c.l.b16 %v202
      %v365 = vunpack.c.h.b16 %v202
      %v366 = vunpack.c.l.b16 %v203
      %v367 = vunpack.c.h.b16 %v203
      %v368 = vunpack.c.l.b16 %v204
      %v369 = vunpack.c.h.b16 %v204
      %v370 = vunpack.c.l.b16 %v205
      %v371 = vunpack.c.h.b16 %v205
      %v372 = vunpack.c.l.b16 %v206
      %v373 = vunpack.c.h.b16 %v206
      %v374 = vunpack.c.l.b16 %v207
      %v375 = vunpack.c.h.b16 %v207
      %v376 = vunpack.c.l.b16 %v208
      %v377 = vunpack.c.h.b16 %v208
      %v378 = vunpack.c.l.b16 %v209
      %v379 = vunpack.c.h.b16 %v209
      %v380 = vunpack.c.l.b16 %v210
      %v381 = vunpack.c.h.b16 %v210
      %v382 = vunpack.c.l.b16 %v211
      %v383 = vunpack.c.h.b16 %v211
      %v384 = vunpack.c.l.b16 %v212
      %v385 = vunpack.c.h.b16 %v212
      %v386 = vunpack.c.l.b16 %v213
      %v387 = vunpack.c.h.b16 %v213
      %v388 = vunpack.c.l.b16 %v214
      %v389 = vunpack.c.h.b16 %v214
      %v390 = vunpack.c.l.b16 %v215
      %v391 = vunpack.c.h.b16 %v215
      %v392 = vunpack.c.l.b16 %v216
      %v393 = vunpack.c.h.b16 %v216
      %v394 = vunpack.c.l.b16 %v217
      %v395 = vunpack.c.h.b16 %v217
      %v396 = vunpack.c.l.b16 %v218
      %v397 = vunpack.c.h.b16 %v218
      %v398 = vunpack.c.l.b16 %v219
      %v399 = vunpack.c.h.b16 %v219
      %v400 = vunpack.c.l.b16 %v220
      %v401 = vunpack.c.h.b16 %v220
      %v402 = vunpack.c.l.b16 %v221
      %v403 = vunpack.c.h.b16 %v221
      %v404 = vunpack.c.l.b16 %v222
      %v405 = vunpack.c.h.b16 %v222
      %v406 = vunpack.c.l.b16 %v223
      %v407 = vunpack.c.h.b16 %v223
      %v408 = vunpack.c.l.b16 %v224
      %v409 = vunpack.c.h.b16 %v224
      %v410 = vunpack.c.l.b16 %v225
      %v411 = vunpack.c.h.b16 %v225
      %v412 = vunpack.c.l.b16 %v226
      %v413 = vunpack.c.h.b16 %v226
      %v414 = vunpack.c.l.b16 %v227
      %v415 = vunpack.c.h.b16 %v227
      %v416 = vunpack.c.l.b16 %v228
      %v417 = vunpack.c.h.b16 %v228
      %v418 = vunpack.c.l.b16 %v229
      %v419 = vunpack.c.h.b16 %v229
      %v420 = vunpack.c.l.b16 %v230
      %v421 = vunpack.c.h.b16 %v230
      %v422 = vunpack.c.l.b16 %v231
      %v423 = vunpack.c.h.b16 %v231
      %v424 = vunpack.c.l.b16 %v232
      %v425 = vunpack.c.h.b16 %v232
      %v426 = vunpack.c.l.b16 %v233
      %v427 = vunpack.c.h.b16 %v233
      %v428 = vunpack.c.l.b16 %v234
      %v429 = vunpack.c.h.b16 %v234
      %v430 = vunpack.c.l.b16 %v235
      %v431 = vunpack.c.h.b16 %v235
      %v432 = vpack.c.b16 %v318, %v316
      %v433 = vpack.c.b16 %v319, %v317
      %v434 = vpack.c.b16 %v322, %v320
      %v435 = vpack.c.b16 %v323, %v321
      %v436 = vpack.c.b16 %v326, %v324
      %v437 = vpack.c.b16 %v327, %v325
      %v438 = vpack.c.b16 %v330, %v328
      %v439 = vpack.c.b16 %v331, %v329
      %v440 = vpack.c.b16 %v334, %v332
      %v441 = vpack.c.b16 %v335, %v333
      %v442 = vpack.c.b16 %v338, %v336
      %v443 = vpack.c.b16 %v339, %v337
      %v444 = vpack.c.b16 %v342, %v340
      %v445 = vpack.c.b16 %v343, %v341
      %v446 = vpack.c.b16 %v346, %v344
      %v447 = vpack.c.b16 %v347, %v345
      %v448 = vpack.c.b16 %v350, %v348
      %v449 = vpack.c.b16 %v351, %v349
      %v450 = vpack.c.b16 %v354, %v352
      %v451 = vpack.c.b16 %v355, %v353
      %v452 = vpack.c.b16 %v358, %v356
      %v453 = vpack.c.b16 %v359, %v357
      %v454 = vpack.c.b16 %v362, %v360
      %v455 = vpack.c.b16 %v363, %v361
      %v456 = vpack.c.b16 %v366, %v364
      %v457 = vpack.c.b16 %v367, %v365
      %v458 = vpack.c.b16 %v370, %v368
      %v459 = vpack.c.b16 %v371, %v369
      %v460 = vpack.c.b16 %v374, %v372
      %v461 = vpack.c.b16 %v375, %v373
      %v462 = vpack.c.b16 %v378, %v376
      %v463 = vpack.c.b16 %v379, %v377
      %v464 = vpack.c.b16 %v382, %v380
      %v465 = vpack.c.b16 %v383, %v381
      %v466 = vpack.c.b16 %v386, %v384
      %v467 = vpack.c.b16 %v387, %v385
      %v468 = vpack.c.b16 %v390, %v388
      %v469 = vpack.c.b16 %v391, %v389
      %v470 = vpack.c.b16 %v394, %v392
      %v471 = vpack.c.b16 %v395, %v393
      %v472 = vpack.c.b16 %v398, %v396
      %v473 = vpack.c.b16 %v399, %v397
      %v474 = vpack.c.b16 %v402, %v400
      %v475 = vpack.c.b16 %v403, %v401
      %v476 = vpack.c.b16 %v406, %v404
      %v477 = vpack.c.b16 %v407, %v405
      %v478 = vpack.c.b16 %v410, %v408
      %v479 = vpack.c.b16 %v411, %v409
      %v480 = vpack.c.b16 %v414, %v412
      %v481 = vpack.c.b16 %v415, %v413
      %v482 = vpack.c.b16 %v418, %v416
      %v483 = vpack.c.b16 %v419, %v417
      %v484 = vpack.c.b16 %v422, %v420
      %v485 = vpack.c.b16 %v423, %v421
      %v486 = vpack.c.b16 %v426, %v424
      %v487 = vpack.c.b16 %v427, %v425
      %v488 = vpack.c.b16 %v430, %v428
      %v489 = vpack.c.b16 %v431, %v429
      %v537 = vunpack.c.l.b16 %v236
      %v538 = vunpack.c.l.b16 %v237
      %v539 = vunpack.c.l.b16 %v238
      %v540 = vunpack.c.l.b16 %v239
      %v541 = vunpack.c.l.b16 %v240
      %v542 = vunpack.c.l.b16 %v241
      %v543 = vunpack.c.l.b16 %v242
      %v544 = vunpack.c.l.b16 %v243
      %v545 = vunpack.c.l.b16 %v244
      %v546 = vunpack.c.l.b16 %v245
      %v547 = vunpack.c.l.b16 %v246
      %v548 = vunpack.c.l.b16 %v247
      %v549 = vunpack.c.l.b16 %v248
      %v550 = vunpack.c.l.b16 %v249
      %v551 = vunpack.c.l.b16 %v250
      %v552 = vunpack.c.l.b16 %v251
      %v553 = vunpack.c.l.b16 %v252
      %v554 = vunpack.c.l.b16 %v253
      %v555 = vpack.c.b16 %v538, %v537
      %v556 = vpack.c.b16 %v540, %v539
      %v557 = vpack.c.b16 %v542, %v541
      %v558 = vpack.c.b16 %v544, %v543
      %v559 = vpack.c.b16 %v546, %v545
      %v560 = vpack.c.b16 %v548, %v547
      %v561 = vpack.c.b16 %v550, %v549
      %v562 = vpack.c.b16 %v552, %v551
      %v563 = vpack.c.b16 %v554, %v553
      %vm573 = vcmask 130048
      %v575 = vsel %vm573, %v433, 0
      %v578 = vsel %vm573, %v435, 0
      %v581 = vsel %vm573, %v437, 0
      %v584 = vsel %vm573, %v439, 0
      %v587 = vsel %vm573, %v441, 0
      %v590 = vsel %vm573, %v443, 0
      %v593 = vsel %vm573, %v445, 0
      %v596 = vsel %vm573, %v447, 0
      %v599 = vsel %vm573, %v449, 0
      %v602 = vsel %vm573, %v451, 0
      %v605 = vsel %vm573, %v453, 0
      %v608 = vsel %vm573, %v455, 0
      %v611 = vsel %vm573, %v457, 0
      %v614 = vsel %vm573, %v459, 0
      %v617 = vsel %vm573, %v461, 0
      %v620 = vsel %vm573, %v463, 0
      %v623 = vsel %vm573, %v465, 0
      %v626 = vsel %vm573, %v467, 0
      %v629 = vsel %vm573, %v469, 0
      %v632 = vsel %vm573, %v471, 0
      %v635 = vsel %vm573, %v473, 0
      %v638 = vsel %vm573, %v475, 0
      %v641 = vsel %vm573, %v477, 0
      %v644 = vsel %vm573, %v479, 0
      %v647 = vsel %vm573, %v481, 0
      %v650 = vsel %vm573, %v483, 0
      %v653 = vsel %vm573, %v485, 0
      %v656 = vsel %vm573, %v487, 0
      %v659 = vsel %vm573, %v489, 0
      %661 = vmatpush.bf16.msra.mxu0 %v562
      %662 = vmatpush.bf16.msra.mxu0 %v561
      %663 = vmatpush.bf16.msra.mxu0 %v560
      %664 = vmatpush.bf16.msra.mxu0 %v559
      %665 = vmatpush.bf16.msra.mxu0 %v558
      %666 = vmatpush.bf16.msra.mxu0 %v557
      %667 = vmatpush.bf16.msra.mxu0 %v556
      %668 = vmatpush.bf16.msra.mxu0 %v555
      %669 = vmatmul.bf16.gmra.mxu0 %v432
      %v670 = vpop.f32.mrf.mxu0
      %v671 = vadd.f32 %v256, %v670
      %v672 = vpop.f32.mrf.mxu0
      %v673 = vadd.f32 %v256, %v672
      %674 = vmatmul.bf16.gmra.mxu0 %v434
      %v675 = vpop.f32.mrf.mxu0
      %v676 = vadd.f32 %v256, %v675
      %v677 = vpop.f32.mrf.mxu0
      %v678 = vadd.f32 %v256, %v677
      %679 = vmatmul.bf16.gmra.mxu0 %v436
      %v680 = vpop.f32.mrf.mxu0
      %v681 = vadd.f32 %v256, %v680
      %v682 = vpop.f32.mrf.mxu0
      %v683 = vadd.f32 %v256, %v682
      %684 = vmatmul.bf16.gmra.mxu0 %v438
      %v685 = vpop.f32.mrf.mxu0
      %v686 = vadd.f32 %v256, %v685
      %v687 = vpop.f32.mrf.mxu0
      %v688 = vadd.f32 %v256, %v687
      %689 = vmatmul.bf16.gmra.mxu0 %v440
      %v690 = vpop.f32.mrf.mxu0
      %v691 = vadd.f32 %v256, %v690
      %v692 = vpop.f32.mrf.mxu0
      %v693 = vadd.f32 %v256, %v692
      %694 = vmatmul.bf16.gmra.mxu0 %v442
      %v695 = vpop.f32.mrf.mxu0
      %v696 = vadd.f32 %v256, %v695
      %v697 = vpop.f32.mrf.mxu0
      %v698 = vadd.f32 %v256, %v697
      %699 = vmatmul.bf16.gmra.mxu0 %v444
      %v700 = vpop.f32.mrf.mxu0
      %v701 = vadd.f32 %v256, %v700
      %v702 = vpop.f32.mrf.mxu0
      %v703 = vadd.f32 %v256, %v702
      %704 = vmatmul.bf16.gmra.mxu0 %v446
      %v705 = vpop.f32.mrf.mxu0
      %v706 = vadd.f32 %v256, %v705
      %v707 = vpop.f32.mrf.mxu0
      %v708 = vadd.f32 %v256, %v707
      %709 = vmatmul.bf16.gmra.mxu0 %v448
      %v710 = vpop.f32.mrf.mxu0
      %v711 = vadd.f32 %v256, %v710
      %v712 = vpop.f32.mrf.mxu0
      %v713 = vadd.f32 %v256, %v712
      %714 = vmatmul.bf16.gmra.mxu0 %v450
      %v715 = vpop.f32.mrf.mxu0
      %v716 = vadd.f32 %v256, %v715
      %v717 = vpop.f32.mrf.mxu0
      %v718 = vadd.f32 %v256, %v717
      %719 = vmatmul.bf16.gmra.mxu0 %v452
      %v720 = vpop.f32.mrf.mxu0
      %v721 = vadd.f32 %v256, %v720
      %v722 = vpop.f32.mrf.mxu0
      %v723 = vadd.f32 %v256, %v722
      %724 = vmatmul.bf16.gmra.mxu0 %v454
      %v725 = vpop.f32.mrf.mxu0
      %v726 = vadd.f32 %v256, %v725
      %v727 = vpop.f32.mrf.mxu0
      %v728 = vadd.f32 %v256, %v727
      %729 = vmatmul.bf16.gmra.mxu0 %v456
      %v730 = vpop.f32.mrf.mxu0
      %v731 = vadd.f32 %v256, %v730
      %v732 = vpop.f32.mrf.mxu0
      %v733 = vadd.f32 %v256, %v732
      %734 = vmatmul.bf16.gmra.mxu0 %v458
      %v735 = vpop.f32.mrf.mxu0
      %v736 = vadd.f32 %v256, %v735
      %v737 = vpop.f32.mrf.mxu0
      %v738 = vadd.f32 %v256, %v737
      %739 = vmatmul.bf16.gmra.mxu0 %v460
      %v740 = vpop.f32.mrf.mxu0
      %v741 = vadd.f32 %v256, %v740
      %v742 = vpop.f32.mrf.mxu0
      %v743 = vadd.f32 %v256, %v742
      %744 = vmatmul.bf16.gmra.mxu0 %v462
      %v745 = vpop.f32.mrf.mxu0
      %v746 = vadd.f32 %v256, %v745
      %v747 = vpop.f32.mrf.mxu0
      %v748 = vadd.f32 %v256, %v747
      %749 = vmatmul.bf16.gmra.mxu0 %v464
      %v750 = vpop.f32.mrf.mxu0
      %v751 = vadd.f32 %v256, %v750
      %v752 = vpop.f32.mrf.mxu0
      %v753 = vadd.f32 %v256, %v752
      %754 = vmatmul.bf16.gmra.mxu0 %v466
      %v755 = vpop.f32.mrf.mxu0
      %v756 = vadd.f32 %v256, %v755
      %v757 = vpop.f32.mrf.mxu0
      %v758 = vadd.f32 %v256, %v757
      %759 = vmatmul.bf16.gmra.mxu0 %v468
      %v760 = vpop.f32.mrf.mxu0
      %v761 = vadd.f32 %v256, %v760
      %v762 = vpop.f32.mrf.mxu0
      %v763 = vadd.f32 %v256, %v762
      %764 = vmatmul.bf16.gmra.mxu0 %v470
      %v765 = vpop.f32.mrf.mxu0
      %v766 = vadd.f32 %v256, %v765
      %v767 = vpop.f32.mrf.mxu0
      %v768 = vadd.f32 %v256, %v767
      %769 = vmatmul.bf16.gmra.mxu0 %v472
      %v770 = vpop.f32.mrf.mxu0
      %v771 = vadd.f32 %v256, %v770
      %v772 = vpop.f32.mrf.mxu0
      %v773 = vadd.f32 %v256, %v772
      %774 = vmatmul.bf16.gmra.mxu0 %v474
      %v775 = vpop.f32.mrf.mxu0
      %v776 = vadd.f32 %v256, %v775
      %v777 = vpop.f32.mrf.mxu0
      %v778 = vadd.f32 %v256, %v777
      %779 = vmatmul.bf16.gmra.mxu0 %v476
      %v780 = vpop.f32.mrf.mxu0
      %v781 = vadd.f32 %v256, %v780
      %v782 = vpop.f32.mrf.mxu0
      %v783 = vadd.f32 %v256, %v782
      %784 = vmatmul.bf16.gmra.mxu0 %v478
      %v785 = vpop.f32.mrf.mxu0
      %v786 = vadd.f32 %v256, %v785
      %v787 = vpop.f32.mrf.mxu0
      %v788 = vadd.f32 %v256, %v787
      %789 = vmatmul.bf16.gmra.mxu0 %v480
      %v790 = vpop.f32.mrf.mxu0
      %v791 = vadd.f32 %v256, %v790
      %v792 = vpop.f32.mrf.mxu0
      %v793 = vadd.f32 %v256, %v792
      %794 = vmatmul.bf16.gmra.mxu0 %v482
      %v795 = vpop.f32.mrf.mxu0
      %v796 = vadd.f32 %v256, %v795
      %v797 = vpop.f32.mrf.mxu0
      %v798 = vadd.f32 %v256, %v797
      %799 = vmatmul.bf16.gmra.mxu0 %v484
      %v800 = vpop.f32.mrf.mxu0
      %v801 = vadd.f32 %v256, %v800
      %v802 = vpop.f32.mrf.mxu0
      %v803 = vadd.f32 %v256, %v802
      %804 = vmatmul.bf16.gmra.mxu0 %v486
      %v805 = vpop.f32.mrf.mxu0
      %v806 = vadd.f32 %v256, %v805
      %v807 = vpop.f32.mrf.mxu0
      %v808 = vadd.f32 %v256, %v807
      %809 = vmatmul.bf16.gmra.mxu0 %v488
      %v810 = vpop.f32.mrf.mxu0
      %v811 = vadd.f32 %v256, %v810
      %v812 = vpop.f32.mrf.mxu0
      %v813 = vadd.f32 %v256, %v812
      %814 = vdwg.mxu0
      %815 = vmatpush.bf16.msra.mxu0 0
      %816 = vmatpush.bf16.msra.mxu0 0
      %817 = vmatpush.bf16.msra.mxu0 0
      %818 = vmatpush.bf16.msra.mxu0 0
      %819 = vmatpush.bf16.msra.mxu0 0
      %820 = vmatpush.bf16.msra.mxu0 0
      %821 = vmatpush.bf16.msra.mxu0 0
      %822 = vmatpush.bf16.msra.mxu0 %v563
      %823 = vmatmul.bf16.gmra.mxu0 %v575
      %v824 = vpop.f32.mrf.mxu0
      %v825 = vadd.f32 %v671, %v824
      %v826 = vpop.f32.mrf.mxu0
      %v827 = vadd.f32 %v673, %v826
      %828 = vmatmul.bf16.gmra.mxu0 %v578
      %v829 = vpop.f32.mrf.mxu0
      %v830 = vadd.f32 %v676, %v829
      %v831 = vpop.f32.mrf.mxu0
      %v832 = vadd.f32 %v678, %v831
      %833 = vmatmul.bf16.gmra.mxu0 %v581
      %v834 = vpop.f32.mrf.mxu0
      %v835 = vadd.f32 %v681, %v834
      %v836 = vpop.f32.mrf.mxu0
      %v837 = vadd.f32 %v683, %v836
      %838 = vmatmul.bf16.gmra.mxu0 %v584
      %v839 = vpop.f32.mrf.mxu0
      %v840 = vadd.f32 %v686, %v839
      %v841 = vpop.f32.mrf.mxu0
      %v842 = vadd.f32 %v688, %v841
      %843 = vmatmul.bf16.gmra.mxu0 %v587
      %v844 = vpop.f32.mrf.mxu0
      %v845 = vadd.f32 %v691, %v844
      %v846 = vpop.f32.mrf.mxu0
      %v847 = vadd.f32 %v693, %v846
      %848 = vmatmul.bf16.gmra.mxu0 %v590
      %v849 = vpop.f32.mrf.mxu0
      %v850 = vadd.f32 %v696, %v849
      %v851 = vpop.f32.mrf.mxu0
      %v852 = vadd.f32 %v698, %v851
      %853 = vmatmul.bf16.gmra.mxu0 %v593
      %v854 = vpop.f32.mrf.mxu0
      %v855 = vadd.f32 %v701, %v854
      %v856 = vpop.f32.mrf.mxu0
      %v857 = vadd.f32 %v703, %v856
      %858 = vmatmul.bf16.gmra.mxu0 %v596
      %v859 = vpop.f32.mrf.mxu0
      %v860 = vadd.f32 %v706, %v859
      %v861 = vpop.f32.mrf.mxu0
      %v862 = vadd.f32 %v708, %v861
      %863 = vmatmul.bf16.gmra.mxu0 %v599
      %v864 = vpop.f32.mrf.mxu0
      %v865 = vadd.f32 %v711, %v864
      %v866 = vpop.f32.mrf.mxu0
      %v867 = vadd.f32 %v713, %v866
      %868 = vmatmul.bf16.gmra.mxu0 %v602
      %v869 = vpop.f32.mrf.mxu0
      %v870 = vadd.f32 %v716, %v869
      %v871 = vpop.f32.mrf.mxu0
      %v872 = vadd.f32 %v718, %v871
      %873 = vmatmul.bf16.gmra.mxu0 %v605
      %v874 = vpop.f32.mrf.mxu0
      %v875 = vadd.f32 %v721, %v874
      %v876 = vpop.f32.mrf.mxu0
      %v877 = vadd.f32 %v723, %v876
      %878 = vmatmul.bf16.gmra.mxu0 %v608
      %v879 = vpop.f32.mrf.mxu0
      %v880 = vadd.f32 %v726, %v879
      %v881 = vpop.f32.mrf.mxu0
      %v882 = vadd.f32 %v728, %v881
      %883 = vmatmul.bf16.gmra.mxu0 %v611
      %v884 = vpop.f32.mrf.mxu0
      %v885 = vadd.f32 %v731, %v884
      %v886 = vpop.f32.mrf.mxu0
      %v887 = vadd.f32 %v733, %v886
      %888 = vmatmul.bf16.gmra.mxu0 %v614
      %v889 = vpop.f32.mrf.mxu0
      %v890 = vadd.f32 %v736, %v889
      %v891 = vpop.f32.mrf.mxu0
      %v892 = vadd.f32 %v738, %v891
      %893 = vmatmul.bf16.gmra.mxu0 %v617
      %v894 = vpop.f32.mrf.mxu0
      %v895 = vadd.f32 %v741, %v894
      %v896 = vpop.f32.mrf.mxu0
      %v897 = vadd.f32 %v743, %v896
      %898 = vmatmul.bf16.gmra.mxu0 %v620
      %v899 = vpop.f32.mrf.mxu0
      %v900 = vadd.f32 %v746, %v899
      %v901 = vpop.f32.mrf.mxu0
      %v902 = vadd.f32 %v748, %v901
      %903 = vmatmul.bf16.gmra.mxu0 %v623
      %v904 = vpop.f32.mrf.mxu0
      %v905 = vadd.f32 %v751, %v904
      %v906 = vpop.f32.mrf.mxu0
      %v907 = vadd.f32 %v753, %v906
      %908 = vmatmul.bf16.gmra.mxu0 %v626
      %v909 = vpop.f32.mrf.mxu0
      %v910 = vadd.f32 %v756, %v909
      %v911 = vpop.f32.mrf.mxu0
      %v912 = vadd.f32 %v758, %v911
      %913 = vmatmul.bf16.gmra.mxu0 %v629
      %v914 = vpop.f32.mrf.mxu0
      %v915 = vadd.f32 %v761, %v914
      %v916 = vpop.f32.mrf.mxu0
      %v917 = vadd.f32 %v763, %v916
      %918 = vmatmul.bf16.gmra.mxu0 %v632
      %v919 = vpop.f32.mrf.mxu0
      %v920 = vadd.f32 %v766, %v919
      %v921 = vpop.f32.mrf.mxu0
      %v922 = vadd.f32 %v768, %v921
      %923 = vmatmul.bf16.gmra.mxu0 %v635
      %v924 = vpop.f32.mrf.mxu0
      %v925 = vadd.f32 %v771, %v924
      %v926 = vpop.f32.mrf.mxu0
      %v927 = vadd.f32 %v773, %v926
      %928 = vmatmul.bf16.gmra.mxu0 %v638
      %v929 = vpop.f32.mrf.mxu0
      %v930 = vadd.f32 %v776, %v929
      %v931 = vpop.f32.mrf.mxu0
      %v932 = vadd.f32 %v778, %v931
      %933 = vmatmul.bf16.gmra.mxu0 %v641
      %v934 = vpop.f32.mrf.mxu0
      %v935 = vadd.f32 %v781, %v934
      %v936 = vpop.f32.mrf.mxu0
      %v937 = vadd.f32 %v783, %v936
      %938 = vmatmul.bf16.gmra.mxu0 %v644
      %v939 = vpop.f32.mrf.mxu0
      %v940 = vadd.f32 %v786, %v939
      %v941 = vpop.f32.mrf.mxu0
      %v942 = vadd.f32 %v788, %v941
      %943 = vmatmul.bf16.gmra.mxu0 %v647
      %v944 = vpop.f32.mrf.mxu0
      %v945 = vadd.f32 %v791, %v944
      %v946 = vpop.f32.mrf.mxu0
      %v947 = vadd.f32 %v793, %v946
      %948 = vmatmul.bf16.gmra.mxu0 %v650
      %v949 = vpop.f32.mrf.mxu0
      %v950 = vadd.f32 %v796, %v949
      %v951 = vpop.f32.mrf.mxu0
      %v952 = vadd.f32 %v798, %v951
      %953 = vmatmul.bf16.gmra.mxu0 %v653
      %v954 = vpop.f32.mrf.mxu0
      %v955 = vadd.f32 %v801, %v954
      %v956 = vpop.f32.mrf.mxu0
      %v957 = vadd.f32 %v803, %v956
      %958 = vmatmul.bf16.gmra.mxu0 %v656
      %v959 = vpop.f32.mrf.mxu0
      %v960 = vadd.f32 %v806, %v959
      %v961 = vpop.f32.mrf.mxu0
      %v962 = vadd.f32 %v808, %v961
      %963 = vmatmul.bf16.gmra.mxu0 %v659
      %v964 = vpop.f32.mrf.mxu0
      %v965 = vadd.f32 %v811, %v964
      %v966 = vpop.f32.mrf.mxu0
      %v967 = vadd.f32 %v813, %v966
      %968 = vdwg.mxu0
      %vm969 = vcmp.ge.f32.partialorder %v825, 0.0
      %vm970 = vcmp.ge.f32.partialorder %v827, 0.0
      %vm971 = vcmp.ge.f32.partialorder %v830, 0.0
      %vm972 = vcmp.ge.f32.partialorder %v832, 0.0
      %vm973 = vcmp.ge.f32.partialorder %v835, 0.0
      %vm974 = vcmp.ge.f32.partialorder %v837, 0.0
      %vm975 = vcmp.ge.f32.partialorder %v840, 0.0
      %vm976 = vcmp.ge.f32.partialorder %v842, 0.0
      %vm977 = vcmp.ge.f32.partialorder %v845, 0.0
      %vm978 = vcmp.ge.f32.partialorder %v847, 0.0
      %vm979 = vcmp.ge.f32.partialorder %v850, 0.0
      %vm980 = vcmp.ge.f32.partialorder %v852, 0.0
      %vm981 = vcmp.ge.f32.partialorder %v855, 0.0
      %vm982 = vcmp.ge.f32.partialorder %v857, 0.0
      %vm983 = vcmp.ge.f32.partialorder %v860, 0.0
      %vm984 = vcmp.ge.f32.partialorder %v862, 0.0
      %vm985 = vcmp.ge.f32.partialorder %v865, 0.0
      %vm986 = vcmp.ge.f32.partialorder %v867, 0.0
      %vm987 = vcmp.ge.f32.partialorder %v870, 0.0
      %vm988 = vcmp.ge.f32.partialorder %v872, 0.0
      %vm989 = vcmp.ge.f32.partialorder %v875, 0.0
      %vm990 = vcmp.ge.f32.partialorder %v877, 0.0
      %vm991 = vcmp.ge.f32.partialorder %v880, 0.0
      %vm992 = vcmp.ge.f32.partialorder %v882, 0.0
      %vm993 = vcmp.ge.f32.partialorder %v885, 0.0
      %vm994 = vcmp.ge.f32.partialorder %v887, 0.0
      %vm995 = vcmp.ge.f32.partialorder %v890, 0.0
      %vm996 = vcmp.ge.f32.partialorder %v892, 0.0
      %vm997 = vcmp.ge.f32.partialorder %v895, 0.0
      %vm998 = vcmp.ge.f32.partialorder %v897, 0.0
      %vm999 = vcmp.ge.f32.partialorder %v900, 0.0
      %vm1000 = vcmp.ge.f32.partialorder %v902, 0.0
      %vm1001 = vcmp.ge.f32.partialorder %v905, 0.0
      %vm1002 = vcmp.ge.f32.partialorder %v907, 0.0
      %vm1003 = vcmp.ge.f32.partialorder %v910, 0.0
      %vm1004 = vcmp.ge.f32.partialorder %v912, 0.0
      %vm1005 = vcmp.ge.f32.partialorder %v915, 0.0
      %vm1006 = vcmp.ge.f32.partialorder %v917, 0.0
      %vm1007 = vcmp.ge.f32.partialorder %v920, 0.0
      %vm1008 = vcmp.ge.f32.partialorder %v922, 0.0
      %vm1009 = vcmp.ge.f32.partialorder %v925, 0.0
      %vm1010 = vcmp.ge.f32.partialorder %v927, 0.0
      %vm1011 = vcmp.ge.f32.partialorder %v930, 0.0
      %vm1012 = vcmp.ge.f32.partialorder %v932, 0.0
      %vm1013 = vcmp.ge.f32.partialorder %v935, 0.0
      %vm1014 = vcmp.ge.f32.partialorder %v937, 0.0
      %vm1015 = vcmp.ge.f32.partialorder %v940, 0.0
      %vm1016 = vcmp.ge.f32.partialorder %v942, 0.0
      %vm1017 = vcmp.ge.f32.partialorder %v945, 0.0
      %vm1018 = vcmp.ge.f32.partialorder %v947, 0.0
      %vm1019 = vcmp.ge.f32.partialorder %v950, 0.0
      %vm1020 = vcmp.ge.f32.partialorder %v952, 0.0
      %vm1021 = vcmp.ge.f32.partialorder %v955, 0.0
      %vm1022 = vcmp.ge.f32.partialorder %v957, 0.0
      %vm1023 = vcmp.ge.f32.partialorder %v960, 0.0
      %vm1024 = vcmp.ge.f32.partialorder %v962, 0.0
      %vm1025 = vcmp.ge.f32.partialorder %v965, 0.0
      %vm1026 = vcmp.ge.f32.partialorder %v967, 0.0
      %v1027 = vmul.f32 %v825, 0.01
      %v1028 = vmul.f32 %v827, 0.01
      %v1029 = vmul.f32 %v830, 0.01
      %v1030 = vmul.f32 %v832, 0.01
      %v1031 = vmul.f32 %v835, 0.01
      %v1032 = vmul.f32 %v837, 0.01
      %v1033 = vmul.f32 %v840, 0.01
      %v1034 = vmul.f32 %v842, 0.01
      %v1035 = vmul.f32 %v845, 0.01
      %v1036 = vmul.f32 %v847, 0.01
      %v1037 = vmul.f32 %v850, 0.01
      %v1038 = vmul.f32 %v852, 0.01
      %v1039 = vmul.f32 %v855, 0.01
      %v1040 = vmul.f32 %v857, 0.01
      %v1041 = vmul.f32 %v860, 0.01
      %v1042 = vmul.f32 %v862, 0.01
      %v1043 = vmul.f32 %v865, 0.01
      %v1044 = vmul.f32 %v867, 0.01
      %v1045 = vmul.f32 %v870, 0.01
      %v1046 = vmul.f32 %v872, 0.01
      %v1047 = vmul.f32 %v875, 0.01
      %v1048 = vmul.f32 %v877, 0.01
      %v1049 = vmul.f32 %v880, 0.01
      %v1050 = vmul.f32 %v882, 0.01
      %v1051 = vmul.f32 %v885, 0.01
      %v1052 = vmul.f32 %v887, 0.01
      %v1053 = vmul.f32 %v890, 0.01
      %v1054 = vmul.f32 %v892, 0.01
      %v1055 = vmul.f32 %v895, 0.01
      %v1056 = vmul.f32 %v897, 0.01
      %v1057 = vmul.f32 %v900, 0.01
      %v1058 = vmul.f32 %v902, 0.01
      %v1059 = vmul.f32 %v905, 0.01
      %v1060 = vmul.f32 %v907, 0.01
      %v1061 = vmul.f32 %v910, 0.01
      %v1062 = vmul.f32 %v912, 0.01
      %v1063 = vmul.f32 %v915, 0.01
      %v1064 = vmul.f32 %v917, 0.01
      %v1065 = vmul.f32 %v920, 0.01
      %v1066 = vmul.f32 %v922, 0.01
      %v1067 = vmul.f32 %v925, 0.01
      %v1068 = vmul.f32 %v927, 0.01
      %v1069 = vmul.f32 %v930, 0.01
      %v1070 = vmul.f32 %v932, 0.01
      %v1071 = vmul.f32 %v935, 0.01
      %v1072 = vmul.f32 %v937, 0.01
      %v1073 = vmul.f32 %v940, 0.01
      %v1074 = vmul.f32 %v942, 0.01
      %v1075 = vmul.f32 %v945, 0.01
      %v1076 = vmul.f32 %v947, 0.01
      %v1077 = vmul.f32 %v950, 0.01
      %v1078 = vmul.f32 %v952, 0.01
      %v1079 = vmul.f32 %v955, 0.01
      %v1080 = vmul.f32 %v957, 0.01
      %v1081 = vmul.f32 %v960, 0.01
      %v1082 = vmul.f32 %v962, 0.01
      %v1083 = vmul.f32 %v965, 0.01
      %v1084 = vmul.f32 %v967, 0.01
      %v1085 = vsel %vm969, %v825, %v1027
      %v1086 = vsel %vm970, %v827, %v1028
      %v1087 = vsel %vm971, %v830, %v1029
      %v1088 = vsel %vm972, %v832, %v1030
      %v1089 = vsel %vm973, %v835, %v1031
      %v1090 = vsel %vm974, %v837, %v1032
      %v1091 = vsel %vm975, %v840, %v1033
      %v1092 = vsel %vm976, %v842, %v1034
      %v1093 = vsel %vm977, %v845, %v1035
      %v1094 = vsel %vm978, %v847, %v1036
      %v1095 = vsel %vm979, %v850, %v1037
      %v1096 = vsel %vm980, %v852, %v1038
      %v1097 = vsel %vm981, %v855, %v1039
      %v1098 = vsel %vm982, %v857, %v1040
      %v1099 = vsel %vm983, %v860, %v1041
      %v1100 = vsel %vm984, %v862, %v1042
      %v1101 = vsel %vm985, %v865, %v1043
      %v1102 = vsel %vm986, %v867, %v1044
      %v1103 = vsel %vm987, %v870, %v1045
      %v1104 = vsel %vm988, %v872, %v1046
      %v1105 = vsel %vm989, %v875, %v1047
      %v1106 = vsel %vm990, %v877, %v1048
      %v1107 = vsel %vm991, %v880, %v1049
      %v1108 = vsel %vm992, %v882, %v1050
      %v1109 = vsel %vm993, %v885, %v1051
      %v1110 = vsel %vm994, %v887, %v1052
      %v1111 = vsel %vm995, %v890, %v1053
      %v1112 = vsel %vm996, %v892, %v1054
      %v1113 = vsel %vm997, %v895, %v1055
      %v1114 = vsel %vm998, %v897, %v1056
      %v1115 = vsel %vm999, %v900, %v1057
      %v1116 = vsel %vm1000, %v902, %v1058
      %v1117 = vsel %vm1001, %v905, %v1059
      %v1118 = vsel %vm1002, %v907, %v1060
      %v1119 = vsel %vm1003, %v910, %v1061
      %v1120 = vsel %vm1004, %v912, %v1062
      %v1121 = vsel %vm1005, %v915, %v1063
      %v1122 = vsel %vm1006, %v917, %v1064
      %v1123 = vsel %vm1007, %v920, %v1065
      %v1124 = vsel %vm1008, %v922, %v1066
      %v1125 = vsel %vm1009, %v925, %v1067
      %v1126 = vsel %vm1010, %v927, %v1068
      %v1127 = vsel %vm1011, %v930, %v1069
      %v1128 = vsel %vm1012, %v932, %v1070
      %v1129 = vsel %vm1013, %v935, %v1071
      %v1130 = vsel %vm1014, %v937, %v1072
      %v1131 = vsel %vm1015, %v940, %v1073
      %v1132 = vsel %vm1016, %v942, %v1074
      %v1133 = vsel %vm1017, %v945, %v1075
      %v1134 = vsel %vm1018, %v947, %v1076
      %v1135 = vsel %vm1019, %v950, %v1077
      %v1136 = vsel %vm1020, %v952, %v1078
      %v1137 = vsel %vm1021, %v955, %v1079
      %v1138 = vsel %vm1022, %v957, %v1080
      %v1139 = vsel %vm1023, %v960, %v1081
      %v1140 = vsel %vm1024, %v962, %v1082
      %v1141 = vsel %vm1025, %v965, %v1083
      %v1142 = vsel %vm1026, %v967, %v1084
      %v1143 = vpack.c.bf16 %v1085, %v1085
      %v1144 = vpack.c.bf16 %v1086, %v1086
      %v1145 = vpack.c.bf16 %v1087, %v1087
      %v1146 = vpack.c.bf16 %v1088, %v1088
      %v1147 = vpack.c.bf16 %v1089, %v1089
      %v1148 = vpack.c.bf16 %v1090, %v1090
      %v1149 = vpack.c.bf16 %v1091, %v1091
      %v1150 = vpack.c.bf16 %v1092, %v1092
      %v1151 = vpack.c.bf16 %v1093, %v1093
      %v1152 = vpack.c.bf16 %v1094, %v1094
      %v1153 = vpack.c.bf16 %v1095, %v1095
      %v1154 = vpack.c.bf16 %v1096, %v1096
      %v1155 = vpack.c.bf16 %v1097, %v1097
      %v1156 = vpack.c.bf16 %v1098, %v1098
      %v1157 = vpack.c.bf16 %v1099, %v1099
      %v1158 = vpack.c.bf16 %v1100, %v1100
      %v1159 = vpack.c.bf16 %v1101, %v1101
      %v1160 = vpack.c.bf16 %v1102, %v1102
      %v1161 = vpack.c.bf16 %v1103, %v1103
      %v1162 = vpack.c.bf16 %v1104, %v1104
      %v1163 = vpack.c.bf16 %v1105, %v1105
      %v1164 = vpack.c.bf16 %v1106, %v1106
      %v1165 = vpack.c.bf16 %v1107, %v1107
      %v1166 = vpack.c.bf16 %v1108, %v1108
      %v1167 = vpack.c.bf16 %v1109, %v1109
      %v1168 = vpack.c.bf16 %v1110, %v1110
      %v1169 = vpack.c.bf16 %v1111, %v1111
      %v1170 = vpack.c.bf16 %v1112, %v1112
      %v1171 = vpack.c.bf16 %v1113, %v1113
      %v1172 = vpack.c.bf16 %v1114, %v1114
      %v1173 = vpack.c.bf16 %v1115, %v1115
      %v1174 = vpack.c.bf16 %v1116, %v1116
      %v1175 = vpack.c.bf16 %v1117, %v1117
      %v1176 = vpack.c.bf16 %v1118, %v1118
      %v1177 = vpack.c.bf16 %v1119, %v1119
      %v1178 = vpack.c.bf16 %v1120, %v1120
      %v1179 = vpack.c.bf16 %v1121, %v1121
      %v1180 = vpack.c.bf16 %v1122, %v1122
      %v1181 = vpack.c.bf16 %v1123, %v1123
      %v1182 = vpack.c.bf16 %v1124, %v1124
      %v1183 = vpack.c.bf16 %v1125, %v1125
      %v1184 = vpack.c.bf16 %v1126, %v1126
      %v1185 = vpack.c.bf16 %v1127, %v1127
      %v1186 = vpack.c.bf16 %v1128, %v1128
      %v1187 = vpack.c.bf16 %v1129, %v1129
      %v1188 = vpack.c.bf16 %v1130, %v1130
      %v1189 = vpack.c.bf16 %v1131, %v1131
      %v1190 = vpack.c.bf16 %v1132, %v1132
      %v1191 = vpack.c.bf16 %v1133, %v1133
      %v1192 = vpack.c.bf16 %v1134, %v1134
      %v1193 = vpack.c.bf16 %v1135, %v1135
      %v1194 = vpack.c.bf16 %v1136, %v1136
      %v1195 = vpack.c.bf16 %v1137, %v1137
      %v1196 = vpack.c.bf16 %v1138, %v1138
      %v1197 = vpack.c.bf16 %v1139, %v1139
      %v1198 = vpack.c.bf16 %v1140, %v1140
      %v1199 = vpack.c.bf16 %v1141, %v1141
      %v1200 = vpack.c.bf16 %v1142, %v1142
      %1201 = vst [vmem:[%s175] sm:$0xf] %v1143
      %1202 = vst [vmem:[%s175 + $0x4] sm:$0xf] %v1144
      %1203 = vst [vmem:[%s175 + $0x8] sm:$0xf] %v1145
      %1204 = vst [vmem:[%s175 + $0xc] sm:$0xf] %v1146
      %1205 = vst [vmem:[%s175 + $0x10] sm:$0xf] %v1147
      %1206 = vst [vmem:[%s175 + $0x14] sm:$0xf] %v1148
      %1207 = vst [vmem:[%s175 + $0x18] sm:$0xf] %v1149
      %1208 = vst [vmem:[%s175 + $0x1c] sm:$0xf] %v1150
      %1209 = vst [vmem:[%s175 + $0x20] sm:$0xf] %v1151
      %1210 = vst [vmem:[%s175 + $0x24] sm:$0xf] %v1152
      %1211 = vst [vmem:[%s175 + $0x28] sm:$0xf] %v1153
      %1212 = vst [vmem:[%s175 + $0x2c] sm:$0xf] %v1154
      %1213 = vst [vmem:[%s175 + $0x30] sm:$0xf] %v1155
      %1214 = vst [vmem:[%s175 + $0x34] sm:$0xf] %v1156
      %1215 = vst [vmem:[%s175 + $0x38] sm:$0xf] %v1157
      %1216 = vst [vmem:[%s175 + $0x3c] sm:$0xf] %v1158
      %1217 = vst [vmem:[%s175 + $0x40] sm:$0xf] %v1159
      %1218 = vst [vmem:[%s175 + $0x44] sm:$0xf] %v1160
      %1219 = vst [vmem:[%s175 + $0x48] sm:$0xf] %v1161
      %1220 = vst [vmem:[%s175 + $0x4c] sm:$0xf] %v1162
      %1221 = vst [vmem:[%s175 + $0x50] sm:$0xf] %v1163
      %1222 = vst [vmem:[%s175 + $0x54] sm:$0xf] %v1164
      %1223 = vst [vmem:[%s175 + $0x58] sm:$0xf] %v1165
      %1224 = vst [vmem:[%s175 + $0x5c] sm:$0xf] %v1166
      %1225 = vst [vmem:[%s175 + $0x60] sm:$0xf] %v1167
      %1226 = vst [vmem:[%s175 + $0x64] sm:$0xf] %v1168
      %1227 = vst [vmem:[%s175 + $0x68] sm:$0xf] %v1169
      %1228 = vst [vmem:[%s175 + $0x6c] sm:$0xf] %v1170
      %1229 = vst [vmem:[%s175 + $0x70] sm:$0xf] %v1171
      %1230 = vst [vmem:[%s175 + $0x74] sm:$0xf] %v1172
      %1231 = vst [vmem:[%s175 + $0x78] sm:$0xf] %v1173
      %1232 = vst [vmem:[%s175 + $0x7c] sm:$0xf] %v1174
      %1233 = vst [vmem:[%s175 + $0x80] sm:$0xf] %v1175
      %1234 = vst [vmem:[%s175 + $0x84] sm:$0xf] %v1176
      %1235 = vst [vmem:[%s175 + $0x88] sm:$0xf] %v1177
      %1236 = vst [vmem:[%s175 + $0x8c] sm:$0xf] %v1178
      %1237 = vst [vmem:[%s175 + $0x90] sm:$0xf] %v1179
      %1238 = vst [vmem:[%s175 + $0x94] sm:$0xf] %v1180
      %1239 = vst [vmem:[%s175 + $0x98] sm:$0xf] %v1181
      %1240 = vst [vmem:[%s175 + $0x9c] sm:$0xf] %v1182
      %1241 = vst [vmem:[%s175 + $0xa0] sm:$0xf] %v1183
      %1242 = vst [vmem:[%s175 + $0xa4] sm:$0xf] %v1184
      %1243 = vst [vmem:[%s175 + $0xa8] sm:$0xf] %v1185
      %1244 = vst [vmem:[%s175 + $0xac] sm:$0xf] %v1186
      %1245 = vst [vmem:[%s175 + $0xb0] sm:$0xf] %v1187
      %1246 = vst [vmem:[%s175 + $0xb4] sm:$0xf] %v1188
      %1247 = vst [vmem:[%s175 + $0xb8] sm:$0xf] %v1189
      %1248 = vst [vmem:[%s175 + $0xbc] sm:$0xf] %v1190
      %1249 = vst [vmem:[%s175 + $0xc0] sm:$0xf] %v1191
      %1250 = vst [vmem:[%s175 + $0xc4] sm:$0xf] %v1192
      %1251 = vst [vmem:[%s175 + $0xc8] sm:$0xf] %v1193
      %1252 = vst [vmem:[%s175 + $0xcc] sm:$0xf] %v1194
      %1253 = vst [vmem:[%s175 + $0xd0] sm:$0xf] %v1195
      %1254 = vst [vmem:[%s175 + $0xd4] sm:$0xf] %v1196
      %1255 = vst [vmem:[%s175 + $0xd8] sm:$0xf] %v1197
      %1256 = vst [vmem:[%s175 + $0xdc] sm:$0xf] %v1198
      %1257 = vst [vmem:[%s175 + $0xe0] sm:$0xf] %v1199
      %1258 = vst [vmem:[%s175 + $0xe4] sm:$0xf] %v1200
      %s1259 = smul.u32 58, %s14
      %p1260 = scmp.lt.s32.totalorder %s1259, 115
      %s1261 = scalar_select %p1260, %s1259, 115
      %s1262 = smul.addr %s1261, 4
      %s1263 = scalar_lea.vmem %s3, %s1262
      // Predicated region
      $region33: #{net_forward.15} parent=31 // pred_check
        %p1264 = pneg %p100
      $region34: #{net_forward.15} parent=31 // pred_check_branch
        %1266 = sbr.rel (%p1264) target = $region36
      $region35: #{net_forward.15} parent=31 // pred_region
        %s1267 = smul.u32 58, %s14
      $region36: #{net_forward.15} parent=31 // pred_fallthru
        _
    $region32: #{net_forward.15} parent=5 // pred_fallthru
      _
    %p1268 = scmp.le.s32.totalorder 2, %s9
    // Predicated region
    $region37: #{net_forward.15} parent=5 // pred_check
      %p1269 = pneg %p1268
    $region38: #{net_forward.15} parent=5 // pred_check_branch
      %1271 = sbr.rel (%p1269) target = $region40
    $region39: #{net_forward.15} parent=5 // pred_region
      %s1272 = ssub.s32 %s9, 2
      // Predicated region
      $region41: #{net_forward.15} parent=39 // pred_check
        %p1273 = pneg %p106
      $region42: #{net_forward.15} parent=39 // pred_check_branch
        %1275 = sbr.rel (%p1273) target = $region44
      $region43: #{net_forward.15} parent=39 // pred_region
        %s1276 = smul.u32 58, %s15
        %p1277 = scmp.lt.s32.totalorder %s1276, 115
        %s1278 = scalar_select %p1277, %s1276, 115
        %s1279 = smul.addr %s1278, 4
        %s1280 = scalar_lea.vmem %s3, %s1279
      $region44: #{net_forward.15} parent=39 // pred_fallthru
        _
    $region40: #{net_forward.15} parent=5 // pred_fallthru
      _
  $region6: #{net_forward.15} parent=0 // loop_footer
    %s13 = sadd.s32 1, %s9
  $region7: #{net_forward.15} parent=0 // loop_footer_branch
    %8 = sbr.rel target = $region3
  $region8: #{net_forward.15} parent=0 // loop_exit
    _

// kernel: net_forward.16
$region0: #{net_forward.16}
  #allocation0 [shape = 'u32[]', space=smem, size = 0x4, offset = 0x4, fixed_abs, tag = 'smem constant byte address 0x4 - core index']
  #allocation1 [shape = 'u32[72,128]{1,0:T(1,128)}', space=vmem, size = 0x9000, scoped, tag = 'internal scratch']
  %s0 = inlined_call_operand.vmem [shape: bf16[4096,72], index: 0, kind: input, shape index: {}]
  %s1 = inlined_call_operand.vmem [shape: bf16[72,128], index: 1, kind: input, shape index: {}]
  %s2 = inlined_call_operand.vmem [shape: f32[1,128], index: 2, kind: input, shape index: {}]
  %s3 = inlined_call_operand.vmem [shape: f32[4096,128], index: 3, kind: output, shape index: {}]
  %s4 = sld [smem:[#allocation0]]
  $region45: #{net_forward.16} parent=0
    _
  %s6 = ssub.s32 1, %s4
  %s7 = scalar_select 0, %s6, %s4
  loop: start=0, step=1, limit=10
  $region2: #{net_forward.16} parent=0 // loop_pre_header
    _
  $region3: #{net_forward.16} parent=0 // loop_header
    %s9 = sphi 0, %s13
    %p10 = scmp.ge.s32.totalorder %s9, 10
    %s19 = sphi 0, %s21
    %s22 = sphi 0, %s19
    %s23 = sphi 0, %s22
    %s39 = sphi 0, %s23
    %s43 = sphi 0, %s43
    %s45 = sphi 0, %s43
    %s46 = sphi 0, %s45
    %s60 = sphi 0, %s46
    %s64 = sphi 0, %s64
    %s66 = sphi 0, %s64
    %s67 = sphi 0, %s66
    %s81 = sphi 0, %s67
    %s87 = sphi 0, %s89
    %s90 = sphi 0, %s87
    %s91 = sphi 0, %s90
    %s107 = sphi 0, %s91
  $region4: #{net_forward.16} parent=0 // loop_header_branch
    %12 = sbr.rel (%p10) target = $region8
  $region5: #{net_forward.16} parent=0 // loop_body
    %s14 = ssub.s32 %s9, 1
    %s15 = ssub.s32 %s9, 2
    %s16 = sadd.s32 %s9, 1
    %s17 = ssub.s32 %s9, %s16
    %p18 = scmp.eq.s32.totalorder %s17, 0
    %s20 = sadd.s32 %s19, 1
    %s21 = scalar_select %p18, %s19, %s20
    %p24 = pneg %p18
    %p25 = scmp.eq.s32.totalorder %s9, 7
    %p26 = por %p24, %p25
    %p27 = scmp.ne.s32.totalorder %s19, %s22
    %p28 = scmp.eq.s32.totalorder %s9, 0
    %p29 = por %p27, %p28
    %p30 = scmp.ne.s32.totalorder %s19, %s22
    %p31 = scmp.eq.s32.totalorder %s14, 7
    %p32 = por %p30, %p31
    %p33 = scmp.ne.s32.totalorder %s22, %s23
    %p34 = scmp.eq.s32.totalorder %s14, 0
    %p35 = por %p33, %p34
    %p36 = scmp.ne.s32.totalorder %s22, %s23
    %p37 = scmp.eq.s32.totalorder %s15, 7
    %p38 = por %p36, %p37
    %p40 = scmp.ne.s32.totalorder %s23, %s39
    %p41 = scmp.eq.s32.totalorder %s15, 0
    %p42 = por %p40, %p41
    %s44 = sadd.s32 %s43, 1
    %p47 = scmp.eq.s32.totalorder %s9, 7
    %p48 = scmp.ne.s32.totalorder %s43, %s45
    %p49 = scmp.eq.s32.totalorder %s9, 0
    %p50 = por %p48, %p49
    %p51 = scmp.ne.s32.totalorder %s43, %s45
    %p52 = scmp.eq.s32.totalorder %s14, 7
    %p53 = por %p51, %p52
    %p54 = scmp.ne.s32.totalorder %s45, %s46
    %p55 = scmp.eq.s32.totalorder %s14, 0
    %p56 = por %p54, %p55
    %p57 = scmp.ne.s32.totalorder %s45, %s46
    %p58 = scmp.eq.s32.totalorder %s15, 7
    %p59 = por %p57, %p58
    %p61 = scmp.ne.s32.totalorder %s46, %s60
    %p62 = scmp.eq.s32.totalorder %s15, 0
    %p63 = por %p61, %p62
    %s65 = sadd.s32 %s64, 1
    %p68 = scmp.eq.s32.totalorder %s9, 7
    %p69 = scmp.ne.s32.totalorder %s64, %s66
    %p70 = scmp.eq.s32.totalorder %s9, 0
    %p71 = por %p69, %p70
    %p72 = scmp.ne.s32.totalorder %s64, %s66
    %p73 = scmp.eq.s32.totalorder %s14, 7
    %p74 = por %p72, %p73
    %p75 = scmp.ne.s32.totalorder %s66, %s67
    %p76 = scmp.eq.s32.totalorder %s14, 0
    %p77 = por %p75, %p76
    %p78 = scmp.ne.s32.totalorder %s66, %s67
    %p79 = scmp.eq.s32.totalorder %s15, 7
    %p80 = por %p78, %p79
    %p82 = scmp.ne.s32.totalorder %s67, %s81
    %p83 = scmp.eq.s32.totalorder %s15, 0
    %p84 = por %p82, %p83
    %s85 = ssub.s32 %s9, %s16
    %p86 = scmp.eq.s32.totalorder %s85, 0
    %s88 = sadd.s32 %s87, 1
    %s89 = scalar_select %p86, %s87, %s88
    %p92 = pneg %p86
    %p93 = scmp.eq.s32.totalorder %s9, 7
    %p94 = por %p92, %p93
    %p95 = scmp.ne.s32.totalorder %s87, %s90
    %p96 = scmp.eq.s32.totalorder %s9, 0
    %p97 = por %p95, %p96
    %p98 = scmp.ne.s32.totalorder %s87, %s90
    %p99 = scmp.eq.s32.totalorder %s14, 7
    %p100 = por %p98, %p99
    %p101 = scmp.ne.s32.totalorder %s90, %s91
    %p102 = scmp.eq.s32.totalorder %s14, 0
    %p103 = por %p101, %p102
    %p104 = scmp.ne.s32.totalorder %s90, %s91
    %p105 = scmp.eq.s32.totalorder %s15, 7
    %p106 = por %p104, %p105
    %p108 = scmp.ne.s32.totalorder %s91, %s107
    %p109 = scmp.eq.s32.totalorder %s15, 0
    %p110 = por %p108, %p109
    %p111 = scmp.le.s32.totalorder 1, %s9
    %p112 = scmp.lt.s32.totalorder %s9, 9
    %p113 = pnand %p111, %p112
    %p114 = pneg %p113
    // Predicated region
    $region9: #{net_forward.16} parent=5 // pred_check
      _
    $region10: #{net_forward.16} parent=5 // pred_check_branch
      %116 = sbr.rel (%p113) target = $region12
    $region11: #{net_forward.16} parent=5 // pred_region
      %s117 = ssub.s32 %s9, 1
      // Predicated region
      $region13: #{net_forward.16} parent=11 // pred_check
        %p118 = pneg %p56
      $region14: #{net_forward.16} parent=11 // pred_check_branch
        %120 = sbr.rel (%p118) target = $region16
      $region15: #{net_forward.16} parent=11 // pred_region
        _
      $region16: #{net_forward.16} parent=11 // pred_fallthru
        _
      // Predicated region
      $region17: #{net_forward.16} parent=11 // pred_check
        %p121 = pneg %p77
      $region18: #{net_forward.16} parent=11 // pred_check_branch
        %123 = sbr.rel (%p121) target = $region20
      $region19: #{net_forward.16} parent=11 // pred_region
        _
      $region20: #{net_forward.16} parent=11 // pred_fallthru
        _
    $region12: #{net_forward.16} parent=5 // pred_fallthru
      _
    %p124 = scmp.lt.s32.totalorder %s9, 8
    // Predicated region
    $region21: #{net_forward.16} parent=5 // pred_check
      %p125 = pneg %p124
    $region22: #{net_forward.16} parent=5 // pred_check_branch
      %127 = sbr.rel (%p125) target = $region24
    $region23: #{net_forward.16} parent=5 // pred_region
      // Predicated region
      $region25: #{net_forward.16} parent=23 // pred_check
        %p128 = pneg %p29
      $region26: #{net_forward.16} parent=23 // pred_check_branch
        %130 = sbr.rel (%p128) target = $region28
      $region27: #{net_forward.16} parent=23 // pred_region
        %s131 = smul.u32 64, %s9
        %p132 = scmp.lt.s32.totalorder %s131, 511
        %s133 = scalar_select %p132, %s131, 511
        %s134 = smul.addr %s133, 4
        %s135 = scalar_lea.vmem %s0, %s134
        %s136 = smul.u32 64, %s9
      $region28: #{net_forward.16} parent=23 // pred_fallthru
        _
    $region24: #{net_forward.16} parent=5 // pred_fallthru
      _
    %p137 = scmp.le.s32.totalorder 1, %s9
    %p138 = scmp.lt.s32.totalorder %s9, 9
    %p139 = pnand %p137, %p138
    %p140 = pneg %p139
    // Predicated region
    $region29: #{net_forward.16} parent=5 // pred_check
      _
    $region30: #{net_forward.16} parent=5 // pred_check_branch
      %142 = sbr.rel (%p139) target = $region32
    $region31: #{net_forward.16} parent=5 // pred_region
      %s143 = ssub.s32 %s9, 1
      %s144 = smul.u32 64, %s14
      %p145 = scmp.lt.s32.totalorder %s144, 511
      %s146 = scalar_select %p145, %s144, 511
      %s147 = smul.addr %s146, 4
      %s148 = scalar_lea.vmem %s0, %s147
      %p149 = pneg %p35
      %p150 = pneg %p32
      %p151 = pneg %p56
      %p152 = pneg %p53
      %p153 = pneg %p77
      %p154 = pneg %p74
      %p155 = pneg %p103
      %p156 = pneg %p100
      %s157 = smul.u32 64, %s14
      %p158 = scmp.lt.s32.totalorder %s157, 511
      %s159 = scalar_select %p158, %s157, 511
      %s160 = smul.addr %s159, 8
      %s161 = scalar_lea.vmem %s3, %s160
      %s162 = smul.u32 64, %s14
      %p163 = scmp.lt.s32.totalorder %s162, 511
      %s164 = scalar_select %p163, %s162, 511
      %s165 = smul.addr %s164, 4
      %s166 = scalar_lea.vmem %s0, %s165
      %s167 = smul.u32 64, %s14
      %s168 = smul.u32 64, %s14
      %p169 = scmp.lt.s32.totalorder %s168, 511
      %s170 = scalar_select %p169, %s168, 511
      %s171 = smul.addr %s170, 8
      %s172 = scalar_lea.vmem %s3, %s171
      %s173 = smul.u32 64, %s14
      %v175 = vld [vmem:[%s166] sm:$0xf]
      %v176 = vld [vmem:[%s166 + $0x4] sm:$0xf]
      %v177 = vld [vmem:[%s166 + $0x8] sm:$0xf]
      %v178 = vld [vmem:[%s166 + $0xc] sm:$0xf]
      %v179 = vld [vmem:[%s166 + $0x10] sm:$0xf]
      %v180 = vld [vmem:[%s166 + $0x14] sm:$0xf]
      %v181 = vld [vmem:[%s166 + $0x18] sm:$0xf]
      %v182 = vld [vmem:[%s166 + $0x1c] sm:$0xf]
      %v183 = vld [vmem:[%s166 + $0x20] sm:$0xf]
      %v184 = vld [vmem:[%s166 + $0x24] sm:$0xf]
      %v185 = vld [vmem:[%s166 + $0x28] sm:$0xf]
      %v186 = vld [vmem:[%s166 + $0x2c] sm:$0xf]
      %v187 = vld [vmem:[%s166 + $0x30] sm:$0xf]
      %v188 = vld [vmem:[%s166 + $0x34] sm:$0xf]
      %v189 = vld [vmem:[%s166 + $0x38] sm:$0xf]
      %v190 = vld [vmem:[%s166 + $0x3c] sm:$0xf]
      %v191 = vld [vmem:[%s166 + $0x40] sm:$0xf]
      %v192 = vld [vmem:[%s166 + $0x44] sm:$0xf]
      %v193 = vld [vmem:[%s166 + $0x48] sm:$0xf]
      %v194 = vld [vmem:[%s166 + $0x4c] sm:$0xf]
      %v195 = vld [vmem:[%s166 + $0x50] sm:$0xf]
      %v196 = vld [vmem:[%s166 + $0x54] sm:$0xf]
      %v197 = vld [vmem:[%s166 + $0x58] sm:$0xf]
      %v198 = vld [vmem:[%s166 + $0x5c] sm:$0xf]
      %v199 = vld [vmem:[%s166 + $0x60] sm:$0xf]
      %v200 = vld [vmem:[%s166 + $0x64] sm:$0xf]
      %v201 = vld [vmem:[%s166 + $0x68] sm:$0xf]
      %v202 = vld [vmem:[%s166 + $0x6c] sm:$0xf]
      %v203 = vld [vmem:[%s166 + $0x70] sm:$0xf]
      %v204 = vld [vmem:[%s166 + $0x74] sm:$0xf]
      %v205 = vld [vmem:[%s166 + $0x78] sm:$0xf]
      %v206 = vld [vmem:[%s166 + $0x7c] sm:$0xf]
      %v207 = vld [vmem:[%s166 + $0x80] sm:$0xf]
      %v208 = vld [vmem:[%s166 + $0x84] sm:$0xf]
      %v209 = vld [vmem:[%s166 + $0x88] sm:$0xf]
      %v210 = vld [vmem:[%s166 + $0x8c] sm:$0xf]
      %v211 = vld [vmem:[%s166 + $0x90] sm:$0xf]
      %v212 = vld [vmem:[%s166 + $0x94] sm:$0xf]
      %v213 = vld [vmem:[%s166 + $0x98] sm:$0xf]
      %v214 = vld [vmem:[%s166 + $0x9c] sm:$0xf]
      %v215 = vld [vmem:[%s166 + $0xa0] sm:$0xf]
      %v216 = vld [vmem:[%s166 + $0xa4] sm:$0xf]
      %v217 = vld [vmem:[%s166 + $0xa8] sm:$0xf]
      %v218 = vld [vmem:[%s166 + $0xac] sm:$0xf]
      %v219 = vld [vmem:[%s166 + $0xb0] sm:$0xf]
      %v220 = vld [vmem:[%s166 + $0xb4] sm:$0xf]
      %v221 = vld [vmem:[%s166 + $0xb8] sm:$0xf]
      %v222 = vld [vmem:[%s166 + $0xbc] sm:$0xf]
      %v223 = vld [vmem:[%s166 + $0xc0] sm:$0xf]
      %v224 = vld [vmem:[%s166 + $0xc4] sm:$0xf]
      %v225 = vld [vmem:[%s166 + $0xc8] sm:$0xf]
      %v226 = vld [vmem:[%s166 + $0xcc] sm:$0xf]
      %v227 = vld [vmem:[%s166 + $0xd0] sm:$0xf]
      %v228 = vld [vmem:[%s166 + $0xd4] sm:$0xf]
      %v229 = vld [vmem:[%s166 + $0xd8] sm:$0xf]
      %v230 = vld [vmem:[%s166 + $0xdc] sm:$0xf]
      %v231 = vld [vmem:[%s166 + $0xe0] sm:$0xf]
      %v232 = vld [vmem:[%s166 + $0xe4] sm:$0xf]
      %v233 = vld [vmem:[%s166 + $0xe8] sm:$0xf]
      %v234 = vld [vmem:[%s166 + $0xec] sm:$0xf]
      %v235 = vld [vmem:[%s166 + $0xf0] sm:$0xf]
      %v236 = vld [vmem:[%s166 + $0xf4] sm:$0xf]
      %v237 = vld [vmem:[%s166 + $0xf8] sm:$0xf]
      %v238 = vld [vmem:[%s166 + $0xfc] sm:$0xf]
      %v239 = vld [vmem:[%s1] sm:$0xf]
      %v240 = vld [vmem:[%s1 + $0x4] sm:$0xf]
      %v241 = vld [vmem:[%s1 + $0x8] sm:$0xf]
      %v242 = vld [vmem:[%s1 + $0xc] sm:$0xf]
      %v243 = vld [vmem:[%s1 + $0x10] sm:$0xf]
      %v244 = vld [vmem:[%s1 + $0x14] sm:$0xf]
      %v245 = vld [vmem:[%s1 + $0x18] sm:$0xf]
      %v246 = vld [vmem:[%s1 + $0x1c] sm:$0xf]
      %v247 = vld [vmem:[%s1 + $0x20] sm:$0xf]
      %v248 = vld [vmem:[%s2] sm:$0x1]
      %v250 = vperm.slane %v248, 0
      %v316 = vunpack.c.l.b16 %v175
      %v317 = vunpack.c.l.b16 %v176
      %v318 = vunpack.c.l.b16 %v177
      %v319 = vunpack.c.l.b16 %v178
      %v320 = vunpack.c.l.b16 %v179
      %v321 = vunpack.c.l.b16 %v180
      %v322 = vunpack.c.l.b16 %v181
      %v323 = vunpack.c.l.b16 %v182
      %v324 = vunpack.c.l.b16 %v183
      %v325 = vunpack.c.l.b16 %v184
      %v326 = vunpack.c.l.b16 %v185
      %v327 = vunpack.c.l.b16 %v186
      %v328 = vunpack.c.l.b16 %v187
      %v329 = vunpack.c.l.b16 %v188
      %v330 = vunpack.c.l.b16 %v189
      %v331 = vunpack.c.l.b16 %v190
      %v332 = vunpack.c.l.b16 %v191
      %v333 = vunpack.c.l.b16 %v192
      %v334 = vunpack.c.l.b16 %v193
      %v335 = vunpack.c.l.b16 %v194
      %v336 = vunpack.c.l.b16 %v195
      %v337 = vunpack.c.l.b16 %v196
      %v338 = vunpack.c.l.b16 %v197
      %v339 = vunpack.c.l.b16 %v198
      %v340 = vunpack.c.l.b16 %v199
      %v341 = vunpack.c.l.b16 %v200
      %v342 = vunpack.c.l.b16 %v201
      %v343 = vunpack.c.l.b16 %v202
      %v344 = vunpack.c.l.b16 %v203
      %v345 = vunpack.c.l.b16 %v204
      %v346 = vunpack.c.l.b16 %v205
      %v347 = vunpack.c.l.b16 %v206
      %v348 = vunpack.c.l.b16 %v207
      %v349 = vunpack.c.l.b16 %v208
      %v350 = vunpack.c.l.b16 %v209
      %v351 = vunpack.c.l.b16 %v210
      %v352 = vunpack.c.l.b16 %v211
      %v353 = vunpack.c.l.b16 %v212
      %v354 = vunpack.c.l.b16 %v213
      %v355 = vunpack.c.l.b16 %v214
      %v356 = vunpack.c.l.b16 %v215
      %v357 = vunpack.c.l.b16 %v216
      %v358 = vunpack.c.l.b16 %v217
      %v359 = vunpack.c.l.b16 %v218
      %v360 = vunpack.c.l.b16 %v219
      %v361 = vunpack.c.l.b16 %v220
      %v362 = vunpack.c.l.b16 %v221
      %v363 = vunpack.c.l.b16 %v222
      %v364 = vunpack.c.l.b16 %v223
      %v365 = vunpack.c.l.b16 %v224
      %v366 = vunpack.c.l.b16 %v225
      %v367 = vunpack.c.l.b16 %v226
      %v368 = vunpack.c.l.b16 %v227
      %v369 = vunpack.c.l.b16 %v228
      %v370 = vunpack.c.l.b16 %v229
      %v371 = vunpack.c.l.b16 %v230
      %v372 = vunpack.c.l.b16 %v231
      %v373 = vunpack.c.l.b16 %v232
      %v374 = vunpack.c.l.b16 %v233
      %v375 = vunpack.c.l.b16 %v234
      %v376 = vunpack.c.l.b16 %v235
      %v377 = vunpack.c.l.b16 %v236
      %v378 = vunpack.c.l.b16 %v237
      %v379 = vunpack.c.l.b16 %v238
      %v380 = vpack.c.b16 %v317, %v316
      %v381 = vpack.c.b16 %v319, %v318
      %v382 = vpack.c.b16 %v321, %v320
      %v383 = vpack.c.b16 %v323, %v322
      %v384 = vpack.c.b16 %v325, %v324
      %v385 = vpack.c.b16 %v327, %v326
      %v386 = vpack.c.b16 %v329, %v328
      %v387 = vpack.c.b16 %v331, %v330
      %v388 = vpack.c.b16 %v333, %v332
      %v389 = vpack.c.b16 %v335, %v334
      %v390 = vpack.c.b16 %v337, %v336
      %v391 = vpack.c.b16 %v339, %v338
      %v392 = vpack.c.b16 %v341, %v340
      %v393 = vpack.c.b16 %v343, %v342
      %v394 = vpack.c.b16 %v345, %v344
      %v395 = vpack.c.b16 %v347, %v346
      %v396 = vpack.c.b16 %v349, %v348
      %v397 = vpack.c.b16 %v351, %v350
      %v398 = vpack.c.b16 %v353, %v352
      %v399 = vpack.c.b16 %v355, %v354
      %v400 = vpack.c.b16 %v357, %v356
      %v401 = vpack.c.b16 %v359, %v358
      %v402 = vpack.c.b16 %v361, %v360
      %v403 = vpack.c.b16 %v363, %v362
      %v404 = vpack.c.b16 %v365, %v364
      %v405 = vpack.c.b16 %v367, %v366
      %v406 = vpack.c.b16 %v369, %v368
      %v407 = vpack.c.b16 %v371, %v370
      %v408 = vpack.c.b16 %v373, %v372
      %v409 = vpack.c.b16 %v375, %v374
      %v410 = vpack.c.b16 %v377, %v376
      %v411 = vpack.c.b16 %v379, %v378
      %v421 = vunpack.c.l.b16 %v239
      %v422 = vunpack.c.l.b16 %v240
      %v423 = vunpack.c.l.b16 %v241
      %v424 = vunpack.c.l.b16 %v242
      %v425 = vunpack.c.l.b16 %v243
      %v426 = vunpack.c.l.b16 %v244
      %v427 = vunpack.c.l.b16 %v245
      %v428 = vunpack.c.l.b16 %v246
      %v429 = vunpack.c.l.b16 %v247
      %v430 = vpack.c.b16 %v422, %v421
      %v431 = vpack.c.b16 %v424, %v423
      %v432 = vpack.c.b16 %v426, %v425
      %v433 = vpack.c.b16 %v428, %v427
      %v434 = vpack.c.b16 %v429, %v429
      %vm439 = vcmask 588800
      %v441 = vsel %vm439, %v380, 0
      %v444 = vsel %vm439, %v381, 0
      %v447 = vsel %vm439, %v382, 0
      %v450 = vsel %vm439, %v383, 0
      %v453 = vsel %vm439, %v384, 0
      %v456 = vsel %vm439, %v385, 0
      %v459 = vsel %vm439, %v386, 0
      %v462 = vsel %vm439, %v387, 0
      %v465 = vsel %vm439, %v388, 0
      %v468 = vsel %vm439, %v389, 0
      %v471 = vsel %vm439, %v390, 0
      %v474 = vsel %vm439, %v391, 0
      %v477 = vsel %vm439, %v392, 0
      %v480 = vsel %vm439, %v393, 0
      %v483 = vsel %vm439, %v394, 0
      %v486 = vsel %vm439, %v395, 0
      %v489 = vsel %vm439, %v396, 0
      %v492 = vsel %vm439, %v397, 0
      %v495 = vsel %vm439, %v398, 0
      %v498 = vsel %vm439, %v399, 0
      %v501 = vsel %vm439, %v400, 0
      %v504 = vsel %vm439, %v401, 0
      %v507 = vsel %vm439, %v402, 0
      %v510 = vsel %vm439, %v403, 0
      %v513 = vsel %vm439, %v404, 0
      %v516 = vsel %vm439, %v405, 0
      %v519 = vsel %vm439, %v406, 0
      %v522 = vsel %vm439, %v407, 0
      %v525 = vsel %vm439, %v408, 0
      %v528 = vsel %vm439, %v409, 0
      %v531 = vsel %vm439, %v410, 0
      %v534 = vsel %vm439, %v411, 0
      %vm536 = vcmask 1043456
      %v538 = vsel %vm536, %v434, 0
      %540 = vmatpush.bf16.msra.mxu0 0
      %541 = vmatpush.bf16.msra.mxu0 0
      %542 = vmatpush.bf16.msra.mxu0 0
      %543 = vmatpush.bf16.msra.mxu0 %v538
      %544 = vmatpush.bf16.msra.mxu0 %v433
      %545 = vmatpush.bf16.msra.mxu0 %v432
      %546 = vmatpush.bf16.msra.mxu0 %v431
      %547 = vmatpush.bf16.msra.mxu0 %v430
      %548 = vmatmul.bf16.gmra.mxu0 %v441
      %v549 = vpop.f32.mrf.mxu0
      %v550 = vadd.f32 %v250, %v549
      %v551 = vpop.f32.mrf.mxu0
      %v552 = vadd.f32 %v250, %v551
      %553 = vmatmul.bf16.gmra.mxu0 %v444
      %v554 = vpop.f32.mrf.mxu0
      %v555 = vadd.f32 %v250, %v554
      %v556 = vpop.f32.mrf.mxu0
      %v557 = vadd.f32 %v250, %v556
      %558 = vmatmul.bf16.gmra.mxu0 %v447
      %v559 = vpop.f32.mrf.mxu0
      %v560 = vadd.f32 %v250, %v559
      %v561 = vpop.f32.mrf.mxu0
      %v562 = vadd.f32 %v250, %v561
      %563 = vmatmul.bf16.gmra.mxu0 %v450
      %v564 = vpop.f32.mrf.mxu0
      %v565 = vadd.f32 %v250, %v564
      %v566 = vpop.f32.mrf.mxu0
      %v567 = vadd.f32 %v250, %v566
      %568 = vmatmul.bf16.gmra.mxu0 %v453
      %v569 = vpop.f32.mrf.mxu0
      %v570 = vadd.f32 %v250, %v569
      %v571 = vpop.f32.mrf.mxu0
      %v572 = vadd.f32 %v250, %v571
      %573 = vmatmul.bf16.gmra.mxu0 %v456
      %v574 = vpop.f32.mrf.mxu0
      %v575 = vadd.f32 %v250, %v574
      %v576 = vpop.f32.mrf.mxu0
      %v577 = vadd.f32 %v250, %v576
      %578 = vmatmul.bf16.gmra.mxu0 %v459
      %v579 = vpop.f32.mrf.mxu0
      %v580 = vadd.f32 %v250, %v579
      %v581 = vpop.f32.mrf.mxu0
      %v582 = vadd.f32 %v250, %v581
      %583 = vmatmul.bf16.gmra.mxu0 %v462
      %v584 = vpop.f32.mrf.mxu0
      %v585 = vadd.f32 %v250, %v584
      %v586 = vpop.f32.mrf.mxu0
      %v587 = vadd.f32 %v250, %v586
      %588 = vmatmul.bf16.gmra.mxu0 %v465
      %v589 = vpop.f32.mrf.mxu0
      %v590 = vadd.f32 %v250, %v589
      %v591 = vpop.f32.mrf.mxu0
      %v592 = vadd.f32 %v250, %v591
      %593 = vmatmul.bf16.gmra.mxu0 %v468
      %v594 = vpop.f32.mrf.mxu0
      %v595 = vadd.f32 %v250, %v594
      %v596 = vpop.f32.mrf.mxu0
      %v597 = vadd.f32 %v250, %v596
      %598 = vmatmul.bf16.gmra.mxu0 %v471
      %v599 = vpop.f32.mrf.mxu0
      %v600 = vadd.f32 %v250, %v599
      %v601 = vpop.f32.mrf.mxu0
      %v602 = vadd.f32 %v250, %v601
      %603 = vmatmul.bf16.gmra.mxu0 %v474
      %v604 = vpop.f32.mrf.mxu0
      %v605 = vadd.f32 %v250, %v604
      %v606 = vpop.f32.mrf.mxu0
      %v607 = vadd.f32 %v250, %v606
      %608 = vmatmul.bf16.gmra.mxu0 %v477
      %v609 = vpop.f32.mrf.mxu0
      %v610 = vadd.f32 %v250, %v609
      %v611 = vpop.f32.mrf.mxu0
      %v612 = vadd.f32 %v250, %v611
      %613 = vmatmul.bf16.gmra.mxu0 %v480
      %v614 = vpop.f32.mrf.mxu0
      %v615 = vadd.f32 %v250, %v614
      %v616 = vpop.f32.mrf.mxu0
      %v617 = vadd.f32 %v250, %v616
      %618 = vmatmul.bf16.gmra.mxu0 %v483
      %v619 = vpop.f32.mrf.mxu0
      %v620 = vadd.f32 %v250, %v619
      %v621 = vpop.f32.mrf.mxu0
      %v622 = vadd.f32 %v250, %v621
      %623 = vmatmul.bf16.gmra.mxu0 %v486
      %v624 = vpop.f32.mrf.mxu0
      %v625 = vadd.f32 %v250, %v624
      %v626 = vpop.f32.mrf.mxu0
      %v627 = vadd.f32 %v250, %v626
      %628 = vmatmul.bf16.gmra.mxu0 %v489
      %v629 = vpop.f32.mrf.mxu0
      %v630 = vadd.f32 %v250, %v629
      %v631 = vpop.f32.mrf.mxu0
      %v632 = vadd.f32 %v250, %v631
      %633 = vmatmul.bf16.gmra.mxu0 %v492
      %v634 = vpop.f32.mrf.mxu0
      %v635 = vadd.f32 %v250, %v634
      %v636 = vpop.f32.mrf.mxu0
      %v637 = vadd.f32 %v250, %v636
      %638 = vmatmul.bf16.gmra.mxu0 %v495
      %v639 = vpop.f32.mrf.mxu0
      %v640 = vadd.f32 %v250, %v639
      %v641 = vpop.f32.mrf.mxu0
      %v642 = vadd.f32 %v250, %v641
      %643 = vmatmul.bf16.gmra.mxu0 %v498
      %v644 = vpop.f32.mrf.mxu0
      %v645 = vadd.f32 %v250, %v644
      %v646 = vpop.f32.mrf.mxu0
      %v647 = vadd.f32 %v250, %v646
      %648 = vmatmul.bf16.gmra.mxu0 %v501
      %v649 = vpop.f32.mrf.mxu0
      %v650 = vadd.f32 %v250, %v649
      %v651 = vpop.f32.mrf.mxu0
      %v652 = vadd.f32 %v250, %v651
      %653 = vmatmul.bf16.gmra.mxu0 %v504
      %v654 = vpop.f32.mrf.mxu0
      %v655 = vadd.f32 %v250, %v654
      %v656 = vpop.f32.mrf.mxu0
      %v657 = vadd.f32 %v250, %v656
      %658 = vmatmul.bf16.gmra.mxu0 %v507
      %v659 = vpop.f32.mrf.mxu0
      %v660 = vadd.f32 %v250, %v659
      %v661 = vpop.f32.mrf.mxu0
      %v662 = vadd.f32 %v250, %v661
      %663 = vmatmul.bf16.gmra.mxu0 %v510
      %v664 = vpop.f32.mrf.mxu0
      %v665 = vadd.f32 %v250, %v664
      %v666 = vpop.f32.mrf.mxu0
      %v667 = vadd.f32 %v250, %v666
      %668 = vmatmul.bf16.gmra.mxu0 %v513
      %v669 = vpop.f32.mrf.mxu0
      %v670 = vadd.f32 %v250, %v669
      %v671 = vpop.f32.mrf.mxu0
      %v672 = vadd.f32 %v250, %v671
      %673 = vmatmul.bf16.gmra.mxu0 %v516
      %v674 = vpop.f32.mrf.mxu0
      %v675 = vadd.f32 %v250, %v674
      %v676 = vpop.f32.mrf.mxu0
      %v677 = vadd.f32 %v250, %v676
      %678 = vmatmul.bf16.gmra.mxu0 %v519
      %v679 = vpop.f32.mrf.mxu0
      %v680 = vadd.f32 %v250, %v679
      %v681 = vpop.f32.mrf.mxu0
      %v682 = vadd.f32 %v250, %v681
      %683 = vmatmul.bf16.gmra.mxu0 %v522
      %v684 = vpop.f32.mrf.mxu0
      %v685 = vadd.f32 %v250, %v684
      %v686 = vpop.f32.mrf.mxu0
      %v687 = vadd.f32 %v250, %v686
      %688 = vmatmul.bf16.gmra.mxu0 %v525
      %v689 = vpop.f32.mrf.mxu0
      %v690 = vadd.f32 %v250, %v689
      %v691 = vpop.f32.mrf.mxu0
      %v692 = vadd.f32 %v250, %v691
      %693 = vmatmul.bf16.gmra.mxu0 %v528
      %v694 = vpop.f32.mrf.mxu0
      %v695 = vadd.f32 %v250, %v694
      %v696 = vpop.f32.mrf.mxu0
      %v697 = vadd.f32 %v250, %v696
      %698 = vmatmul.bf16.gmra.mxu0 %v531
      %v699 = vpop.f32.mrf.mxu0
      %v700 = vadd.f32 %v250, %v699
      %v701 = vpop.f32.mrf.mxu0
      %v702 = vadd.f32 %v250, %v701
      %703 = vmatmul.bf16.gmra.mxu0 %v534
      %v704 = vpop.f32.mrf.mxu0
      %v705 = vadd.f32 %v250, %v704
      %v706 = vpop.f32.mrf.mxu0
      %v707 = vadd.f32 %v250, %v706
      %708 = vdwg.mxu0
      %v709 = vxor.u32 %v550, 2147483648
      %v710 = vxor.u32 %v552, 2147483648
      %v711 = vxor.u32 %v555, 2147483648
      %v712 = vxor.u32 %v557, 2147483648
      %v713 = vxor.u32 %v560, 2147483648
      %v714 = vxor.u32 %v562, 2147483648
      %v715 = vxor.u32 %v565, 2147483648
      %v716 = vxor.u32 %v567, 2147483648
      %v717 = vxor.u32 %v570, 2147483648
      %v718 = vxor.u32 %v572, 2147483648
      %v719 = vxor.u32 %v575, 2147483648
      %v720 = vxor.u32 %v577, 2147483648
      %v721 = vxor.u32 %v580, 2147483648
      %v722 = vxor.u32 %v582, 2147483648
      %v723 = vxor.u32 %v585, 2147483648
      %v724 = vxor.u32 %v587, 2147483648
      %v725 = vxor.u32 %v590, 2147483648
      %v726 = vxor.u32 %v592, 2147483648
      %v727 = vxor.u32 %v595, 2147483648
      %v728 = vxor.u32 %v597, 2147483648
      %v729 = vxor.u32 %v600, 2147483648
      %v730 = vxor.u32 %v602, 2147483648
      %v731 = vxor.u32 %v605, 2147483648
      %v732 = vxor.u32 %v607, 2147483648
      %v733 = vxor.u32 %v610, 2147483648
      %v734 = vxor.u32 %v612, 2147483648
      %v735 = vxor.u32 %v615, 2147483648
      %v736 = vxor.u32 %v617, 2147483648
      %v737 = vxor.u32 %v620, 2147483648
      %v738 = vxor.u32 %v622, 2147483648
      %v739 = vxor.u32 %v625, 2147483648
      %v740 = vxor.u32 %v627, 2147483648
      %v741 = vxor.u32 %v630, 2147483648
      %v742 = vxor.u32 %v632, 2147483648
      %v743 = vxor.u32 %v635, 2147483648
      %v744 = vxor.u32 %v637, 2147483648
      %v745 = vxor.u32 %v640, 2147483648
      %v746 = vxor.u32 %v642, 2147483648
      %v747 = vxor.u32 %v645, 2147483648
      %v748 = vxor.u32 %v647, 2147483648
      %v749 = vxor.u32 %v650, 2147483648
      %v750 = vxor.u32 %v652, 2147483648
      %v751 = vxor.u32 %v655, 2147483648
      %v752 = vxor.u32 %v657, 2147483648
      %v753 = vxor.u32 %v660, 2147483648
      %v754 = vxor.u32 %v662, 2147483648
      %v755 = vxor.u32 %v665, 2147483648
      %v756 = vxor.u32 %v667, 2147483648
      %v757 = vxor.u32 %v670, 2147483648
      %v758 = vxor.u32 %v672, 2147483648
      %v759 = vxor.u32 %v675, 2147483648
      %v760 = vxor.u32 %v677, 2147483648
      %v761 = vxor.u32 %v680, 2147483648
      %v762 = vxor.u32 %v682, 2147483648
      %v763 = vxor.u32 %v685, 2147483648
      %v764 = vxor.u32 %v687, 2147483648
      %v765 = vxor.u32 %v690, 2147483648
      %v766 = vxor.u32 %v692, 2147483648
      %v767 = vxor.u32 %v695, 2147483648
      %v768 = vxor.u32 %v697, 2147483648
      %v769 = vxor.u32 %v700, 2147483648
      %v770 = vxor.u32 %v702, 2147483648
      %v771 = vxor.u32 %v705, 2147483648
      %v772 = vxor.u32 %v707, 2147483648
      %v773 = vmul.f32 %v709, 1.442695
      %v774 = vpow.pop %v773
      %v775 = vmul.f32 %v710, 1.442695
      %v776 = vpow.pop %v775
      %v777 = vmul.f32 %v711, 1.442695
      %v778 = vpow.pop %v777
      %v779 = vmul.f32 %v712, 1.442695
      %v780 = vpow.pop %v779
      %v781 = vmul.f32 %v713, 1.442695
      %v782 = vpow.pop %v781
      %v783 = vmul.f32 %v714, 1.442695
      %v784 = vpow.pop %v783
      %v785 = vmul.f32 %v715, 1.442695
      %v786 = vpow.pop %v785
      %v787 = vmul.f32 %v716, 1.442695
      %v788 = vpow.pop %v787
      %v789 = vmul.f32 %v717, 1.442695
      %v790 = vpow.pop %v789
      %v791 = vmul.f32 %v718, 1.442695
      %v792 = vpow.pop %v791
      %v793 = vmul.f32 %v719, 1.442695
      %v794 = vpow.pop %v793
      %v795 = vmul.f32 %v720, 1.442695
      %v796 = vpow.pop %v795
      %v797 = vmul.f32 %v721, 1.442695
      %v798 = vpow.pop %v797
      %v799 = vmul.f32 %v722, 1.442695
      %v800 = vpow.pop %v799
      %v801 = vmul.f32 %v723, 1.442695
      %v802 = vpow.pop %v801
      %v803 = vmul.f32 %v724, 1.442695
      %v804 = vpow.pop %v803
      %v805 = vmul.f32 %v725, 1.442695
      %v806 = vpow.pop %v805
      %v807 = vmul.f32 %v726, 1.442695
      %v808 = vpow.pop %v807
      %v809 = vmul.f32 %v727, 1.442695
      %v810 = vpow.pop %v809
      %v811 = vmul.f32 %v728, 1.442695
      %v812 = vpow.pop %v811
      %v813 = vmul.f32 %v729, 1.442695
      %v814 = vpow.pop %v813
      %v815 = vmul.f32 %v730, 1.442695
      %v816 = vpow.pop %v815
      %v817 = vmul.f32 %v731, 1.442695
      %v818 = vpow.pop %v817
      %v819 = vmul.f32 %v732, 1.442695
      %v820 = vpow.pop %v819
      %v821 = vmul.f32 %v733, 1.442695
      %v822 = vpow.pop %v821
      %v823 = vmul.f32 %v734, 1.442695
      %v824 = vpow.pop %v823
      %v825 = vmul.f32 %v735, 1.442695
      %v826 = vpow.pop %v825
      %v827 = vmul.f32 %v736, 1.442695
      %v828 = vpow.pop %v827
      %v829 = vmul.f32 %v737, 1.442695
      %v830 = vpow.pop %v829
      %v831 = vmul.f32 %v738, 1.442695
      %v832 = vpow.pop %v831
      %v833 = vmul.f32 %v739, 1.442695
      %v834 = vpow.pop %v833
      %v835 = vmul.f32 %v740, 1.442695
      %v836 = vpow.pop %v835
      %v837 = vmul.f32 %v741, 1.442695
      %v838 = vpow.pop %v837
      %v839 = vmul.f32 %v742, 1.442695
      %v840 = vpow.pop %v839
      %v841 = vmul.f32 %v743, 1.442695
      %v842 = vpow.pop %v841
      %v843 = vmul.f32 %v744, 1.442695
      %v844 = vpow.pop %v843
      %v845 = vmul.f32 %v745, 1.442695
      %v846 = vpow.pop %v845
      %v847 = vmul.f32 %v746, 1.442695
      %v848 = vpow.pop %v847
      %v849 = vmul.f32 %v747, 1.442695
      %v850 = vpow.pop %v849
      %v851 = vmul.f32 %v748, 1.442695
      %v852 = vpow.pop %v851
      %v853 = vmul.f32 %v749, 1.442695
      %v854 = vpow.pop %v853
      %v855 = vmul.f32 %v750, 1.442695
      %v856 = vpow.pop %v855
      %v857 = vmul.f32 %v751, 1.442695
      %v858 = vpow.pop %v857
      %v859 = vmul.f32 %v752, 1.442695
      %v860 = vpow.pop %v859
      %v861 = vmul.f32 %v753, 1.442695
      %v862 = vpow.pop %v861
      %v863 = vmul.f32 %v754, 1.442695
      %v864 = vpow.pop %v863
      %v865 = vmul.f32 %v755, 1.442695
      %v866 = vpow.pop %v865
      %v867 = vmul.f32 %v756, 1.442695
      %v868 = vpow.pop %v867
      %v869 = vmul.f32 %v757, 1.442695
      %v870 = vpow.pop %v869
      %v871 = vmul.f32 %v758, 1.442695
      %v872 = vpow.pop %v871
      %v873 = vmul.f32 %v759, 1.442695
      %v874 = vpow.pop %v873
      %v875 = vmul.f32 %v760, 1.442695
      %v876 = vpow.pop %v875
      %v877 = vmul.f32 %v761, 1.442695
      %v878 = vpow.pop %v877
      %v879 = vmul.f32 %v762, 1.442695
      %v880 = vpow.pop %v879
      %v881 = vmul.f32 %v763, 1.442695
      %v882 = vpow.pop %v881
      %v883 = vmul.f32 %v764, 1.442695
      %v884 = vpow.pop %v883
      %v885 = vmul.f32 %v765, 1.442695
      %v886 = vpow.pop %v885
      %v887 = vmul.f32 %v766, 1.442695
      %v888 = vpow.pop %v887
      %v889 = vmul.f32 %v767, 1.442695
      %v890 = vpow.pop %v889
      %v891 = vmul.f32 %v768, 1.442695
      %v892 = vpow.pop %v891
      %v893 = vmul.f32 %v769, 1.442695
      %v894 = vpow.pop %v893
      %v895 = vmul.f32 %v770, 1.442695
      %v896 = vpow.pop %v895
      %v897 = vmul.f32 %v771, 1.442695
      %v898 = vpow.pop %v897
      %v899 = vmul.f32 %v772, 1.442695
      %v900 = vpow.pop %v899
      %v901 = vadd.f32 %v774, 1.0
      %v902 = vadd.f32 %v776, 1.0
      %v903 = vadd.f32 %v778, 1.0
      %v904 = vadd.f32 %v780, 1.0
      %v905 = vadd.f32 %v782, 1.0
      %v906 = vadd.f32 %v784, 1.0
      %v907 = vadd.f32 %v786, 1.0
      %v908 = vadd.f32 %v788, 1.0
      %v909 = vadd.f32 %v790, 1.0
      %v910 = vadd.f32 %v792, 1.0
      %v911 = vadd.f32 %v794, 1.0
      %v912 = vadd.f32 %v796, 1.0
      %v913 = vadd.f32 %v798, 1.0
      %v914 = vadd.f32 %v800, 1.0
      %v915 = vadd.f32 %v802, 1.0
      %v916 = vadd.f32 %v804, 1.0
      %v917 = vadd.f32 %v806, 1.0
      %v918 = vadd.f32 %v808, 1.0
      %v919 = vadd.f32 %v810, 1.0
      %v920 = vadd.f32 %v812, 1.0
      %v921 = vadd.f32 %v814, 1.0
      %v922 = vadd.f32 %v816, 1.0
      %v923 = vadd.f32 %v818, 1.0
      %v924 = vadd.f32 %v820, 1.0
      %v925 = vadd.f32 %v822, 1.0
      %v926 = vadd.f32 %v824, 1.0
      %v927 = vadd.f32 %v826, 1.0
      %v928 = vadd.f32 %v828, 1.0
      %v929 = vadd.f32 %v830, 1.0
      %v930 = vadd.f32 %v832, 1.0
      %v931 = vadd.f32 %v834, 1.0
      %v932 = vadd.f32 %v836, 1.0
      %v933 = vadd.f32 %v838, 1.0
      %v934 = vadd.f32 %v840, 1.0
      %v935 = vadd.f32 %v842, 1.0
      %v936 = vadd.f32 %v844, 1.0
      %v937 = vadd.f32 %v846, 1.0
      %v938 = vadd.f32 %v848, 1.0
      %v939 = vadd.f32 %v850, 1.0
      %v940 = vadd.f32 %v852, 1.0
      %v941 = vadd.f32 %v854, 1.0
      %v942 = vadd.f32 %v856, 1.0
      %v943 = vadd.f32 %v858, 1.0
      %v944 = vadd.f32 %v860, 1.0
      %v945 = vadd.f32 %v862, 1.0
      %v946 = vadd.f32 %v864, 1.0
      %v947 = vadd.f32 %v866, 1.0
      %v948 = vadd.f32 %v868, 1.0
      %v949 = vadd.f32 %v870, 1.0
      %v950 = vadd.f32 %v872, 1.0
      %v951 = vadd.f32 %v874, 1.0
      %v952 = vadd.f32 %v876, 1.0
      %v953 = vadd.f32 %v878, 1.0
      %v954 = vadd.f32 %v880, 1.0
      %v955 = vadd.f32 %v882, 1.0
      %v956 = vadd.f32 %v884, 1.0
      %v957 = vadd.f32 %v886, 1.0
      %v958 = vadd.f32 %v888, 1.0
      %v959 = vadd.f32 %v890, 1.0
      %v960 = vadd.f32 %v892, 1.0
      %v961 = vadd.f32 %v894, 1.0
      %v962 = vadd.f32 %v896, 1.0
      %v963 = vadd.f32 %v898, 1.0
      %v964 = vadd.f32 %v900, 1.0
      %v965 = vrcp.pop %v901
      %v966 = vmul.f32 %v901, %v965
      %v967 = vsub.f32 1.0, %v966
      %v968 = vmul.f32 %v965, %v967
      %v969 = vadd.f32 %v965, %v968
      %vm970 = vweird.f32 %v901
      %vm971 = vweird.f32 %v965
      %vm972 = vmor %vm970, %vm971
      %v973 = vsel %vm972, %v965, %v969
      %v974 = vand.u32 2147483647, %v901
      %vm975 = vcmp.eq.f32.partialorder %v974, 8.507059e+37
      %v976 = vand.u32 %v901, 2147483648
      %v977 = vor.u32 1.1754944e-38, %v976
      %v978 = vsel %vm975, %v977, %v973
      %v979 = vmul.f32 1.0, %v978
      %v980 = vrcp.pop %v902
      %v981 = vmul.f32 %v902, %v980
      %v982 = vsub.f32 1.0, %v981
      %v983 = vmul.f32 %v980, %v982
      %v984 = vadd.f32 %v980, %v983
      %vm985 = vweird.f32 %v902
      %vm986 = vweird.f32 %v980
      %vm987 = vmor %vm985, %vm986
      %v988 = vsel %vm987, %v980, %v984
      %v989 = vand.u32 2147483647, %v902
      %vm990 = vcmp.eq.f32.partialorder %v989, 8.507059e+37
      %v991 = vand.u32 %v902, 2147483648
      %v992 = vor.u32 1.1754944e-38, %v991
      %v993 = vsel %vm990, %v992, %v988
      %v994 = vmul.f32 1.0, %v993
      %v995 = vrcp.pop %v903
      %v996 = vmul.f32 %v903, %v995
      %v997 = vsub.f32 1.0, %v996
      %v998 = vmul.f32 %v995, %v997
      %v999 = vadd.f32 %v995, %v998
      %vm1000 = vweird.f32 %v903
      %vm1001 = vweird.f32 %v995
      %vm1002 = vmor %vm1000, %vm1001
      %v1003 = vsel %vm1002, %v995, %v999
      %v1004 = vand.u32 2147483647, %v903
      %vm1005 = vcmp.eq.f32.partialorder %v1004, 8.507059e+37
      %v1006 = vand.u32 %v903, 2147483648
      %v1007 = vor.u32 1.1754944e-38, %v1006
      %v1008 = vsel %vm1005, %v1007, %v1003
      %v1009 = vmul.f32 1.0, %v1008
      %v1010 = vrcp.pop %v904
      %v1011 = vmul.f32 %v904, %v1010
      %v1012 = vsub.f32 1.0, %v1011
      %v1013 = vmul.f32 %v1010, %v1012
      %v1014 = vadd.f32 %v1010, %v1013
      %vm1015 = vweird.f32 %v904
      %vm1016 = vweird.f32 %v1010
      %vm1017 = vmor %vm1015, %vm1016
      %v1018 = vsel %vm1017, %v1010, %v1014
      %v1019 = vand.u32 2147483647, %v904
      %vm1020 = vcmp.eq.f32.partialorder %v1019, 8.507059e+37
      %v1021 = vand.u32 %v904, 2147483648
      %v1022 = vor.u32 1.1754944e-38, %v1021
      %v1023 = vsel %vm1020, %v1022, %v1018
      %v1024 = vmul.f32 1.0, %v1023
      %v1025 = vrcp.pop %v905
      %v1026 = vmul.f32 %v905, %v1025
      %v1027 = vsub.f32 1.0, %v1026
      %v1028 = vmul.f32 %v1025, %v1027
      %v1029 = vadd.f32 %v1025, %v1028
      %vm1030 = vweird.f32 %v905
      %vm1031 = vweird.f32 %v1025
      %vm1032 = vmor %vm1030, %vm1031
      %v1033 = vsel %vm1032, %v1025, %v1029
      %v1034 = vand.u32 2147483647, %v905
      %vm1035 = vcmp.eq.f32.partialorder %v1034, 8.507059e+37
      %v1036 = vand.u32 %v905, 2147483648
      %v1037 = vor.u32 1.1754944e-38, %v1036
      %v1038 = vsel %vm1035, %v1037, %v1033
      %v1039 = vmul.f32 1.0, %v1038
      %v1040 = vrcp.pop %v906
      %v1041 = vmul.f32 %v906, %v1040
      %v1042 = vsub.f32 1.0, %v1041
      %v1043 = vmul.f32 %v1040, %v1042
      %v1044 = vadd.f32 %v1040, %v1043
      %vm1045 = vweird.f32 %v906
      %vm1046 = vweird.f32 %v1040
      %vm1047 = vmor %vm1045, %vm1046
      %v1048 = vsel %vm1047, %v1040, %v1044
      %v1049 = vand.u32 2147483647, %v906
      %vm1050 = vcmp.eq.f32.partialorder %v1049, 8.507059e+37
      %v1051 = vand.u32 %v906, 2147483648
      %v1052 = vor.u32 1.1754944e-38, %v1051
      %v1053 = vsel %vm1050, %v1052, %v1048
      %v1054 = vmul.f32 1.0, %v1053
      %v1055 = vrcp.pop %v907
      %v1056 = vmul.f32 %v907, %v1055
      %v1057 = vsub.f32 1.0, %v1056
      %v1058 = vmul.f32 %v1055, %v1057
      %v1059 = vadd.f32 %v1055, %v1058
      %vm1060 = vweird.f32 %v907
      %vm1061 = vweird.f32 %v1055
      %vm1062 = vmor %vm1060, %vm1061
      %v1063 = vsel %vm1062, %v1055, %v1059
      %v1064 = vand.u32 2147483647, %v907
      %vm1065 = vcmp.eq.f32.partialorder %v1064, 8.507059e+37
      %v1066 = vand.u32 %v907, 2147483648
      %v1067 = vor.u32 1.1754944e-38, %v1066
      %v1068 = vsel %vm1065, %v1067, %v1063
      %v1069 = vmul.f32 1.0, %v1068
      %v1070 = vrcp.pop %v908
      %v1071 = vmul.f32 %v908, %v1070
      %v1072 = vsub.f32 1.0, %v1071
      %v1073 = vmul.f32 %v1070, %v1072
      %v1074 = vadd.f32 %v1070, %v1073
      %vm1075 = vweird.f32 %v908
      %vm1076 = vweird.f32 %v1070
      %vm1077 = vmor %vm1075, %vm1076
      %v1078 = vsel %vm1077, %v1070, %v1074
      %v1079 = vand.u32 2147483647, %v908
      %vm1080 = vcmp.eq.f32.partialorder %v1079, 8.507059e+37
      %v1081 = vand.u32 %v908, 2147483648
      %v1082 = vor.u32 1.1754944e-38, %v1081
      %v1083 = vsel %vm1080, %v1082, %v1078
      %v1084 = vmul.f32 1.0, %v1083
      %v1085 = vrcp.pop %v909
      %v1086 = vmul.f32 %v909, %v1085
      %v1087 = vsub.f32 1.0, %v1086
      %v1088 = vmul.f32 %v1085, %v1087
      %v1089 = vadd.f32 %v1085, %v1088
      %vm1090 = vweird.f32 %v909
      %vm1091 = vweird.f32 %v1085
      %vm1092 = vmor %vm1090, %vm1091
      %v1093 = vsel %vm1092, %v1085, %v1089
      %v1094 = vand.u32 2147483647, %v909
      %vm1095 = vcmp.eq.f32.partialorder %v1094, 8.507059e+37
      %v1096 = vand.u32 %v909, 2147483648
      %v1097 = vor.u32 1.1754944e-38, %v1096
      %v1098 = vsel %vm1095, %v1097, %v1093
      %v1099 = vmul.f32 1.0, %v1098
      %v1100 = vrcp.pop %v910
      %v1101 = vmul.f32 %v910, %v1100
      %v1102 = vsub.f32 1.0, %v1101
      %v1103 = vmul.f32 %v1100, %v1102
      %v1104 = vadd.f32 %v1100, %v1103
      %vm1105 = vweird.f32 %v910
      %vm1106 = vweird.f32 %v1100
      %vm1107 = vmor %vm1105, %vm1106
      %v1108 = vsel %vm1107, %v1100, %v1104
      %v1109 = vand.u32 2147483647, %v910
      %vm1110 = vcmp.eq.f32.partialorder %v1109, 8.507059e+37
      %v1111 = vand.u32 %v910, 2147483648
      %v1112 = vor.u32 1.1754944e-38, %v1111
      %v1113 = vsel %vm1110, %v1112, %v1108
      %v1114 = vmul.f32 1.0, %v1113
      %v1115 = vrcp.pop %v911
      %v1116 = vmul.f32 %v911, %v1115
      %v1117 = vsub.f32 1.0, %v1116
      %v1118 = vmul.f32 %v1115, %v1117
      %v1119 = vadd.f32 %v1115, %v1118
      %vm1120 = vweird.f32 %v911
      %vm1121 = vweird.f32 %v1115
      %vm1122 = vmor %vm1120, %vm1121
      %v1123 = vsel %vm1122, %v1115, %v1119
      %v1124 = vand.u32 2147483647, %v911
      %vm1125 = vcmp.eq.f32.partialorder %v1124, 8.507059e+37
      %v1126 = vand.u32 %v911, 2147483648
      %v1127 = vor.u32 1.1754944e-38, %v1126
      %v1128 = vsel %vm1125, %v1127, %v1123
      %v1129 = vmul.f32 1.0, %v1128
      %v1130 = vrcp.pop %v912
      %v1131 = vmul.f32 %v912, %v1130
      %v1132 = vsub.f32 1.0, %v1131
      %v1133 = vmul.f32 %v1130, %v1132
      %v1134 = vadd.f32 %v1130, %v1133
      %vm1135 = vweird.f32 %v912
      %vm1136 = vweird.f32 %v1130
      %vm1137 = vmor %vm1135, %vm1136
      %v1138 = vsel %vm1137, %v1130, %v1134
      %v1139 = vand.u32 2147483647, %v912
      %vm1140 = vcmp.eq.f32.partialorder %v1139, 8.507059e+37
      %v1141 = vand.u32 %v912, 2147483648
      %v1142 = vor.u32 1.1754944e-38, %v1141
      %v1143 = vsel %vm1140, %v1142, %v1138
      %v1144 = vmul.f32 1.0, %v1143
      %v1145 = vrcp.pop %v913
      %v1146 = vmul.f32 %v913, %v1145
      %v1147 = vsub.f32 1.0, %v1146
      %v1148 = vmul.f32 %v1145, %v1147
      %v1149 = vadd.f32 %v1145, %v1148
      %vm1150 = vweird.f32 %v913
      %vm1151 = vweird.f32 %v1145
      %vm1152 = vmor %vm1150, %vm1151
      %v1153 = vsel %vm1152, %v1145, %v1149
      %v1154 = vand.u32 2147483647, %v913
      %vm1155 = vcmp.eq.f32.partialorder %v1154, 8.507059e+37
      %v1156 = vand.u32 %v913, 2147483648
      %v1157 = vor.u32 1.1754944e-38, %v1156
      %v1158 = vsel %vm1155, %v1157, %v1153
      %v1159 = vmul.f32 1.0, %v1158
      %v1160 = vrcp.pop %v914
      %v1161 = vmul.f32 %v914, %v1160
      %v1162 = vsub.f32 1.0, %v1161
      %v1163 = vmul.f32 %v1160, %v1162
      %v1164 = vadd.f32 %v1160, %v1163
      %vm1165 = vweird.f32 %v914
      %vm1166 = vweird.f32 %v1160
      %vm1167 = vmor %vm1165, %vm1166
      %v1168 = vsel %vm1167, %v1160, %v1164
      %v1169 = vand.u32 2147483647, %v914
      %vm1170 = vcmp.eq.f32.partialorder %v1169, 8.507059e+37
      %v1171 = vand.u32 %v914, 2147483648
      %v1172 = vor.u32 1.1754944e-38, %v1171
      %v1173 = vsel %vm1170, %v1172, %v1168
      %v1174 = vmul.f32 1.0, %v1173
      %v1175 = vrcp.pop %v915
      %v1176 = vmul.f32 %v915, %v1175
      %v1177 = vsub.f32 1.0, %v1176
      %v1178 = vmul.f32 %v1175, %v1177
      %v1179 = vadd.f32 %v1175, %v1178
      %vm1180 = vweird.f32 %v915
      %vm1181 = vweird.f32 %v1175
      %vm1182 = vmor %vm1180, %vm1181
      %v1183 = vsel %vm1182, %v1175, %v1179
      %v1184 = vand.u32 2147483647, %v915
      %vm1185 = vcmp.eq.f32.partialorder %v1184, 8.507059e+37
      %v1186 = vand.u32 %v915, 2147483648
      %v1187 = vor.u32 1.1754944e-38, %v1186
      %v1188 = vsel %vm1185, %v1187, %v1183
      %v1189 = vmul.f32 1.0, %v1188
      %v1190 = vrcp.pop %v916
      %v1191 = vmul.f32 %v916, %v1190
      %v1192 = vsub.f32 1.0, %v1191
      %v1193 = vmul.f32 %v1190, %v1192
      %v1194 = vadd.f32 %v1190, %v1193
      %vm1195 = vweird.f32 %v916
      %vm1196 = vweird.f32 %v1190
      %vm1197 = vmor %vm1195, %vm1196
      %v1198 = vsel %vm1197, %v1190, %v1194
      %v1199 = vand.u32 2147483647, %v916
      %vm1200 = vcmp.eq.f32.partialorder %v1199, 8.507059e+37
      %v1201 = vand.u32 %v916, 2147483648
      %v1202 = vor.u32 1.1754944e-38, %v1201
      %v1203 = vsel %vm1200, %v1202, %v1198
      %v1204 = vmul.f32 1.0, %v1203
      %v1205 = vrcp.pop %v917
      %v1206 = vmul.f32 %v917, %v1205
      %v1207 = vsub.f32 1.0, %v1206
      %v1208 = vmul.f32 %v1205, %v1207
      %v1209 = vadd.f32 %v1205, %v1208
      %vm1210 = vweird.f32 %v917
      %vm1211 = vweird.f32 %v1205
      %vm1212 = vmor %vm1210, %vm1211
      %v1213 = vsel %vm1212, %v1205, %v1209
      %v1214 = vand.u32 2147483647, %v917
      %vm1215 = vcmp.eq.f32.partialorder %v1214, 8.507059e+37
      %v1216 = vand.u32 %v917, 2147483648
      %v1217 = vor.u32 1.1754944e-38, %v1216
      %v1218 = vsel %vm1215, %v1217, %v1213
      %v1219 = vmul.f32 1.0, %v1218
      %v1220 = vrcp.pop %v918
      %v1221 = vmul.f32 %v918, %v1220
      %v1222 = vsub.f32 1.0, %v1221
      %v1223 = vmul.f32 %v1220, %v1222
      %v1224 = vadd.f32 %v1220, %v1223
      %vm1225 = vweird.f32 %v918
      %vm1226 = vweird.f32 %v1220
      %vm1227 = vmor %vm1225, %vm1226
      %v1228 = vsel %vm1227, %v1220, %v1224
      %v1229 = vand.u32 2147483647, %v918
      %vm1230 = vcmp.eq.f32.partialorder %v1229, 8.507059e+37
      %v1231 = vand.u32 %v918, 2147483648
      %v1232 = vor.u32 1.1754944e-38, %v1231
      %v1233 = vsel %vm1230, %v1232, %v1228
      %v1234 = vmul.f32 1.0, %v1233
      %v1235 = vrcp.pop %v919
      %v1236 = vmul.f32 %v919, %v1235
      %v1237 = vsub.f32 1.0, %v1236
      %v1238 = vmul.f32 %v1235, %v1237
      %v1239 = vadd.f32 %v1235, %v1238
      %vm1240 = vweird.f32 %v919
      %vm1241 = vweird.f32 %v1235
      %vm1242 = vmor %vm1240, %vm1241
      %v1243 = vsel %vm1242, %v1235, %v1239
      %v1244 = vand.u32 2147483647, %v919
      %vm1245 = vcmp.eq.f32.partialorder %v1244, 8.507059e+37
      %v1246 = vand.u32 %v919, 2147483648
      %v1247 = vor.u32 1.1754944e-38, %v1246
      %v1248 = vsel %vm1245, %v1247, %v1243
      %v1249 = vmul.f32 1.0, %v1248
      %v1250 = vrcp.pop %v920
      %v1251 = vmul.f32 %v920, %v1250
      %v1252 = vsub.f32 1.0, %v1251
      %v1253 = vmul.f32 %v1250, %v1252
      %v1254 = vadd.f32 %v1250, %v1253
      %vm1255 = vweird.f32 %v920
      %vm1256 = vweird.f32 %v1250
      %vm1257 = vmor %vm1255, %vm1256
      %v1258 = vsel %vm1257, %v1250, %v1254
      %v1259 = vand.u32 2147483647, %v920
      %vm1260 = vcmp.eq.f32.partialorder %v1259, 8.507059e+37
      %v1261 = vand.u32 %v920, 2147483648
      %v1262 = vor.u32 1.1754944e-38, %v1261
      %v1263 = vsel %vm1260, %v1262, %v1258
      %v1264 = vmul.f32 1.0, %v1263
      %v1265 = vrcp.pop %v921
      %v1266 = vmul.f32 %v921, %v1265
      %v1267 = vsub.f32 1.0, %v1266
      %v1268 = vmul.f32 %v1265, %v1267
      %v1269 = vadd.f32 %v1265, %v1268
      %vm1270 = vweird.f32 %v921
      %vm1271 = vweird.f32 %v1265
      %vm1272 = vmor %vm1270, %vm1271
      %v1273 = vsel %vm1272, %v1265, %v1269
      %v1274 = vand.u32 2147483647, %v921
      %vm1275 = vcmp.eq.f32.partialorder %v1274, 8.507059e+37
      %v1276 = vand.u32 %v921, 2147483648
      %v1277 = vor.u32 1.1754944e-38, %v1276
      %v1278 = vsel %vm1275, %v1277, %v1273
      %v1279 = vmul.f32 1.0, %v1278
      %v1280 = vrcp.pop %v922
      %v1281 = vmul.f32 %v922, %v1280
      %v1282 = vsub.f32 1.0, %v1281
      %v1283 = vmul.f32 %v1280, %v1282
      %v1284 = vadd.f32 %v1280, %v1283
      %vm1285 = vweird.f32 %v922
      %vm1286 = vweird.f32 %v1280
      %vm1287 = vmor %vm1285, %vm1286
      %v1288 = vsel %vm1287, %v1280, %v1284
      %v1289 = vand.u32 2147483647, %v922
      %vm1290 = vcmp.eq.f32.partialorder %v1289, 8.507059e+37
      %v1291 = vand.u32 %v922, 2147483648
      %v1292 = vor.u32 1.1754944e-38, %v1291
      %v1293 = vsel %vm1290, %v1292, %v1288
      %v1294 = vmul.f32 1.0, %v1293
      %v1295 = vrcp.pop %v923
      %v1296 = vmul.f32 %v923, %v1295
      %v1297 = vsub.f32 1.0, %v1296
      %v1298 = vmul.f32 %v1295, %v1297
      %v1299 = vadd.f32 %v1295, %v1298
      %vm1300 = vweird.f32 %v923
      %vm1301 = vweird.f32 %v1295
      %vm1302 = vmor %vm1300, %vm1301
      %v1303 = vsel %vm1302, %v1295, %v1299
      %v1304 = vand.u32 2147483647, %v923
      %vm1305 = vcmp.eq.f32.partialorder %v1304, 8.507059e+37
      %v1306 = vand.u32 %v923, 2147483648
      %v1307 = vor.u32 1.1754944e-38, %v1306
      %v1308 = vsel %vm1305, %v1307, %v1303
      %v1309 = vmul.f32 1.0, %v1308
      %v1310 = vrcp.pop %v924
      %v1311 = vmul.f32 %v924, %v1310
      %v1312 = vsub.f32 1.0, %v1311
      %v1313 = vmul.f32 %v1310, %v1312
      %v1314 = vadd.f32 %v1310, %v1313
      %vm1315 = vweird.f32 %v924
      %vm1316 = vweird.f32 %v1310
      %vm1317 = vmor %vm1315, %vm1316
      %v1318 = vsel %vm1317, %v1310, %v1314
      %v1319 = vand.u32 2147483647, %v924
      %vm1320 = vcmp.eq.f32.partialorder %v1319, 8.507059e+37
      %v1321 = vand.u32 %v924, 2147483648
      %v1322 = vor.u32 1.1754944e-38, %v1321
      %v1323 = vsel %vm1320, %v1322, %v1318
      %v1324 = vmul.f32 1.0, %v1323
      %v1325 = vrcp.pop %v925
      %v1326 = vmul.f32 %v925, %v1325
      %v1327 = vsub.f32 1.0, %v1326
      %v1328 = vmul.f32 %v1325, %v1327
      %v1329 = vadd.f32 %v1325, %v1328
      %vm1330 = vweird.f32 %v925
      %vm1331 = vweird.f32 %v1325
      %vm1332 = vmor %vm1330, %vm1331
      %v1333 = vsel %vm1332, %v1325, %v1329
      %v1334 = vand.u32 2147483647, %v925
      %vm1335 = vcmp.eq.f32.partialorder %v1334, 8.507059e+37
      %v1336 = vand.u32 %v925, 2147483648
      %v1337 = vor.u32 1.1754944e-38, %v1336
      %v1338 = vsel %vm1335, %v1337, %v1333
      %v1339 = vmul.f32 1.0, %v1338
      %v1340 = vrcp.pop %v926
      %v1341 = vmul.f32 %v926, %v1340
      %v1342 = vsub.f32 1.0, %v1341
      %v1343 = vmul.f32 %v1340, %v1342
      %v1344 = vadd.f32 %v1340, %v1343
      %vm1345 = vweird.f32 %v926
      %vm1346 = vweird.f32 %v1340
      %vm1347 = vmor %vm1345, %vm1346
      %v1348 = vsel %vm1347, %v1340, %v1344
      %v1349 = vand.u32 2147483647, %v926
      %vm1350 = vcmp.eq.f32.partialorder %v1349, 8.507059e+37
      %v1351 = vand.u32 %v926, 2147483648
      %v1352 = vor.u32 1.1754944e-38, %v1351
      %v1353 = vsel %vm1350, %v1352, %v1348
      %v1354 = vmul.f32 1.0, %v1353
      %v1355 = vrcp.pop %v927
      %v1356 = vmul.f32 %v927, %v1355
      %v1357 = vsub.f32 1.0, %v1356
      %v1358 = vmul.f32 %v1355, %v1357
      %v1359 = vadd.f32 %v1355, %v1358
      %vm1360 = vweird.f32 %v927
      %vm1361 = vweird.f32 %v1355
      %vm1362 = vmor %vm1360, %vm1361
      %v1363 = vsel %vm1362, %v1355, %v1359
      %v1364 = vand.u32 2147483647, %v927
      %vm1365 = vcmp.eq.f32.partialorder %v1364, 8.507059e+37
      %v1366 = vand.u32 %v927, 2147483648
      %v1367 = vor.u32 1.1754944e-38, %v1366
      %v1368 = vsel %vm1365, %v1367, %v1363
      %v1369 = vmul.f32 1.0, %v1368
      %v1370 = vrcp.pop %v928
      %v1371 = vmul.f32 %v928, %v1370
      %v1372 = vsub.f32 1.0, %v1371
      %v1373 = vmul.f32 %v1370, %v1372
      %v1374 = vadd.f32 %v1370, %v1373
      %vm1375 = vweird.f32 %v928
      %vm1376 = vweird.f32 %v1370
      %vm1377 = vmor %vm1375, %vm1376
      %v1378 = vsel %vm1377, %v1370, %v1374
      %v1379 = vand.u32 2147483647, %v928
      %vm1380 = vcmp.eq.f32.partialorder %v1379, 8.507059e+37
      %v1381 = vand.u32 %v928, 2147483648
      %v1382 = vor.u32 1.1754944e-38, %v1381
      %v1383 = vsel %vm1380, %v1382, %v1378
      %v1384 = vmul.f32 1.0, %v1383
      %v1385 = vrcp.pop %v929
      %v1386 = vmul.f32 %v929, %v1385
      %v1387 = vsub.f32 1.0, %v1386
      %v1388 = vmul.f32 %v1385, %v1387
      %v1389 = vadd.f32 %v1385, %v1388
      %vm1390 = vweird.f32 %v929
      %vm1391 = vweird.f32 %v1385
      %vm1392 = vmor %vm1390, %vm1391
      %v1393 = vsel %vm1392, %v1385, %v1389
      %v1394 = vand.u32 2147483647, %v929
      %vm1395 = vcmp.eq.f32.partialorder %v1394, 8.507059e+37
      %v1396 = vand.u32 %v929, 2147483648
      %v1397 = vor.u32 1.1754944e-38, %v1396
      %v1398 = vsel %vm1395, %v1397, %v1393
      %v1399 = vmul.f32 1.0, %v1398
      %v1400 = vrcp.pop %v930
      %v1401 = vmul.f32 %v930, %v1400
      %v1402 = vsub.f32 1.0, %v1401
      %v1403 = vmul.f32 %v1400, %v1402
      %v1404 = vadd.f32 %v1400, %v1403
      %vm1405 = vweird.f32 %v930
      %vm1406 = vweird.f32 %v1400
      %vm1407 = vmor %vm1405, %vm1406
      %v1408 = vsel %vm1407, %v1400, %v1404
      %v1409 = vand.u32 2147483647, %v930
      %vm1410 = vcmp.eq.f32.partialorder %v1409, 8.507059e+37
      %v1411 = vand.u32 %v930, 2147483648
      %v1412 = vor.u32 1.1754944e-38, %v1411
      %v1413 = vsel %vm1410, %v1412, %v1408
      %v1414 = vmul.f32 1.0, %v1413
      %v1415 = vrcp.pop %v931
      %v1416 = vmul.f32 %v931, %v1415
      %v1417 = vsub.f32 1.0, %v1416
      %v1418 = vmul.f32 %v1415, %v1417
      %v1419 = vadd.f32 %v1415, %v1418
      %vm1420 = vweird.f32 %v931
      %vm1421 = vweird.f32 %v1415
      %vm1422 = vmor %vm1420, %vm1421
      %v1423 = vsel %vm1422, %v1415, %v1419
      %v1424 = vand.u32 2147483647, %v931
      %vm1425 = vcmp.eq.f32.partialorder %v1424, 8.507059e+37
      %v1426 = vand.u32 %v931, 2147483648
      %v1427 = vor.u32 1.1754944e-38, %v1426
      %v1428 = vsel %vm1425, %v1427, %v1423
      %v1429 = vmul.f32 1.0, %v1428
      %v1430 = vrcp.pop %v932
      %v1431 = vmul.f32 %v932, %v1430
      %v1432 = vsub.f32 1.0, %v1431
      %v1433 = vmul.f32 %v1430, %v1432
      %v1434 = vadd.f32 %v1430, %v1433
      %vm1435 = vweird.f32 %v932
      %vm1436 = vweird.f32 %v1430
      %vm1437 = vmor %vm1435, %vm1436
      %v1438 = vsel %vm1437, %v1430, %v1434
      %v1439 = vand.u32 2147483647, %v932
      %vm1440 = vcmp.eq.f32.partialorder %v1439, 8.507059e+37
      %v1441 = vand.u32 %v932, 2147483648
      %v1442 = vor.u32 1.1754944e-38, %v1441
      %v1443 = vsel %vm1440, %v1442, %v1438
      %v1444 = vmul.f32 1.0, %v1443
      %v1445 = vrcp.pop %v933
      %v1446 = vmul.f32 %v933, %v1445
      %v1447 = vsub.f32 1.0, %v1446
      %v1448 = vmul.f32 %v1445, %v1447
      %v1449 = vadd.f32 %v1445, %v1448
      %vm1450 = vweird.f32 %v933
      %vm1451 = vweird.f32 %v1445
      %vm1452 = vmor %vm1450, %vm1451
      %v1453 = vsel %vm1452, %v1445, %v1449
      %v1454 = vand.u32 2147483647, %v933
      %vm1455 = vcmp.eq.f32.partialorder %v1454, 8.507059e+37
      %v1456 = vand.u32 %v933, 2147483648
      %v1457 = vor.u32 1.1754944e-38, %v1456
      %v1458 = vsel %vm1455, %v1457, %v1453
      %v1459 = vmul.f32 1.0, %v1458
      %v1460 = vrcp.pop %v934
      %v1461 = vmul.f32 %v934, %v1460
      %v1462 = vsub.f32 1.0, %v1461
      %v1463 = vmul.f32 %v1460, %v1462
      %v1464 = vadd.f32 %v1460, %v1463
      %vm1465 = vweird.f32 %v934
      %vm1466 = vweird.f32 %v1460
      %vm1467 = vmor %vm1465, %vm1466
      %v1468 = vsel %vm1467, %v1460, %v1464
      %v1469 = vand.u32 2147483647, %v934
      %vm1470 = vcmp.eq.f32.partialorder %v1469, 8.507059e+37
      %v1471 = vand.u32 %v934, 2147483648
      %v1472 = vor.u32 1.1754944e-38, %v1471
      %v1473 = vsel %vm1470, %v1472, %v1468
      %v1474 = vmul.f32 1.0, %v1473
      %v1475 = vrcp.pop %v935
      %v1476 = vmul.f32 %v935, %v1475
      %v1477 = vsub.f32 1.0, %v1476
      %v1478 = vmul.f32 %v1475, %v1477
      %v1479 = vadd.f32 %v1475, %v1478
      %vm1480 = vweird.f32 %v935
      %vm1481 = vweird.f32 %v1475
      %vm1482 = vmor %vm1480, %vm1481
      %v1483 = vsel %vm1482, %v1475, %v1479
      %v1484 = vand.u32 2147483647, %v935
      %vm1485 = vcmp.eq.f32.partialorder %v1484, 8.507059e+37
      %v1486 = vand.u32 %v935, 2147483648
      %v1487 = vor.u32 1.1754944e-38, %v1486
      %v1488 = vsel %vm1485, %v1487, %v1483
      %v1489 = vmul.f32 1.0, %v1488
      %v1490 = vrcp.pop %v936
      %v1491 = vmul.f32 %v936, %v1490
      %v1492 = vsub.f32 1.0, %v1491
      %v1493 = vmul.f32 %v1490, %v1492
      %v1494 = vadd.f32 %v1490, %v1493
      %vm1495 = vweird.f32 %v936
      %vm1496 = vweird.f32 %v1490
      %vm1497 = vmor %vm1495, %vm1496
      %v1498 = vsel %vm1497, %v1490, %v1494
      %v1499 = vand.u32 2147483647, %v936
      %vm1500 = vcmp.eq.f32.partialorder %v1499, 8.507059e+37
      %v1501 = vand.u32 %v936, 2147483648
      %v1502 = vor.u32 1.1754944e-38, %v1501
      %v1503 = vsel %vm1500, %v1502, %v1498
      %v1504 = vmul.f32 1.0, %v1503
      %v1505 = vrcp.pop %v937
      %v1506 = vmul.f32 %v937, %v1505
      %v1507 = vsub.f32 1.0, %v1506
      %v1508 = vmul.f32 %v1505, %v1507
      %v1509 = vadd.f32 %v1505, %v1508
      %vm1510 = vweird.f32 %v937
      %vm1511 = vweird.f32 %v1505
      %vm1512 = vmor %vm1510, %vm1511
      %v1513 = vsel %vm1512, %v1505, %v1509
      %v1514 = vand.u32 2147483647, %v937
      %vm1515 = vcmp.eq.f32.partialorder %v1514, 8.507059e+37
      %v1516 = vand.u32 %v937, 2147483648
      %v1517 = vor.u32 1.1754944e-38, %v1516
      %v1518 = vsel %vm1515, %v1517, %v1513
      %v1519 = vmul.f32 1.0, %v1518
      %v1520 = vrcp.pop %v938
      %v1521 = vmul.f32 %v938, %v1520
      %v1522 = vsub.f32 1.0, %v1521
      %v1523 = vmul.f32 %v1520, %v1522
      %v1524 = vadd.f32 %v1520, %v1523
      %vm1525 = vweird.f32 %v938
      %vm1526 = vweird.f32 %v1520
      %vm1527 = vmor %vm1525, %vm1526
      %v1528 = vsel %vm1527, %v1520, %v1524
      %v1529 = vand.u32 2147483647, %v938
      %vm1530 = vcmp.eq.f32.partialorder %v1529, 8.507059e+37
      %v1531 = vand.u32 %v938, 2147483648
      %v1532 = vor.u32 1.1754944e-38, %v1531
      %v1533 = vsel %vm1530, %v1532, %v1528
      %v1534 = vmul.f32 1.0, %v1533
      %v1535 = vrcp.pop %v939
      %v1536 = vmul.f32 %v939, %v1535
      %v1537 = vsub.f32 1.0, %v1536
      %v1538 = vmul.f32 %v1535, %v1537
      %v1539 = vadd.f32 %v1535, %v1538
      %vm1540 = vweird.f32 %v939
      %vm1541 = vweird.f32 %v1535
      %vm1542 = vmor %vm1540, %vm1541
      %v1543 = vsel %vm1542, %v1535, %v1539
      %v1544 = vand.u32 2147483647, %v939
      %vm1545 = vcmp.eq.f32.partialorder %v1544, 8.507059e+37
      %v1546 = vand.u32 %v939, 2147483648
      %v1547 = vor.u32 1.1754944e-38, %v1546
      %v1548 = vsel %vm1545, %v1547, %v1543
      %v1549 = vmul.f32 1.0, %v1548
      %v1550 = vrcp.pop %v940
      %v1551 = vmul.f32 %v940, %v1550
      %v1552 = vsub.f32 1.0, %v1551
      %v1553 = vmul.f32 %v1550, %v1552
      %v1554 = vadd.f32 %v1550, %v1553
      %vm1555 = vweird.f32 %v940
      %vm1556 = vweird.f32 %v1550
      %vm1557 = vmor %vm1555, %vm1556
      %v1558 = vsel %vm1557, %v1550, %v1554
      %v1559 = vand.u32 2147483647, %v940
      %vm1560 = vcmp.eq.f32.partialorder %v1559, 8.507059e+37
      %v1561 = vand.u32 %v940, 2147483648
      %v1562 = vor.u32 1.1754944e-38, %v1561
      %v1563 = vsel %vm1560, %v1562, %v1558
      %v1564 = vmul.f32 1.0, %v1563
      %v1565 = vrcp.pop %v941
      %v1566 = vmul.f32 %v941, %v1565
      %v1567 = vsub.f32 1.0, %v1566
      %v1568 = vmul.f32 %v1565, %v1567
      %v1569 = vadd.f32 %v1565, %v1568
      %vm1570 = vweird.f32 %v941
      %vm1571 = vweird.f32 %v1565
      %vm1572 = vmor %vm1570, %vm1571
      %v1573 = vsel %vm1572, %v1565, %v1569
      %v1574 = vand.u32 2147483647, %v941
      %vm1575 = vcmp.eq.f32.partialorder %v1574, 8.507059e+37
      %v1576 = vand.u32 %v941, 2147483648
      %v1577 = vor.u32 1.1754944e-38, %v1576
      %v1578 = vsel %vm1575, %v1577, %v1573
      %v1579 = vmul.f32 1.0, %v1578
      %v1580 = vrcp.pop %v942
      %v1581 = vmul.f32 %v942, %v1580
      %v1582 = vsub.f32 1.0, %v1581
      %v1583 = vmul.f32 %v1580, %v1582
      %v1584 = vadd.f32 %v1580, %v1583
      %vm1585 = vweird.f32 %v942
      %vm1586 = vweird.f32 %v1580
      %vm1587 = vmor %vm1585, %vm1586
      %v1588 = vsel %vm1587, %v1580, %v1584
      %v1589 = vand.u32 2147483647, %v942
      %vm1590 = vcmp.eq.f32.partialorder %v1589, 8.507059e+37
      %v1591 = vand.u32 %v942, 2147483648
      %v1592 = vor.u32 1.1754944e-38, %v1591
      %v1593 = vsel %vm1590, %v1592, %v1588
      %v1594 = vmul.f32 1.0, %v1593
      %v1595 = vrcp.pop %v943
      %v1596 = vmul.f32 %v943, %v1595
      %v1597 = vsub.f32 1.0, %v1596
      %v1598 = vmul.f32 %v1595, %v1597
      %v1599 = vadd.f32 %v1595, %v1598
      %vm1600 = vweird.f32 %v943
      %vm1601 = vweird.f32 %v1595
      %vm1602 = vmor %vm1600, %vm1601
      %v1603 = vsel %vm1602, %v1595, %v1599
      %v1604 = vand.u32 2147483647, %v943
      %vm1605 = vcmp.eq.f32.partialorder %v1604, 8.507059e+37
      %v1606 = vand.u32 %v943, 2147483648
      %v1607 = vor.u32 1.1754944e-38, %v1606
      %v1608 = vsel %vm1605, %v1607, %v1603
      %v1609 = vmul.f32 1.0, %v1608
      %v1610 = vrcp.pop %v944
      %v1611 = vmul.f32 %v944, %v1610
      %v1612 = vsub.f32 1.0, %v1611
      %v1613 = vmul.f32 %v1610, %v1612
      %v1614 = vadd.f32 %v1610, %v1613
      %vm1615 = vweird.f32 %v944
      %vm1616 = vweird.f32 %v1610
      %vm1617 = vmor %vm1615, %vm1616
      %v1618 = vsel %vm1617, %v1610, %v1614
      %v1619 = vand.u32 2147483647, %v944
      %vm1620 = vcmp.eq.f32.partialorder %v1619, 8.507059e+37
      %v1621 = vand.u32 %v944, 2147483648
      %v1622 = vor.u32 1.1754944e-38, %v1621
      %v1623 = vsel %vm1620, %v1622, %v1618
      %v1624 = vmul.f32 1.0, %v1623
      %v1625 = vrcp.pop %v945
      %v1626 = vmul.f32 %v945, %v1625
      %v1627 = vsub.f32 1.0, %v1626
      %v1628 = vmul.f32 %v1625, %v1627
      %v1629 = vadd.f32 %v1625, %v1628
      %vm1630 = vweird.f32 %v945
      %vm1631 = vweird.f32 %v1625
      %vm1632 = vmor %vm1630, %vm1631
      %v1633 = vsel %vm1632, %v1625, %v1629
      %v1634 = vand.u32 2147483647, %v945
      %vm1635 = vcmp.eq.f32.partialorder %v1634, 8.507059e+37
      %v1636 = vand.u32 %v945, 2147483648
      %v1637 = vor.u32 1.1754944e-38, %v1636
      %v1638 = vsel %vm1635, %v1637, %v1633
      %v1639 = vmul.f32 1.0, %v1638
      %v1640 = vrcp.pop %v946
      %v1641 = vmul.f32 %v946, %v1640
      %v1642 = vsub.f32 1.0, %v1641
      %v1643 = vmul.f32 %v1640, %v1642
      %v1644 = vadd.f32 %v1640, %v1643
      %vm1645 = vweird.f32 %v946
      %vm1646 = vweird.f32 %v1640
      %vm1647 = vmor %vm1645, %vm1646
      %v1648 = vsel %vm1647, %v1640, %v1644
      %v1649 = vand.u32 2147483647, %v946
      %vm1650 = vcmp.eq.f32.partialorder %v1649, 8.507059e+37
      %v1651 = vand.u32 %v946, 2147483648
      %v1652 = vor.u32 1.1754944e-38, %v1651
      %v1653 = vsel %vm1650, %v1652, %v1648
      %v1654 = vmul.f32 1.0, %v1653
      %v1655 = vrcp.pop %v947
      %v1656 = vmul.f32 %v947, %v1655
      %v1657 = vsub.f32 1.0, %v1656
      %v1658 = vmul.f32 %v1655, %v1657
      %v1659 = vadd.f32 %v1655, %v1658
      %vm1660 = vweird.f32 %v947
      %vm1661 = vweird.f32 %v1655
      %vm1662 = vmor %vm1660, %vm1661
      %v1663 = vsel %vm1662, %v1655, %v1659
      %v1664 = vand.u32 2147483647, %v947
      %vm1665 = vcmp.eq.f32.partialorder %v1664, 8.507059e+37
      %v1666 = vand.u32 %v947, 2147483648
      %v1667 = vor.u32 1.1754944e-38, %v1666
      %v1668 = vsel %vm1665, %v1667, %v1663
      %v1669 = vmul.f32 1.0, %v1668
      %v1670 = vrcp.pop %v948
      %v1671 = vmul.f32 %v948, %v1670
      %v1672 = vsub.f32 1.0, %v1671
      %v1673 = vmul.f32 %v1670, %v1672
      %v1674 = vadd.f32 %v1670, %v1673
      %vm1675 = vweird.f32 %v948
      %vm1676 = vweird.f32 %v1670
      %vm1677 = vmor %vm1675, %vm1676
      %v1678 = vsel %vm1677, %v1670, %v1674
      %v1679 = vand.u32 2147483647, %v948
      %vm1680 = vcmp.eq.f32.partialorder %v1679, 8.507059e+37
      %v1681 = vand.u32 %v948, 2147483648
      %v1682 = vor.u32 1.1754944e-38, %v1681
      %v1683 = vsel %vm1680, %v1682, %v1678
      %v1684 = vmul.f32 1.0, %v1683
      %v1685 = vrcp.pop %v949
      %v1686 = vmul.f32 %v949, %v1685
      %v1687 = vsub.f32 1.0, %v1686
      %v1688 = vmul.f32 %v1685, %v1687
      %v1689 = vadd.f32 %v1685, %v1688
      %vm1690 = vweird.f32 %v949
      %vm1691 = vweird.f32 %v1685
      %vm1692 = vmor %vm1690, %vm1691
      %v1693 = vsel %vm1692, %v1685, %v1689
      %v1694 = vand.u32 2147483647, %v949
      %vm1695 = vcmp.eq.f32.partialorder %v1694, 8.507059e+37
      %v1696 = vand.u32 %v949, 2147483648
      %v1697 = vor.u32 1.1754944e-38, %v1696
      %v1698 = vsel %vm1695, %v1697, %v1693
      %v1699 = vmul.f32 1.0, %v1698
      %v1700 = vrcp.pop %v950
      %v1701 = vmul.f32 %v950, %v1700
      %v1702 = vsub.f32 1.0, %v1701
      %v1703 = vmul.f32 %v1700, %v1702
      %v1704 = vadd.f32 %v1700, %v1703
      %vm1705 = vweird.f32 %v950
      %vm1706 = vweird.f32 %v1700
      %vm1707 = vmor %vm1705, %vm1706
      %v1708 = vsel %vm1707, %v1700, %v1704
      %v1709 = vand.u32 2147483647, %v950
      %vm1710 = vcmp.eq.f32.partialorder %v1709, 8.507059e+37
      %v1711 = vand.u32 %v950, 2147483648
      %v1712 = vor.u32 1.1754944e-38, %v1711
      %v1713 = vsel %vm1710, %v1712, %v1708
      %v1714 = vmul.f32 1.0, %v1713
      %v1715 = vrcp.pop %v951
      %v1716 = vmul.f32 %v951, %v1715
      %v1717 = vsub.f32 1.0, %v1716
      %v1718 = vmul.f32 %v1715, %v1717
      %v1719 = vadd.f32 %v1715, %v1718
      %vm1720 = vweird.f32 %v951
      %vm1721 = vweird.f32 %v1715
      %vm1722 = vmor %vm1720, %vm1721
      %v1723 = vsel %vm1722, %v1715, %v1719
      %v1724 = vand.u32 2147483647, %v951
      %vm1725 = vcmp.eq.f32.partialorder %v1724, 8.507059e+37
      %v1726 = vand.u32 %v951, 2147483648
      %v1727 = vor.u32 1.1754944e-38, %v1726
      %v1728 = vsel %vm1725, %v1727, %v1723
      %v1729 = vmul.f32 1.0, %v1728
      %v1730 = vrcp.pop %v952
      %v1731 = vmul.f32 %v952, %v1730
      %v1732 = vsub.f32 1.0, %v1731
      %v1733 = vmul.f32 %v1730, %v1732
      %v1734 = vadd.f32 %v1730, %v1733
      %vm1735 = vweird.f32 %v952
      %vm1736 = vweird.f32 %v1730
      %vm1737 = vmor %vm1735, %vm1736
      %v1738 = vsel %vm1737, %v1730, %v1734
      %v1739 = vand.u32 2147483647, %v952
      %vm1740 = vcmp.eq.f32.partialorder %v1739, 8.507059e+37
      %v1741 = vand.u32 %v952, 2147483648
      %v1742 = vor.u32 1.1754944e-38, %v1741
      %v1743 = vsel %vm1740, %v1742, %v1738
      %v1744 = vmul.f32 1.0, %v1743
      %v1745 = vrcp.pop %v953
      %v1746 = vmul.f32 %v953, %v1745
      %v1747 = vsub.f32 1.0, %v1746
      %v1748 = vmul.f32 %v1745, %v1747
      %v1749 = vadd.f32 %v1745, %v1748
      %vm1750 = vweird.f32 %v953
      %vm1751 = vweird.f32 %v1745
      %vm1752 = vmor %vm1750, %vm1751
      %v1753 = vsel %vm1752, %v1745, %v1749
      %v1754 = vand.u32 2147483647, %v953
      %vm1755 = vcmp.eq.f32.partialorder %v1754, 8.507059e+37
      %v1756 = vand.u32 %v953, 2147483648
      %v1757 = vor.u32 1.1754944e-38, %v1756
      %v1758 = vsel %vm1755, %v1757, %v1753
      %v1759 = vmul.f32 1.0, %v1758
      %v1760 = vrcp.pop %v954
      %v1761 = vmul.f32 %v954, %v1760
      %v1762 = vsub.f32 1.0, %v1761
      %v1763 = vmul.f32 %v1760, %v1762
      %v1764 = vadd.f32 %v1760, %v1763
      %vm1765 = vweird.f32 %v954
      %vm1766 = vweird.f32 %v1760
      %vm1767 = vmor %vm1765, %vm1766
      %v1768 = vsel %vm1767, %v1760, %v1764
      %v1769 = vand.u32 2147483647, %v954
      %vm1770 = vcmp.eq.f32.partialorder %v1769, 8.507059e+37
      %v1771 = vand.u32 %v954, 2147483648
      %v1772 = vor.u32 1.1754944e-38, %v1771
      %v1773 = vsel %vm1770, %v1772, %v1768
      %v1774 = vmul.f32 1.0, %v1773
      %v1775 = vrcp.pop %v955
      %v1776 = vmul.f32 %v955, %v1775
      %v1777 = vsub.f32 1.0, %v1776
      %v1778 = vmul.f32 %v1775, %v1777
      %v1779 = vadd.f32 %v1775, %v1778
      %vm1780 = vweird.f32 %v955
      %vm1781 = vweird.f32 %v1775
      %vm1782 = vmor %vm1780, %vm1781
      %v1783 = vsel %vm1782, %v1775, %v1779
      %v1784 = vand.u32 2147483647, %v955
      %vm1785 = vcmp.eq.f32.partialorder %v1784, 8.507059e+37
      %v1786 = vand.u32 %v955, 2147483648
      %v1787 = vor.u32 1.1754944e-38, %v1786
      %v1788 = vsel %vm1785, %v1787, %v1783
      %v1789 = vmul.f32 1.0, %v1788
      %v1790 = vrcp.pop %v956
      %v1791 = vmul.f32 %v956, %v1790
      %v1792 = vsub.f32 1.0, %v1791
      %v1793 = vmul.f32 %v1790, %v1792
      %v1794 = vadd.f32 %v1790, %v1793
      %vm1795 = vweird.f32 %v956
      %vm1796 = vweird.f32 %v1790
      %vm1797 = vmor %vm1795, %vm1796
      %v1798 = vsel %vm1797, %v1790, %v1794
      %v1799 = vand.u32 2147483647, %v956
      %vm1800 = vcmp.eq.f32.partialorder %v1799, 8.507059e+37
      %v1801 = vand.u32 %v956, 2147483648
      %v1802 = vor.u32 1.1754944e-38, %v1801
      %v1803 = vsel %vm1800, %v1802, %v1798
      %v1804 = vmul.f32 1.0, %v1803
      %v1805 = vrcp.pop %v957
      %v1806 = vmul.f32 %v957, %v1805
      %v1807 = vsub.f32 1.0, %v1806
      %v1808 = vmul.f32 %v1805, %v1807
      %v1809 = vadd.f32 %v1805, %v1808
      %vm1810 = vweird.f32 %v957
      %vm1811 = vweird.f32 %v1805
      %vm1812 = vmor %vm1810, %vm1811
      %v1813 = vsel %vm1812, %v1805, %v1809
      %v1814 = vand.u32 2147483647, %v957
      %vm1815 = vcmp.eq.f32.partialorder %v1814, 8.507059e+37
      %v1816 = vand.u32 %v957, 2147483648
      %v1817 = vor.u32 1.1754944e-38, %v1816
      %v1818 = vsel %vm1815, %v1817, %v1813
      %v1819 = vmul.f32 1.0, %v1818
      %v1820 = vrcp.pop %v958
      %v1821 = vmul.f32 %v958, %v1820
      %v1822 = vsub.f32 1.0, %v1821
      %v1823 = vmul.f32 %v1820, %v1822
      %v1824 = vadd.f32 %v1820, %v1823
      %vm1825 = vweird.f32 %v958
      %vm1826 = vweird.f32 %v1820
      %vm1827 = vmor %vm1825, %vm1826
      %v1828 = vsel %vm1827, %v1820, %v1824
      %v1829 = vand.u32 2147483647, %v958
      %vm1830 = vcmp.eq.f32.partialorder %v1829, 8.507059e+37
      %v1831 = vand.u32 %v958, 2147483648
      %v1832 = vor.u32 1.1754944e-38, %v1831
      %v1833 = vsel %vm1830, %v1832, %v1828
      %v1834 = vmul.f32 1.0, %v1833
      %v1835 = vrcp.pop %v959
      %v1836 = vmul.f32 %v959, %v1835
      %v1837 = vsub.f32 1.0, %v1836
      %v1838 = vmul.f32 %v1835, %v1837
      %v1839 = vadd.f32 %v1835, %v1838
      %vm1840 = vweird.f32 %v959
      %vm1841 = vweird.f32 %v1835
      %vm1842 = vmor %vm1840, %vm1841
      %v1843 = vsel %vm1842, %v1835, %v1839
      %v1844 = vand.u32 2147483647, %v959
      %vm1845 = vcmp.eq.f32.partialorder %v1844, 8.507059e+37
      %v1846 = vand.u32 %v959, 2147483648
      %v1847 = vor.u32 1.1754944e-38, %v1846
      %v1848 = vsel %vm1845, %v1847, %v1843
      %v1849 = vmul.f32 1.0, %v1848
      %v1850 = vrcp.pop %v960
      %v1851 = vmul.f32 %v960, %v1850
      %v1852 = vsub.f32 1.0, %v1851
      %v1853 = vmul.f32 %v1850, %v1852
      %v1854 = vadd.f32 %v1850, %v1853
      %vm1855 = vweird.f32 %v960
      %vm1856 = vweird.f32 %v1850
      %vm1857 = vmor %vm1855, %vm1856
      %v1858 = vsel %vm1857, %v1850, %v1854
      %v1859 = vand.u32 2147483647, %v960
      %vm1860 = vcmp.eq.f32.partialorder %v1859, 8.507059e+37
      %v1861 = vand.u32 %v960, 2147483648
      %v1862 = vor.u32 1.1754944e-38, %v1861
      %v1863 = vsel %vm1860, %v1862, %v1858
      %v1864 = vmul.f32 1.0, %v1863
      %v1865 = vrcp.pop %v961
      %v1866 = vmul.f32 %v961, %v1865
      %v1867 = vsub.f32 1.0, %v1866
      %v1868 = vmul.f32 %v1865, %v1867
      %v1869 = vadd.f32 %v1865, %v1868
      %vm1870 = vweird.f32 %v961
      %vm1871 = vweird.f32 %v1865
      %vm1872 = vmor %vm1870, %vm1871
      %v1873 = vsel %vm1872, %v1865, %v1869
      %v1874 = vand.u32 2147483647, %v961
      %vm1875 = vcmp.eq.f32.partialorder %v1874, 8.507059e+37
      %v1876 = vand.u32 %v961, 2147483648
      %v1877 = vor.u32 1.1754944e-38, %v1876
      %v1878 = vsel %vm1875, %v1877, %v1873
      %v1879 = vmul.f32 1.0, %v1878
      %v1880 = vrcp.pop %v962
      %v1881 = vmul.f32 %v962, %v1880
      %v1882 = vsub.f32 1.0, %v1881
      %v1883 = vmul.f32 %v1880, %v1882
      %v1884 = vadd.f32 %v1880, %v1883
      %vm1885 = vweird.f32 %v962
      %vm1886 = vweird.f32 %v1880
      %vm1887 = vmor %vm1885, %vm1886
      %v1888 = vsel %vm1887, %v1880, %v1884
      %v1889 = vand.u32 2147483647, %v962
      %vm1890 = vcmp.eq.f32.partialorder %v1889, 8.507059e+37
      %v1891 = vand.u32 %v962, 2147483648
      %v1892 = vor.u32 1.1754944e-38, %v1891
      %v1893 = vsel %vm1890, %v1892, %v1888
      %v1894 = vmul.f32 1.0, %v1893
      %v1895 = vrcp.pop %v963
      %v1896 = vmul.f32 %v963, %v1895
      %v1897 = vsub.f32 1.0, %v1896
      %v1898 = vmul.f32 %v1895, %v1897
      %v1899 = vadd.f32 %v1895, %v1898
      %vm1900 = vweird.f32 %v963
      %vm1901 = vweird.f32 %v1895
      %vm1902 = vmor %vm1900, %vm1901
      %v1903 = vsel %vm1902, %v1895, %v1899
      %v1904 = vand.u32 2147483647, %v963
      %vm1905 = vcmp.eq.f32.partialorder %v1904, 8.507059e+37
      %v1906 = vand.u32 %v963, 2147483648
      %v1907 = vor.u32 1.1754944e-38, %v1906
      %v1908 = vsel %vm1905, %v1907, %v1903
      %v1909 = vmul.f32 1.0, %v1908
      %v1910 = vrcp.pop %v964
      %v1911 = vmul.f32 %v964, %v1910
      %v1912 = vsub.f32 1.0, %v1911
      %v1913 = vmul.f32 %v1910, %v1912
      %v1914 = vadd.f32 %v1910, %v1913
      %vm1915 = vweird.f32 %v964
      %vm1916 = vweird.f32 %v1910
      %vm1917 = vmor %vm1915, %vm1916
      %v1918 = vsel %vm1917, %v1910, %v1914
      %v1919 = vand.u32 2147483647, %v964
      %vm1920 = vcmp.eq.f32.partialorder %v1919, 8.507059e+37
      %v1921 = vand.u32 %v964, 2147483648
      %v1922 = vor.u32 1.1754944e-38, %v1921
      %v1923 = vsel %vm1920, %v1922, %v1918
      %v1924 = vmul.f32 1.0, %v1923
      %1925 = vst [vmem:[%s172] sm:$0xff] %v979
      %1926 = vst [vmem:[%s172 + $0x8] sm:$0xff] %v994
      %1927 = vst [vmem:[%s172 + $0x10] sm:$0xff] %v1009
      %1928 = vst [vmem:[%s172 + $0x18] sm:$0xff] %v1024
      %1929 = vst [vmem:[%s172 + $0x20] sm:$0xff] %v1039
      %1930 = vst [vmem:[%s172 + $0x28] sm:$0xff] %v1054
      %1931 = vst [vmem:[%s172 + $0x30] sm:$0xff] %v1069
      %1932 = vst [vmem:[%s172 + $0x38] sm:$0xff] %v1084
      %1933 = vst [vmem:[%s172 + $0x40] sm:$0xff] %v1099
      %1934 = vst [vmem:[%s172 + $0x48] sm:$0xff] %v1114
      %1935 = vst [vmem:[%s172 + $0x50] sm:$0xff] %v1129
      %1936 = vst [vmem:[%s172 + $0x58] sm:$0xff] %v1144
      %1937 = vst [vmem:[%s172 + $0x60] sm:$0xff] %v1159
      %1938 = vst [vmem:[%s172 + $0x68] sm:$0xff] %v1174
      %1939 = vst [vmem:[%s172 + $0x70] sm:$0xff] %v1189
      %1940 = vst [vmem:[%s172 + $0x78] sm:$0xff] %v1204
      %1941 = vst [vmem:[%s172 + $0x80] sm:$0xff] %v1219
      %1942 = vst [vmem:[%s172 + $0x88] sm:$0xff] %v1234
      %1943 = vst [vmem:[%s172 + $0x90] sm:$0xff] %v1249
      %1944 = vst [vmem:[%s172 + $0x98] sm:$0xff] %v1264
      %1945 = vst [vmem:[%s172 + $0xa0] sm:$0xff] %v1279
      %1946 = vst [vmem:[%s172 + $0xa8] sm:$0xff] %v1294
      %1947 = vst [vmem:[%s172 + $0xb0] sm:$0xff] %v1309
      %1948 = vst [vmem:[%s172 + $0xb8] sm:$0xff] %v1324
      %1949 = vst [vmem:[%s172 + $0xc0] sm:$0xff] %v1339
      %1950 = vst [vmem:[%s172 + $0xc8] sm:$0xff] %v1354
      %1951 = vst [vmem:[%s172 + $0xd0] sm:$0xff] %v1369
      %1952 = vst [vmem:[%s172 + $0xd8] sm:$0xff] %v1384
      %1953 = vst [vmem:[%s172 + $0xe0] sm:$0xff] %v1399
      %1954 = vst [vmem:[%s172 + $0xe8] sm:$0xff] %v1414
      %1955 = vst [vmem:[%s172 + $0xf0] sm:$0xff] %v1429
      %1956 = vst [vmem:[%s172 + $0xf8] sm:$0xff] %v1444
      %1957 = vst [vmem:[%s172 + $0x100] sm:$0xff] %v1459
      %1958 = vst [vmem:[%s172 + $0x108] sm:$0xff] %v1474
      %1959 = vst [vmem:[%s172 + $0x110] sm:$0xff] %v1489
      %1960 = vst [vmem:[%s172 + $0x118] sm:$0xff] %v1504
      %1961 = vst [vmem:[%s172 + $0x120] sm:$0xff] %v1519
      %1962 = vst [vmem:[%s172 + $0x128] sm:$0xff] %v1534
      %1963 = vst [vmem:[%s172 + $0x130] sm:$0xff] %v1549
      %1964 = vst [vmem:[%s172 + $0x138] sm:$0xff] %v1564
      %1965 = vst [vmem:[%s172 + $0x140] sm:$0xff] %v1579
      %1966 = vst [vmem:[%s172 + $0x148] sm:$0xff] %v1594
      %1967 = vst [vmem:[%s172 + $0x150] sm:$0xff] %v1609
      %1968 = vst [vmem:[%s172 + $0x158] sm:$0xff] %v1624
      %1969 = vst [vmem:[%s172 + $0x160] sm:$0xff] %v1639
      %1970 = vst [vmem:[%s172 + $0x168] sm:$0xff] %v1654
      %1971 = vst [vmem:[%s172 + $0x170] sm:$0xff] %v1669
      %1972 = vst [vmem:[%s172 + $0x178] sm:$0xff] %v1684
      %1973 = vst [vmem:[%s172 + $0x180] sm:$0xff] %v1699
      %1974 = vst [vmem:[%s172 + $0x188] sm:$0xff] %v1714
      %1975 = vst [vmem:[%s172 + $0x190] sm:$0xff] %v1729
      %1976 = vst [vmem:[%s172 + $0x198] sm:$0xff] %v1744
      %1977 = vst [vmem:[%s172 + $0x1a0] sm:$0xff] %v1759
      %1978 = vst [vmem:[%s172 + $0x1a8] sm:$0xff] %v1774
      %1979 = vst [vmem:[%s172 + $0x1b0] sm:$0xff] %v1789
      %1980 = vst [vmem:[%s172 + $0x1b8] sm:$0xff] %v1804
      %1981 = vst [vmem:[%s172 + $0x1c0] sm:$0xff] %v1819
      %1982 = vst [vmem:[%s172 + $0x1c8] sm:$0xff] %v1834
      %1983 = vst [vmem:[%s172 + $0x1d0] sm:$0xff] %v1849
      %1984 = vst [vmem:[%s172 + $0x1d8] sm:$0xff] %v1864
      %1985 = vst [vmem:[%s172 + $0x1e0] sm:$0xff] %v1879
      %1986 = vst [vmem:[%s172 + $0x1e8] sm:$0xff] %v1894
      %1987 = vst [vmem:[%s172 + $0x1f0] sm:$0xff] %v1909
      %1988 = vst [vmem:[%s172 + $0x1f8] sm:$0xff] %v1924
      %s1989 = smul.u32 64, %s14
      %p1990 = scmp.lt.s32.totalorder %s1989, 511
      %s1991 = scalar_select %p1990, %s1989, 511
      %s1992 = smul.addr %s1991, 8
      %s1993 = scalar_lea.vmem %s3, %s1992
      // Predicated region
      $region33: #{net_forward.16} parent=31 // pred_check
        %p1994 = pneg %p100
      $region34: #{net_forward.16} parent=31 // pred_check_branch
        %1996 = sbr.rel (%p1994) target = $region36
      $region35: #{net_forward.16} parent=31 // pred_region
        %s1997 = smul.u32 64, %s14
      $region36: #{net_forward.16} parent=31 // pred_fallthru
        _
    $region32: #{net_forward.16} parent=5 // pred_fallthru
      _
    %p1998 = scmp.le.s32.totalorder 2, %s9
    // Predicated region
    $region37: #{net_forward.16} parent=5 // pred_check
      %p1999 = pneg %p1998
    $region38: #{net_forward.16} parent=5 // pred_check_branch
      %2001 = sbr.rel (%p1999) target = $region40
    $region39: #{net_forward.16} parent=5 // pred_region
      %s2002 = ssub.s32 %s9, 2
      // Predicated region
      $region41: #{net_forward.16} parent=39 // pred_check
        %p2003 = pneg %p106
      $region42: #{net_forward.16} parent=39 // pred_check_branch
        %2005 = sbr.rel (%p2003) target = $region44
      $region43: #{net_forward.16} parent=39 // pred_region
        %s2006 = smul.u32 64, %s15
        %p2007 = scmp.lt.s32.totalorder %s2006, 511
        %s2008 = scalar_select %p2007, %s2006, 511
        %s2009 = smul.addr %s2008, 8
        %s2010 = scalar_lea.vmem %s3, %s2009
      $region44: #{net_forward.16} parent=39 // pred_fallthru
        _
    $region40: #{net_forward.16} parent=5 // pred_fallthru
      _
  $region6: #{net_forward.16} parent=0 // loop_footer
    %s13 = sadd.s32 1, %s9
  $region7: #{net_forward.16} parent=0 // loop_footer_branch
    %8 = sbr.rel target = $region3
  $region8: #{net_forward.16} parent=0 // loop_exit
    _

// kernel: net_forward.17
$region0: #{net_forward.17}
  #allocation0 [shape = 'u32[]', space=smem, size = 0x4, offset = 0x4, fixed_abs, tag = 'smem constant byte address 0x4 - core index']
  #allocation1 [shape = 'u32[72,128]{1,0:T(1,128)}', space=vmem, size = 0x9000, scoped, tag = 'internal scratch']
  %s0 = inlined_call_operand.vmem [shape: f32[2,784], index: 0, kind: input, shape index: {}]
  %s1 = inlined_call_operand.vmem [shape: f32[2,784], index: 1, kind: input, shape index: {}]
  %s2 = inlined_call_operand.vmem [shape: f32[2,50], index: 2, kind: input, shape index: {}]
  %s3 = inlined_call_operand.vmem [shape: f32[2,50], index: 3, kind: input, shape index: {}]
  %s4 = inlined_call_operand.hbm [shape: f32[1,1], index: 4, kind: output, shape index: {}]
  %s5 = sld [smem:[#allocation0]]
  $region26: #{net_forward.17} parent=0
    _
  %s7 = ssub.s32 1, %s5
  %s8 = scalar_select 0, %s7, %s5
  $region1: #{net_forward.17} parent=0
    #allocation2 [shape = 'u8[512]{0}', space=vmem, size = 0x400, scoped, tag = 'output window, operand 0, single buffered']
    #allocation3 [shape = 's32[1]{0}', space=sflag, size = 0x4, scoped, tag = 'scoped memory for net_forward.17']
    %9 = vsyncpa [#allocation3], 0
    // Predicated region
    $region2: #{net_forward.17} parent=1 // pred_check
      _
    $region3: #{net_forward.17} parent=1 // pred_check_branch
      %11 = sbr.rel (0) target = $region5
    $region4: #{net_forward.17} parent=1 // pred_region
      _
    $region5: #{net_forward.17} parent=1 // pred_fallthru
      _
    // Predicated region
    $region6: #{net_forward.17} parent=1 // pred_check
      _
    $region7: #{net_forward.17} parent=1 // pred_check_branch
      %13 = sbr.rel (0) target = $region9
    $region8: #{net_forward.17} parent=1 // pred_region
      _
    $region9: #{net_forward.17} parent=1 // pred_fallthru
      _
    // Predicated region
    $region10: #{net_forward.17} parent=1 // pred_check
      _
    $region11: #{net_forward.17} parent=1 // pred_check_branch
      %15 = sbr.rel (0) target = $region13
    $region12: #{net_forward.17} parent=1 // pred_region
      _
    $region13: #{net_forward.17} parent=1 // pred_fallthru
      _
    // Predicated region
    $region14: #{net_forward.17} parent=1 // pred_check
      _
    $region15: #{net_forward.17} parent=1 // pred_check_branch
      %17 = sbr.rel (0) target = $region17
    $region16: #{net_forward.17} parent=1 // pred_region
      _
    $region17: #{net_forward.17} parent=1 // pred_fallthru
      _
    %v18 = vld [vmem:[%s0] sm:$0xff]
    %v19 = vld [vmem:[%s0 + $0x8] sm:$0x3f]
    %v20 = vld [vmem:[%s1] sm:$0xff]
    %v21 = vld [vmem:[%s1 + $0x8] sm:$0x3f]
    %v22 = vlog2.pop %v18
    %v23 = vmul.f32 %v22, 0.6931472
    %v24 = vlog2.pop %v19
    %v25 = vmul.f32 %v24, 0.6931472
    %v26 = vmax.f32 %v23, -100.0
    %v27 = vmax.f32 %v25, -100.0
    %v28 = vsub.f32 1.0, %v18
    %v29 = vsub.f32 1.0, %v19
    %v30 = vlog2.pop %v28
    %v31 = vmul.f32 %v30, 0.6931472
    %v32 = vlog2.pop %v29
    %v33 = vmul.f32 %v32, 0.6931472
    %v34 = vmax.f32 %v31, -100.0
    %v35 = vmax.f32 %v33, -100.0
    %v36 = vmul.f32 %v20, %v26
    %v37 = vmul.f32 %v21, %v27
    %v38 = vsub.f32 1.0, %v20
    %v39 = vsub.f32 1.0, %v21
    %v40 = vmul.f32 %v38, %v34
    %v41 = vmul.f32 %v39, %v35
    %v42 = vadd.f32 %v36, %v40
    %v43 = vadd.f32 %v37, %v41
    %46 = vst [vmem:[#allocation1] ss:$4 sm:$0xff] %v42
    %s47 = scalar_lea.vmem [#allocation1], 32
    %48 = vst [vmem:[%s47] ss:$4 sm:$0xff] %v43
    %v49 = vld.sshfl [vmem:[#allocation1] sm:$0xff pattern:$0x73625140]
    %v50 = vld.sshfl [vmem:[#allocation1 + $0x8] sm:$0xff pattern:$0x73625140]
    %v51 = vld.sshfl [vmem:[#allocation1 + $0x10] sm:$0xff pattern:$0x73625140]
    %v52 = vld.sshfl [vmem:[#allocation1 + $0x18] sm:$0xff pattern:$0x73625140]
    %v53 = vld.sshfl [vmem:[#allocation1 + $0x20] sm:$0xff pattern:$0x73625140]
    %v54 = vld.sshfl [vmem:[#allocation1 + $0x28] sm:$0xff pattern:$0x73625140]
    %v55 = vld.sshfl [vmem:[#allocation1 + $0x30] sm:$0xff pattern:$0x73625140]
    %vm63 = vcmask 1041408
    %v64 = vsel %vm63, %v49, 0.0
    %v65 = vsel %vm63, %v50, 0.0
    %v66 = vadd.f32 %v64, %v65
    %v67 = vsel %vm63, %v51, 0.0
    %v68 = vadd.f32 %v66, %v67
    %v69 = vsel %vm63, %v52, 0.0
    %v70 = vadd.f32 %v68, %v69
    %v71 = vsel %vm63, %v53, 0.0
    %v72 = vadd.f32 %v70, %v71
    %v73 = vsel %vm63, %v54, 0.0
    %v74 = vadd.f32 %v72, %v73
    %vm75 = vcmask 123904
    %v76 = vsel %vm75, %v55, 0.0
    %v77 = vadd.f32 %v74, %v76
    %78 = vadd.xlane.f32.xlu0 %v77
    %v79 = vpop.xlane.xlu0 %78
    %v80 = vrot.slane %v79, 4
    %v81 = vadd.f32 %v79, %v80
    %v82 = vrot.slane %v81, 2
    %v83 = vadd.f32 %v81, %v82
    %v84 = vrot.slane %v83, 1
    %v85 = vadd.f32 %v83, %v84
    %s86 = vtos %v85
    %v87 = vstv %s86
    %v88 = vsub.f32 0.0, %v87
    %v89 = vld [vmem:[%s2] sm:$0x3]
    %v90 = vld [vmem:[%s3] sm:$0x3]
    %v91 = vadd.f32 %v90, 1.0
    %v92 = vmul.f32 %v89, %v89
    %v93 = vsub.f32 %v91, %v92
    %v94 = vmul.f32 %v90, 1.442695
    %v95 = vpow.pop %v94
    %v96 = vsub.f32 %v93, %v95
    %vm97 = vcmask 402432
    %v98 = vsel %vm97, %v96, 0.0
    %99 = vadd.xlane.f32.xlu0 %v98
    %v100 = vpop.xlane.xlu0 %99
    %v101 = vrot.slane %v100, 4
    %v102 = vadd.f32 %v100, %v101
    %v103 = vrot.slane %v102, 2
    %v104 = vadd.f32 %v102, %v103
    %v105 = vrot.slane %v104, 1
    %v106 = vadd.f32 %v104, %v105
    %s107 = vtos %v106
    %v108 = vstv %s107
    %v109 = vmul.f32 %v108, -0.5
    %v110 = vmul.f32 %v109, 0.1
    %v111 = vadd.f32 %v88, %v110
    %v112 = vrcp.pop 2.0
    %v113 = vmul.f32 2.0, %v112
    %v114 = vsub.f32 1.0, %v113
    %v115 = vmul.f32 %v112, %v114
    %v116 = vadd.f32 %v112, %v115
    %vm117 = vweird.f32 %v112
    %v118 = vsel %vm117, %v112, %v116
    %v119 = vmul.f32 %v111, %v118
    %vm120 = vcmask 0
    %121 = vst.msk [vmem:[#allocation2] sm:$0x1] %vm120, %v119
    // Predicated region
    $region18: #{net_forward.17} parent=1 // pred_check
      _
    $region19: #{net_forward.17} parent=1 // pred_check_branch
      %123 = sbr.rel (0) target = $region21
    $region20: #{net_forward.17} parent=1 // pred_region
      %125 = vsyncadd [#allocation3], 0
      %s127 = sshll.u32 [#allocation2], 4
      %s128 = int_to_ptr.vmem [resolvable:$true] %s127
      %s129 = sshll.u32 %s4, 4
      %s130 = int_to_ptr.hbm [resolvable:$true] %s129
      %132 = dma.vmem_to_hbm [thread:$0]  %s128, 16, %s130, [#allocation3]
    $region21: #{net_forward.17} parent=1 // pred_fallthru
      _
    // Predicated region
    $region22: #{net_forward.17} parent=1 // pred_check
      _
    $region23: #{net_forward.17} parent=1 // pred_check_branch
      %134 = sbr.rel (0) target = $region25
    $region24: #{net_forward.17} parent=1 // pred_region
      %136 = dma.done [#allocation3], 16
    $region25: #{net_forward.17} parent=1 // pred_fallthru
      _
    %137 = vsyncpa [#allocation3], 1

</llo_original>
